<compile_context>
chip_gen: v7x
topology: tpu7x:2x2x1
jax: 0.10.0
libtpu: 0.0.40
codegen_flags: <defaults>
</compile_context>

<pallas_src>
import jax
import jax.numpy as jnp
from jax.experimental import pallas as pl
from jax.experimental.pallas import tpu as pltpu

LEAK = 0.2  # args.e_activation_leak for the 'lrelu' generator activation


# ----------------------------------------------------------------------------
# Pallas kernel: bf16 MXU matmul, f32 accumulation (the hot path).
# ----------------------------------------------------------------------------
def _matmul_kernel(a_ref, b_ref, o_ref):
    o_ref[...] = jnp.dot(a_ref[...], b_ref[...],
                         preferred_element_type=jnp.float32)


def pallas_matmul(a, b, *, tm_cap=4096):
    """a: (M, K) bf16, b: (K, N) bf16 -> (M, N) f32."""
    M, K = a.shape
    K2, N = b.shape
    assert K == K2
    tm = min(tm_cap, M)
    if tm != M:
        tm = max(8, (tm // 8) * 8)          # keep sublane-aligned blocks
    grid = (pl.cdiv(M, tm),)                # robust for any batch size
    return pl.pallas_call(
        _matmul_kernel,
        out_shape=jax.ShapeDtypeStruct((M, N), jnp.float32),
        grid_spec=pltpu.PrefetchScalarGridSpec(
            num_scalar_prefetch=0,
            grid=grid,
            in_specs=[
                pl.BlockSpec((tm, K), lambda i: (i, 0)),
                pl.BlockSpec((K, N), lambda i: (0, 0)),
            ],
            out_specs=pl.BlockSpec((tm, N), lambda i: (i, 0)),
        ),
        compiler_params=pltpu.CompilerParams(
            dimension_semantics=("parallel",)),
    )(a, b)


# ----------------------------------------------------------------------------
# Overlap-add epilogue for the direct-form deconv (plain JAX; XLA fuses it).
# ----------------------------------------------------------------------------
def _overlap_add_s2(y, n, h, w, cout):
    """y: (n*h*w, 16*cout) per-input-pixel 4x4 tap patches -> (n, 2h, 2w, cout).

    ConvTranspose2d(k=4, s=2, p=1): output pixel (2m+pa, 2q+pb) sums exactly
    two taps per spatial dim:
      pa=0:  (ih=m, kh=1) + (ih=m-1, kh=3)
      pa=1:  (ih=m, kh=2) + (ih=m+1, kh=0)         (same pattern along width)
    """
    yy = y.reshape(n, h, w, 4, 4, cout)
    # height combine
    dn = jnp.pad(yy[:, :-1, :, 3], ((0, 0), (1, 0), (0, 0), (0, 0), (0, 0)))
    up = jnp.pad(yy[:, 1:, :, 0], ((0, 0), (0, 1), (0, 0), (0, 0), (0, 0)))
    even_h = yy[:, :, :, 1] + dn
    odd_h = yy[:, :, :, 2] + up
    rows = jnp.stack([even_h, odd_h], axis=2).reshape(n, 2 * h, w, 4, cout)
    # width combine
    dn = jnp.pad(rows[:, :, :-1, 3], ((0, 0), (0, 0), (1, 0), (0, 0)))
    up = jnp.pad(rows[:, :, 1:, 0], ((0, 0), (0, 0), (0, 1), (0, 0)))
    even_w = rows[:, :, :, 1] + dn
    odd_w = rows[:, :, :, 2] + up
    return jnp.stack([even_w, odd_w], axis=3).reshape(n, 2 * h, 2 * w, cout)


def deconv_s2_block(x, wm_bf16, bias, act):
    """x: (n, h, w, cin) f32 -> (n, 2h, 2w, cout) f32 via the Pallas matmul."""
    n, h, w, cin = x.shape
    cout = wm_bf16.shape[1] // 16
    a = x.astype(jnp.bfloat16).reshape(n * h * w, cin)   # free reshape, no im2col
    y = pallas_matmul(a, wm_bf16)                        # (n*h*w, 16*cout) f32
    out = _overlap_add_s2(y, n, h, w, cout) + bias       # bias after overlap-add
    if act == "lrelu":
        return jnp.where(out > 0, out, LEAK * out)
    return jnp.tanh(out)


# ----------------------------------------------------------------------------
# Parameters
# ----------------------------------------------------------------------------
def init_params(key, nz=16, ngf=4, nc=3):
    """PyTorch-layout ConvTranspose2d params: w (Cin, Cout, 4, 4), b (Cout,)."""
    chans = [nz, ngf * 16, ngf * 8, ngf * 4, ngf * 2, ngf, nc]
    params = []
    for i in range(6):
        key, kw, kb = jax.random.split(key, 3)
        cin, cout = chans[i], chans[i + 1]
        w = jax.random.normal(kw, (cin, cout, 4, 4), jnp.float32) * 0.05
        b = jax.random.normal(kb, (cout,), jnp.float32) * 0.05
        params.append((w, b))
    return params


def pack_params(params):
    """One-time repack into kernel layout (hoisted out of the forward path)."""
    w1, b1 = params[0]
    nz, c1 = w1.shape[0], w1.shape[1]
    w1m = jnp.transpose(w1, (0, 2, 3, 1)).reshape(nz, 16 * c1)   # f32, XLA matmul
    layers = []
    for w, b in params[1:]:
        cin, cout = w.shape[0], w.shape[1]
        wm = jnp.transpose(w, (0, 2, 3, 1)).reshape(cin, 16 * cout)
        layers.append((wm.astype(jnp.bfloat16), b))
    return {"l1": (w1m, b1), "layers": tuple(layers)}


# ----------------------------------------------------------------------------
# Forward pass
# ----------------------------------------------------------------------------
def netG_forward(packed, z):
    """z: (N, nz, 1, 1) NCHW -> (N, nc, 128, 128) NCHW."""
    n = z.shape[0]
    w1m, b1 = packed["l1"]
    c1 = b1.shape[0]

    # Layer 1: ConvTranspose2d(nz, ngf*16, 4, 1, 0) on a 1x1 input == matmul.
    x = jnp.dot(z.reshape(n, -1), w1m).reshape(n, 4, 4, c1) + b1
    x = jnp.where(x > 0, x, LEAK * x)                   # LeakyReLU(0.2)

    # Layers 2..6: stride-2 ConvTranspose2d (4,2,1); Pallas matmul + epilogue.
    n_layers = len(packed["layers"])
    for i, (wm, b) in enumerate(packed["layers"]):
        act = "tanh" if i == n_layers - 1 else "lrelu"
        x = deconv_s2_block(x, wm, b, act)              # 8,16,32,64,128

    return jnp.transpose(x, (0, 3, 1, 2))               # NHWC -> NCHW


# ----------------------------------------------------------------------------
# Pure-XLA f32 reference (for numerical validation only)
# ----------------------------------------------------------------------------
def _ref_conv_transpose(x_nhwc, w, b, stride, pad):
    k = w.shape[2]
    rhs = jnp.transpose(w[:, :, ::-1, ::-1], (2, 3, 0, 1))   # flipped, HWIO
    out = jax.lax.conv_general_dilated(
        x_nhwc, rhs, window_strides=(1, 1),
        padding=[(k - 1 - pad, k - 1 - pad)] * 2,
        lhs_dilation=(stride, stride),
        dimension_numbers=("NHWC", "HWIO", "NHWC"),
        precision=jax.lax.Precision.HIGHEST)
    return out + b


def netG_reference(params, z):
    x = jnp.transpose(z, (0, 2, 3, 1))                  # NCHW 1x1 -> NHWC
    for i, (w, b) in enumerate(params):
        stride, pad = (1, 0) if i == 0 else (2, 1)
        x = _ref_conv_transpose(x, w, b, stride, pad)
        if i == len(params) - 1:
            x = jnp.tanh(x)
        else:
            x = jnp.where(x > 0, x, LEAK * x)
    return jnp.transpose(x, (0, 3, 1, 2))


if __name__ == "__main__":
    key = jax.random.PRNGKey(0)
    kp, kz = jax.random.split(key)
    params = init_params(kp, nz=16, ngf=4, nc=3)
    packed = pack_params(params)
    z = jax.random.normal(kz, (2, 16, 1, 1), jnp.float32)

    out = jax.block_until_ready(jax.jit(netG_forward)(packed, z))
    assert out.shape == (2, 3, 128, 128), out.shape
    assert bool(jnp.all(jnp.isfinite(out)))
    assert float(jnp.max(jnp.abs(out))) <= 1.0 + 1e-6   # Tanh range

    # Validate against a plain-XLA f32 ConvTranspose reference (bf16 MXU
    # operands in the Pallas path -> loose-but-comfortable tolerance).
    ref = jax.block_until_ready(jax.jit(netG_reference)(params, z))
    max_err = float(jnp.max(jnp.abs(out - ref)))
    assert max_err < 2e-2, max_err

    print("KERNEL_OK")
</pallas_src>

<mosaic_0001>
module attributes {stable_mosaic.version = 11 : i64} {
  func.func @_matmul_kernel(%arg0: i32, %arg1: memref<32x64xbf16, #tpu.memory_space<vmem>>, %arg2: memref<64x512xbf16, #tpu.memory_space<vmem>>, %arg3: memref<32x512xf32, #tpu.memory_space<vmem>>) attributes {dimension_semantics = [#tpu.dimension_semantics<parallel>], iteration_bounds = array<i64: 1>, scalar_prefetch = 0 : i64, scratch_operands = 0 : i64, tpu.core_type = #tpu.core_type<tc>, window_params = [{transform_indices = @transform_0, window_bounds = array<i64: 32, 64>}, {pipeline_mode = #tpu.pipeline_mode<synchronous>, transform_indices = @transform_1, window_bounds = array<i64: 64, 512>}, {transform_indices = @transform_2, window_bounds = array<i64: 32, 512>}]} {
    %c0 = arith.constant 0 : index
    %c0_0 = arith.constant 0 : index
    %0 = vector.load %arg1[%c0, %c0_0] : memref<32x64xbf16, #tpu.memory_space<vmem>>, vector<32x64xbf16>
    %c0_1 = arith.constant 0 : index
    %c0_2 = arith.constant 0 : index
    %1 = vector.load %arg2[%c0_1, %c0_2] : memref<64x512xbf16, #tpu.memory_space<vmem>>, vector<64x512xbf16>
    %cst = arith.constant dense<0.000000e+00> : vector<32x512xf32>
    %2 = tpu.matmul %0, %1, %cst {dimension_numbers = #tpu.dot_dimension_numbers<[1], [0], [0], [1], [0, 0, 1, 1], [], []>} : vector<32x64xbf16>, vector<64x512xbf16>, vector<32x512xf32> -> vector<32x512xf32>
    %c0_3 = arith.constant 0 : index
    %c0_4 = arith.constant 0 : index
    %3 = vector.load %arg3[%c0_3, %c0_4] : memref<32x512xf32, #tpu.memory_space<vmem>>, vector<32x512xf32>
    tpu.vector_store %arg3[%c0_3, %c0_4], %2 {strides = array<i32>} : memref<32x512xf32, #tpu.memory_space<vmem>>, vector<32x512xf32>,
    return
  }
  func.func @transform_0(%arg0: i32) -> (i32, i32) {
    %c0_i32 = arith.constant 0 : i32
    %c0_i32_0 = arith.constant 0 : i32
    return %arg0, %c0_i32 : i32, i32
  }
  func.func @transform_1(%arg0: i32) -> (i32, i32) {
    %c0_i32 = arith.constant 0 : i32
    %c0_i32_0 = arith.constant 0 : i32
    %c0_i32_1 = arith.constant 0 : i32
    return %c0_i32, %c0_i32_0 : i32, i32
  }
  func.func @transform_2(%arg0: i32) -> (i32, i32) {
    %c0_i32 = arith.constant 0 : i32
    %c0_i32_0 = arith.constant 0 : i32
    return %arg0, %c0_i32 : i32, i32
  }
}

module attributes {stable_mosaic.version = 11 : i64} {
  func.func @_matmul_kernel(%arg0: i32, %arg1: memref<128x32xbf16, #tpu.memory_space<vmem>>, %arg2: memref<32x256xbf16, #tpu.memory_space<vmem>>, %arg3: memref<128x256xf32, #tpu.memory_space<vmem>>) attributes {dimension_semantics = [#tpu.dimension_semantics<parallel>], iteration_bounds = array<i64: 1>, scalar_prefetch = 0 : i64, scratch_operands = 0 : i64, tpu.core_type = #tpu.core_type<tc>, window_params = [{transform_indices = @transform_0, window_bounds = array<i64: 128, 32>}, {pipeline_mode = #tpu.pipeline_mode<synchronous>, transform_indices = @transform_1, window_bounds = array<i64: 32, 256>}, {transform_indices = @transform_2, window_bounds = array<i64: 128, 256>}]} {
    %c0 = arith.constant 0 : index
    %c0_0 = arith.constant 0 : index
    %0 = vector.load %arg1[%c0, %c0_0] : memref<128x32xbf16, #tpu.memory_space<vmem>>, vector<128x32xbf16>
    %c0_1 = arith.constant 0 : index
    %c0_2 = arith.constant 0 : index
    %1 = vector.load %arg2[%c0_1, %c0_2] : memref<32x256xbf16, #tpu.memory_space<vmem>>, vector<32x256xbf16>
    %cst = arith.constant dense<0.000000e+00> : vector<128x256xf32>
    %2 = tpu.matmul %0, %1, %cst {dimension_numbers = #tpu.dot_dimension_numbers<[1], [0], [0], [1], [0, 0, 1, 1], [], []>} : vector<128x32xbf16>, vector<32x256xbf16>, vector<128x256xf32> -> vector<128x256xf32>
    %c0_3 = arith.constant 0 : index
    %c0_4 = arith.constant 0 : index
    %3 = vector.load %arg3[%c0_3, %c0_4] : memref<128x256xf32, #tpu.memory_space<vmem>>, vector<128x256xf32>
    tpu.vector_store %arg3[%c0_3, %c0_4], %2 {strides = array<i32>} : memref<128x256xf32, #tpu.memory_space<vmem>>, vector<128x256xf32>,
    return
  }
  func.func @transform_0(%arg0: i32) -> (i32, i32) {
    %c0_i32 = arith.constant 0 : i32
    %c0_i32_0 = arith.constant 0 : i32
    return %arg0, %c0_i32 : i32, i32
  }
  func.func @transform_1(%arg0: i32) -> (i32, i32) {
    %c0_i32 = arith.constant 0 : i32
    %c0_i32_0 = arith.constant 0 : i32
    %c0_i32_1 = arith.constant 0 : i32
    return %c0_i32, %c0_i32_0 : i32, i32
  }
  func.func @transform_2(%arg0: i32) -> (i32, i32) {
    %c0_i32 = arith.constant 0 : i32
    %c0_i32_0 = arith.constant 0 : i32
    return %arg0, %c0_i32 : i32, i32
  }
}

module attributes {stable_mosaic.version = 11 : i64} {
  func.func @_matmul_kernel(%arg0: i32, %arg1: memref<512x16xbf16, #tpu.memory_space<vmem>>, %arg2: memref<16x128xbf16, #tpu.memory_space<vmem>>, %arg3: memref<512x128xf32, #tpu.memory_space<vmem>>) attributes {dimension_semantics = [#tpu.dimension_semantics<parallel>], iteration_bounds = array<i64: 1>, scalar_prefetch = 0 : i64, scratch_operands = 0 : i64, tpu.core_type = #tpu.core_type<tc>, window_params = [{transform_indices = @transform_0, window_bounds = array<i64: 512, 16>}, {pipeline_mode = #tpu.pipeline_mode<synchronous>, transform_indices = @transform_1, window_bounds = array<i64: 16, 128>}, {transform_indices = @transform_2, window_bounds = array<i64: 512, 128>}]} {
    %c0 = arith.constant 0 : index
    %c0_0 = arith.constant 0 : index
    %0 = vector.load %arg1[%c0, %c0_0] : memref<512x16xbf16, #tpu.memory_space<vmem>>, vector<512x16xbf16>
    %c0_1 = arith.constant 0 : index
    %c0_2 = arith.constant 0 : index
    %1 = vector.load %arg2[%c0_1, %c0_2] : memref<16x128xbf16, #tpu.memory_space<vmem>>, vector<16x128xbf16>
    %cst = arith.constant dense<0.000000e+00> : vector<512x128xf32>
    %2 = tpu.matmul %0, %1, %cst {dimension_numbers = #tpu.dot_dimension_numbers<[1], [0], [0], [1], [0, 0, 1, 1], [], []>} : vector<512x16xbf16>, vector<16x128xbf16>, vector<512x128xf32> -> vector<512x128xf32>
    %c0_3 = arith.constant 0 : index
    %c0_4 = arith.constant 0 : index
    %3 = vector.load %arg3[%c0_3, %c0_4] : memref<512x128xf32, #tpu.memory_space<vmem>>, vector<512x128xf32>
    tpu.vector_store %arg3[%c0_3, %c0_4], %2 {strides = array<i32>} : memref<512x128xf32, #tpu.memory_space<vmem>>, vector<512x128xf32>,
    return
  }
  func.func @transform_0(%arg0: i32) -> (i32, i32) {
    %c0_i32 = arith.constant 0 : i32
    %c0_i32_0 = arith.constant 0 : i32
    return %arg0, %c0_i32 : i32, i32
  }
  func.func @transform_1(%arg0: i32) -> (i32, i32) {
    %c0_i32 = arith.constant 0 : i32
    %c0_i32_0 = arith.constant 0 : i32
    %c0_i32_1 = arith.constant 0 : i32
    return %c0_i32, %c0_i32_0 : i32, i32
  }
  func.func @transform_2(%arg0: i32) -> (i32, i32) {
    %c0_i32 = arith.constant 0 : i32
    %c0_i32_0 = arith.constant 0 : i32
    return %arg0, %c0_i32 : i32, i32
  }
}

module attributes {stable_mosaic.version = 11 : i64} {
  func.func @_matmul_kernel(%arg0: i32, %arg1: memref<2048x8xbf16, #tpu.memory_space<vmem>>, %arg2: memref<8x64xbf16, #tpu.memory_space<vmem>>, %arg3: memref<2048x64xf32, #tpu.memory_space<vmem>>) attributes {dimension_semantics = [#tpu.dimension_semantics<parallel>], iteration_bounds = array<i64: 1>, scalar_prefetch = 0 : i64, scratch_operands = 0 : i64, tpu.core_type = #tpu.core_type<tc>, window_params = [{transform_indices = @transform_0, window_bounds = array<i64: 2048, 8>}, {pipeline_mode = #tpu.pipeline_mode<synchronous>, transform_indices = @transform_1, window_bounds = array<i64: 8, 64>}, {transform_indices = @transform_2, window_bounds = array<i64: 2048, 64>}]} {
    %c0 = arith.constant 0 : index
    %c0_0 = arith.constant 0 : index
    %0 = vector.load %arg1[%c0, %c0_0] : memref<2048x8xbf16, #tpu.memory_space<vmem>>, vector<2048x8xbf16>
    %c0_1 = arith.constant 0 : index
    %c0_2 = arith.constant 0 : index
    %1 = vector.load %arg2[%c0_1, %c0_2] : memref<8x64xbf16, #tpu.memory_space<vmem>>, vector<8x64xbf16>
    %cst = arith.constant dense<0.000000e+00> : vector<2048x64xf32>
    %2 = tpu.matmul %0, %1, %cst {dimension_numbers = #tpu.dot_dimension_numbers<[1], [0], [0], [1], [0, 0, 1, 1], [], []>} : vector<2048x8xbf16>, vector<8x64xbf16>, vector<2048x64xf32> -> vector<2048x64xf32>
    %c0_3 = arith.constant 0 : index
    %c0_4 = arith.constant 0 : index
    %3 = vector.load %arg3[%c0_3, %c0_4] : memref<2048x64xf32, #tpu.memory_space<vmem>>, vector<2048x64xf32>
    tpu.vector_store %arg3[%c0_3, %c0_4], %2 {strides = array<i32>} : memref<2048x64xf32, #tpu.memory_space<vmem>>, vector<2048x64xf32>,
    return
  }
  func.func @transform_0(%arg0: i32) -> (i32, i32) {
    %c0_i32 = arith.constant 0 : i32
    %c0_i32_0 = arith.constant 0 : i32
    return %arg0, %c0_i32 : i32, i32
  }
  func.func @transform_1(%arg0: i32) -> (i32, i32) {
    %c0_i32 = arith.constant 0 : i32
    %c0_i32_0 = arith.constant 0 : i32
    %c0_i32_1 = arith.constant 0 : i32
    return %c0_i32, %c0_i32_0 : i32, i32
  }
  func.func @transform_2(%arg0: i32) -> (i32, i32) {
    %c0_i32 = arith.constant 0 : i32
    %c0_i32_0 = arith.constant 0 : i32
    return %arg0, %c0_i32 : i32, i32
  }
}

module attributes {stable_mosaic.version = 11 : i64} {
  func.func @_matmul_kernel(%arg0: i32, %arg1: memref<4096x4xbf16, #tpu.memory_space<vmem>>, %arg2: memref<4x48xbf16, #tpu.memory_space<vmem>>, %arg3: memref<4096x48xf32, #tpu.memory_space<vmem>>) attributes {dimension_semantics = [#tpu.dimension_semantics<parallel>], iteration_bounds = array<i64: 2>, scalar_prefetch = 0 : i64, scratch_operands = 0 : i64, tpu.core_type = #tpu.core_type<tc>, window_params = [{transform_indices = @transform_0, window_bounds = array<i64: 4096, 4>}, {pipeline_mode = #tpu.pipeline_mode<synchronous>, transform_indices = @transform_1, window_bounds = array<i64: 4, 48>}, {transform_indices = @transform_2, window_bounds = array<i64: 4096, 48>}]} {
    %c0 = arith.constant 0 : index
    %c0_0 = arith.constant 0 : index
    %0 = vector.load %arg1[%c0, %c0_0] : memref<4096x4xbf16, #tpu.memory_space<vmem>>, vector<4096x4xbf16>
    %c0_1 = arith.constant 0 : index
    %c0_2 = arith.constant 0 : index
    %1 = vector.load %arg2[%c0_1, %c0_2] : memref<4x48xbf16, #tpu.memory_space<vmem>>, vector<4x48xbf16>
    %cst = arith.constant dense<0.000000e+00> : vector<4096x48xf32>
    %2 = tpu.matmul %0, %1, %cst {dimension_numbers = #tpu.dot_dimension_numbers<[1], [0], [0], [1], [0, 0, 1, 1], [], []>} : vector<4096x4xbf16>, vector<4x48xbf16>, vector<4096x48xf32> -> vector<4096x48xf32>
    %c0_3 = arith.constant 0 : index
    %c0_4 = arith.constant 0 : index
    %3 = vector.load %arg3[%c0_3, %c0_4] : memref<4096x48xf32, #tpu.memory_space<vmem>>, vector<4096x48xf32>
    tpu.vector_store %arg3[%c0_3, %c0_4], %2 {strides = array<i32>} : memref<4096x48xf32, #tpu.memory_space<vmem>>, vector<4096x48xf32>,
    return
  }
  func.func @transform_0(%arg0: i32) -> (i32, i32) {
    %c0_i32 = arith.constant 0 : i32
    %c0_i32_0 = arith.constant 0 : i32
    return %arg0, %c0_i32 : i32, i32
  }
  func.func @transform_1(%arg0: i32) -> (i32, i32) {
    %c0_i32 = arith.constant 0 : i32
    %c0_i32_0 = arith.constant 0 : i32
    %c0_i32_1 = arith.constant 0 : i32
    return %c0_i32, %c0_i32_0 : i32, i32
  }
  func.func @transform_2(%arg0: i32) -> (i32, i32) {
    %c0_i32 = arith.constant 0 : i32
    %c0_i32_0 = arith.constant 0 : i32
    return %arg0, %c0_i32 : i32, i32
  }
}

</mosaic_0001>

<llo_original>
// kernel: netG_forward.5
$region0: #{netG_forward.5}
  #allocation0 [shape = 'u32[]', space=smem, size = 0x4, offset = 0x4, fixed_abs, tag = 'smem constant byte address 0x4 - core index']
  #allocation1 [shape = 'u32[144,128]{1,0:T(1,128)}', space=vmem, size = 0x12000, scoped, tag = 'internal scratch']
  %s0 = inlined_call_operand.vmem [shape: bf16[32,64], index: 0, kind: input, shape index: {}]
  %s1 = inlined_call_operand.hbm [shape: bf16[64,512], index: 1, kind: input, shape index: {}]
  %s2 = inlined_call_operand.vmem [shape: f32[32,512], index: 2, kind: output, shape index: {}]
  %s3 = sld [smem:[#allocation0]]
  $region22: #{netG_forward.5} parent=0
    _
  %s5 = ssub.s32 1, %s3
  %s6 = scalar_select 0, %s5, %s3
  $region1: #{netG_forward.5} parent=0
    #allocation2 [shape = 'u8[65536]{0}', space=vmem, size = 0x10000, scoped, tag = 'input window, operand 1, single buffered']
    #allocation3 [shape = 's32[1]{0}', space=sflag, size = 0x4, scoped, tag = 'scoped memory for netG_forward.5']
    %7 = vsyncpa [#allocation3], 0
    // Predicated region
    $region2: #{netG_forward.5} parent=1 // pred_check
      _
    $region3: #{netG_forward.5} parent=1 // pred_check_branch
      %9 = sbr.rel (0) target = $region5
    $region4: #{netG_forward.5} parent=1 // pred_region
      _
    $region5: #{netG_forward.5} parent=1 // pred_fallthru
      _
    // Predicated region
    $region6: #{netG_forward.5} parent=1 // pred_check
      _
    $region7: #{netG_forward.5} parent=1 // pred_check_branch
      %11 = sbr.rel (0) target = $region9
    $region8: #{netG_forward.5} parent=1 // pred_region
      %s13 = ssub.s32 2048, 2048
      %14 = vsyncadd [#allocation3], %s13
      %s15 = sshll.u32 [#allocation2], 4
      %s16 = int_to_ptr.vmem [resolvable:$true] %s15
      %21 = dma.hbm_to_vmem [thread:$0]  %s1, 2048, %s16, [#allocation3], 256, 256, 16
    $region9: #{netG_forward.5} parent=1 // pred_fallthru
      _
    // Predicated region
    $region10: #{netG_forward.5} parent=1 // pred_check
      _
    $region11: #{netG_forward.5} parent=1 // pred_check_branch
      %23 = sbr.rel (0) target = $region13
    $region12: #{netG_forward.5} parent=1 // pred_region
      %24 = dma.done [#allocation3], 2048
    $region13: #{netG_forward.5} parent=1 // pred_fallthru
      _
    %v26 = vld [vmem:[%s0] sm:$0xf]
    %v27 = vld [vmem:[%s0 + $0x4] sm:$0xf]
    %v28 = vld [vmem:[%s0 + $0x8] sm:$0xf]
    %v29 = vld [vmem:[%s0 + $0xc] sm:$0xf]
    %v30 = vld [vmem:[#allocation2] sm:$0xff]
    %v31 = vld [vmem:[#allocation2 + $0x8] sm:$0xff]
    %v32 = vld [vmem:[#allocation2 + $0x10] sm:$0xff]
    %v33 = vld [vmem:[#allocation2 + $0x18] sm:$0xff]
    %v34 = vld [vmem:[#allocation2 + $0x20] sm:$0xff]
    %v35 = vld [vmem:[#allocation2 + $0x28] sm:$0xff]
    %v36 = vld [vmem:[#allocation2 + $0x30] sm:$0xff]
    %v37 = vld [vmem:[#allocation2 + $0x38] sm:$0xff]
    %v38 = vld [vmem:[#allocation2 + $0x40] sm:$0xff]
    %v39 = vld [vmem:[#allocation2 + $0x48] sm:$0xff]
    %v40 = vld [vmem:[#allocation2 + $0x50] sm:$0xff]
    %v41 = vld [vmem:[#allocation2 + $0x58] sm:$0xff]
    %v42 = vld [vmem:[#allocation2 + $0x60] sm:$0xff]
    %v43 = vld [vmem:[#allocation2 + $0x68] sm:$0xff]
    %v44 = vld [vmem:[#allocation2 + $0x70] sm:$0xff]
    %v45 = vld [vmem:[#allocation2 + $0x78] sm:$0xff]
    %v50 = vunpack.c.l.b16 %v26
    %v51 = vunpack.c.l.b16 %v27
    %v52 = vunpack.c.l.b16 %v28
    %v53 = vunpack.c.l.b16 %v29
    %v54 = vpack.c.b16 %v51, %v50
    %v55 = vpack.c.b16 %v53, %v52
    %v72 = vunpack.c.l.b16 %v30
    %v73 = vunpack.c.h.b16 %v30
    %v74 = vunpack.c.l.b16 %v31
    %v75 = vunpack.c.h.b16 %v31
    %v76 = vunpack.c.l.b16 %v32
    %v77 = vunpack.c.h.b16 %v32
    %v78 = vunpack.c.l.b16 %v33
    %v79 = vunpack.c.h.b16 %v33
    %v80 = vunpack.c.l.b16 %v34
    %v81 = vunpack.c.h.b16 %v34
    %v82 = vunpack.c.l.b16 %v35
    %v83 = vunpack.c.h.b16 %v35
    %v84 = vunpack.c.l.b16 %v36
    %v85 = vunpack.c.h.b16 %v36
    %v86 = vunpack.c.l.b16 %v37
    %v87 = vunpack.c.h.b16 %v37
    %v88 = vunpack.c.l.b16 %v38
    %v89 = vunpack.c.h.b16 %v38
    %v90 = vunpack.c.l.b16 %v39
    %v91 = vunpack.c.h.b16 %v39
    %v92 = vunpack.c.l.b16 %v40
    %v93 = vunpack.c.h.b16 %v40
    %v94 = vunpack.c.l.b16 %v41
    %v95 = vunpack.c.h.b16 %v41
    %v96 = vunpack.c.l.b16 %v42
    %v97 = vunpack.c.h.b16 %v42
    %v98 = vunpack.c.l.b16 %v43
    %v99 = vunpack.c.h.b16 %v43
    %v100 = vunpack.c.l.b16 %v44
    %v101 = vunpack.c.h.b16 %v44
    %v102 = vunpack.c.l.b16 %v45
    %v103 = vunpack.c.h.b16 %v45
    %v104 = vpack.c.b16 %v76, %v72
    %v105 = vpack.c.b16 %v77, %v73
    %v106 = vpack.c.b16 %v78, %v74
    %v107 = vpack.c.b16 %v79, %v75
    %v108 = vpack.c.b16 %v84, %v80
    %v109 = vpack.c.b16 %v85, %v81
    %v110 = vpack.c.b16 %v86, %v82
    %v111 = vpack.c.b16 %v87, %v83
    %v112 = vpack.c.b16 %v92, %v88
    %v113 = vpack.c.b16 %v93, %v89
    %v114 = vpack.c.b16 %v94, %v90
    %v115 = vpack.c.b16 %v95, %v91
    %v116 = vpack.c.b16 %v100, %v96
    %v117 = vpack.c.b16 %v101, %v97
    %v118 = vpack.c.b16 %v102, %v98
    %v119 = vpack.c.b16 %v103, %v99
    %vm136 = vcmask 523264
    %v138 = vsel %vm136, %v54, 0
    %v141 = vsel %vm136, %v55, 0
    %143 = vmatprep.subr.bf16.mxu0 %v105
    %144 = vmatpush1.bf16.msra.mxu0 %v104
    %145 = vmatprep.subr.bf16.mxu0 %v109
    %146 = vmatpush1.bf16.msra.mxu0 %v108
    %147 = vmatprep.subr.bf16.mxu0 %v113
    %148 = vmatpush1.bf16.msra.mxu0 %v112
    %149 = vmatprep.subr.bf16.mxu0 %v117
    %150 = vmatpush1.bf16.msra.mxu0 %v116
    %151 = vmatprep.subr.bf16.mxu0 0
    %152 = vmatpush1.bf16.msra.mxu0 0
    %153 = vmatprep.subr.bf16.mxu0 0
    %154 = vmatpush1.bf16.msra.mxu0 0
    %155 = vmatprep.subr.bf16.mxu0 0
    %156 = vmatpush1.bf16.msra.mxu0 0
    %157 = vmatprep.subr.bf16.mxu0 0
    %158 = vmatpush1.bf16.msra.mxu0 0
    %159 = vmatprep.subr.bf16.mxu0 0
    %160 = vmatpush1.bf16.msra.mxu0 0
    %161 = vmatprep.subr.bf16.mxu0 0
    %162 = vmatpush1.bf16.msra.mxu0 0
    %163 = vmatprep.subr.bf16.mxu0 0
    %164 = vmatpush1.bf16.msra.mxu0 0
    %165 = vmatprep.subr.bf16.mxu0 0
    %166 = vmatpush1.bf16.msra.mxu0 0
    %167 = vmatprep.subr.bf16.mxu0 0
    %168 = vmatpush1.bf16.msra.mxu0 0
    %169 = vmatprep.subr.bf16.mxu0 0
    %170 = vmatpush1.bf16.msra.mxu0 0
    %171 = vmatprep.subr.bf16.mxu0 0
    %172 = vmatpush1.bf16.msra.mxu0 0
    %173 = vmatprep.subr.bf16.mxu0 0
    %174 = vmatpush1.bf16.msra.mxu0 0
    %175 = vmatprep.mubr.bf16.mxu0 0
    %176 = vmatmul.mubr.bf16.gmra.mrb[0].mxu0 %v138
    %v177 = vpop.f32.mrb[0].mxu0
    %v178 = vadd.f32 0.0, %v177
    %v179 = vpop.f32.mrb[0].mxu0
    %v180 = vadd.f32 0.0, %v179
    %v181 = vpop.f32.mrb[0].mxu0
    %v182 = vadd.f32 0.0, %v181
    %v183 = vpop.f32.mrb[0].mxu0
    %v184 = vadd.f32 0.0, %v183
    %185 = vmatprep.mubr.bf16.mxu0 0
    %186 = vmatmul.mubr.bf16.gmra.mrb[0].mxu0 %v141
    %v187 = vpop.f32.mrb[0].mxu0
    %v188 = vadd.f32 0.0, %v187
    %v189 = vpop.f32.mrb[0].mxu0
    %v190 = vadd.f32 0.0, %v189
    %v191 = vpop.f32.mrb[0].mxu0
    %v192 = vadd.f32 0.0, %v191
    %v193 = vpop.f32.mrb[0].mxu0
    %v194 = vadd.f32 0.0, %v193
    %195 = vdwg.mxu0
    %196 = vmatprep.subr.bf16.mxu0 %v107
    %197 = vmatpush1.bf16.msra.mxu0 %v106
    %198 = vmatprep.subr.bf16.mxu0 %v111
    %199 = vmatpush1.bf16.msra.mxu0 %v110
    %200 = vmatprep.subr.bf16.mxu0 %v115
    %201 = vmatpush1.bf16.msra.mxu0 %v114
    %202 = vmatprep.subr.bf16.mxu0 %v119
    %203 = vmatpush1.bf16.msra.mxu0 %v118
    %204 = vmatprep.subr.bf16.mxu0 0
    %205 = vmatpush1.bf16.msra.mxu0 0
    %206 = vmatprep.subr.bf16.mxu0 0
    %207 = vmatpush1.bf16.msra.mxu0 0
    %208 = vmatprep.subr.bf16.mxu0 0
    %209 = vmatpush1.bf16.msra.mxu0 0
    %210 = vmatprep.subr.bf16.mxu0 0
    %211 = vmatpush1.bf16.msra.mxu0 0
    %212 = vmatprep.subr.bf16.mxu0 0
    %213 = vmatpush1.bf16.msra.mxu0 0
    %214 = vmatprep.subr.bf16.mxu0 0
    %215 = vmatpush1.bf16.msra.mxu0 0
    %216 = vmatprep.subr.bf16.mxu0 0
    %217 = vmatpush1.bf16.msra.mxu0 0
    %218 = vmatprep.subr.bf16.mxu0 0
    %219 = vmatpush1.bf16.msra.mxu0 0
    %220 = vmatprep.subr.bf16.mxu0 0
    %221 = vmatpush1.bf16.msra.mxu0 0
    %222 = vmatprep.subr.bf16.mxu0 0
    %223 = vmatpush1.bf16.msra.mxu0 0
    %224 = vmatprep.subr.bf16.mxu0 0
    %225 = vmatpush1.bf16.msra.mxu0 0
    %226 = vmatprep.subr.bf16.mxu0 0
    %227 = vmatpush1.bf16.msra.mxu0 0
    %228 = vmatprep.mubr.bf16.mxu0 0
    %229 = vmatmul.mubr.bf16.gmra.mrb[0].mxu0 %v138
    %v230 = vpop.f32.mrb[0].mxu0
    %v231 = vadd.f32 0.0, %v230
    %v232 = vpop.f32.mrb[0].mxu0
    %v233 = vadd.f32 0.0, %v232
    %v234 = vpop.f32.mrb[0].mxu0
    %v235 = vadd.f32 0.0, %v234
    %v236 = vpop.f32.mrb[0].mxu0
    %v237 = vadd.f32 0.0, %v236
    %238 = vmatprep.mubr.bf16.mxu0 0
    %239 = vmatmul.mubr.bf16.gmra.mrb[0].mxu0 %v141
    %v240 = vpop.f32.mrb[0].mxu0
    %v241 = vadd.f32 0.0, %v240
    %v242 = vpop.f32.mrb[0].mxu0
    %v243 = vadd.f32 0.0, %v242
    %v244 = vpop.f32.mrb[0].mxu0
    %v245 = vadd.f32 0.0, %v244
    %v246 = vpop.f32.mrb[0].mxu0
    %v247 = vadd.f32 0.0, %v246
    %248 = vdwg.mxu0
    %249 = vst [vmem:[%s2] sm:$0xff] %v178
    %250 = vst [vmem:[%s2 + $0x8] sm:$0xff] %v180
    %251 = vst [vmem:[%s2 + $0x10] sm:$0xff] %v231
    %252 = vst [vmem:[%s2 + $0x18] sm:$0xff] %v233
    %253 = vst [vmem:[%s2 + $0x20] sm:$0xff] %v182
    %254 = vst [vmem:[%s2 + $0x28] sm:$0xff] %v184
    %255 = vst [vmem:[%s2 + $0x30] sm:$0xff] %v235
    %256 = vst [vmem:[%s2 + $0x38] sm:$0xff] %v237
    %257 = vst [vmem:[%s2 + $0x40] sm:$0xff] %v188
    %258 = vst [vmem:[%s2 + $0x48] sm:$0xff] %v190
    %259 = vst [vmem:[%s2 + $0x50] sm:$0xff] %v241
    %260 = vst [vmem:[%s2 + $0x58] sm:$0xff] %v243
    %261 = vst [vmem:[%s2 + $0x60] sm:$0xff] %v192
    %262 = vst [vmem:[%s2 + $0x68] sm:$0xff] %v194
    %263 = vst [vmem:[%s2 + $0x70] sm:$0xff] %v245
    %264 = vst [vmem:[%s2 + $0x78] sm:$0xff] %v247
    // Predicated region
    $region14: #{netG_forward.5} parent=1 // pred_check
      _
    $region15: #{netG_forward.5} parent=1 // pred_check_branch
      %266 = sbr.rel (0) target = $region17
    $region16: #{netG_forward.5} parent=1 // pred_region
      _
    $region17: #{netG_forward.5} parent=1 // pred_fallthru
      _
    // Predicated region
    $region18: #{netG_forward.5} parent=1 // pred_check
      _
    $region19: #{netG_forward.5} parent=1 // pred_check_branch
      %268 = sbr.rel (0) target = $region21
    $region20: #{netG_forward.5} parent=1 // pred_region
      _
    $region21: #{netG_forward.5} parent=1 // pred_fallthru
      _
    %269 = vsyncpa [#allocation3], 1

// kernel: netG_forward.6
$region0: #{netG_forward.6}
  #allocation0 [shape = 'u32[]', space=smem, size = 0x4, offset = 0x4, fixed_abs, tag = 'smem constant byte address 0x4 - core index']
  #allocation1 [shape = 'u32[144,128]{1,0:T(1,128)}', space=vmem, size = 0x12000, scoped, tag = 'internal scratch']
  %s0 = inlined_call_operand.vmem [shape: bf16[128,32], index: 0, kind: input, shape index: {}]
  %s1 = inlined_call_operand.vmem [shape: bf16[32,256], index: 1, kind: input, shape index: {}]
  %s2 = inlined_call_operand.vmem [shape: f32[128,256], index: 2, kind: output, shape index: {}]
  %s3 = sld [smem:[#allocation0]]
  $region18: #{netG_forward.6} parent=0
    _
  %s5 = ssub.s32 1, %s3
  %s6 = scalar_select 0, %s5, %s3
  // Predicated region
  $region2: #{netG_forward.6} parent=0 // pred_check
    _
  $region3: #{netG_forward.6} parent=0 // pred_check_branch
    %8 = sbr.rel (0) target = $region5
  $region4: #{netG_forward.6} parent=0 // pred_region
    _
  $region5: #{netG_forward.6} parent=0 // pred_fallthru
    _
  // Predicated region
  $region6: #{netG_forward.6} parent=0 // pred_check
    _
  $region7: #{netG_forward.6} parent=0 // pred_check_branch
    %10 = sbr.rel (0) target = $region9
  $region8: #{netG_forward.6} parent=0 // pred_region
    _
  $region9: #{netG_forward.6} parent=0 // pred_fallthru
    _
  %v12 = vld [vmem:[%s0] sm:$0xf]
  %v13 = vld [vmem:[%s0 + $0x4] sm:$0xf]
  %v14 = vld [vmem:[%s0 + $0x8] sm:$0xf]
  %v15 = vld [vmem:[%s0 + $0xc] sm:$0xf]
  %v16 = vld [vmem:[%s0 + $0x10] sm:$0xf]
  %v17 = vld [vmem:[%s0 + $0x14] sm:$0xf]
  %v18 = vld [vmem:[%s0 + $0x18] sm:$0xf]
  %v19 = vld [vmem:[%s0 + $0x1c] sm:$0xf]
  %v20 = vld [vmem:[%s0 + $0x20] sm:$0xf]
  %v21 = vld [vmem:[%s0 + $0x24] sm:$0xf]
  %v22 = vld [vmem:[%s0 + $0x28] sm:$0xf]
  %v23 = vld [vmem:[%s0 + $0x2c] sm:$0xf]
  %v24 = vld [vmem:[%s0 + $0x30] sm:$0xf]
  %v25 = vld [vmem:[%s0 + $0x34] sm:$0xf]
  %v26 = vld [vmem:[%s0 + $0x38] sm:$0xf]
  %v27 = vld [vmem:[%s0 + $0x3c] sm:$0xf]
  %v28 = vld [vmem:[%s1] sm:$0xff]
  %v29 = vld [vmem:[%s1 + $0x8] sm:$0xff]
  %v30 = vld [vmem:[%s1 + $0x10] sm:$0xff]
  %v31 = vld [vmem:[%s1 + $0x18] sm:$0xff]
  %v48 = vunpack.c.l.b16 %v12
  %v49 = vunpack.c.l.b16 %v13
  %v50 = vunpack.c.l.b16 %v14
  %v51 = vunpack.c.l.b16 %v15
  %v52 = vunpack.c.l.b16 %v16
  %v53 = vunpack.c.l.b16 %v17
  %v54 = vunpack.c.l.b16 %v18
  %v55 = vunpack.c.l.b16 %v19
  %v56 = vunpack.c.l.b16 %v20
  %v57 = vunpack.c.l.b16 %v21
  %v58 = vunpack.c.l.b16 %v22
  %v59 = vunpack.c.l.b16 %v23
  %v60 = vunpack.c.l.b16 %v24
  %v61 = vunpack.c.l.b16 %v25
  %v62 = vunpack.c.l.b16 %v26
  %v63 = vunpack.c.l.b16 %v27
  %v64 = vpack.c.b16 %v49, %v48
  %v65 = vpack.c.b16 %v51, %v50
  %v66 = vpack.c.b16 %v53, %v52
  %v67 = vpack.c.b16 %v55, %v54
  %v68 = vpack.c.b16 %v57, %v56
  %v69 = vpack.c.b16 %v59, %v58
  %v70 = vpack.c.b16 %v61, %v60
  %v71 = vpack.c.b16 %v63, %v62
  %v76 = vunpack.c.l.b16 %v28
  %v77 = vunpack.c.h.b16 %v28
  %v78 = vunpack.c.l.b16 %v29
  %v79 = vunpack.c.h.b16 %v29
  %v80 = vunpack.c.l.b16 %v30
  %v81 = vunpack.c.h.b16 %v30
  %v82 = vunpack.c.l.b16 %v31
  %v83 = vunpack.c.h.b16 %v31
  %v84 = vpack.c.b16 %v78, %v76
  %v85 = vpack.c.b16 %v79, %v77
  %v86 = vpack.c.b16 %v82, %v80
  %v87 = vpack.c.b16 %v83, %v81
  %vm92 = vcmask 261120
  %v94 = vsel %vm92, %v64, 0
  %v97 = vsel %vm92, %v65, 0
  %v100 = vsel %vm92, %v66, 0
  %v103 = vsel %vm92, %v67, 0
  %v106 = vsel %vm92, %v68, 0
  %v109 = vsel %vm92, %v69, 0
  %v112 = vsel %vm92, %v70, 0
  %v115 = vsel %vm92, %v71, 0
  %117 = vmatprep.subr.bf16.mxu0 %v85
  %118 = vmatpush1.bf16.msra.mxu0 %v84
  %119 = vmatprep.subr.bf16.mxu0 %v87
  %120 = vmatpush1.bf16.msra.mxu0 %v86
  %121 = vmatprep.subr.bf16.mxu0 0
  %122 = vmatpush1.bf16.msra.mxu0 0
  %123 = vmatprep.subr.bf16.mxu0 0
  %124 = vmatpush1.bf16.msra.mxu0 0
  %125 = vmatprep.subr.bf16.mxu0 0
  %126 = vmatpush1.bf16.msra.mxu0 0
  %127 = vmatprep.subr.bf16.mxu0 0
  %128 = vmatpush1.bf16.msra.mxu0 0
  %129 = vmatprep.subr.bf16.mxu0 0
  %130 = vmatpush1.bf16.msra.mxu0 0
  %131 = vmatprep.subr.bf16.mxu0 0
  %132 = vmatpush1.bf16.msra.mxu0 0
  %133 = vmatprep.subr.bf16.mxu0 0
  %134 = vmatpush1.bf16.msra.mxu0 0
  %135 = vmatprep.subr.bf16.mxu0 0
  %136 = vmatpush1.bf16.msra.mxu0 0
  %137 = vmatprep.subr.bf16.mxu0 0
  %138 = vmatpush1.bf16.msra.mxu0 0
  %139 = vmatprep.subr.bf16.mxu0 0
  %140 = vmatpush1.bf16.msra.mxu0 0
  %141 = vmatprep.subr.bf16.mxu0 0
  %142 = vmatpush1.bf16.msra.mxu0 0
  %143 = vmatprep.subr.bf16.mxu0 0
  %144 = vmatpush1.bf16.msra.mxu0 0
  %145 = vmatprep.subr.bf16.mxu0 0
  %146 = vmatpush1.bf16.msra.mxu0 0
  %147 = vmatprep.subr.bf16.mxu0 0
  %148 = vmatpush1.bf16.msra.mxu0 0
  %149 = vmatprep.mubr.bf16.mxu0 0
  %150 = vmatmul.mubr.bf16.gmra.mrb[0].mxu0 %v94
  %v151 = vpop.f32.mrb[0].mxu0
  %v152 = vadd.f32 0.0, %v151
  %v153 = vpop.f32.mrb[0].mxu0
  %v154 = vadd.f32 0.0, %v153
  %v155 = vpop.f32.mrb[0].mxu0
  %v156 = vadd.f32 0.0, %v155
  %v157 = vpop.f32.mrb[0].mxu0
  %v158 = vadd.f32 0.0, %v157
  %159 = vmatprep.mubr.bf16.mxu0 0
  %160 = vmatmul.mubr.bf16.gmra.mrb[0].mxu0 %v97
  %v161 = vpop.f32.mrb[0].mxu0
  %v162 = vadd.f32 0.0, %v161
  %v163 = vpop.f32.mrb[0].mxu0
  %v164 = vadd.f32 0.0, %v163
  %v165 = vpop.f32.mrb[0].mxu0
  %v166 = vadd.f32 0.0, %v165
  %v167 = vpop.f32.mrb[0].mxu0
  %v168 = vadd.f32 0.0, %v167
  %169 = vmatprep.mubr.bf16.mxu0 0
  %170 = vmatmul.mubr.bf16.gmra.mrb[0].mxu0 %v100
  %v171 = vpop.f32.mrb[0].mxu0
  %v172 = vadd.f32 0.0, %v171
  %v173 = vpop.f32.mrb[0].mxu0
  %v174 = vadd.f32 0.0, %v173
  %v175 = vpop.f32.mrb[0].mxu0
  %v176 = vadd.f32 0.0, %v175
  %v177 = vpop.f32.mrb[0].mxu0
  %v178 = vadd.f32 0.0, %v177
  %179 = vmatprep.mubr.bf16.mxu0 0
  %180 = vmatmul.mubr.bf16.gmra.mrb[0].mxu0 %v103
  %v181 = vpop.f32.mrb[0].mxu0
  %v182 = vadd.f32 0.0, %v181
  %v183 = vpop.f32.mrb[0].mxu0
  %v184 = vadd.f32 0.0, %v183
  %v185 = vpop.f32.mrb[0].mxu0
  %v186 = vadd.f32 0.0, %v185
  %v187 = vpop.f32.mrb[0].mxu0
  %v188 = vadd.f32 0.0, %v187
  %189 = vmatprep.mubr.bf16.mxu0 0
  %190 = vmatmul.mubr.bf16.gmra.mrb[0].mxu0 %v106
  %v191 = vpop.f32.mrb[0].mxu0
  %v192 = vadd.f32 0.0, %v191
  %v193 = vpop.f32.mrb[0].mxu0
  %v194 = vadd.f32 0.0, %v193
  %v195 = vpop.f32.mrb[0].mxu0
  %v196 = vadd.f32 0.0, %v195
  %v197 = vpop.f32.mrb[0].mxu0
  %v198 = vadd.f32 0.0, %v197
  %199 = vmatprep.mubr.bf16.mxu0 0
  %200 = vmatmul.mubr.bf16.gmra.mrb[0].mxu0 %v109
  %v201 = vpop.f32.mrb[0].mxu0
  %v202 = vadd.f32 0.0, %v201
  %v203 = vpop.f32.mrb[0].mxu0
  %v204 = vadd.f32 0.0, %v203
  %v205 = vpop.f32.mrb[0].mxu0
  %v206 = vadd.f32 0.0, %v205
  %v207 = vpop.f32.mrb[0].mxu0
  %v208 = vadd.f32 0.0, %v207
  %209 = vmatprep.mubr.bf16.mxu0 0
  %210 = vmatmul.mubr.bf16.gmra.mrb[0].mxu0 %v112
  %v211 = vpop.f32.mrb[0].mxu0
  %v212 = vadd.f32 0.0, %v211
  %v213 = vpop.f32.mrb[0].mxu0
  %v214 = vadd.f32 0.0, %v213
  %v215 = vpop.f32.mrb[0].mxu0
  %v216 = vadd.f32 0.0, %v215
  %v217 = vpop.f32.mrb[0].mxu0
  %v218 = vadd.f32 0.0, %v217
  %219 = vmatprep.mubr.bf16.mxu0 0
  %220 = vmatmul.mubr.bf16.gmra.mrb[0].mxu0 %v115
  %v221 = vpop.f32.mrb[0].mxu0
  %v222 = vadd.f32 0.0, %v221
  %v223 = vpop.f32.mrb[0].mxu0
  %v224 = vadd.f32 0.0, %v223
  %v225 = vpop.f32.mrb[0].mxu0
  %v226 = vadd.f32 0.0, %v225
  %v227 = vpop.f32.mrb[0].mxu0
  %v228 = vadd.f32 0.0, %v227
  %229 = vdwg.mxu0
  %230 = vst [vmem:[%s2] sm:$0xff] %v152
  %231 = vst [vmem:[%s2 + $0x8] sm:$0xff] %v154
  %232 = vst [vmem:[%s2 + $0x10] sm:$0xff] %v156
  %233 = vst [vmem:[%s2 + $0x18] sm:$0xff] %v158
  %234 = vst [vmem:[%s2 + $0x20] sm:$0xff] %v162
  %235 = vst [vmem:[%s2 + $0x28] sm:$0xff] %v164
  %236 = vst [vmem:[%s2 + $0x30] sm:$0xff] %v166
  %237 = vst [vmem:[%s2 + $0x38] sm:$0xff] %v168
  %238 = vst [vmem:[%s2 + $0x40] sm:$0xff] %v172
  %239 = vst [vmem:[%s2 + $0x48] sm:$0xff] %v174
  %240 = vst [vmem:[%s2 + $0x50] sm:$0xff] %v176
  %241 = vst [vmem:[%s2 + $0x58] sm:$0xff] %v178
  %242 = vst [vmem:[%s2 + $0x60] sm:$0xff] %v182
  %243 = vst [vmem:[%s2 + $0x68] sm:$0xff] %v184
  %244 = vst [vmem:[%s2 + $0x70] sm:$0xff] %v186
  %245 = vst [vmem:[%s2 + $0x78] sm:$0xff] %v188
  %246 = vst [vmem:[%s2 + $0x80] sm:$0xff] %v192
  %247 = vst [vmem:[%s2 + $0x88] sm:$0xff] %v194
  %248 = vst [vmem:[%s2 + $0x90] sm:$0xff] %v196
  %249 = vst [vmem:[%s2 + $0x98] sm:$0xff] %v198
  %250 = vst [vmem:[%s2 + $0xa0] sm:$0xff] %v202
  %251 = vst [vmem:[%s2 + $0xa8] sm:$0xff] %v204
  %252 = vst [vmem:[%s2 + $0xb0] sm:$0xff] %v206
  %253 = vst [vmem:[%s2 + $0xb8] sm:$0xff] %v208
  %254 = vst [vmem:[%s2 + $0xc0] sm:$0xff] %v212
  %255 = vst [vmem:[%s2 + $0xc8] sm:$0xff] %v214
  %256 = vst [vmem:[%s2 + $0xd0] sm:$0xff] %v216
  %257 = vst [vmem:[%s2 + $0xd8] sm:$0xff] %v218
  %258 = vst [vmem:[%s2 + $0xe0] sm:$0xff] %v222
  %259 = vst [vmem:[%s2 + $0xe8] sm:$0xff] %v224
  %260 = vst [vmem:[%s2 + $0xf0] sm:$0xff] %v226
  %261 = vst [vmem:[%s2 + $0xf8] sm:$0xff] %v228
  // Predicated region
  $region10: #{netG_forward.6} parent=0 // pred_check
    _
  $region11: #{netG_forward.6} parent=0 // pred_check_branch
    %263 = sbr.rel (0) target = $region13
  $region12: #{netG_forward.6} parent=0 // pred_region
    _
  $region13: #{netG_forward.6} parent=0 // pred_fallthru
    _
  // Predicated region
  $region14: #{netG_forward.6} parent=0 // pred_check
    _
  $region15: #{netG_forward.6} parent=0 // pred_check_branch
    %265 = sbr.rel (0) target = $region17
  $region16: #{netG_forward.6} parent=0 // pred_region
    _
  $region17: #{netG_forward.6} parent=0 // pred_fallthru
    _

// kernel: netG_forward.7
$region0: #{netG_forward.7}
  #allocation0 [shape = 'u32[]', space=smem, size = 0x4, offset = 0x4, fixed_abs, tag = 'smem constant byte address 0x4 - core index']
  #allocation1 [shape = 'u32[144,128]{1,0:T(1,128)}', space=vmem, size = 0x12000, scoped, tag = 'internal scratch']
  %s0 = inlined_call_operand.vmem [shape: bf16[512,16], index: 0, kind: input, shape index: {}]
  %s1 = inlined_call_operand.vmem [shape: bf16[16,128], index: 1, kind: input, shape index: {}]
  %s2 = inlined_call_operand.vmem [shape: f32[512,128], index: 2, kind: output, shape index: {}]
  %s3 = sld [smem:[#allocation0]]
  $region18: #{netG_forward.7} parent=0
    _
  %s5 = ssub.s32 1, %s3
  %s6 = scalar_select 0, %s5, %s3
  // Predicated region
  $region2: #{netG_forward.7} parent=0 // pred_check
    _
  $region3: #{netG_forward.7} parent=0 // pred_check_branch
    %8 = sbr.rel (0) target = $region5
  $region4: #{netG_forward.7} parent=0 // pred_region
    _
  $region5: #{netG_forward.7} parent=0 // pred_fallthru
    _
  // Predicated region
  $region6: #{netG_forward.7} parent=0 // pred_check
    _
  $region7: #{netG_forward.7} parent=0 // pred_check_branch
    %10 = sbr.rel (0) target = $region9
  $region8: #{netG_forward.7} parent=0 // pred_region
    _
  $region9: #{netG_forward.7} parent=0 // pred_fallthru
    _
  %v12 = vld [vmem:[%s0] sm:$0xf]
  %v13 = vld [vmem:[%s0 + $0x4] sm:$0xf]
  %v14 = vld [vmem:[%s0 + $0x8] sm:$0xf]
  %v15 = vld [vmem:[%s0 + $0xc] sm:$0xf]
  %v16 = vld [vmem:[%s0 + $0x10] sm:$0xf]
  %v17 = vld [vmem:[%s0 + $0x14] sm:$0xf]
  %v18 = vld [vmem:[%s0 + $0x18] sm:$0xf]
  %v19 = vld [vmem:[%s0 + $0x1c] sm:$0xf]
  %v20 = vld [vmem:[%s0 + $0x20] sm:$0xf]
  %v21 = vld [vmem:[%s0 + $0x24] sm:$0xf]
  %v22 = vld [vmem:[%s0 + $0x28] sm:$0xf]
  %v23 = vld [vmem:[%s0 + $0x2c] sm:$0xf]
  %v24 = vld [vmem:[%s0 + $0x30] sm:$0xf]
  %v25 = vld [vmem:[%s0 + $0x34] sm:$0xf]
  %v26 = vld [vmem:[%s0 + $0x38] sm:$0xf]
  %v27 = vld [vmem:[%s0 + $0x3c] sm:$0xf]
  %v28 = vld [vmem:[%s0 + $0x40] sm:$0xf]
  %v29 = vld [vmem:[%s0 + $0x44] sm:$0xf]
  %v30 = vld [vmem:[%s0 + $0x48] sm:$0xf]
  %v31 = vld [vmem:[%s0 + $0x4c] sm:$0xf]
  %v32 = vld [vmem:[%s0 + $0x50] sm:$0xf]
  %v33 = vld [vmem:[%s0 + $0x54] sm:$0xf]
  %v34 = vld [vmem:[%s0 + $0x58] sm:$0xf]
  %v35 = vld [vmem:[%s0 + $0x5c] sm:$0xf]
  %v36 = vld [vmem:[%s0 + $0x60] sm:$0xf]
  %v37 = vld [vmem:[%s0 + $0x64] sm:$0xf]
  %v38 = vld [vmem:[%s0 + $0x68] sm:$0xf]
  %v39 = vld [vmem:[%s0 + $0x6c] sm:$0xf]
  %v40 = vld [vmem:[%s0 + $0x70] sm:$0xf]
  %v41 = vld [vmem:[%s0 + $0x74] sm:$0xf]
  %v42 = vld [vmem:[%s0 + $0x78] sm:$0xf]
  %v43 = vld [vmem:[%s0 + $0x7c] sm:$0xf]
  %v44 = vld [vmem:[%s0 + $0x80] sm:$0xf]
  %v45 = vld [vmem:[%s0 + $0x84] sm:$0xf]
  %v46 = vld [vmem:[%s0 + $0x88] sm:$0xf]
  %v47 = vld [vmem:[%s0 + $0x8c] sm:$0xf]
  %v48 = vld [vmem:[%s0 + $0x90] sm:$0xf]
  %v49 = vld [vmem:[%s0 + $0x94] sm:$0xf]
  %v50 = vld [vmem:[%s0 + $0x98] sm:$0xf]
  %v51 = vld [vmem:[%s0 + $0x9c] sm:$0xf]
  %v52 = vld [vmem:[%s0 + $0xa0] sm:$0xf]
  %v53 = vld [vmem:[%s0 + $0xa4] sm:$0xf]
  %v54 = vld [vmem:[%s0 + $0xa8] sm:$0xf]
  %v55 = vld [vmem:[%s0 + $0xac] sm:$0xf]
  %v56 = vld [vmem:[%s0 + $0xb0] sm:$0xf]
  %v57 = vld [vmem:[%s0 + $0xb4] sm:$0xf]
  %v58 = vld [vmem:[%s0 + $0xb8] sm:$0xf]
  %v59 = vld [vmem:[%s0 + $0xbc] sm:$0xf]
  %v60 = vld [vmem:[%s0 + $0xc0] sm:$0xf]
  %v61 = vld [vmem:[%s0 + $0xc4] sm:$0xf]
  %v62 = vld [vmem:[%s0 + $0xc8] sm:$0xf]
  %v63 = vld [vmem:[%s0 + $0xcc] sm:$0xf]
  %v64 = vld [vmem:[%s0 + $0xd0] sm:$0xf]
  %v65 = vld [vmem:[%s0 + $0xd4] sm:$0xf]
  %v66 = vld [vmem:[%s0 + $0xd8] sm:$0xf]
  %v67 = vld [vmem:[%s0 + $0xdc] sm:$0xf]
  %v68 = vld [vmem:[%s0 + $0xe0] sm:$0xf]
  %v69 = vld [vmem:[%s0 + $0xe4] sm:$0xf]
  %v70 = vld [vmem:[%s0 + $0xe8] sm:$0xf]
  %v71 = vld [vmem:[%s0 + $0xec] sm:$0xf]
  %v72 = vld [vmem:[%s0 + $0xf0] sm:$0xf]
  %v73 = vld [vmem:[%s0 + $0xf4] sm:$0xf]
  %v74 = vld [vmem:[%s0 + $0xf8] sm:$0xf]
  %v75 = vld [vmem:[%s0 + $0xfc] sm:$0xf]
  %v76 = vld [vmem:[%s1] sm:$0xf]
  %v77 = vld [vmem:[%s1 + $0x4] sm:$0xf]
  %v142 = vunpack.c.l.b16 %v12
  %v143 = vunpack.c.l.b16 %v13
  %v144 = vunpack.c.l.b16 %v14
  %v145 = vunpack.c.l.b16 %v15
  %v146 = vunpack.c.l.b16 %v16
  %v147 = vunpack.c.l.b16 %v17
  %v148 = vunpack.c.l.b16 %v18
  %v149 = vunpack.c.l.b16 %v19
  %v150 = vunpack.c.l.b16 %v20
  %v151 = vunpack.c.l.b16 %v21
  %v152 = vunpack.c.l.b16 %v22
  %v153 = vunpack.c.l.b16 %v23
  %v154 = vunpack.c.l.b16 %v24
  %v155 = vunpack.c.l.b16 %v25
  %v156 = vunpack.c.l.b16 %v26
  %v157 = vunpack.c.l.b16 %v27
  %v158 = vunpack.c.l.b16 %v28
  %v159 = vunpack.c.l.b16 %v29
  %v160 = vunpack.c.l.b16 %v30
  %v161 = vunpack.c.l.b16 %v31
  %v162 = vunpack.c.l.b16 %v32
  %v163 = vunpack.c.l.b16 %v33
  %v164 = vunpack.c.l.b16 %v34
  %v165 = vunpack.c.l.b16 %v35
  %v166 = vunpack.c.l.b16 %v36
  %v167 = vunpack.c.l.b16 %v37
  %v168 = vunpack.c.l.b16 %v38
  %v169 = vunpack.c.l.b16 %v39
  %v170 = vunpack.c.l.b16 %v40
  %v171 = vunpack.c.l.b16 %v41
  %v172 = vunpack.c.l.b16 %v42
  %v173 = vunpack.c.l.b16 %v43
  %v174 = vunpack.c.l.b16 %v44
  %v175 = vunpack.c.l.b16 %v45
  %v176 = vunpack.c.l.b16 %v46
  %v177 = vunpack.c.l.b16 %v47
  %v178 = vunpack.c.l.b16 %v48
  %v179 = vunpack.c.l.b16 %v49
  %v180 = vunpack.c.l.b16 %v50
  %v181 = vunpack.c.l.b16 %v51
  %v182 = vunpack.c.l.b16 %v52
  %v183 = vunpack.c.l.b16 %v53
  %v184 = vunpack.c.l.b16 %v54
  %v185 = vunpack.c.l.b16 %v55
  %v186 = vunpack.c.l.b16 %v56
  %v187 = vunpack.c.l.b16 %v57
  %v188 = vunpack.c.l.b16 %v58
  %v189 = vunpack.c.l.b16 %v59
  %v190 = vunpack.c.l.b16 %v60
  %v191 = vunpack.c.l.b16 %v61
  %v192 = vunpack.c.l.b16 %v62
  %v193 = vunpack.c.l.b16 %v63
  %v194 = vunpack.c.l.b16 %v64
  %v195 = vunpack.c.l.b16 %v65
  %v196 = vunpack.c.l.b16 %v66
  %v197 = vunpack.c.l.b16 %v67
  %v198 = vunpack.c.l.b16 %v68
  %v199 = vunpack.c.l.b16 %v69
  %v200 = vunpack.c.l.b16 %v70
  %v201 = vunpack.c.l.b16 %v71
  %v202 = vunpack.c.l.b16 %v72
  %v203 = vunpack.c.l.b16 %v73
  %v204 = vunpack.c.l.b16 %v74
  %v205 = vunpack.c.l.b16 %v75
  %v206 = vpack.c.b16 %v143, %v142
  %v207 = vpack.c.b16 %v145, %v144
  %v208 = vpack.c.b16 %v147, %v146
  %v209 = vpack.c.b16 %v149, %v148
  %v210 = vpack.c.b16 %v151, %v150
  %v211 = vpack.c.b16 %v153, %v152
  %v212 = vpack.c.b16 %v155, %v154
  %v213 = vpack.c.b16 %v157, %v156
  %v214 = vpack.c.b16 %v159, %v158
  %v215 = vpack.c.b16 %v161, %v160
  %v216 = vpack.c.b16 %v163, %v162
  %v217 = vpack.c.b16 %v165, %v164
  %v218 = vpack.c.b16 %v167, %v166
  %v219 = vpack.c.b16 %v169, %v168
  %v220 = vpack.c.b16 %v171, %v170
  %v221 = vpack.c.b16 %v173, %v172
  %v222 = vpack.c.b16 %v175, %v174
  %v223 = vpack.c.b16 %v177, %v176
  %v224 = vpack.c.b16 %v179, %v178
  %v225 = vpack.c.b16 %v181, %v180
  %v226 = vpack.c.b16 %v183, %v182
  %v227 = vpack.c.b16 %v185, %v184
  %v228 = vpack.c.b16 %v187, %v186
  %v229 = vpack.c.b16 %v189, %v188
  %v230 = vpack.c.b16 %v191, %v190
  %v231 = vpack.c.b16 %v193, %v192
  %v232 = vpack.c.b16 %v195, %v194
  %v233 = vpack.c.b16 %v197, %v196
  %v234 = vpack.c.b16 %v199, %v198
  %v235 = vpack.c.b16 %v201, %v200
  %v236 = vpack.c.b16 %v203, %v202
  %v237 = vpack.c.b16 %v205, %v204
  %v240 = vunpack.c.l.b16 %v76
  %v241 = vunpack.c.l.b16 %v77
  %v242 = vpack.c.b16 %v241, %v240
  %vm244 = vcmask 130048
  %v246 = vsel %vm244, %v206, 0
  %v249 = vsel %vm244, %v207, 0
  %v252 = vsel %vm244, %v208, 0
  %v255 = vsel %vm244, %v209, 0
  %v258 = vsel %vm244, %v210, 0
  %v261 = vsel %vm244, %v211, 0
  %v264 = vsel %vm244, %v212, 0
  %v267 = vsel %vm244, %v213, 0
  %v270 = vsel %vm244, %v214, 0
  %v273 = vsel %vm244, %v215, 0
  %v276 = vsel %vm244, %v216, 0
  %v279 = vsel %vm244, %v217, 0
  %v282 = vsel %vm244, %v218, 0
  %v285 = vsel %vm244, %v219, 0
  %v288 = vsel %vm244, %v220, 0
  %v291 = vsel %vm244, %v221, 0
  %v294 = vsel %vm244, %v222, 0
  %v297 = vsel %vm244, %v223, 0
  %v300 = vsel %vm244, %v224, 0
  %v303 = vsel %vm244, %v225, 0
  %v306 = vsel %vm244, %v226, 0
  %v309 = vsel %vm244, %v227, 0
  %v312 = vsel %vm244, %v228, 0
  %v315 = vsel %vm244, %v229, 0
  %v318 = vsel %vm244, %v230, 0
  %v321 = vsel %vm244, %v231, 0
  %v324 = vsel %vm244, %v232, 0
  %v327 = vsel %vm244, %v233, 0
  %v330 = vsel %vm244, %v234, 0
  %v333 = vsel %vm244, %v235, 0
  %v336 = vsel %vm244, %v236, 0
  %v339 = vsel %vm244, %v237, 0
  %341 = vmatprep.subr.bf16.mxu0 0
  %342 = vmatpush1.bf16.msra.mxu0 %v242
  %343 = vmatprep.subr.bf16.mxu0 0
  %344 = vmatpush1.bf16.msra.mxu0 0
  %345 = vmatprep.subr.bf16.mxu0 0
  %346 = vmatpush1.bf16.msra.mxu0 0
  %347 = vmatprep.subr.bf16.mxu0 0
  %348 = vmatpush1.bf16.msra.mxu0 0
  %349 = vmatprep.subr.bf16.mxu0 0
  %350 = vmatpush1.bf16.msra.mxu0 0
  %351 = vmatprep.subr.bf16.mxu0 0
  %352 = vmatpush1.bf16.msra.mxu0 0
  %353 = vmatprep.subr.bf16.mxu0 0
  %354 = vmatpush1.bf16.msra.mxu0 0
  %355 = vmatprep.subr.bf16.mxu0 0
  %356 = vmatpush1.bf16.msra.mxu0 0
  %357 = vmatprep.subr.bf16.mxu0 0
  %358 = vmatpush1.bf16.msra.mxu0 0
  %359 = vmatprep.subr.bf16.mxu0 0
  %360 = vmatpush1.bf16.msra.mxu0 0
  %361 = vmatprep.subr.bf16.mxu0 0
  %362 = vmatpush1.bf16.msra.mxu0 0
  %363 = vmatprep.subr.bf16.mxu0 0
  %364 = vmatpush1.bf16.msra.mxu0 0
  %365 = vmatprep.subr.bf16.mxu0 0
  %366 = vmatpush1.bf16.msra.mxu0 0
  %367 = vmatprep.subr.bf16.mxu0 0
  %368 = vmatpush1.bf16.msra.mxu0 0
  %369 = vmatprep.subr.bf16.mxu0 0
  %370 = vmatpush1.bf16.msra.mxu0 0
  %371 = vmatprep.subr.bf16.mxu0 0
  %372 = vmatpush1.bf16.msra.mxu0 0
  %373 = vmatprep.mubr.bf16.mxu0 0
  %374 = vmatmul.mubr.bf16.gmra.mrb[0].mxu0 %v246
  %v375 = vpop.f32.mrb[0].mxu0
  %v376 = vadd.f32 0.0, %v375
  %v377 = vpop.f32.mrb[0].mxu0
  %v378 = vpop.f32.mrb[0].mxu0
  %v379 = vadd.f32 0.0, %v378
  %v380 = vpop.f32.mrb[0].mxu0
  %381 = vmatprep.mubr.bf16.mxu0 0
  %382 = vmatmul.mubr.bf16.gmra.mrb[0].mxu0 %v249
  %v383 = vpop.f32.mrb[0].mxu0
  %v384 = vadd.f32 0.0, %v383
  %v385 = vpop.f32.mrb[0].mxu0
  %v386 = vpop.f32.mrb[0].mxu0
  %v387 = vadd.f32 0.0, %v386
  %v388 = vpop.f32.mrb[0].mxu0
  %389 = vmatprep.mubr.bf16.mxu0 0
  %390 = vmatmul.mubr.bf16.gmra.mrb[0].mxu0 %v252
  %v391 = vpop.f32.mrb[0].mxu0
  %v392 = vadd.f32 0.0, %v391
  %v393 = vpop.f32.mrb[0].mxu0
  %v394 = vpop.f32.mrb[0].mxu0
  %v395 = vadd.f32 0.0, %v394
  %v396 = vpop.f32.mrb[0].mxu0
  %397 = vmatprep.mubr.bf16.mxu0 0
  %398 = vmatmul.mubr.bf16.gmra.mrb[0].mxu0 %v255
  %v399 = vpop.f32.mrb[0].mxu0
  %v400 = vadd.f32 0.0, %v399
  %v401 = vpop.f32.mrb[0].mxu0
  %v402 = vpop.f32.mrb[0].mxu0
  %v403 = vadd.f32 0.0, %v402
  %v404 = vpop.f32.mrb[0].mxu0
  %405 = vmatprep.mubr.bf16.mxu0 0
  %406 = vmatmul.mubr.bf16.gmra.mrb[0].mxu0 %v258
  %v407 = vpop.f32.mrb[0].mxu0
  %v408 = vadd.f32 0.0, %v407
  %v409 = vpop.f32.mrb[0].mxu0
  %v410 = vpop.f32.mrb[0].mxu0
  %v411 = vadd.f32 0.0, %v410
  %v412 = vpop.f32.mrb[0].mxu0
  %413 = vmatprep.mubr.bf16.mxu0 0
  %414 = vmatmul.mubr.bf16.gmra.mrb[0].mxu0 %v261
  %v415 = vpop.f32.mrb[0].mxu0
  %v416 = vadd.f32 0.0, %v415
  %v417 = vpop.f32.mrb[0].mxu0
  %v418 = vpop.f32.mrb[0].mxu0
  %v419 = vadd.f32 0.0, %v418
  %v420 = vpop.f32.mrb[0].mxu0
  %421 = vmatprep.mubr.bf16.mxu0 0
  %422 = vmatmul.mubr.bf16.gmra.mrb[0].mxu0 %v264
  %v423 = vpop.f32.mrb[0].mxu0
  %v424 = vadd.f32 0.0, %v423
  %v425 = vpop.f32.mrb[0].mxu0
  %v426 = vpop.f32.mrb[0].mxu0
  %v427 = vadd.f32 0.0, %v426
  %v428 = vpop.f32.mrb[0].mxu0
  %429 = vmatprep.mubr.bf16.mxu0 0
  %430 = vmatmul.mubr.bf16.gmra.mrb[0].mxu0 %v267
  %v431 = vpop.f32.mrb[0].mxu0
  %v432 = vadd.f32 0.0, %v431
  %v433 = vpop.f32.mrb[0].mxu0
  %v434 = vpop.f32.mrb[0].mxu0
  %v435 = vadd.f32 0.0, %v434
  %v436 = vpop.f32.mrb[0].mxu0
  %437 = vmatprep.mubr.bf16.mxu0 0
  %438 = vmatmul.mubr.bf16.gmra.mrb[0].mxu0 %v270
  %v439 = vpop.f32.mrb[0].mxu0
  %v440 = vadd.f32 0.0, %v439
  %v441 = vpop.f32.mrb[0].mxu0
  %v442 = vpop.f32.mrb[0].mxu0
  %v443 = vadd.f32 0.0, %v442
  %v444 = vpop.f32.mrb[0].mxu0
  %445 = vmatprep.mubr.bf16.mxu0 0
  %446 = vmatmul.mubr.bf16.gmra.mrb[0].mxu0 %v273
  %v447 = vpop.f32.mrb[0].mxu0
  %v448 = vadd.f32 0.0, %v447
  %v449 = vpop.f32.mrb[0].mxu0
  %v450 = vpop.f32.mrb[0].mxu0
  %v451 = vadd.f32 0.0, %v450
  %v452 = vpop.f32.mrb[0].mxu0
  %453 = vmatprep.mubr.bf16.mxu0 0
  %454 = vmatmul.mubr.bf16.gmra.mrb[0].mxu0 %v276
  %v455 = vpop.f32.mrb[0].mxu0
  %v456 = vadd.f32 0.0, %v455
  %v457 = vpop.f32.mrb[0].mxu0
  %v458 = vpop.f32.mrb[0].mxu0
  %v459 = vadd.f32 0.0, %v458
  %v460 = vpop.f32.mrb[0].mxu0
  %461 = vmatprep.mubr.bf16.mxu0 0
  %462 = vmatmul.mubr.bf16.gmra.mrb[0].mxu0 %v279
  %v463 = vpop.f32.mrb[0].mxu0
  %v464 = vadd.f32 0.0, %v463
  %v465 = vpop.f32.mrb[0].mxu0
  %v466 = vpop.f32.mrb[0].mxu0
  %v467 = vadd.f32 0.0, %v466
  %v468 = vpop.f32.mrb[0].mxu0
  %469 = vmatprep.mubr.bf16.mxu0 0
  %470 = vmatmul.mubr.bf16.gmra.mrb[0].mxu0 %v282
  %v471 = vpop.f32.mrb[0].mxu0
  %v472 = vadd.f32 0.0, %v471
  %v473 = vpop.f32.mrb[0].mxu0
  %v474 = vpop.f32.mrb[0].mxu0
  %v475 = vadd.f32 0.0, %v474
  %v476 = vpop.f32.mrb[0].mxu0
  %477 = vmatprep.mubr.bf16.mxu0 0
  %478 = vmatmul.mubr.bf16.gmra.mrb[0].mxu0 %v285
  %v479 = vpop.f32.mrb[0].mxu0
  %v480 = vadd.f32 0.0, %v479
  %v481 = vpop.f32.mrb[0].mxu0
  %v482 = vpop.f32.mrb[0].mxu0
  %v483 = vadd.f32 0.0, %v482
  %v484 = vpop.f32.mrb[0].mxu0
  %485 = vmatprep.mubr.bf16.mxu0 0
  %486 = vmatmul.mubr.bf16.gmra.mrb[0].mxu0 %v288
  %v487 = vpop.f32.mrb[0].mxu0
  %v488 = vadd.f32 0.0, %v487
  %v489 = vpop.f32.mrb[0].mxu0
  %v490 = vpop.f32.mrb[0].mxu0
  %v491 = vadd.f32 0.0, %v490
  %v492 = vpop.f32.mrb[0].mxu0
  %493 = vmatprep.mubr.bf16.mxu0 0
  %494 = vmatmul.mubr.bf16.gmra.mrb[0].mxu0 %v291
  %v495 = vpop.f32.mrb[0].mxu0
  %v496 = vadd.f32 0.0, %v495
  %v497 = vpop.f32.mrb[0].mxu0
  %v498 = vpop.f32.mrb[0].mxu0
  %v499 = vadd.f32 0.0, %v498
  %v500 = vpop.f32.mrb[0].mxu0
  %501 = vmatprep.mubr.bf16.mxu0 0
  %502 = vmatmul.mubr.bf16.gmra.mrb[0].mxu0 %v294
  %v503 = vpop.f32.mrb[0].mxu0
  %v504 = vadd.f32 0.0, %v503
  %v505 = vpop.f32.mrb[0].mxu0
  %v506 = vpop.f32.mrb[0].mxu0
  %v507 = vadd.f32 0.0, %v506
  %v508 = vpop.f32.mrb[0].mxu0
  %509 = vmatprep.mubr.bf16.mxu0 0
  %510 = vmatmul.mubr.bf16.gmra.mrb[0].mxu0 %v297
  %v511 = vpop.f32.mrb[0].mxu0
  %v512 = vadd.f32 0.0, %v511
  %v513 = vpop.f32.mrb[0].mxu0
  %v514 = vpop.f32.mrb[0].mxu0
  %v515 = vadd.f32 0.0, %v514
  %v516 = vpop.f32.mrb[0].mxu0
  %517 = vmatprep.mubr.bf16.mxu0 0
  %518 = vmatmul.mubr.bf16.gmra.mrb[0].mxu0 %v300
  %v519 = vpop.f32.mrb[0].mxu0
  %v520 = vadd.f32 0.0, %v519
  %v521 = vpop.f32.mrb[0].mxu0
  %v522 = vpop.f32.mrb[0].mxu0
  %v523 = vadd.f32 0.0, %v522
  %v524 = vpop.f32.mrb[0].mxu0
  %525 = vmatprep.mubr.bf16.mxu0 0
  %526 = vmatmul.mubr.bf16.gmra.mrb[0].mxu0 %v303
  %v527 = vpop.f32.mrb[0].mxu0
  %v528 = vadd.f32 0.0, %v527
  %v529 = vpop.f32.mrb[0].mxu0
  %v530 = vpop.f32.mrb[0].mxu0
  %v531 = vadd.f32 0.0, %v530
  %v532 = vpop.f32.mrb[0].mxu0
  %533 = vmatprep.mubr.bf16.mxu0 0
  %534 = vmatmul.mubr.bf16.gmra.mrb[0].mxu0 %v306
  %v535 = vpop.f32.mrb[0].mxu0
  %v536 = vadd.f32 0.0, %v535
  %v537 = vpop.f32.mrb[0].mxu0
  %v538 = vpop.f32.mrb[0].mxu0
  %v539 = vadd.f32 0.0, %v538
  %v540 = vpop.f32.mrb[0].mxu0
  %541 = vmatprep.mubr.bf16.mxu0 0
  %542 = vmatmul.mubr.bf16.gmra.mrb[0].mxu0 %v309
  %v543 = vpop.f32.mrb[0].mxu0
  %v544 = vadd.f32 0.0, %v543
  %v545 = vpop.f32.mrb[0].mxu0
  %v546 = vpop.f32.mrb[0].mxu0
  %v547 = vadd.f32 0.0, %v546
  %v548 = vpop.f32.mrb[0].mxu0
  %549 = vmatprep.mubr.bf16.mxu0 0
  %550 = vmatmul.mubr.bf16.gmra.mrb[0].mxu0 %v312
  %v551 = vpop.f32.mrb[0].mxu0
  %v552 = vadd.f32 0.0, %v551
  %v553 = vpop.f32.mrb[0].mxu0
  %v554 = vpop.f32.mrb[0].mxu0
  %v555 = vadd.f32 0.0, %v554
  %v556 = vpop.f32.mrb[0].mxu0
  %557 = vmatprep.mubr.bf16.mxu0 0
  %558 = vmatmul.mubr.bf16.gmra.mrb[0].mxu0 %v315
  %v559 = vpop.f32.mrb[0].mxu0
  %v560 = vadd.f32 0.0, %v559
  %v561 = vpop.f32.mrb[0].mxu0
  %v562 = vpop.f32.mrb[0].mxu0
  %v563 = vadd.f32 0.0, %v562
  %v564 = vpop.f32.mrb[0].mxu0
  %565 = vmatprep.mubr.bf16.mxu0 0
  %566 = vmatmul.mubr.bf16.gmra.mrb[0].mxu0 %v318
  %v567 = vpop.f32.mrb[0].mxu0
  %v568 = vadd.f32 0.0, %v567
  %v569 = vpop.f32.mrb[0].mxu0
  %v570 = vpop.f32.mrb[0].mxu0
  %v571 = vadd.f32 0.0, %v570
  %v572 = vpop.f32.mrb[0].mxu0
  %573 = vmatprep.mubr.bf16.mxu0 0
  %574 = vmatmul.mubr.bf16.gmra.mrb[0].mxu0 %v321
  %v575 = vpop.f32.mrb[0].mxu0
  %v576 = vadd.f32 0.0, %v575
  %v577 = vpop.f32.mrb[0].mxu0
  %v578 = vpop.f32.mrb[0].mxu0
  %v579 = vadd.f32 0.0, %v578
  %v580 = vpop.f32.mrb[0].mxu0
  %581 = vmatprep.mubr.bf16.mxu0 0
  %582 = vmatmul.mubr.bf16.gmra.mrb[0].mxu0 %v324
  %v583 = vpop.f32.mrb[0].mxu0
  %v584 = vadd.f32 0.0, %v583
  %v585 = vpop.f32.mrb[0].mxu0
  %v586 = vpop.f32.mrb[0].mxu0
  %v587 = vadd.f32 0.0, %v586
  %v588 = vpop.f32.mrb[0].mxu0
  %589 = vmatprep.mubr.bf16.mxu0 0
  %590 = vmatmul.mubr.bf16.gmra.mrb[0].mxu0 %v327
  %v591 = vpop.f32.mrb[0].mxu0
  %v592 = vadd.f32 0.0, %v591
  %v593 = vpop.f32.mrb[0].mxu0
  %v594 = vpop.f32.mrb[0].mxu0
  %v595 = vadd.f32 0.0, %v594
  %v596 = vpop.f32.mrb[0].mxu0
  %597 = vmatprep.mubr.bf16.mxu0 0
  %598 = vmatmul.mubr.bf16.gmra.mrb[0].mxu0 %v330
  %v599 = vpop.f32.mrb[0].mxu0
  %v600 = vadd.f32 0.0, %v599
  %v601 = vpop.f32.mrb[0].mxu0
  %v602 = vpop.f32.mrb[0].mxu0
  %v603 = vadd.f32 0.0, %v602
  %v604 = vpop.f32.mrb[0].mxu0
  %605 = vmatprep.mubr.bf16.mxu0 0
  %606 = vmatmul.mubr.bf16.gmra.mrb[0].mxu0 %v333
  %v607 = vpop.f32.mrb[0].mxu0
  %v608 = vadd.f32 0.0, %v607
  %v609 = vpop.f32.mrb[0].mxu0
  %v610 = vpop.f32.mrb[0].mxu0
  %v611 = vadd.f32 0.0, %v610
  %v612 = vpop.f32.mrb[0].mxu0
  %613 = vmatprep.mubr.bf16.mxu0 0
  %614 = vmatmul.mubr.bf16.gmra.mrb[0].mxu0 %v336
  %v615 = vpop.f32.mrb[0].mxu0
  %v616 = vadd.f32 0.0, %v615
  %v617 = vpop.f32.mrb[0].mxu0
  %v618 = vpop.f32.mrb[0].mxu0
  %v619 = vadd.f32 0.0, %v618
  %v620 = vpop.f32.mrb[0].mxu0
  %621 = vmatprep.mubr.bf16.mxu0 0
  %622 = vmatmul.mubr.bf16.gmra.mrb[0].mxu0 %v339
  %v623 = vpop.f32.mrb[0].mxu0
  %v624 = vadd.f32 0.0, %v623
  %v625 = vpop.f32.mrb[0].mxu0
  %v626 = vpop.f32.mrb[0].mxu0
  %v627 = vadd.f32 0.0, %v626
  %v628 = vpop.f32.mrb[0].mxu0
  %629 = vdwg.mxu0
  %630 = vst [vmem:[%s2] sm:$0xff] %v376
  %631 = vst [vmem:[%s2 + $0x8] sm:$0xff] %v379
  %632 = vst [vmem:[%s2 + $0x10] sm:$0xff] %v384
  %633 = vst [vmem:[%s2 + $0x18] sm:$0xff] %v387
  %634 = vst [vmem:[%s2 + $0x20] sm:$0xff] %v392
  %635 = vst [vmem:[%s2 + $0x28] sm:$0xff] %v395
  %636 = vst [vmem:[%s2 + $0x30] sm:$0xff] %v400
  %637 = vst [vmem:[%s2 + $0x38] sm:$0xff] %v403
  %638 = vst [vmem:[%s2 + $0x40] sm:$0xff] %v408
  %639 = vst [vmem:[%s2 + $0x48] sm:$0xff] %v411
  %640 = vst [vmem:[%s2 + $0x50] sm:$0xff] %v416
  %641 = vst [vmem:[%s2 + $0x58] sm:$0xff] %v419
  %642 = vst [vmem:[%s2 + $0x60] sm:$0xff] %v424
  %643 = vst [vmem:[%s2 + $0x68] sm:$0xff] %v427
  %644 = vst [vmem:[%s2 + $0x70] sm:$0xff] %v432
  %645 = vst [vmem:[%s2 + $0x78] sm:$0xff] %v435
  %646 = vst [vmem:[%s2 + $0x80] sm:$0xff] %v440
  %647 = vst [vmem:[%s2 + $0x88] sm:$0xff] %v443
  %648 = vst [vmem:[%s2 + $0x90] sm:$0xff] %v448
  %649 = vst [vmem:[%s2 + $0x98] sm:$0xff] %v451
  %650 = vst [vmem:[%s2 + $0xa0] sm:$0xff] %v456
  %651 = vst [vmem:[%s2 + $0xa8] sm:$0xff] %v459
  %652 = vst [vmem:[%s2 + $0xb0] sm:$0xff] %v464
  %653 = vst [vmem:[%s2 + $0xb8] sm:$0xff] %v467
  %654 = vst [vmem:[%s2 + $0xc0] sm:$0xff] %v472
  %655 = vst [vmem:[%s2 + $0xc8] sm:$0xff] %v475
  %656 = vst [vmem:[%s2 + $0xd0] sm:$0xff] %v480
  %657 = vst [vmem:[%s2 + $0xd8] sm:$0xff] %v483
  %658 = vst [vmem:[%s2 + $0xe0] sm:$0xff] %v488
  %659 = vst [vmem:[%s2 + $0xe8] sm:$0xff] %v491
  %660 = vst [vmem:[%s2 + $0xf0] sm:$0xff] %v496
  %661 = vst [vmem:[%s2 + $0xf8] sm:$0xff] %v499
  %662 = vst [vmem:[%s2 + $0x100] sm:$0xff] %v504
  %663 = vst [vmem:[%s2 + $0x108] sm:$0xff] %v507
  %664 = vst [vmem:[%s2 + $0x110] sm:$0xff] %v512
  %665 = vst [vmem:[%s2 + $0x118] sm:$0xff] %v515
  %666 = vst [vmem:[%s2 + $0x120] sm:$0xff] %v520
  %667 = vst [vmem:[%s2 + $0x128] sm:$0xff] %v523
  %668 = vst [vmem:[%s2 + $0x130] sm:$0xff] %v528
  %669 = vst [vmem:[%s2 + $0x138] sm:$0xff] %v531
  %670 = vst [vmem:[%s2 + $0x140] sm:$0xff] %v536
  %671 = vst [vmem:[%s2 + $0x148] sm:$0xff] %v539
  %672 = vst [vmem:[%s2 + $0x150] sm:$0xff] %v544
  %673 = vst [vmem:[%s2 + $0x158] sm:$0xff] %v547
  %674 = vst [vmem:[%s2 + $0x160] sm:$0xff] %v552
  %675 = vst [vmem:[%s2 + $0x168] sm:$0xff] %v555
  %676 = vst [vmem:[%s2 + $0x170] sm:$0xff] %v560
  %677 = vst [vmem:[%s2 + $0x178] sm:$0xff] %v563
  %678 = vst [vmem:[%s2 + $0x180] sm:$0xff] %v568
  %679 = vst [vmem:[%s2 + $0x188] sm:$0xff] %v571
  %680 = vst [vmem:[%s2 + $0x190] sm:$0xff] %v576
  %681 = vst [vmem:[%s2 + $0x198] sm:$0xff] %v579
  %682 = vst [vmem:[%s2 + $0x1a0] sm:$0xff] %v584
  %683 = vst [vmem:[%s2 + $0x1a8] sm:$0xff] %v587
  %684 = vst [vmem:[%s2 + $0x1b0] sm:$0xff] %v592
  %685 = vst [vmem:[%s2 + $0x1b8] sm:$0xff] %v595
  %686 = vst [vmem:[%s2 + $0x1c0] sm:$0xff] %v600
  %687 = vst [vmem:[%s2 + $0x1c8] sm:$0xff] %v603
  %688 = vst [vmem:[%s2 + $0x1d0] sm:$0xff] %v608
  %689 = vst [vmem:[%s2 + $0x1d8] sm:$0xff] %v611
  %690 = vst [vmem:[%s2 + $0x1e0] sm:$0xff] %v616
  %691 = vst [vmem:[%s2 + $0x1e8] sm:$0xff] %v619
  %692 = vst [vmem:[%s2 + $0x1f0] sm:$0xff] %v624
  %693 = vst [vmem:[%s2 + $0x1f8] sm:$0xff] %v627
  // Predicated region
  $region10: #{netG_forward.7} parent=0 // pred_check
    _
  $region11: #{netG_forward.7} parent=0 // pred_check_branch
    %695 = sbr.rel (0) target = $region13
  $region12: #{netG_forward.7} parent=0 // pred_region
    _
  $region13: #{netG_forward.7} parent=0 // pred_fallthru
    _
  // Predicated region
  $region14: #{netG_forward.7} parent=0 // pred_check
    _
  $region15: #{netG_forward.7} parent=0 // pred_check_branch
    %697 = sbr.rel (0) target = $region17
  $region16: #{netG_forward.7} parent=0 // pred_region
    _
  $region17: #{netG_forward.7} parent=0 // pred_fallthru
    _

// kernel: netG_forward.8
$region0: #{netG_forward.8}
  #allocation0 [shape = 'u32[]', space=smem, size = 0x4, offset = 0x4, fixed_abs, tag = 'smem constant byte address 0x4 - core index']
  #allocation1 [shape = 'u32[144,128]{1,0:T(1,128)}', space=vmem, size = 0x12000, scoped, tag = 'internal scratch']
  %s0 = inlined_call_operand.vmem [shape: bf16[2048,8], index: 0, kind: input, shape index: {}]
  %s1 = inlined_call_operand.vmem [shape: bf16[8,64], index: 1, kind: input, shape index: {}]
  %s2 = inlined_call_operand.vmem [shape: f32[2048,64], index: 2, kind: output, shape index: {}]
  %s3 = sld [smem:[#allocation0]]
  $region18: #{netG_forward.8} parent=0
    _
  %s5 = ssub.s32 1, %s3
  %s6 = scalar_select 0, %s5, %s3
  // Predicated region
  $region2: #{netG_forward.8} parent=0 // pred_check
    _
  $region3: #{netG_forward.8} parent=0 // pred_check_branch
    %8 = sbr.rel (0) target = $region5
  $region4: #{netG_forward.8} parent=0 // pred_region
    _
  $region5: #{netG_forward.8} parent=0 // pred_fallthru
    _
  // Predicated region
  $region6: #{netG_forward.8} parent=0 // pred_check
    _
  $region7: #{netG_forward.8} parent=0 // pred_check_branch
    %10 = sbr.rel (0) target = $region9
  $region8: #{netG_forward.8} parent=0 // pred_region
    _
  $region9: #{netG_forward.8} parent=0 // pred_fallthru
    _
  %v12 = vld [vmem:[%s0] sm:$0xf]
  %v13 = vld [vmem:[%s0 + $0x4] sm:$0xf]
  %v14 = vld [vmem:[%s0 + $0x8] sm:$0xf]
  %v15 = vld [vmem:[%s0 + $0xc] sm:$0xf]
  %v16 = vld [vmem:[%s0 + $0x10] sm:$0xf]
  %v17 = vld [vmem:[%s0 + $0x14] sm:$0xf]
  %v18 = vld [vmem:[%s0 + $0x18] sm:$0xf]
  %v19 = vld [vmem:[%s0 + $0x1c] sm:$0xf]
  %v20 = vld [vmem:[%s0 + $0x20] sm:$0xf]
  %v21 = vld [vmem:[%s0 + $0x24] sm:$0xf]
  %v22 = vld [vmem:[%s0 + $0x28] sm:$0xf]
  %v23 = vld [vmem:[%s0 + $0x2c] sm:$0xf]
  %v24 = vld [vmem:[%s0 + $0x30] sm:$0xf]
  %v25 = vld [vmem:[%s0 + $0x34] sm:$0xf]
  %v26 = vld [vmem:[%s0 + $0x38] sm:$0xf]
  %v27 = vld [vmem:[%s0 + $0x3c] sm:$0xf]
  %v28 = vld [vmem:[%s0 + $0x40] sm:$0xf]
  %v29 = vld [vmem:[%s0 + $0x44] sm:$0xf]
  %v30 = vld [vmem:[%s0 + $0x48] sm:$0xf]
  %v31 = vld [vmem:[%s0 + $0x4c] sm:$0xf]
  %v32 = vld [vmem:[%s0 + $0x50] sm:$0xf]
  %v33 = vld [vmem:[%s0 + $0x54] sm:$0xf]
  %v34 = vld [vmem:[%s0 + $0x58] sm:$0xf]
  %v35 = vld [vmem:[%s0 + $0x5c] sm:$0xf]
  %v36 = vld [vmem:[%s0 + $0x60] sm:$0xf]
  %v37 = vld [vmem:[%s0 + $0x64] sm:$0xf]
  %v38 = vld [vmem:[%s0 + $0x68] sm:$0xf]
  %v39 = vld [vmem:[%s0 + $0x6c] sm:$0xf]
  %v40 = vld [vmem:[%s0 + $0x70] sm:$0xf]
  %v41 = vld [vmem:[%s0 + $0x74] sm:$0xf]
  %v42 = vld [vmem:[%s0 + $0x78] sm:$0xf]
  %v43 = vld [vmem:[%s0 + $0x7c] sm:$0xf]
  %v44 = vld [vmem:[%s0 + $0x80] sm:$0xf]
  %v45 = vld [vmem:[%s0 + $0x84] sm:$0xf]
  %v46 = vld [vmem:[%s0 + $0x88] sm:$0xf]
  %v47 = vld [vmem:[%s0 + $0x8c] sm:$0xf]
  %v48 = vld [vmem:[%s0 + $0x90] sm:$0xf]
  %v49 = vld [vmem:[%s0 + $0x94] sm:$0xf]
  %v50 = vld [vmem:[%s0 + $0x98] sm:$0xf]
  %v51 = vld [vmem:[%s0 + $0x9c] sm:$0xf]
  %v52 = vld [vmem:[%s0 + $0xa0] sm:$0xf]
  %v53 = vld [vmem:[%s0 + $0xa4] sm:$0xf]
  %v54 = vld [vmem:[%s0 + $0xa8] sm:$0xf]
  %v55 = vld [vmem:[%s0 + $0xac] sm:$0xf]
  %v56 = vld [vmem:[%s0 + $0xb0] sm:$0xf]
  %v57 = vld [vmem:[%s0 + $0xb4] sm:$0xf]
  %v58 = vld [vmem:[%s0 + $0xb8] sm:$0xf]
  %v59 = vld [vmem:[%s0 + $0xbc] sm:$0xf]
  %v60 = vld [vmem:[%s0 + $0xc0] sm:$0xf]
  %v61 = vld [vmem:[%s0 + $0xc4] sm:$0xf]
  %v62 = vld [vmem:[%s0 + $0xc8] sm:$0xf]
  %v63 = vld [vmem:[%s0 + $0xcc] sm:$0xf]
  %v64 = vld [vmem:[%s0 + $0xd0] sm:$0xf]
  %v65 = vld [vmem:[%s0 + $0xd4] sm:$0xf]
  %v66 = vld [vmem:[%s0 + $0xd8] sm:$0xf]
  %v67 = vld [vmem:[%s0 + $0xdc] sm:$0xf]
  %v68 = vld [vmem:[%s0 + $0xe0] sm:$0xf]
  %v69 = vld [vmem:[%s0 + $0xe4] sm:$0xf]
  %v70 = vld [vmem:[%s0 + $0xe8] sm:$0xf]
  %v71 = vld [vmem:[%s0 + $0xec] sm:$0xf]
  %v72 = vld [vmem:[%s0 + $0xf0] sm:$0xf]
  %v73 = vld [vmem:[%s0 + $0xf4] sm:$0xf]
  %v74 = vld [vmem:[%s0 + $0xf8] sm:$0xf]
  %v75 = vld [vmem:[%s0 + $0xfc] sm:$0xf]
  %v76 = vld [vmem:[%s0 + $0x100] sm:$0xf]
  %v77 = vld [vmem:[%s0 + $0x104] sm:$0xf]
  %v78 = vld [vmem:[%s0 + $0x108] sm:$0xf]
  %v79 = vld [vmem:[%s0 + $0x10c] sm:$0xf]
  %v80 = vld [vmem:[%s0 + $0x110] sm:$0xf]
  %v81 = vld [vmem:[%s0 + $0x114] sm:$0xf]
  %v82 = vld [vmem:[%s0 + $0x118] sm:$0xf]
  %v83 = vld [vmem:[%s0 + $0x11c] sm:$0xf]
  %v84 = vld [vmem:[%s0 + $0x120] sm:$0xf]
  %v85 = vld [vmem:[%s0 + $0x124] sm:$0xf]
  %v86 = vld [vmem:[%s0 + $0x128] sm:$0xf]
  %v87 = vld [vmem:[%s0 + $0x12c] sm:$0xf]
  %v88 = vld [vmem:[%s0 + $0x130] sm:$0xf]
  %v89 = vld [vmem:[%s0 + $0x134] sm:$0xf]
  %v90 = vld [vmem:[%s0 + $0x138] sm:$0xf]
  %v91 = vld [vmem:[%s0 + $0x13c] sm:$0xf]
  %v92 = vld [vmem:[%s0 + $0x140] sm:$0xf]
  %v93 = vld [vmem:[%s0 + $0x144] sm:$0xf]
  %v94 = vld [vmem:[%s0 + $0x148] sm:$0xf]
  %v95 = vld [vmem:[%s0 + $0x14c] sm:$0xf]
  %v96 = vld [vmem:[%s0 + $0x150] sm:$0xf]
  %v97 = vld [vmem:[%s0 + $0x154] sm:$0xf]
  %v98 = vld [vmem:[%s0 + $0x158] sm:$0xf]
  %v99 = vld [vmem:[%s0 + $0x15c] sm:$0xf]
  %v100 = vld [vmem:[%s0 + $0x160] sm:$0xf]
  %v101 = vld [vmem:[%s0 + $0x164] sm:$0xf]
  %v102 = vld [vmem:[%s0 + $0x168] sm:$0xf]
  %v103 = vld [vmem:[%s0 + $0x16c] sm:$0xf]
  %v104 = vld [vmem:[%s0 + $0x170] sm:$0xf]
  %v105 = vld [vmem:[%s0 + $0x174] sm:$0xf]
  %v106 = vld [vmem:[%s0 + $0x178] sm:$0xf]
  %v107 = vld [vmem:[%s0 + $0x17c] sm:$0xf]
  %v108 = vld [vmem:[%s0 + $0x180] sm:$0xf]
  %v109 = vld [vmem:[%s0 + $0x184] sm:$0xf]
  %v110 = vld [vmem:[%s0 + $0x188] sm:$0xf]
  %v111 = vld [vmem:[%s0 + $0x18c] sm:$0xf]
  %v112 = vld [vmem:[%s0 + $0x190] sm:$0xf]
  %v113 = vld [vmem:[%s0 + $0x194] sm:$0xf]
  %v114 = vld [vmem:[%s0 + $0x198] sm:$0xf]
  %v115 = vld [vmem:[%s0 + $0x19c] sm:$0xf]
  %v116 = vld [vmem:[%s0 + $0x1a0] sm:$0xf]
  %v117 = vld [vmem:[%s0 + $0x1a4] sm:$0xf]
  %v118 = vld [vmem:[%s0 + $0x1a8] sm:$0xf]
  %v119 = vld [vmem:[%s0 + $0x1ac] sm:$0xf]
  %v120 = vld [vmem:[%s0 + $0x1b0] sm:$0xf]
  %v121 = vld [vmem:[%s0 + $0x1b4] sm:$0xf]
  %v122 = vld [vmem:[%s0 + $0x1b8] sm:$0xf]
  %v123 = vld [vmem:[%s0 + $0x1bc] sm:$0xf]
  %v124 = vld [vmem:[%s0 + $0x1c0] sm:$0xf]
  %v125 = vld [vmem:[%s0 + $0x1c4] sm:$0xf]
  %v126 = vld [vmem:[%s0 + $0x1c8] sm:$0xf]
  %v127 = vld [vmem:[%s0 + $0x1cc] sm:$0xf]
  %v128 = vld [vmem:[%s0 + $0x1d0] sm:$0xf]
  %v129 = vld [vmem:[%s0 + $0x1d4] sm:$0xf]
  %v130 = vld [vmem:[%s0 + $0x1d8] sm:$0xf]
  %v131 = vld [vmem:[%s0 + $0x1dc] sm:$0xf]
  %v132 = vld [vmem:[%s0 + $0x1e0] sm:$0xf]
  %v133 = vld [vmem:[%s0 + $0x1e4] sm:$0xf]
  %v134 = vld [vmem:[%s0 + $0x1e8] sm:$0xf]
  %v135 = vld [vmem:[%s0 + $0x1ec] sm:$0xf]
  %v136 = vld [vmem:[%s0 + $0x1f0] sm:$0xf]
  %v137 = vld [vmem:[%s0 + $0x1f4] sm:$0xf]
  %v138 = vld [vmem:[%s0 + $0x1f8] sm:$0xf]
  %v139 = vld [vmem:[%s0 + $0x1fc] sm:$0xf]
  %v140 = vld [vmem:[%s0 + $0x200] sm:$0xf]
  %v141 = vld [vmem:[%s0 + $0x204] sm:$0xf]
  %v142 = vld [vmem:[%s0 + $0x208] sm:$0xf]
  %v143 = vld [vmem:[%s0 + $0x20c] sm:$0xf]
  %v144 = vld [vmem:[%s0 + $0x210] sm:$0xf]
  %v145 = vld [vmem:[%s0 + $0x214] sm:$0xf]
  %v146 = vld [vmem:[%s0 + $0x218] sm:$0xf]
  %v147 = vld [vmem:[%s0 + $0x21c] sm:$0xf]
  %v148 = vld [vmem:[%s0 + $0x220] sm:$0xf]
  %v149 = vld [vmem:[%s0 + $0x224] sm:$0xf]
  %v150 = vld [vmem:[%s0 + $0x228] sm:$0xf]
  %v151 = vld [vmem:[%s0 + $0x22c] sm:$0xf]
  %v152 = vld [vmem:[%s0 + $0x230] sm:$0xf]
  %v153 = vld [vmem:[%s0 + $0x234] sm:$0xf]
  %v154 = vld [vmem:[%s0 + $0x238] sm:$0xf]
  %v155 = vld [vmem:[%s0 + $0x23c] sm:$0xf]
  %v156 = vld [vmem:[%s0 + $0x240] sm:$0xf]
  %v157 = vld [vmem:[%s0 + $0x244] sm:$0xf]
  %v158 = vld [vmem:[%s0 + $0x248] sm:$0xf]
  %v159 = vld [vmem:[%s0 + $0x24c] sm:$0xf]
  %v160 = vld [vmem:[%s0 + $0x250] sm:$0xf]
  %v161 = vld [vmem:[%s0 + $0x254] sm:$0xf]
  %v162 = vld [vmem:[%s0 + $0x258] sm:$0xf]
  %v163 = vld [vmem:[%s0 + $0x25c] sm:$0xf]
  %v164 = vld [vmem:[%s0 + $0x260] sm:$0xf]
  %v165 = vld [vmem:[%s0 + $0x264] sm:$0xf]
  %v166 = vld [vmem:[%s0 + $0x268] sm:$0xf]
  %v167 = vld [vmem:[%s0 + $0x26c] sm:$0xf]
  %v168 = vld [vmem:[%s0 + $0x270] sm:$0xf]
  %v169 = vld [vmem:[%s0 + $0x274] sm:$0xf]
  %v170 = vld [vmem:[%s0 + $0x278] sm:$0xf]
  %v171 = vld [vmem:[%s0 + $0x27c] sm:$0xf]
  %v172 = vld [vmem:[%s0 + $0x280] sm:$0xf]
  %v173 = vld [vmem:[%s0 + $0x284] sm:$0xf]
  %v174 = vld [vmem:[%s0 + $0x288] sm:$0xf]
  %v175 = vld [vmem:[%s0 + $0x28c] sm:$0xf]
  %v176 = vld [vmem:[%s0 + $0x290] sm:$0xf]
  %v177 = vld [vmem:[%s0 + $0x294] sm:$0xf]
  %v178 = vld [vmem:[%s0 + $0x298] sm:$0xf]
  %v179 = vld [vmem:[%s0 + $0x29c] sm:$0xf]
  %v180 = vld [vmem:[%s0 + $0x2a0] sm:$0xf]
  %v181 = vld [vmem:[%s0 + $0x2a4] sm:$0xf]
  %v182 = vld [vmem:[%s0 + $0x2a8] sm:$0xf]
  %v183 = vld [vmem:[%s0 + $0x2ac] sm:$0xf]
  %v184 = vld [vmem:[%s0 + $0x2b0] sm:$0xf]
  %v185 = vld [vmem:[%s0 + $0x2b4] sm:$0xf]
  %v186 = vld [vmem:[%s0 + $0x2b8] sm:$0xf]
  %v187 = vld [vmem:[%s0 + $0x2bc] sm:$0xf]
  %v188 = vld [vmem:[%s0 + $0x2c0] sm:$0xf]
  %v189 = vld [vmem:[%s0 + $0x2c4] sm:$0xf]
  %v190 = vld [vmem:[%s0 + $0x2c8] sm:$0xf]
  %v191 = vld [vmem:[%s0 + $0x2cc] sm:$0xf]
  %v192 = vld [vmem:[%s0 + $0x2d0] sm:$0xf]
  %v193 = vld [vmem:[%s0 + $0x2d4] sm:$0xf]
  %v194 = vld [vmem:[%s0 + $0x2d8] sm:$0xf]
  %v195 = vld [vmem:[%s0 + $0x2dc] sm:$0xf]
  %v196 = vld [vmem:[%s0 + $0x2e0] sm:$0xf]
  %v197 = vld [vmem:[%s0 + $0x2e4] sm:$0xf]
  %v198 = vld [vmem:[%s0 + $0x2e8] sm:$0xf]
  %v199 = vld [vmem:[%s0 + $0x2ec] sm:$0xf]
  %v200 = vld [vmem:[%s0 + $0x2f0] sm:$0xf]
  %v201 = vld [vmem:[%s0 + $0x2f4] sm:$0xf]
  %v202 = vld [vmem:[%s0 + $0x2f8] sm:$0xf]
  %v203 = vld [vmem:[%s0 + $0x2fc] sm:$0xf]
  %v204 = vld [vmem:[%s0 + $0x300] sm:$0xf]
  %v205 = vld [vmem:[%s0 + $0x304] sm:$0xf]
  %v206 = vld [vmem:[%s0 + $0x308] sm:$0xf]
  %v207 = vld [vmem:[%s0 + $0x30c] sm:$0xf]
  %v208 = vld [vmem:[%s0 + $0x310] sm:$0xf]
  %v209 = vld [vmem:[%s0 + $0x314] sm:$0xf]
  %v210 = vld [vmem:[%s0 + $0x318] sm:$0xf]
  %v211 = vld [vmem:[%s0 + $0x31c] sm:$0xf]
  %v212 = vld [vmem:[%s0 + $0x320] sm:$0xf]
  %v213 = vld [vmem:[%s0 + $0x324] sm:$0xf]
  %v214 = vld [vmem:[%s0 + $0x328] sm:$0xf]
  %v215 = vld [vmem:[%s0 + $0x32c] sm:$0xf]
  %v216 = vld [vmem:[%s0 + $0x330] sm:$0xf]
  %v217 = vld [vmem:[%s0 + $0x334] sm:$0xf]
  %v218 = vld [vmem:[%s0 + $0x338] sm:$0xf]
  %v219 = vld [vmem:[%s0 + $0x33c] sm:$0xf]
  %v220 = vld [vmem:[%s0 + $0x340] sm:$0xf]
  %v221 = vld [vmem:[%s0 + $0x344] sm:$0xf]
  %v222 = vld [vmem:[%s0 + $0x348] sm:$0xf]
  %v223 = vld [vmem:[%s0 + $0x34c] sm:$0xf]
  %v224 = vld [vmem:[%s0 + $0x350] sm:$0xf]
  %v225 = vld [vmem:[%s0 + $0x354] sm:$0xf]
  %v226 = vld [vmem:[%s0 + $0x358] sm:$0xf]
  %v227 = vld [vmem:[%s0 + $0x35c] sm:$0xf]
  %v228 = vld [vmem:[%s0 + $0x360] sm:$0xf]
  %v229 = vld [vmem:[%s0 + $0x364] sm:$0xf]
  %v230 = vld [vmem:[%s0 + $0x368] sm:$0xf]
  %v231 = vld [vmem:[%s0 + $0x36c] sm:$0xf]
  %v232 = vld [vmem:[%s0 + $0x370] sm:$0xf]
  %v233 = vld [vmem:[%s0 + $0x374] sm:$0xf]
  %v234 = vld [vmem:[%s0 + $0x378] sm:$0xf]
  %v235 = vld [vmem:[%s0 + $0x37c] sm:$0xf]
  %v236 = vld [vmem:[%s0 + $0x380] sm:$0xf]
  %v237 = vld [vmem:[%s0 + $0x384] sm:$0xf]
  %v238 = vld [vmem:[%s0 + $0x388] sm:$0xf]
  %v239 = vld [vmem:[%s0 + $0x38c] sm:$0xf]
  %v240 = vld [vmem:[%s0 + $0x390] sm:$0xf]
  %v241 = vld [vmem:[%s0 + $0x394] sm:$0xf]
  %v242 = vld [vmem:[%s0 + $0x398] sm:$0xf]
  %v243 = vld [vmem:[%s0 + $0x39c] sm:$0xf]
  %v244 = vld [vmem:[%s0 + $0x3a0] sm:$0xf]
  %v245 = vld [vmem:[%s0 + $0x3a4] sm:$0xf]
  %v246 = vld [vmem:[%s0 + $0x3a8] sm:$0xf]
  %v247 = vld [vmem:[%s0 + $0x3ac] sm:$0xf]
  %v248 = vld [vmem:[%s0 + $0x3b0] sm:$0xf]
  %v249 = vld [vmem:[%s0 + $0x3b4] sm:$0xf]
  %v250 = vld [vmem:[%s0 + $0x3b8] sm:$0xf]
  %v251 = vld [vmem:[%s0 + $0x3bc] sm:$0xf]
  %v252 = vld [vmem:[%s0 + $0x3c0] sm:$0xf]
  %v253 = vld [vmem:[%s0 + $0x3c4] sm:$0xf]
  %v254 = vld [vmem:[%s0 + $0x3c8] sm:$0xf]
  %v255 = vld [vmem:[%s0 + $0x3cc] sm:$0xf]
  %v256 = vld [vmem:[%s0 + $0x3d0] sm:$0xf]
  %v257 = vld [vmem:[%s0 + $0x3d4] sm:$0xf]
  %v258 = vld [vmem:[%s0 + $0x3d8] sm:$0xf]
  %v259 = vld [vmem:[%s0 + $0x3dc] sm:$0xf]
  %v260 = vld [vmem:[%s0 + $0x3e0] sm:$0xf]
  %v261 = vld [vmem:[%s0 + $0x3e4] sm:$0xf]
  %v262 = vld [vmem:[%s0 + $0x3e8] sm:$0xf]
  %v263 = vld [vmem:[%s0 + $0x3ec] sm:$0xf]
  %v264 = vld [vmem:[%s0 + $0x3f0] sm:$0xf]
  %v265 = vld [vmem:[%s0 + $0x3f4] sm:$0xf]
  %v266 = vld [vmem:[%s0 + $0x3f8] sm:$0xf]
  %v267 = vld [vmem:[%s0 + $0x3fc] sm:$0xf]
  %v268 = vld [vmem:[%s1] sm:$0xf]
  %v525 = vunpack.c.l.b16 %v12
  %v526 = vunpack.c.l.b16 %v13
  %v527 = vunpack.c.l.b16 %v14
  %v528 = vunpack.c.l.b16 %v15
  %v529 = vunpack.c.l.b16 %v16
  %v530 = vunpack.c.l.b16 %v17
  %v531 = vunpack.c.l.b16 %v18
  %v532 = vunpack.c.l.b16 %v19
  %v533 = vunpack.c.l.b16 %v20
  %v534 = vunpack.c.l.b16 %v21
  %v535 = vunpack.c.l.b16 %v22
  %v536 = vunpack.c.l.b16 %v23
  %v537 = vunpack.c.l.b16 %v24
  %v538 = vunpack.c.l.b16 %v25
  %v539 = vunpack.c.l.b16 %v26
  %v540 = vunpack.c.l.b16 %v27
  %v541 = vunpack.c.l.b16 %v28
  %v542 = vunpack.c.l.b16 %v29
  %v543 = vunpack.c.l.b16 %v30
  %v544 = vunpack.c.l.b16 %v31
  %v545 = vunpack.c.l.b16 %v32
  %v546 = vunpack.c.l.b16 %v33
  %v547 = vunpack.c.l.b16 %v34
  %v548 = vunpack.c.l.b16 %v35
  %v549 = vunpack.c.l.b16 %v36
  %v550 = vunpack.c.l.b16 %v37
  %v551 = vunpack.c.l.b16 %v38
  %v552 = vunpack.c.l.b16 %v39
  %v553 = vunpack.c.l.b16 %v40
  %v554 = vunpack.c.l.b16 %v41
  %v555 = vunpack.c.l.b16 %v42
  %v556 = vunpack.c.l.b16 %v43
  %v557 = vunpack.c.l.b16 %v44
  %v558 = vunpack.c.l.b16 %v45
  %v559 = vunpack.c.l.b16 %v46
  %v560 = vunpack.c.l.b16 %v47
  %v561 = vunpack.c.l.b16 %v48
  %v562 = vunpack.c.l.b16 %v49
  %v563 = vunpack.c.l.b16 %v50
  %v564 = vunpack.c.l.b16 %v51
  %v565 = vunpack.c.l.b16 %v52
  %v566 = vunpack.c.l.b16 %v53
  %v567 = vunpack.c.l.b16 %v54
  %v568 = vunpack.c.l.b16 %v55
  %v569 = vunpack.c.l.b16 %v56
  %v570 = vunpack.c.l.b16 %v57
  %v571 = vunpack.c.l.b16 %v58
  %v572 = vunpack.c.l.b16 %v59
  %v573 = vunpack.c.l.b16 %v60
  %v574 = vunpack.c.l.b16 %v61
  %v575 = vunpack.c.l.b16 %v62
  %v576 = vunpack.c.l.b16 %v63
  %v577 = vunpack.c.l.b16 %v64
  %v578 = vunpack.c.l.b16 %v65
  %v579 = vunpack.c.l.b16 %v66
  %v580 = vunpack.c.l.b16 %v67
  %v581 = vunpack.c.l.b16 %v68
  %v582 = vunpack.c.l.b16 %v69
  %v583 = vunpack.c.l.b16 %v70
  %v584 = vunpack.c.l.b16 %v71
  %v585 = vunpack.c.l.b16 %v72
  %v586 = vunpack.c.l.b16 %v73
  %v587 = vunpack.c.l.b16 %v74
  %v588 = vunpack.c.l.b16 %v75
  %v589 = vunpack.c.l.b16 %v76
  %v590 = vunpack.c.l.b16 %v77
  %v591 = vunpack.c.l.b16 %v78
  %v592 = vunpack.c.l.b16 %v79
  %v593 = vunpack.c.l.b16 %v80
  %v594 = vunpack.c.l.b16 %v81
  %v595 = vunpack.c.l.b16 %v82
  %v596 = vunpack.c.l.b16 %v83
  %v597 = vunpack.c.l.b16 %v84
  %v598 = vunpack.c.l.b16 %v85
  %v599 = vunpack.c.l.b16 %v86
  %v600 = vunpack.c.l.b16 %v87
  %v601 = vunpack.c.l.b16 %v88
  %v602 = vunpack.c.l.b16 %v89
  %v603 = vunpack.c.l.b16 %v90
  %v604 = vunpack.c.l.b16 %v91
  %v605 = vunpack.c.l.b16 %v92
  %v606 = vunpack.c.l.b16 %v93
  %v607 = vunpack.c.l.b16 %v94
  %v608 = vunpack.c.l.b16 %v95
  %v609 = vunpack.c.l.b16 %v96
  %v610 = vunpack.c.l.b16 %v97
  %v611 = vunpack.c.l.b16 %v98
  %v612 = vunpack.c.l.b16 %v99
  %v613 = vunpack.c.l.b16 %v100
  %v614 = vunpack.c.l.b16 %v101
  %v615 = vunpack.c.l.b16 %v102
  %v616 = vunpack.c.l.b16 %v103
  %v617 = vunpack.c.l.b16 %v104
  %v618 = vunpack.c.l.b16 %v105
  %v619 = vunpack.c.l.b16 %v106
  %v620 = vunpack.c.l.b16 %v107
  %v621 = vunpack.c.l.b16 %v108
  %v622 = vunpack.c.l.b16 %v109
  %v623 = vunpack.c.l.b16 %v110
  %v624 = vunpack.c.l.b16 %v111
  %v625 = vunpack.c.l.b16 %v112
  %v626 = vunpack.c.l.b16 %v113
  %v627 = vunpack.c.l.b16 %v114
  %v628 = vunpack.c.l.b16 %v115
  %v629 = vunpack.c.l.b16 %v116
  %v630 = vunpack.c.l.b16 %v117
  %v631 = vunpack.c.l.b16 %v118
  %v632 = vunpack.c.l.b16 %v119
  %v633 = vunpack.c.l.b16 %v120
  %v634 = vunpack.c.l.b16 %v121
  %v635 = vunpack.c.l.b16 %v122
  %v636 = vunpack.c.l.b16 %v123
  %v637 = vunpack.c.l.b16 %v124
  %v638 = vunpack.c.l.b16 %v125
  %v639 = vunpack.c.l.b16 %v126
  %v640 = vunpack.c.l.b16 %v127
  %v641 = vunpack.c.l.b16 %v128
  %v642 = vunpack.c.l.b16 %v129
  %v643 = vunpack.c.l.b16 %v130
  %v644 = vunpack.c.l.b16 %v131
  %v645 = vunpack.c.l.b16 %v132
  %v646 = vunpack.c.l.b16 %v133
  %v647 = vunpack.c.l.b16 %v134
  %v648 = vunpack.c.l.b16 %v135
  %v649 = vunpack.c.l.b16 %v136
  %v650 = vunpack.c.l.b16 %v137
  %v651 = vunpack.c.l.b16 %v138
  %v652 = vunpack.c.l.b16 %v139
  %v653 = vunpack.c.l.b16 %v140
  %v654 = vunpack.c.l.b16 %v141
  %v655 = vunpack.c.l.b16 %v142
  %v656 = vunpack.c.l.b16 %v143
  %v657 = vunpack.c.l.b16 %v144
  %v658 = vunpack.c.l.b16 %v145
  %v659 = vunpack.c.l.b16 %v146
  %v660 = vunpack.c.l.b16 %v147
  %v661 = vunpack.c.l.b16 %v148
  %v662 = vunpack.c.l.b16 %v149
  %v663 = vunpack.c.l.b16 %v150
  %v664 = vunpack.c.l.b16 %v151
  %v665 = vunpack.c.l.b16 %v152
  %v666 = vunpack.c.l.b16 %v153
  %v667 = vunpack.c.l.b16 %v154
  %v668 = vunpack.c.l.b16 %v155
  %v669 = vunpack.c.l.b16 %v156
  %v670 = vunpack.c.l.b16 %v157
  %v671 = vunpack.c.l.b16 %v158
  %v672 = vunpack.c.l.b16 %v159
  %v673 = vunpack.c.l.b16 %v160
  %v674 = vunpack.c.l.b16 %v161
  %v675 = vunpack.c.l.b16 %v162
  %v676 = vunpack.c.l.b16 %v163
  %v677 = vunpack.c.l.b16 %v164
  %v678 = vunpack.c.l.b16 %v165
  %v679 = vunpack.c.l.b16 %v166
  %v680 = vunpack.c.l.b16 %v167
  %v681 = vunpack.c.l.b16 %v168
  %v682 = vunpack.c.l.b16 %v169
  %v683 = vunpack.c.l.b16 %v170
  %v684 = vunpack.c.l.b16 %v171
  %v685 = vunpack.c.l.b16 %v172
  %v686 = vunpack.c.l.b16 %v173
  %v687 = vunpack.c.l.b16 %v174
  %v688 = vunpack.c.l.b16 %v175
  %v689 = vunpack.c.l.b16 %v176
  %v690 = vunpack.c.l.b16 %v177
  %v691 = vunpack.c.l.b16 %v178
  %v692 = vunpack.c.l.b16 %v179
  %v693 = vunpack.c.l.b16 %v180
  %v694 = vunpack.c.l.b16 %v181
  %v695 = vunpack.c.l.b16 %v182
  %v696 = vunpack.c.l.b16 %v183
  %v697 = vunpack.c.l.b16 %v184
  %v698 = vunpack.c.l.b16 %v185
  %v699 = vunpack.c.l.b16 %v186
  %v700 = vunpack.c.l.b16 %v187
  %v701 = vunpack.c.l.b16 %v188
  %v702 = vunpack.c.l.b16 %v189
  %v703 = vunpack.c.l.b16 %v190
  %v704 = vunpack.c.l.b16 %v191
  %v705 = vunpack.c.l.b16 %v192
  %v706 = vunpack.c.l.b16 %v193
  %v707 = vunpack.c.l.b16 %v194
  %v708 = vunpack.c.l.b16 %v195
  %v709 = vunpack.c.l.b16 %v196
  %v710 = vunpack.c.l.b16 %v197
  %v711 = vunpack.c.l.b16 %v198
  %v712 = vunpack.c.l.b16 %v199
  %v713 = vunpack.c.l.b16 %v200
  %v714 = vunpack.c.l.b16 %v201
  %v715 = vunpack.c.l.b16 %v202
  %v716 = vunpack.c.l.b16 %v203
  %v717 = vunpack.c.l.b16 %v204
  %v718 = vunpack.c.l.b16 %v205
  %v719 = vunpack.c.l.b16 %v206
  %v720 = vunpack.c.l.b16 %v207
  %v721 = vunpack.c.l.b16 %v208
  %v722 = vunpack.c.l.b16 %v209
  %v723 = vunpack.c.l.b16 %v210
  %v724 = vunpack.c.l.b16 %v211
  %v725 = vunpack.c.l.b16 %v212
  %v726 = vunpack.c.l.b16 %v213
  %v727 = vunpack.c.l.b16 %v214
  %v728 = vunpack.c.l.b16 %v215
  %v729 = vunpack.c.l.b16 %v216
  %v730 = vunpack.c.l.b16 %v217
  %v731 = vunpack.c.l.b16 %v218
  %v732 = vunpack.c.l.b16 %v219
  %v733 = vunpack.c.l.b16 %v220
  %v734 = vunpack.c.l.b16 %v221
  %v735 = vunpack.c.l.b16 %v222
  %v736 = vunpack.c.l.b16 %v223
  %v737 = vunpack.c.l.b16 %v224
  %v738 = vunpack.c.l.b16 %v225
  %v739 = vunpack.c.l.b16 %v226
  %v740 = vunpack.c.l.b16 %v227
  %v741 = vunpack.c.l.b16 %v228
  %v742 = vunpack.c.l.b16 %v229
  %v743 = vunpack.c.l.b16 %v230
  %v744 = vunpack.c.l.b16 %v231
  %v745 = vunpack.c.l.b16 %v232
  %v746 = vunpack.c.l.b16 %v233
  %v747 = vunpack.c.l.b16 %v234
  %v748 = vunpack.c.l.b16 %v235
  %v749 = vunpack.c.l.b16 %v236
  %v750 = vunpack.c.l.b16 %v237
  %v751 = vunpack.c.l.b16 %v238
  %v752 = vunpack.c.l.b16 %v239
  %v753 = vunpack.c.l.b16 %v240
  %v754 = vunpack.c.l.b16 %v241
  %v755 = vunpack.c.l.b16 %v242
  %v756 = vunpack.c.l.b16 %v243
  %v757 = vunpack.c.l.b16 %v244
  %v758 = vunpack.c.l.b16 %v245
  %v759 = vunpack.c.l.b16 %v246
  %v760 = vunpack.c.l.b16 %v247
  %v761 = vunpack.c.l.b16 %v248
  %v762 = vunpack.c.l.b16 %v249
  %v763 = vunpack.c.l.b16 %v250
  %v764 = vunpack.c.l.b16 %v251
  %v765 = vunpack.c.l.b16 %v252
  %v766 = vunpack.c.l.b16 %v253
  %v767 = vunpack.c.l.b16 %v254
  %v768 = vunpack.c.l.b16 %v255
  %v769 = vunpack.c.l.b16 %v256
  %v770 = vunpack.c.l.b16 %v257
  %v771 = vunpack.c.l.b16 %v258
  %v772 = vunpack.c.l.b16 %v259
  %v773 = vunpack.c.l.b16 %v260
  %v774 = vunpack.c.l.b16 %v261
  %v775 = vunpack.c.l.b16 %v262
  %v776 = vunpack.c.l.b16 %v263
  %v777 = vunpack.c.l.b16 %v264
  %v778 = vunpack.c.l.b16 %v265
  %v779 = vunpack.c.l.b16 %v266
  %v780 = vunpack.c.l.b16 %v267
  %v781 = vpack.c.b16 %v526, %v525
  %v782 = vpack.c.b16 %v528, %v527
  %v783 = vpack.c.b16 %v530, %v529
  %v784 = vpack.c.b16 %v532, %v531
  %v785 = vpack.c.b16 %v534, %v533
  %v786 = vpack.c.b16 %v536, %v535
  %v787 = vpack.c.b16 %v538, %v537
  %v788 = vpack.c.b16 %v540, %v539
  %v789 = vpack.c.b16 %v542, %v541
  %v790 = vpack.c.b16 %v544, %v543
  %v791 = vpack.c.b16 %v546, %v545
  %v792 = vpack.c.b16 %v548, %v547
  %v793 = vpack.c.b16 %v550, %v549
  %v794 = vpack.c.b16 %v552, %v551
  %v795 = vpack.c.b16 %v554, %v553
  %v796 = vpack.c.b16 %v556, %v555
  %v797 = vpack.c.b16 %v558, %v557
  %v798 = vpack.c.b16 %v560, %v559
  %v799 = vpack.c.b16 %v562, %v561
  %v800 = vpack.c.b16 %v564, %v563
  %v801 = vpack.c.b16 %v566, %v565
  %v802 = vpack.c.b16 %v568, %v567
  %v803 = vpack.c.b16 %v570, %v569
  %v804 = vpack.c.b16 %v572, %v571
  %v805 = vpack.c.b16 %v574, %v573
  %v806 = vpack.c.b16 %v576, %v575
  %v807 = vpack.c.b16 %v578, %v577
  %v808 = vpack.c.b16 %v580, %v579
  %v809 = vpack.c.b16 %v582, %v581
  %v810 = vpack.c.b16 %v584, %v583
  %v811 = vpack.c.b16 %v586, %v585
  %v812 = vpack.c.b16 %v588, %v587
  %v813 = vpack.c.b16 %v590, %v589
  %v814 = vpack.c.b16 %v592, %v591
  %v815 = vpack.c.b16 %v594, %v593
  %v816 = vpack.c.b16 %v596, %v595
  %v817 = vpack.c.b16 %v598, %v597
  %v818 = vpack.c.b16 %v600, %v599
  %v819 = vpack.c.b16 %v602, %v601
  %v820 = vpack.c.b16 %v604, %v603
  %v821 = vpack.c.b16 %v606, %v605
  %v822 = vpack.c.b16 %v608, %v607
  %v823 = vpack.c.b16 %v610, %v609
  %v824 = vpack.c.b16 %v612, %v611
  %v825 = vpack.c.b16 %v614, %v613
  %v826 = vpack.c.b16 %v616, %v615
  %v827 = vpack.c.b16 %v618, %v617
  %v828 = vpack.c.b16 %v620, %v619
  %v829 = vpack.c.b16 %v622, %v621
  %v830 = vpack.c.b16 %v624, %v623
  %v831 = vpack.c.b16 %v626, %v625
  %v832 = vpack.c.b16 %v628, %v627
  %v833 = vpack.c.b16 %v630, %v629
  %v834 = vpack.c.b16 %v632, %v631
  %v835 = vpack.c.b16 %v634, %v633
  %v836 = vpack.c.b16 %v636, %v635
  %v837 = vpack.c.b16 %v638, %v637
  %v838 = vpack.c.b16 %v640, %v639
  %v839 = vpack.c.b16 %v642, %v641
  %v840 = vpack.c.b16 %v644, %v643
  %v841 = vpack.c.b16 %v646, %v645
  %v842 = vpack.c.b16 %v648, %v647
  %v843 = vpack.c.b16 %v650, %v649
  %v844 = vpack.c.b16 %v652, %v651
  %v845 = vpack.c.b16 %v654, %v653
  %v846 = vpack.c.b16 %v656, %v655
  %v847 = vpack.c.b16 %v658, %v657
  %v848 = vpack.c.b16 %v660, %v659
  %v849 = vpack.c.b16 %v662, %v661
  %v850 = vpack.c.b16 %v664, %v663
  %v851 = vpack.c.b16 %v666, %v665
  %v852 = vpack.c.b16 %v668, %v667
  %v853 = vpack.c.b16 %v670, %v669
  %v854 = vpack.c.b16 %v672, %v671
  %v855 = vpack.c.b16 %v674, %v673
  %v856 = vpack.c.b16 %v676, %v675
  %v857 = vpack.c.b16 %v678, %v677
  %v858 = vpack.c.b16 %v680, %v679
  %v859 = vpack.c.b16 %v682, %v681
  %v860 = vpack.c.b16 %v684, %v683
  %v861 = vpack.c.b16 %v686, %v685
  %v862 = vpack.c.b16 %v688, %v687
  %v863 = vpack.c.b16 %v690, %v689
  %v864 = vpack.c.b16 %v692, %v691
  %v865 = vpack.c.b16 %v694, %v693
  %v866 = vpack.c.b16 %v696, %v695
  %v867 = vpack.c.b16 %v698, %v697
  %v868 = vpack.c.b16 %v700, %v699
  %v869 = vpack.c.b16 %v702, %v701
  %v870 = vpack.c.b16 %v704, %v703
  %v871 = vpack.c.b16 %v706, %v705
  %v872 = vpack.c.b16 %v708, %v707
  %v873 = vpack.c.b16 %v710, %v709
  %v874 = vpack.c.b16 %v712, %v711
  %v875 = vpack.c.b16 %v714, %v713
  %v876 = vpack.c.b16 %v716, %v715
  %v877 = vpack.c.b16 %v718, %v717
  %v878 = vpack.c.b16 %v720, %v719
  %v879 = vpack.c.b16 %v722, %v721
  %v880 = vpack.c.b16 %v724, %v723
  %v881 = vpack.c.b16 %v726, %v725
  %v882 = vpack.c.b16 %v728, %v727
  %v883 = vpack.c.b16 %v730, %v729
  %v884 = vpack.c.b16 %v732, %v731
  %v885 = vpack.c.b16 %v734, %v733
  %v886 = vpack.c.b16 %v736, %v735
  %v887 = vpack.c.b16 %v738, %v737
  %v888 = vpack.c.b16 %v740, %v739
  %v889 = vpack.c.b16 %v742, %v741
  %v890 = vpack.c.b16 %v744, %v743
  %v891 = vpack.c.b16 %v746, %v745
  %v892 = vpack.c.b16 %v748, %v747
  %v893 = vpack.c.b16 %v750, %v749
  %v894 = vpack.c.b16 %v752, %v751
  %v895 = vpack.c.b16 %v754, %v753
  %v896 = vpack.c.b16 %v756, %v755
  %v897 = vpack.c.b16 %v758, %v757
  %v898 = vpack.c.b16 %v760, %v759
  %v899 = vpack.c.b16 %v762, %v761
  %v900 = vpack.c.b16 %v764, %v763
  %v901 = vpack.c.b16 %v766, %v765
  %v902 = vpack.c.b16 %v768, %v767
  %v903 = vpack.c.b16 %v770, %v769
  %v904 = vpack.c.b16 %v772, %v771
  %v905 = vpack.c.b16 %v774, %v773
  %v906 = vpack.c.b16 %v776, %v775
  %v907 = vpack.c.b16 %v778, %v777
  %v908 = vpack.c.b16 %v780, %v779
  %vm909 = vcmask 64512
  %v911 = vsel %vm909, %v781, 0
  %v914 = vsel %vm909, %v782, 0
  %v917 = vsel %vm909, %v783, 0
  %v920 = vsel %vm909, %v784, 0
  %v923 = vsel %vm909, %v785, 0
  %v926 = vsel %vm909, %v786, 0
  %v929 = vsel %vm909, %v787, 0
  %v932 = vsel %vm909, %v788, 0
  %v935 = vsel %vm909, %v789, 0
  %v938 = vsel %vm909, %v790, 0
  %v941 = vsel %vm909, %v791, 0
  %v944 = vsel %vm909, %v792, 0
  %v947 = vsel %vm909, %v793, 0
  %v950 = vsel %vm909, %v794, 0
  %v953 = vsel %vm909, %v795, 0
  %v956 = vsel %vm909, %v796, 0
  %v959 = vsel %vm909, %v797, 0
  %v962 = vsel %vm909, %v798, 0
  %v965 = vsel %vm909, %v799, 0
  %v968 = vsel %vm909, %v800, 0
  %v971 = vsel %vm909, %v801, 0
  %v974 = vsel %vm909, %v802, 0
  %v977 = vsel %vm909, %v803, 0
  %v980 = vsel %vm909, %v804, 0
  %v983 = vsel %vm909, %v805, 0
  %v986 = vsel %vm909, %v806, 0
  %v989 = vsel %vm909, %v807, 0
  %v992 = vsel %vm909, %v808, 0
  %v995 = vsel %vm909, %v809, 0
  %v998 = vsel %vm909, %v810, 0
  %v1001 = vsel %vm909, %v811, 0
  %v1004 = vsel %vm909, %v812, 0
  %v1007 = vsel %vm909, %v813, 0
  %v1010 = vsel %vm909, %v814, 0
  %v1013 = vsel %vm909, %v815, 0
  %v1016 = vsel %vm909, %v816, 0
  %v1019 = vsel %vm909, %v817, 0
  %v1022 = vsel %vm909, %v818, 0
  %v1025 = vsel %vm909, %v819, 0
  %v1028 = vsel %vm909, %v820, 0
  %v1031 = vsel %vm909, %v821, 0
  %v1034 = vsel %vm909, %v822, 0
  %v1037 = vsel %vm909, %v823, 0
  %v1040 = vsel %vm909, %v824, 0
  %v1043 = vsel %vm909, %v825, 0
  %v1046 = vsel %vm909, %v826, 0
  %v1049 = vsel %vm909, %v827, 0
  %v1052 = vsel %vm909, %v828, 0
  %v1055 = vsel %vm909, %v829, 0
  %v1058 = vsel %vm909, %v830, 0
  %v1061 = vsel %vm909, %v831, 0
  %v1064 = vsel %vm909, %v832, 0
  %v1067 = vsel %vm909, %v833, 0
  %v1070 = vsel %vm909, %v834, 0
  %v1073 = vsel %vm909, %v835, 0
  %v1076 = vsel %vm909, %v836, 0
  %v1079 = vsel %vm909, %v837, 0
  %v1082 = vsel %vm909, %v838, 0
  %v1085 = vsel %vm909, %v839, 0
  %v1088 = vsel %vm909, %v840, 0
  %v1091 = vsel %vm909, %v841, 0
  %v1094 = vsel %vm909, %v842, 0
  %v1097 = vsel %vm909, %v843, 0
  %v1100 = vsel %vm909, %v844, 0
  %v1103 = vsel %vm909, %v845, 0
  %v1106 = vsel %vm909, %v846, 0
  %v1109 = vsel %vm909, %v847, 0
  %v1112 = vsel %vm909, %v848, 0
  %v1115 = vsel %vm909, %v849, 0
  %v1118 = vsel %vm909, %v850, 0
  %v1121 = vsel %vm909, %v851, 0
  %v1124 = vsel %vm909, %v852, 0
  %v1127 = vsel %vm909, %v853, 0
  %v1130 = vsel %vm909, %v854, 0
  %v1133 = vsel %vm909, %v855, 0
  %v1136 = vsel %vm909, %v856, 0
  %v1139 = vsel %vm909, %v857, 0
  %v1142 = vsel %vm909, %v858, 0
  %v1145 = vsel %vm909, %v859, 0
  %v1148 = vsel %vm909, %v860, 0
  %v1151 = vsel %vm909, %v861, 0
  %v1154 = vsel %vm909, %v862, 0
  %v1157 = vsel %vm909, %v863, 0
  %v1160 = vsel %vm909, %v864, 0
  %v1163 = vsel %vm909, %v865, 0
  %v1166 = vsel %vm909, %v866, 0
  %v1169 = vsel %vm909, %v867, 0
  %v1172 = vsel %vm909, %v868, 0
  %v1175 = vsel %vm909, %v869, 0
  %v1178 = vsel %vm909, %v870, 0
  %v1181 = vsel %vm909, %v871, 0
  %v1184 = vsel %vm909, %v872, 0
  %v1187 = vsel %vm909, %v873, 0
  %v1190 = vsel %vm909, %v874, 0
  %v1193 = vsel %vm909, %v875, 0
  %v1196 = vsel %vm909, %v876, 0
  %v1199 = vsel %vm909, %v877, 0
  %v1202 = vsel %vm909, %v878, 0
  %v1205 = vsel %vm909, %v879, 0
  %v1208 = vsel %vm909, %v880, 0
  %v1211 = vsel %vm909, %v881, 0
  %v1214 = vsel %vm909, %v882, 0
  %v1217 = vsel %vm909, %v883, 0
  %v1220 = vsel %vm909, %v884, 0
  %v1223 = vsel %vm909, %v885, 0
  %v1226 = vsel %vm909, %v886, 0
  %v1229 = vsel %vm909, %v887, 0
  %v1232 = vsel %vm909, %v888, 0
  %v1235 = vsel %vm909, %v889, 0
  %v1238 = vsel %vm909, %v890, 0
  %v1241 = vsel %vm909, %v891, 0
  %v1244 = vsel %vm909, %v892, 0
  %v1247 = vsel %vm909, %v893, 0
  %v1250 = vsel %vm909, %v894, 0
  %v1253 = vsel %vm909, %v895, 0
  %v1256 = vsel %vm909, %v896, 0
  %v1259 = vsel %vm909, %v897, 0
  %v1262 = vsel %vm909, %v898, 0
  %v1265 = vsel %vm909, %v899, 0
  %v1268 = vsel %vm909, %v900, 0
  %v1271 = vsel %vm909, %v901, 0
  %v1274 = vsel %vm909, %v902, 0
  %v1277 = vsel %vm909, %v903, 0
  %v1280 = vsel %vm909, %v904, 0
  %v1283 = vsel %vm909, %v905, 0
  %v1286 = vsel %vm909, %v906, 0
  %v1289 = vsel %vm909, %v907, 0
  %v1292 = vsel %vm909, %v908, 0
  %vm1294 = vcmask 1043456
  %v1296 = vsel %vm1294, %v268, 0
  %1298 = vmatprep.subr.bf16.mxu0 0
  %1299 = vmatpush1.bf16.msra.mxu0 %v1296
  %1300 = vmatprep.subr.bf16.mxu0 0
  %1301 = vmatpush1.bf16.msra.mxu0 0
  %1302 = vmatprep.subr.bf16.mxu0 0
  %1303 = vmatpush1.bf16.msra.mxu0 0
  %1304 = vmatprep.subr.bf16.mxu0 0
  %1305 = vmatpush1.bf16.msra.mxu0 0
  %1306 = vmatprep.subr.bf16.mxu0 0
  %1307 = vmatpush1.bf16.msra.mxu0 0
  %1308 = vmatprep.subr.bf16.mxu0 0
  %1309 = vmatpush1.bf16.msra.mxu0 0
  %1310 = vmatprep.subr.bf16.mxu0 0
  %1311 = vmatpush1.bf16.msra.mxu0 0
  %1312 = vmatprep.subr.bf16.mxu0 0
  %1313 = vmatpush1.bf16.msra.mxu0 0
  %1314 = vmatprep.subr.bf16.mxu0 0
  %1315 = vmatpush1.bf16.msra.mxu0 0
  %1316 = vmatprep.subr.bf16.mxu0 0
  %1317 = vmatpush1.bf16.msra.mxu0 0
  %1318 = vmatprep.subr.bf16.mxu0 0
  %1319 = vmatpush1.bf16.msra.mxu0 0
  %1320 = vmatprep.subr.bf16.mxu0 0
  %1321 = vmatpush1.bf16.msra.mxu0 0
  %1322 = vmatprep.subr.bf16.mxu0 0
  %1323 = vmatpush1.bf16.msra.mxu0 0
  %1324 = vmatprep.subr.bf16.mxu0 0
  %1325 = vmatpush1.bf16.msra.mxu0 0
  %1326 = vmatprep.subr.bf16.mxu0 0
  %1327 = vmatpush1.bf16.msra.mxu0 0
  %1328 = vmatprep.subr.bf16.mxu0 0
  %1329 = vmatpush1.bf16.msra.mxu0 0
  %1330 = vmatprep.mubr.bf16.mxu0 0
  %1331 = vmatmul.mubr.bf16.gmra.mrb[0].mxu0 %v911
  %v1332 = vpop.f32.mrb[0].mxu0
  %v1333 = vadd.f32 0.0, %v1332
  %v1334 = vpop.f32.mrb[0].mxu0
  %v1335 = vpop.f32.mrb[0].mxu0
  %v1336 = vadd.f32 0.0, %v1335
  %v1337 = vpop.f32.mrb[0].mxu0
  %1338 = vmatprep.mubr.bf16.mxu0 0
  %1339 = vmatmul.mubr.bf16.gmra.mrb[0].mxu0 %v914
  %v1340 = vpop.f32.mrb[0].mxu0
  %v1341 = vadd.f32 0.0, %v1340
  %v1342 = vpop.f32.mrb[0].mxu0
  %v1343 = vpop.f32.mrb[0].mxu0
  %v1344 = vadd.f32 0.0, %v1343
  %v1345 = vpop.f32.mrb[0].mxu0
  %1346 = vmatprep.mubr.bf16.mxu0 0
  %1347 = vmatmul.mubr.bf16.gmra.mrb[0].mxu0 %v917
  %v1348 = vpop.f32.mrb[0].mxu0
  %v1349 = vadd.f32 0.0, %v1348
  %v1350 = vpop.f32.mrb[0].mxu0
  %v1351 = vpop.f32.mrb[0].mxu0
  %v1352 = vadd.f32 0.0, %v1351
  %v1353 = vpop.f32.mrb[0].mxu0
  %1354 = vmatprep.mubr.bf16.mxu0 0
  %1355 = vmatmul.mubr.bf16.gmra.mrb[0].mxu0 %v920
  %v1356 = vpop.f32.mrb[0].mxu0
  %v1357 = vadd.f32 0.0, %v1356
  %v1358 = vpop.f32.mrb[0].mxu0
  %v1359 = vpop.f32.mrb[0].mxu0
  %v1360 = vadd.f32 0.0, %v1359
  %v1361 = vpop.f32.mrb[0].mxu0
  %1362 = vmatprep.mubr.bf16.mxu0 0
  %1363 = vmatmul.mubr.bf16.gmra.mrb[0].mxu0 %v923
  %v1364 = vpop.f32.mrb[0].mxu0
  %v1365 = vadd.f32 0.0, %v1364
  %v1366 = vpop.f32.mrb[0].mxu0
  %v1367 = vpop.f32.mrb[0].mxu0
  %v1368 = vadd.f32 0.0, %v1367
  %v1369 = vpop.f32.mrb[0].mxu0
  %1370 = vmatprep.mubr.bf16.mxu0 0
  %1371 = vmatmul.mubr.bf16.gmra.mrb[0].mxu0 %v926
  %v1372 = vpop.f32.mrb[0].mxu0
  %v1373 = vadd.f32 0.0, %v1372
  %v1374 = vpop.f32.mrb[0].mxu0
  %v1375 = vpop.f32.mrb[0].mxu0
  %v1376 = vadd.f32 0.0, %v1375
  %v1377 = vpop.f32.mrb[0].mxu0
  %1378 = vmatprep.mubr.bf16.mxu0 0
  %1379 = vmatmul.mubr.bf16.gmra.mrb[0].mxu0 %v929
  %v1380 = vpop.f32.mrb[0].mxu0
  %v1381 = vadd.f32 0.0, %v1380
  %v1382 = vpop.f32.mrb[0].mxu0
  %v1383 = vpop.f32.mrb[0].mxu0
  %v1384 = vadd.f32 0.0, %v1383
  %v1385 = vpop.f32.mrb[0].mxu0
  %1386 = vmatprep.mubr.bf16.mxu0 0
  %1387 = vmatmul.mubr.bf16.gmra.mrb[0].mxu0 %v932
  %v1388 = vpop.f32.mrb[0].mxu0
  %v1389 = vadd.f32 0.0, %v1388
  %v1390 = vpop.f32.mrb[0].mxu0
  %v1391 = vpop.f32.mrb[0].mxu0
  %v1392 = vadd.f32 0.0, %v1391
  %v1393 = vpop.f32.mrb[0].mxu0
  %1394 = vmatprep.mubr.bf16.mxu0 0
  %1395 = vmatmul.mubr.bf16.gmra.mrb[0].mxu0 %v935
  %v1396 = vpop.f32.mrb[0].mxu0
  %v1397 = vadd.f32 0.0, %v1396
  %v1398 = vpop.f32.mrb[0].mxu0
  %v1399 = vpop.f32.mrb[0].mxu0
  %v1400 = vadd.f32 0.0, %v1399
  %v1401 = vpop.f32.mrb[0].mxu0
  %1402 = vmatprep.mubr.bf16.mxu0 0
  %1403 = vmatmul.mubr.bf16.gmra.mrb[0].mxu0 %v938
  %v1404 = vpop.f32.mrb[0].mxu0
  %v1405 = vadd.f32 0.0, %v1404
  %v1406 = vpop.f32.mrb[0].mxu0
  %v1407 = vpop.f32.mrb[0].mxu0
  %v1408 = vadd.f32 0.0, %v1407
  %v1409 = vpop.f32.mrb[0].mxu0
  %1410 = vmatprep.mubr.bf16.mxu0 0
  %1411 = vmatmul.mubr.bf16.gmra.mrb[0].mxu0 %v941
  %v1412 = vpop.f32.mrb[0].mxu0
  %v1413 = vadd.f32 0.0, %v1412
  %v1414 = vpop.f32.mrb[0].mxu0
  %v1415 = vpop.f32.mrb[0].mxu0
  %v1416 = vadd.f32 0.0, %v1415
  %v1417 = vpop.f32.mrb[0].mxu0
  %1418 = vmatprep.mubr.bf16.mxu0 0
  %1419 = vmatmul.mubr.bf16.gmra.mrb[0].mxu0 %v944
  %v1420 = vpop.f32.mrb[0].mxu0
  %v1421 = vadd.f32 0.0, %v1420
  %v1422 = vpop.f32.mrb[0].mxu0
  %v1423 = vpop.f32.mrb[0].mxu0
  %v1424 = vadd.f32 0.0, %v1423
  %v1425 = vpop.f32.mrb[0].mxu0
  %1426 = vmatprep.mubr.bf16.mxu0 0
  %1427 = vmatmul.mubr.bf16.gmra.mrb[0].mxu0 %v947
  %v1428 = vpop.f32.mrb[0].mxu0
  %v1429 = vadd.f32 0.0, %v1428
  %v1430 = vpop.f32.mrb[0].mxu0
  %v1431 = vpop.f32.mrb[0].mxu0
  %v1432 = vadd.f32 0.0, %v1431
  %v1433 = vpop.f32.mrb[0].mxu0
  %1434 = vmatprep.mubr.bf16.mxu0 0
  %1435 = vmatmul.mubr.bf16.gmra.mrb[0].mxu0 %v950
  %v1436 = vpop.f32.mrb[0].mxu0
  %v1437 = vadd.f32 0.0, %v1436
  %v1438 = vpop.f32.mrb[0].mxu0
  %v1439 = vpop.f32.mrb[0].mxu0
  %v1440 = vadd.f32 0.0, %v1439
  %v1441 = vpop.f32.mrb[0].mxu0
  %1442 = vmatprep.mubr.bf16.mxu0 0
  %1443 = vmatmul.mubr.bf16.gmra.mrb[0].mxu0 %v953
  %v1444 = vpop.f32.mrb[0].mxu0
  %v1445 = vadd.f32 0.0, %v1444
  %v1446 = vpop.f32.mrb[0].mxu0
  %v1447 = vpop.f32.mrb[0].mxu0
  %v1448 = vadd.f32 0.0, %v1447
  %v1449 = vpop.f32.mrb[0].mxu0
  %1450 = vmatprep.mubr.bf16.mxu0 0
  %1451 = vmatmul.mubr.bf16.gmra.mrb[0].mxu0 %v956
  %v1452 = vpop.f32.mrb[0].mxu0
  %v1453 = vadd.f32 0.0, %v1452
  %v1454 = vpop.f32.mrb[0].mxu0
  %v1455 = vpop.f32.mrb[0].mxu0
  %v1456 = vadd.f32 0.0, %v1455
  %v1457 = vpop.f32.mrb[0].mxu0
  %1458 = vmatprep.mubr.bf16.mxu0 0
  %1459 = vmatmul.mubr.bf16.gmra.mrb[0].mxu0 %v959
  %v1460 = vpop.f32.mrb[0].mxu0
  %v1461 = vadd.f32 0.0, %v1460
  %v1462 = vpop.f32.mrb[0].mxu0
  %v1463 = vpop.f32.mrb[0].mxu0
  %v1464 = vadd.f32 0.0, %v1463
  %v1465 = vpop.f32.mrb[0].mxu0
  %1466 = vmatprep.mubr.bf16.mxu0 0
  %1467 = vmatmul.mubr.bf16.gmra.mrb[0].mxu0 %v962
  %v1468 = vpop.f32.mrb[0].mxu0
  %v1469 = vadd.f32 0.0, %v1468
  %v1470 = vpop.f32.mrb[0].mxu0
  %v1471 = vpop.f32.mrb[0].mxu0
  %v1472 = vadd.f32 0.0, %v1471
  %v1473 = vpop.f32.mrb[0].mxu0
  %1474 = vmatprep.mubr.bf16.mxu0 0
  %1475 = vmatmul.mubr.bf16.gmra.mrb[0].mxu0 %v965
  %v1476 = vpop.f32.mrb[0].mxu0
  %v1477 = vadd.f32 0.0, %v1476
  %v1478 = vpop.f32.mrb[0].mxu0
  %v1479 = vpop.f32.mrb[0].mxu0
  %v1480 = vadd.f32 0.0, %v1479
  %v1481 = vpop.f32.mrb[0].mxu0
  %1482 = vmatprep.mubr.bf16.mxu0 0
  %1483 = vmatmul.mubr.bf16.gmra.mrb[0].mxu0 %v968
  %v1484 = vpop.f32.mrb[0].mxu0
  %v1485 = vadd.f32 0.0, %v1484
  %v1486 = vpop.f32.mrb[0].mxu0
  %v1487 = vpop.f32.mrb[0].mxu0
  %v1488 = vadd.f32 0.0, %v1487
  %v1489 = vpop.f32.mrb[0].mxu0
  %1490 = vmatprep.mubr.bf16.mxu0 0
  %1491 = vmatmul.mubr.bf16.gmra.mrb[0].mxu0 %v971
  %v1492 = vpop.f32.mrb[0].mxu0
  %v1493 = vadd.f32 0.0, %v1492
  %v1494 = vpop.f32.mrb[0].mxu0
  %v1495 = vpop.f32.mrb[0].mxu0
  %v1496 = vadd.f32 0.0, %v1495
  %v1497 = vpop.f32.mrb[0].mxu0
  %1498 = vmatprep.mubr.bf16.mxu0 0
  %1499 = vmatmul.mubr.bf16.gmra.mrb[0].mxu0 %v974
  %v1500 = vpop.f32.mrb[0].mxu0
  %v1501 = vadd.f32 0.0, %v1500
  %v1502 = vpop.f32.mrb[0].mxu0
  %v1503 = vpop.f32.mrb[0].mxu0
  %v1504 = vadd.f32 0.0, %v1503
  %v1505 = vpop.f32.mrb[0].mxu0
  %1506 = vmatprep.mubr.bf16.mxu0 0
  %1507 = vmatmul.mubr.bf16.gmra.mrb[0].mxu0 %v977
  %v1508 = vpop.f32.mrb[0].mxu0
  %v1509 = vadd.f32 0.0, %v1508
  %v1510 = vpop.f32.mrb[0].mxu0
  %v1511 = vpop.f32.mrb[0].mxu0
  %v1512 = vadd.f32 0.0, %v1511
  %v1513 = vpop.f32.mrb[0].mxu0
  %1514 = vmatprep.mubr.bf16.mxu0 0
  %1515 = vmatmul.mubr.bf16.gmra.mrb[0].mxu0 %v980
  %v1516 = vpop.f32.mrb[0].mxu0
  %v1517 = vadd.f32 0.0, %v1516
  %v1518 = vpop.f32.mrb[0].mxu0
  %v1519 = vpop.f32.mrb[0].mxu0
  %v1520 = vadd.f32 0.0, %v1519
  %v1521 = vpop.f32.mrb[0].mxu0
  %1522 = vmatprep.mubr.bf16.mxu0 0
  %1523 = vmatmul.mubr.bf16.gmra.mrb[0].mxu0 %v983
  %v1524 = vpop.f32.mrb[0].mxu0
  %v1525 = vadd.f32 0.0, %v1524
  %v1526 = vpop.f32.mrb[0].mxu0
  %v1527 = vpop.f32.mrb[0].mxu0
  %v1528 = vadd.f32 0.0, %v1527
  %v1529 = vpop.f32.mrb[0].mxu0
  %1530 = vmatprep.mubr.bf16.mxu0 0
  %1531 = vmatmul.mubr.bf16.gmra.mrb[0].mxu0 %v986
  %v1532 = vpop.f32.mrb[0].mxu0
  %v1533 = vadd.f32 0.0, %v1532
  %v1534 = vpop.f32.mrb[0].mxu0
  %v1535 = vpop.f32.mrb[0].mxu0
  %v1536 = vadd.f32 0.0, %v1535
  %v1537 = vpop.f32.mrb[0].mxu0
  %1538 = vmatprep.mubr.bf16.mxu0 0
  %1539 = vmatmul.mubr.bf16.gmra.mrb[0].mxu0 %v989
  %v1540 = vpop.f32.mrb[0].mxu0
  %v1541 = vadd.f32 0.0, %v1540
  %v1542 = vpop.f32.mrb[0].mxu0
  %v1543 = vpop.f32.mrb[0].mxu0
  %v1544 = vadd.f32 0.0, %v1543
  %v1545 = vpop.f32.mrb[0].mxu0
  %1546 = vmatprep.mubr.bf16.mxu0 0
  %1547 = vmatmul.mubr.bf16.gmra.mrb[0].mxu0 %v992
  %v1548 = vpop.f32.mrb[0].mxu0
  %v1549 = vadd.f32 0.0, %v1548
  %v1550 = vpop.f32.mrb[0].mxu0
  %v1551 = vpop.f32.mrb[0].mxu0
  %v1552 = vadd.f32 0.0, %v1551
  %v1553 = vpop.f32.mrb[0].mxu0
  %1554 = vmatprep.mubr.bf16.mxu0 0
  %1555 = vmatmul.mubr.bf16.gmra.mrb[0].mxu0 %v995
  %v1556 = vpop.f32.mrb[0].mxu0
  %v1557 = vadd.f32 0.0, %v1556
  %v1558 = vpop.f32.mrb[0].mxu0
  %v1559 = vpop.f32.mrb[0].mxu0
  %v1560 = vadd.f32 0.0, %v1559
  %v1561 = vpop.f32.mrb[0].mxu0
  %1562 = vmatprep.mubr.bf16.mxu0 0
  %1563 = vmatmul.mubr.bf16.gmra.mrb[0].mxu0 %v998
  %v1564 = vpop.f32.mrb[0].mxu0
  %v1565 = vadd.f32 0.0, %v1564
  %v1566 = vpop.f32.mrb[0].mxu0
  %v1567 = vpop.f32.mrb[0].mxu0
  %v1568 = vadd.f32 0.0, %v1567
  %v1569 = vpop.f32.mrb[0].mxu0
  %1570 = vmatprep.mubr.bf16.mxu0 0
  %1571 = vmatmul.mubr.bf16.gmra.mrb[0].mxu0 %v1001
  %v1572 = vpop.f32.mrb[0].mxu0
  %v1573 = vadd.f32 0.0, %v1572
  %v1574 = vpop.f32.mrb[0].mxu0
  %v1575 = vpop.f32.mrb[0].mxu0
  %v1576 = vadd.f32 0.0, %v1575
  %v1577 = vpop.f32.mrb[0].mxu0
  %1578 = vmatprep.mubr.bf16.mxu0 0
  %1579 = vmatmul.mubr.bf16.gmra.mrb[0].mxu0 %v1004
  %v1580 = vpop.f32.mrb[0].mxu0
  %v1581 = vadd.f32 0.0, %v1580
  %v1582 = vpop.f32.mrb[0].mxu0
  %v1583 = vpop.f32.mrb[0].mxu0
  %v1584 = vadd.f32 0.0, %v1583
  %v1585 = vpop.f32.mrb[0].mxu0
  %1586 = vmatprep.mubr.bf16.mxu0 0
  %1587 = vmatmul.mubr.bf16.gmra.mrb[0].mxu0 %v1007
  %v1588 = vpop.f32.mrb[0].mxu0
  %v1589 = vadd.f32 0.0, %v1588
  %v1590 = vpop.f32.mrb[0].mxu0
  %v1591 = vpop.f32.mrb[0].mxu0
  %v1592 = vadd.f32 0.0, %v1591
  %v1593 = vpop.f32.mrb[0].mxu0
  %1594 = vmatprep.mubr.bf16.mxu0 0
  %1595 = vmatmul.mubr.bf16.gmra.mrb[0].mxu0 %v1010
  %v1596 = vpop.f32.mrb[0].mxu0
  %v1597 = vadd.f32 0.0, %v1596
  %v1598 = vpop.f32.mrb[0].mxu0
  %v1599 = vpop.f32.mrb[0].mxu0
  %v1600 = vadd.f32 0.0, %v1599
  %v1601 = vpop.f32.mrb[0].mxu0
  %1602 = vmatprep.mubr.bf16.mxu0 0
  %1603 = vmatmul.mubr.bf16.gmra.mrb[0].mxu0 %v1013
  %v1604 = vpop.f32.mrb[0].mxu0
  %v1605 = vadd.f32 0.0, %v1604
  %v1606 = vpop.f32.mrb[0].mxu0
  %v1607 = vpop.f32.mrb[0].mxu0
  %v1608 = vadd.f32 0.0, %v1607
  %v1609 = vpop.f32.mrb[0].mxu0
  %1610 = vmatprep.mubr.bf16.mxu0 0
  %1611 = vmatmul.mubr.bf16.gmra.mrb[0].mxu0 %v1016
  %v1612 = vpop.f32.mrb[0].mxu0
  %v1613 = vadd.f32 0.0, %v1612
  %v1614 = vpop.f32.mrb[0].mxu0
  %v1615 = vpop.f32.mrb[0].mxu0
  %v1616 = vadd.f32 0.0, %v1615
  %v1617 = vpop.f32.mrb[0].mxu0
  %1618 = vmatprep.mubr.bf16.mxu0 0
  %1619 = vmatmul.mubr.bf16.gmra.mrb[0].mxu0 %v1019
  %v1620 = vpop.f32.mrb[0].mxu0
  %v1621 = vadd.f32 0.0, %v1620
  %v1622 = vpop.f32.mrb[0].mxu0
  %v1623 = vpop.f32.mrb[0].mxu0
  %v1624 = vadd.f32 0.0, %v1623
  %v1625 = vpop.f32.mrb[0].mxu0
  %1626 = vmatprep.mubr.bf16.mxu0 0
  %1627 = vmatmul.mubr.bf16.gmra.mrb[0].mxu0 %v1022
  %v1628 = vpop.f32.mrb[0].mxu0
  %v1629 = vadd.f32 0.0, %v1628
  %v1630 = vpop.f32.mrb[0].mxu0
  %v1631 = vpop.f32.mrb[0].mxu0
  %v1632 = vadd.f32 0.0, %v1631
  %v1633 = vpop.f32.mrb[0].mxu0
  %1634 = vmatprep.mubr.bf16.mxu0 0
  %1635 = vmatmul.mubr.bf16.gmra.mrb[0].mxu0 %v1025
  %v1636 = vpop.f32.mrb[0].mxu0
  %v1637 = vadd.f32 0.0, %v1636
  %v1638 = vpop.f32.mrb[0].mxu0
  %v1639 = vpop.f32.mrb[0].mxu0
  %v1640 = vadd.f32 0.0, %v1639
  %v1641 = vpop.f32.mrb[0].mxu0
  %1642 = vmatprep.mubr.bf16.mxu0 0
  %1643 = vmatmul.mubr.bf16.gmra.mrb[0].mxu0 %v1028
  %v1644 = vpop.f32.mrb[0].mxu0
  %v1645 = vadd.f32 0.0, %v1644
  %v1646 = vpop.f32.mrb[0].mxu0
  %v1647 = vpop.f32.mrb[0].mxu0
  %v1648 = vadd.f32 0.0, %v1647
  %v1649 = vpop.f32.mrb[0].mxu0
  %1650 = vmatprep.mubr.bf16.mxu0 0
  %1651 = vmatmul.mubr.bf16.gmra.mrb[0].mxu0 %v1031
  %v1652 = vpop.f32.mrb[0].mxu0
  %v1653 = vadd.f32 0.0, %v1652
  %v1654 = vpop.f32.mrb[0].mxu0
  %v1655 = vpop.f32.mrb[0].mxu0
  %v1656 = vadd.f32 0.0, %v1655
  %v1657 = vpop.f32.mrb[0].mxu0
  %1658 = vmatprep.mubr.bf16.mxu0 0
  %1659 = vmatmul.mubr.bf16.gmra.mrb[0].mxu0 %v1034
  %v1660 = vpop.f32.mrb[0].mxu0
  %v1661 = vadd.f32 0.0, %v1660
  %v1662 = vpop.f32.mrb[0].mxu0
  %v1663 = vpop.f32.mrb[0].mxu0
  %v1664 = vadd.f32 0.0, %v1663
  %v1665 = vpop.f32.mrb[0].mxu0
  %1666 = vmatprep.mubr.bf16.mxu0 0
  %1667 = vmatmul.mubr.bf16.gmra.mrb[0].mxu0 %v1037
  %v1668 = vpop.f32.mrb[0].mxu0
  %v1669 = vadd.f32 0.0, %v1668
  %v1670 = vpop.f32.mrb[0].mxu0
  %v1671 = vpop.f32.mrb[0].mxu0
  %v1672 = vadd.f32 0.0, %v1671
  %v1673 = vpop.f32.mrb[0].mxu0
  %1674 = vmatprep.mubr.bf16.mxu0 0
  %1675 = vmatmul.mubr.bf16.gmra.mrb[0].mxu0 %v1040
  %v1676 = vpop.f32.mrb[0].mxu0
  %v1677 = vadd.f32 0.0, %v1676
  %v1678 = vpop.f32.mrb[0].mxu0
  %v1679 = vpop.f32.mrb[0].mxu0
  %v1680 = vadd.f32 0.0, %v1679
  %v1681 = vpop.f32.mrb[0].mxu0
  %1682 = vmatprep.mubr.bf16.mxu0 0
  %1683 = vmatmul.mubr.bf16.gmra.mrb[0].mxu0 %v1043
  %v1684 = vpop.f32.mrb[0].mxu0
  %v1685 = vadd.f32 0.0, %v1684
  %v1686 = vpop.f32.mrb[0].mxu0
  %v1687 = vpop.f32.mrb[0].mxu0
  %v1688 = vadd.f32 0.0, %v1687
  %v1689 = vpop.f32.mrb[0].mxu0
  %1690 = vmatprep.mubr.bf16.mxu0 0
  %1691 = vmatmul.mubr.bf16.gmra.mrb[0].mxu0 %v1046
  %v1692 = vpop.f32.mrb[0].mxu0
  %v1693 = vadd.f32 0.0, %v1692
  %v1694 = vpop.f32.mrb[0].mxu0
  %v1695 = vpop.f32.mrb[0].mxu0
  %v1696 = vadd.f32 0.0, %v1695
  %v1697 = vpop.f32.mrb[0].mxu0
  %1698 = vmatprep.mubr.bf16.mxu0 0
  %1699 = vmatmul.mubr.bf16.gmra.mrb[0].mxu0 %v1049
  %v1700 = vpop.f32.mrb[0].mxu0
  %v1701 = vadd.f32 0.0, %v1700
  %v1702 = vpop.f32.mrb[0].mxu0
  %v1703 = vpop.f32.mrb[0].mxu0
  %v1704 = vadd.f32 0.0, %v1703
  %v1705 = vpop.f32.mrb[0].mxu0
  %1706 = vmatprep.mubr.bf16.mxu0 0
  %1707 = vmatmul.mubr.bf16.gmra.mrb[0].mxu0 %v1052
  %v1708 = vpop.f32.mrb[0].mxu0
  %v1709 = vadd.f32 0.0, %v1708
  %v1710 = vpop.f32.mrb[0].mxu0
  %v1711 = vpop.f32.mrb[0].mxu0
  %v1712 = vadd.f32 0.0, %v1711
  %v1713 = vpop.f32.mrb[0].mxu0
  %1714 = vmatprep.mubr.bf16.mxu0 0
  %1715 = vmatmul.mubr.bf16.gmra.mrb[0].mxu0 %v1055
  %v1716 = vpop.f32.mrb[0].mxu0
  %v1717 = vadd.f32 0.0, %v1716
  %v1718 = vpop.f32.mrb[0].mxu0
  %v1719 = vpop.f32.mrb[0].mxu0
  %v1720 = vadd.f32 0.0, %v1719
  %v1721 = vpop.f32.mrb[0].mxu0
  %1722 = vmatprep.mubr.bf16.mxu0 0
  %1723 = vmatmul.mubr.bf16.gmra.mrb[0].mxu0 %v1058
  %v1724 = vpop.f32.mrb[0].mxu0
  %v1725 = vadd.f32 0.0, %v1724
  %v1726 = vpop.f32.mrb[0].mxu0
  %v1727 = vpop.f32.mrb[0].mxu0
  %v1728 = vadd.f32 0.0, %v1727
  %v1729 = vpop.f32.mrb[0].mxu0
  %1730 = vmatprep.mubr.bf16.mxu0 0
  %1731 = vmatmul.mubr.bf16.gmra.mrb[0].mxu0 %v1061
  %v1732 = vpop.f32.mrb[0].mxu0
  %v1733 = vadd.f32 0.0, %v1732
  %v1734 = vpop.f32.mrb[0].mxu0
  %v1735 = vpop.f32.mrb[0].mxu0
  %v1736 = vadd.f32 0.0, %v1735
  %v1737 = vpop.f32.mrb[0].mxu0
  %1738 = vmatprep.mubr.bf16.mxu0 0
  %1739 = vmatmul.mubr.bf16.gmra.mrb[0].mxu0 %v1064
  %v1740 = vpop.f32.mrb[0].mxu0
  %v1741 = vadd.f32 0.0, %v1740
  %v1742 = vpop.f32.mrb[0].mxu0
  %v1743 = vpop.f32.mrb[0].mxu0
  %v1744 = vadd.f32 0.0, %v1743
  %v1745 = vpop.f32.mrb[0].mxu0
  %1746 = vmatprep.mubr.bf16.mxu0 0
  %1747 = vmatmul.mubr.bf16.gmra.mrb[0].mxu0 %v1067
  %v1748 = vpop.f32.mrb[0].mxu0
  %v1749 = vadd.f32 0.0, %v1748
  %v1750 = vpop.f32.mrb[0].mxu0
  %v1751 = vpop.f32.mrb[0].mxu0
  %v1752 = vadd.f32 0.0, %v1751
  %v1753 = vpop.f32.mrb[0].mxu0
  %1754 = vmatprep.mubr.bf16.mxu0 0
  %1755 = vmatmul.mubr.bf16.gmra.mrb[0].mxu0 %v1070
  %v1756 = vpop.f32.mrb[0].mxu0
  %v1757 = vadd.f32 0.0, %v1756
  %v1758 = vpop.f32.mrb[0].mxu0
  %v1759 = vpop.f32.mrb[0].mxu0
  %v1760 = vadd.f32 0.0, %v1759
  %v1761 = vpop.f32.mrb[0].mxu0
  %1762 = vmatprep.mubr.bf16.mxu0 0
  %1763 = vmatmul.mubr.bf16.gmra.mrb[0].mxu0 %v1073
  %v1764 = vpop.f32.mrb[0].mxu0
  %v1765 = vadd.f32 0.0, %v1764
  %v1766 = vpop.f32.mrb[0].mxu0
  %v1767 = vpop.f32.mrb[0].mxu0
  %v1768 = vadd.f32 0.0, %v1767
  %v1769 = vpop.f32.mrb[0].mxu0
  %1770 = vmatprep.mubr.bf16.mxu0 0
  %1771 = vmatmul.mubr.bf16.gmra.mrb[0].mxu0 %v1076
  %v1772 = vpop.f32.mrb[0].mxu0
  %v1773 = vadd.f32 0.0, %v1772
  %v1774 = vpop.f32.mrb[0].mxu0
  %v1775 = vpop.f32.mrb[0].mxu0
  %v1776 = vadd.f32 0.0, %v1775
  %v1777 = vpop.f32.mrb[0].mxu0
  %1778 = vmatprep.mubr.bf16.mxu0 0
  %1779 = vmatmul.mubr.bf16.gmra.mrb[0].mxu0 %v1079
  %v1780 = vpop.f32.mrb[0].mxu0
  %v1781 = vadd.f32 0.0, %v1780
  %v1782 = vpop.f32.mrb[0].mxu0
  %v1783 = vpop.f32.mrb[0].mxu0
  %v1784 = vadd.f32 0.0, %v1783
  %v1785 = vpop.f32.mrb[0].mxu0
  %1786 = vmatprep.mubr.bf16.mxu0 0
  %1787 = vmatmul.mubr.bf16.gmra.mrb[0].mxu0 %v1082
  %v1788 = vpop.f32.mrb[0].mxu0
  %v1789 = vadd.f32 0.0, %v1788
  %v1790 = vpop.f32.mrb[0].mxu0
  %v1791 = vpop.f32.mrb[0].mxu0
  %v1792 = vadd.f32 0.0, %v1791
  %v1793 = vpop.f32.mrb[0].mxu0
  %1794 = vmatprep.mubr.bf16.mxu0 0
  %1795 = vmatmul.mubr.bf16.gmra.mrb[0].mxu0 %v1085
  %v1796 = vpop.f32.mrb[0].mxu0
  %v1797 = vadd.f32 0.0, %v1796
  %v1798 = vpop.f32.mrb[0].mxu0
  %v1799 = vpop.f32.mrb[0].mxu0
  %v1800 = vadd.f32 0.0, %v1799
  %v1801 = vpop.f32.mrb[0].mxu0
  %1802 = vmatprep.mubr.bf16.mxu0 0
  %1803 = vmatmul.mubr.bf16.gmra.mrb[0].mxu0 %v1088
  %v1804 = vpop.f32.mrb[0].mxu0
  %v1805 = vadd.f32 0.0, %v1804
  %v1806 = vpop.f32.mrb[0].mxu0
  %v1807 = vpop.f32.mrb[0].mxu0
  %v1808 = vadd.f32 0.0, %v1807
  %v1809 = vpop.f32.mrb[0].mxu0
  %1810 = vmatprep.mubr.bf16.mxu0 0
  %1811 = vmatmul.mubr.bf16.gmra.mrb[0].mxu0 %v1091
  %v1812 = vpop.f32.mrb[0].mxu0
  %v1813 = vadd.f32 0.0, %v1812
  %v1814 = vpop.f32.mrb[0].mxu0
  %v1815 = vpop.f32.mrb[0].mxu0
  %v1816 = vadd.f32 0.0, %v1815
  %v1817 = vpop.f32.mrb[0].mxu0
  %1818 = vmatprep.mubr.bf16.mxu0 0
  %1819 = vmatmul.mubr.bf16.gmra.mrb[0].mxu0 %v1094
  %v1820 = vpop.f32.mrb[0].mxu0
  %v1821 = vadd.f32 0.0, %v1820
  %v1822 = vpop.f32.mrb[0].mxu0
  %v1823 = vpop.f32.mrb[0].mxu0
  %v1824 = vadd.f32 0.0, %v1823
  %v1825 = vpop.f32.mrb[0].mxu0
  %1826 = vmatprep.mubr.bf16.mxu0 0
  %1827 = vmatmul.mubr.bf16.gmra.mrb[0].mxu0 %v1097
  %v1828 = vpop.f32.mrb[0].mxu0
  %v1829 = vadd.f32 0.0, %v1828
  %v1830 = vpop.f32.mrb[0].mxu0
  %v1831 = vpop.f32.mrb[0].mxu0
  %v1832 = vadd.f32 0.0, %v1831
  %v1833 = vpop.f32.mrb[0].mxu0
  %1834 = vmatprep.mubr.bf16.mxu0 0
  %1835 = vmatmul.mubr.bf16.gmra.mrb[0].mxu0 %v1100
  %v1836 = vpop.f32.mrb[0].mxu0
  %v1837 = vadd.f32 0.0, %v1836
  %v1838 = vpop.f32.mrb[0].mxu0
  %v1839 = vpop.f32.mrb[0].mxu0
  %v1840 = vadd.f32 0.0, %v1839
  %v1841 = vpop.f32.mrb[0].mxu0
  %1842 = vmatprep.mubr.bf16.mxu0 0
  %1843 = vmatmul.mubr.bf16.gmra.mrb[0].mxu0 %v1103
  %v1844 = vpop.f32.mrb[0].mxu0
  %v1845 = vadd.f32 0.0, %v1844
  %v1846 = vpop.f32.mrb[0].mxu0
  %v1847 = vpop.f32.mrb[0].mxu0
  %v1848 = vadd.f32 0.0, %v1847
  %v1849 = vpop.f32.mrb[0].mxu0
  %1850 = vmatprep.mubr.bf16.mxu0 0
  %1851 = vmatmul.mubr.bf16.gmra.mrb[0].mxu0 %v1106
  %v1852 = vpop.f32.mrb[0].mxu0
  %v1853 = vadd.f32 0.0, %v1852
  %v1854 = vpop.f32.mrb[0].mxu0
  %v1855 = vpop.f32.mrb[0].mxu0
  %v1856 = vadd.f32 0.0, %v1855
  %v1857 = vpop.f32.mrb[0].mxu0
  %1858 = vmatprep.mubr.bf16.mxu0 0
  %1859 = vmatmul.mubr.bf16.gmra.mrb[0].mxu0 %v1109
  %v1860 = vpop.f32.mrb[0].mxu0
  %v1861 = vadd.f32 0.0, %v1860
  %v1862 = vpop.f32.mrb[0].mxu0
  %v1863 = vpop.f32.mrb[0].mxu0
  %v1864 = vadd.f32 0.0, %v1863
  %v1865 = vpop.f32.mrb[0].mxu0
  %1866 = vmatprep.mubr.bf16.mxu0 0
  %1867 = vmatmul.mubr.bf16.gmra.mrb[0].mxu0 %v1112
  %v1868 = vpop.f32.mrb[0].mxu0
  %v1869 = vadd.f32 0.0, %v1868
  %v1870 = vpop.f32.mrb[0].mxu0
  %v1871 = vpop.f32.mrb[0].mxu0
  %v1872 = vadd.f32 0.0, %v1871
  %v1873 = vpop.f32.mrb[0].mxu0
  %1874 = vmatprep.mubr.bf16.mxu0 0
  %1875 = vmatmul.mubr.bf16.gmra.mrb[0].mxu0 %v1115
  %v1876 = vpop.f32.mrb[0].mxu0
  %v1877 = vadd.f32 0.0, %v1876
  %v1878 = vpop.f32.mrb[0].mxu0
  %v1879 = vpop.f32.mrb[0].mxu0
  %v1880 = vadd.f32 0.0, %v1879
  %v1881 = vpop.f32.mrb[0].mxu0
  %1882 = vmatprep.mubr.bf16.mxu0 0
  %1883 = vmatmul.mubr.bf16.gmra.mrb[0].mxu0 %v1118
  %v1884 = vpop.f32.mrb[0].mxu0
  %v1885 = vadd.f32 0.0, %v1884
  %v1886 = vpop.f32.mrb[0].mxu0
  %v1887 = vpop.f32.mrb[0].mxu0
  %v1888 = vadd.f32 0.0, %v1887
  %v1889 = vpop.f32.mrb[0].mxu0
  %1890 = vmatprep.mubr.bf16.mxu0 0
  %1891 = vmatmul.mubr.bf16.gmra.mrb[0].mxu0 %v1121
  %v1892 = vpop.f32.mrb[0].mxu0
  %v1893 = vadd.f32 0.0, %v1892
  %v1894 = vpop.f32.mrb[0].mxu0
  %v1895 = vpop.f32.mrb[0].mxu0
  %v1896 = vadd.f32 0.0, %v1895
  %v1897 = vpop.f32.mrb[0].mxu0
  %1898 = vmatprep.mubr.bf16.mxu0 0
  %1899 = vmatmul.mubr.bf16.gmra.mrb[0].mxu0 %v1124
  %v1900 = vpop.f32.mrb[0].mxu0
  %v1901 = vadd.f32 0.0, %v1900
  %v1902 = vpop.f32.mrb[0].mxu0
  %v1903 = vpop.f32.mrb[0].mxu0
  %v1904 = vadd.f32 0.0, %v1903
  %v1905 = vpop.f32.mrb[0].mxu0
  %1906 = vmatprep.mubr.bf16.mxu0 0
  %1907 = vmatmul.mubr.bf16.gmra.mrb[0].mxu0 %v1127
  %v1908 = vpop.f32.mrb[0].mxu0
  %v1909 = vadd.f32 0.0, %v1908
  %v1910 = vpop.f32.mrb[0].mxu0
  %v1911 = vpop.f32.mrb[0].mxu0
  %v1912 = vadd.f32 0.0, %v1911
  %v1913 = vpop.f32.mrb[0].mxu0
  %1914 = vmatprep.mubr.bf16.mxu0 0
  %1915 = vmatmul.mubr.bf16.gmra.mrb[0].mxu0 %v1130
  %v1916 = vpop.f32.mrb[0].mxu0
  %v1917 = vadd.f32 0.0, %v1916
  %v1918 = vpop.f32.mrb[0].mxu0
  %v1919 = vpop.f32.mrb[0].mxu0
  %v1920 = vadd.f32 0.0, %v1919
  %v1921 = vpop.f32.mrb[0].mxu0
  %1922 = vmatprep.mubr.bf16.mxu0 0
  %1923 = vmatmul.mubr.bf16.gmra.mrb[0].mxu0 %v1133
  %v1924 = vpop.f32.mrb[0].mxu0
  %v1925 = vadd.f32 0.0, %v1924
  %v1926 = vpop.f32.mrb[0].mxu0
  %v1927 = vpop.f32.mrb[0].mxu0
  %v1928 = vadd.f32 0.0, %v1927
  %v1929 = vpop.f32.mrb[0].mxu0
  %1930 = vmatprep.mubr.bf16.mxu0 0
  %1931 = vmatmul.mubr.bf16.gmra.mrb[0].mxu0 %v1136
  %v1932 = vpop.f32.mrb[0].mxu0
  %v1933 = vadd.f32 0.0, %v1932
  %v1934 = vpop.f32.mrb[0].mxu0
  %v1935 = vpop.f32.mrb[0].mxu0
  %v1936 = vadd.f32 0.0, %v1935
  %v1937 = vpop.f32.mrb[0].mxu0
  %1938 = vmatprep.mubr.bf16.mxu0 0
  %1939 = vmatmul.mubr.bf16.gmra.mrb[0].mxu0 %v1139
  %v1940 = vpop.f32.mrb[0].mxu0
  %v1941 = vadd.f32 0.0, %v1940
  %v1942 = vpop.f32.mrb[0].mxu0
  %v1943 = vpop.f32.mrb[0].mxu0
  %v1944 = vadd.f32 0.0, %v1943
  %v1945 = vpop.f32.mrb[0].mxu0
  %1946 = vmatprep.mubr.bf16.mxu0 0
  %1947 = vmatmul.mubr.bf16.gmra.mrb[0].mxu0 %v1142
  %v1948 = vpop.f32.mrb[0].mxu0
  %v1949 = vadd.f32 0.0, %v1948
  %v1950 = vpop.f32.mrb[0].mxu0
  %v1951 = vpop.f32.mrb[0].mxu0
  %v1952 = vadd.f32 0.0, %v1951
  %v1953 = vpop.f32.mrb[0].mxu0
  %1954 = vmatprep.mubr.bf16.mxu0 0
  %1955 = vmatmul.mubr.bf16.gmra.mrb[0].mxu0 %v1145
  %v1956 = vpop.f32.mrb[0].mxu0
  %v1957 = vadd.f32 0.0, %v1956
  %v1958 = vpop.f32.mrb[0].mxu0
  %v1959 = vpop.f32.mrb[0].mxu0
  %v1960 = vadd.f32 0.0, %v1959
  %v1961 = vpop.f32.mrb[0].mxu0
  %1962 = vmatprep.mubr.bf16.mxu0 0
  %1963 = vmatmul.mubr.bf16.gmra.mrb[0].mxu0 %v1148
  %v1964 = vpop.f32.mrb[0].mxu0
  %v1965 = vadd.f32 0.0, %v1964
  %v1966 = vpop.f32.mrb[0].mxu0
  %v1967 = vpop.f32.mrb[0].mxu0
  %v1968 = vadd.f32 0.0, %v1967
  %v1969 = vpop.f32.mrb[0].mxu0
  %1970 = vmatprep.mubr.bf16.mxu0 0
  %1971 = vmatmul.mubr.bf16.gmra.mrb[0].mxu0 %v1151
  %v1972 = vpop.f32.mrb[0].mxu0
  %v1973 = vadd.f32 0.0, %v1972
  %v1974 = vpop.f32.mrb[0].mxu0
  %v1975 = vpop.f32.mrb[0].mxu0
  %v1976 = vadd.f32 0.0, %v1975
  %v1977 = vpop.f32.mrb[0].mxu0
  %1978 = vmatprep.mubr.bf16.mxu0 0
  %1979 = vmatmul.mubr.bf16.gmra.mrb[0].mxu0 %v1154
  %v1980 = vpop.f32.mrb[0].mxu0
  %v1981 = vadd.f32 0.0, %v1980
  %v1982 = vpop.f32.mrb[0].mxu0
  %v1983 = vpop.f32.mrb[0].mxu0
  %v1984 = vadd.f32 0.0, %v1983
  %v1985 = vpop.f32.mrb[0].mxu0
  %1986 = vmatprep.mubr.bf16.mxu0 0
  %1987 = vmatmul.mubr.bf16.gmra.mrb[0].mxu0 %v1157
  %v1988 = vpop.f32.mrb[0].mxu0
  %v1989 = vadd.f32 0.0, %v1988
  %v1990 = vpop.f32.mrb[0].mxu0
  %v1991 = vpop.f32.mrb[0].mxu0
  %v1992 = vadd.f32 0.0, %v1991
  %v1993 = vpop.f32.mrb[0].mxu0
  %1994 = vmatprep.mubr.bf16.mxu0 0
  %1995 = vmatmul.mubr.bf16.gmra.mrb[0].mxu0 %v1160
  %v1996 = vpop.f32.mrb[0].mxu0
  %v1997 = vadd.f32 0.0, %v1996
  %v1998 = vpop.f32.mrb[0].mxu0
  %v1999 = vpop.f32.mrb[0].mxu0
  %v2000 = vadd.f32 0.0, %v1999
  %v2001 = vpop.f32.mrb[0].mxu0
  %2002 = vmatprep.mubr.bf16.mxu0 0
  %2003 = vmatmul.mubr.bf16.gmra.mrb[0].mxu0 %v1163
  %v2004 = vpop.f32.mrb[0].mxu0
  %v2005 = vadd.f32 0.0, %v2004
  %v2006 = vpop.f32.mrb[0].mxu0
  %v2007 = vpop.f32.mrb[0].mxu0
  %v2008 = vadd.f32 0.0, %v2007
  %v2009 = vpop.f32.mrb[0].mxu0
  %2010 = vmatprep.mubr.bf16.mxu0 0
  %2011 = vmatmul.mubr.bf16.gmra.mrb[0].mxu0 %v1166
  %v2012 = vpop.f32.mrb[0].mxu0
  %v2013 = vadd.f32 0.0, %v2012
  %v2014 = vpop.f32.mrb[0].mxu0
  %v2015 = vpop.f32.mrb[0].mxu0
  %v2016 = vadd.f32 0.0, %v2015
  %v2017 = vpop.f32.mrb[0].mxu0
  %2018 = vmatprep.mubr.bf16.mxu0 0
  %2019 = vmatmul.mubr.bf16.gmra.mrb[0].mxu0 %v1169
  %v2020 = vpop.f32.mrb[0].mxu0
  %v2021 = vadd.f32 0.0, %v2020
  %v2022 = vpop.f32.mrb[0].mxu0
  %v2023 = vpop.f32.mrb[0].mxu0
  %v2024 = vadd.f32 0.0, %v2023
  %v2025 = vpop.f32.mrb[0].mxu0
  %2026 = vmatprep.mubr.bf16.mxu0 0
  %2027 = vmatmul.mubr.bf16.gmra.mrb[0].mxu0 %v1172
  %v2028 = vpop.f32.mrb[0].mxu0
  %v2029 = vadd.f32 0.0, %v2028
  %v2030 = vpop.f32.mrb[0].mxu0
  %v2031 = vpop.f32.mrb[0].mxu0
  %v2032 = vadd.f32 0.0, %v2031
  %v2033 = vpop.f32.mrb[0].mxu0
  %2034 = vmatprep.mubr.bf16.mxu0 0
  %2035 = vmatmul.mubr.bf16.gmra.mrb[0].mxu0 %v1175
  %v2036 = vpop.f32.mrb[0].mxu0
  %v2037 = vadd.f32 0.0, %v2036
  %v2038 = vpop.f32.mrb[0].mxu0
  %v2039 = vpop.f32.mrb[0].mxu0
  %v2040 = vadd.f32 0.0, %v2039
  %v2041 = vpop.f32.mrb[0].mxu0
  %2042 = vmatprep.mubr.bf16.mxu0 0
  %2043 = vmatmul.mubr.bf16.gmra.mrb[0].mxu0 %v1178
  %v2044 = vpop.f32.mrb[0].mxu0
  %v2045 = vadd.f32 0.0, %v2044
  %v2046 = vpop.f32.mrb[0].mxu0
  %v2047 = vpop.f32.mrb[0].mxu0
  %v2048 = vadd.f32 0.0, %v2047
  %v2049 = vpop.f32.mrb[0].mxu0
  %2050 = vmatprep.mubr.bf16.mxu0 0
  %2051 = vmatmul.mubr.bf16.gmra.mrb[0].mxu0 %v1181
  %v2052 = vpop.f32.mrb[0].mxu0
  %v2053 = vadd.f32 0.0, %v2052
  %v2054 = vpop.f32.mrb[0].mxu0
  %v2055 = vpop.f32.mrb[0].mxu0
  %v2056 = vadd.f32 0.0, %v2055
  %v2057 = vpop.f32.mrb[0].mxu0
  %2058 = vmatprep.mubr.bf16.mxu0 0
  %2059 = vmatmul.mubr.bf16.gmra.mrb[0].mxu0 %v1184
  %v2060 = vpop.f32.mrb[0].mxu0
  %v2061 = vadd.f32 0.0, %v2060
  %v2062 = vpop.f32.mrb[0].mxu0
  %v2063 = vpop.f32.mrb[0].mxu0
  %v2064 = vadd.f32 0.0, %v2063
  %v2065 = vpop.f32.mrb[0].mxu0
  %2066 = vmatprep.mubr.bf16.mxu0 0
  %2067 = vmatmul.mubr.bf16.gmra.mrb[0].mxu0 %v1187
  %v2068 = vpop.f32.mrb[0].mxu0
  %v2069 = vadd.f32 0.0, %v2068
  %v2070 = vpop.f32.mrb[0].mxu0
  %v2071 = vpop.f32.mrb[0].mxu0
  %v2072 = vadd.f32 0.0, %v2071
  %v2073 = vpop.f32.mrb[0].mxu0
  %2074 = vmatprep.mubr.bf16.mxu0 0
  %2075 = vmatmul.mubr.bf16.gmra.mrb[0].mxu0 %v1190
  %v2076 = vpop.f32.mrb[0].mxu0
  %v2077 = vadd.f32 0.0, %v2076
  %v2078 = vpop.f32.mrb[0].mxu0
  %v2079 = vpop.f32.mrb[0].mxu0
  %v2080 = vadd.f32 0.0, %v2079
  %v2081 = vpop.f32.mrb[0].mxu0
  %2082 = vmatprep.mubr.bf16.mxu0 0
  %2083 = vmatmul.mubr.bf16.gmra.mrb[0].mxu0 %v1193
  %v2084 = vpop.f32.mrb[0].mxu0
  %v2085 = vadd.f32 0.0, %v2084
  %v2086 = vpop.f32.mrb[0].mxu0
  %v2087 = vpop.f32.mrb[0].mxu0
  %v2088 = vadd.f32 0.0, %v2087
  %v2089 = vpop.f32.mrb[0].mxu0
  %2090 = vmatprep.mubr.bf16.mxu0 0
  %2091 = vmatmul.mubr.bf16.gmra.mrb[0].mxu0 %v1196
  %v2092 = vpop.f32.mrb[0].mxu0
  %v2093 = vadd.f32 0.0, %v2092
  %v2094 = vpop.f32.mrb[0].mxu0
  %v2095 = vpop.f32.mrb[0].mxu0
  %v2096 = vadd.f32 0.0, %v2095
  %v2097 = vpop.f32.mrb[0].mxu0
  %2098 = vmatprep.mubr.bf16.mxu0 0
  %2099 = vmatmul.mubr.bf16.gmra.mrb[0].mxu0 %v1199
  %v2100 = vpop.f32.mrb[0].mxu0
  %v2101 = vadd.f32 0.0, %v2100
  %v2102 = vpop.f32.mrb[0].mxu0
  %v2103 = vpop.f32.mrb[0].mxu0
  %v2104 = vadd.f32 0.0, %v2103
  %v2105 = vpop.f32.mrb[0].mxu0
  %2106 = vmatprep.mubr.bf16.mxu0 0
  %2107 = vmatmul.mubr.bf16.gmra.mrb[0].mxu0 %v1202
  %v2108 = vpop.f32.mrb[0].mxu0
  %v2109 = vadd.f32 0.0, %v2108
  %v2110 = vpop.f32.mrb[0].mxu0
  %v2111 = vpop.f32.mrb[0].mxu0
  %v2112 = vadd.f32 0.0, %v2111
  %v2113 = vpop.f32.mrb[0].mxu0
  %2114 = vmatprep.mubr.bf16.mxu0 0
  %2115 = vmatmul.mubr.bf16.gmra.mrb[0].mxu0 %v1205
  %v2116 = vpop.f32.mrb[0].mxu0
  %v2117 = vadd.f32 0.0, %v2116
  %v2118 = vpop.f32.mrb[0].mxu0
  %v2119 = vpop.f32.mrb[0].mxu0
  %v2120 = vadd.f32 0.0, %v2119
  %v2121 = vpop.f32.mrb[0].mxu0
  %2122 = vmatprep.mubr.bf16.mxu0 0
  %2123 = vmatmul.mubr.bf16.gmra.mrb[0].mxu0 %v1208
  %v2124 = vpop.f32.mrb[0].mxu0
  %v2125 = vadd.f32 0.0, %v2124
  %v2126 = vpop.f32.mrb[0].mxu0
  %v2127 = vpop.f32.mrb[0].mxu0
  %v2128 = vadd.f32 0.0, %v2127
  %v2129 = vpop.f32.mrb[0].mxu0
  %2130 = vmatprep.mubr.bf16.mxu0 0
  %2131 = vmatmul.mubr.bf16.gmra.mrb[0].mxu0 %v1211
  %v2132 = vpop.f32.mrb[0].mxu0
  %v2133 = vadd.f32 0.0, %v2132
  %v2134 = vpop.f32.mrb[0].mxu0
  %v2135 = vpop.f32.mrb[0].mxu0
  %v2136 = vadd.f32 0.0, %v2135
  %v2137 = vpop.f32.mrb[0].mxu0
  %2138 = vmatprep.mubr.bf16.mxu0 0
  %2139 = vmatmul.mubr.bf16.gmra.mrb[0].mxu0 %v1214
  %v2140 = vpop.f32.mrb[0].mxu0
  %v2141 = vadd.f32 0.0, %v2140
  %v2142 = vpop.f32.mrb[0].mxu0
  %v2143 = vpop.f32.mrb[0].mxu0
  %v2144 = vadd.f32 0.0, %v2143
  %v2145 = vpop.f32.mrb[0].mxu0
  %2146 = vmatprep.mubr.bf16.mxu0 0
  %2147 = vmatmul.mubr.bf16.gmra.mrb[0].mxu0 %v1217
  %v2148 = vpop.f32.mrb[0].mxu0
  %v2149 = vadd.f32 0.0, %v2148
  %v2150 = vpop.f32.mrb[0].mxu0
  %v2151 = vpop.f32.mrb[0].mxu0
  %v2152 = vadd.f32 0.0, %v2151
  %v2153 = vpop.f32.mrb[0].mxu0
  %2154 = vmatprep.mubr.bf16.mxu0 0
  %2155 = vmatmul.mubr.bf16.gmra.mrb[0].mxu0 %v1220
  %v2156 = vpop.f32.mrb[0].mxu0
  %v2157 = vadd.f32 0.0, %v2156
  %v2158 = vpop.f32.mrb[0].mxu0
  %v2159 = vpop.f32.mrb[0].mxu0
  %v2160 = vadd.f32 0.0, %v2159
  %v2161 = vpop.f32.mrb[0].mxu0
  %2162 = vmatprep.mubr.bf16.mxu0 0
  %2163 = vmatmul.mubr.bf16.gmra.mrb[0].mxu0 %v1223
  %v2164 = vpop.f32.mrb[0].mxu0
  %v2165 = vadd.f32 0.0, %v2164
  %v2166 = vpop.f32.mrb[0].mxu0
  %v2167 = vpop.f32.mrb[0].mxu0
  %v2168 = vadd.f32 0.0, %v2167
  %v2169 = vpop.f32.mrb[0].mxu0
  %2170 = vmatprep.mubr.bf16.mxu0 0
  %2171 = vmatmul.mubr.bf16.gmra.mrb[0].mxu0 %v1226
  %v2172 = vpop.f32.mrb[0].mxu0
  %v2173 = vadd.f32 0.0, %v2172
  %v2174 = vpop.f32.mrb[0].mxu0
  %v2175 = vpop.f32.mrb[0].mxu0
  %v2176 = vadd.f32 0.0, %v2175
  %v2177 = vpop.f32.mrb[0].mxu0
  %2178 = vmatprep.mubr.bf16.mxu0 0
  %2179 = vmatmul.mubr.bf16.gmra.mrb[0].mxu0 %v1229
  %v2180 = vpop.f32.mrb[0].mxu0
  %v2181 = vadd.f32 0.0, %v2180
  %v2182 = vpop.f32.mrb[0].mxu0
  %v2183 = vpop.f32.mrb[0].mxu0
  %v2184 = vadd.f32 0.0, %v2183
  %v2185 = vpop.f32.mrb[0].mxu0
  %2186 = vmatprep.mubr.bf16.mxu0 0
  %2187 = vmatmul.mubr.bf16.gmra.mrb[0].mxu0 %v1232
  %v2188 = vpop.f32.mrb[0].mxu0
  %v2189 = vadd.f32 0.0, %v2188
  %v2190 = vpop.f32.mrb[0].mxu0
  %v2191 = vpop.f32.mrb[0].mxu0
  %v2192 = vadd.f32 0.0, %v2191
  %v2193 = vpop.f32.mrb[0].mxu0
  %2194 = vmatprep.mubr.bf16.mxu0 0
  %2195 = vmatmul.mubr.bf16.gmra.mrb[0].mxu0 %v1235
  %v2196 = vpop.f32.mrb[0].mxu0
  %v2197 = vadd.f32 0.0, %v2196
  %v2198 = vpop.f32.mrb[0].mxu0
  %v2199 = vpop.f32.mrb[0].mxu0
  %v2200 = vadd.f32 0.0, %v2199
  %v2201 = vpop.f32.mrb[0].mxu0
  %2202 = vmatprep.mubr.bf16.mxu0 0
  %2203 = vmatmul.mubr.bf16.gmra.mrb[0].mxu0 %v1238
  %v2204 = vpop.f32.mrb[0].mxu0
  %v2205 = vadd.f32 0.0, %v2204
  %v2206 = vpop.f32.mrb[0].mxu0
  %v2207 = vpop.f32.mrb[0].mxu0
  %v2208 = vadd.f32 0.0, %v2207
  %v2209 = vpop.f32.mrb[0].mxu0
  %2210 = vmatprep.mubr.bf16.mxu0 0
  %2211 = vmatmul.mubr.bf16.gmra.mrb[0].mxu0 %v1241
  %v2212 = vpop.f32.mrb[0].mxu0
  %v2213 = vadd.f32 0.0, %v2212
  %v2214 = vpop.f32.mrb[0].mxu0
  %v2215 = vpop.f32.mrb[0].mxu0
  %v2216 = vadd.f32 0.0, %v2215
  %v2217 = vpop.f32.mrb[0].mxu0
  %2218 = vmatprep.mubr.bf16.mxu0 0
  %2219 = vmatmul.mubr.bf16.gmra.mrb[0].mxu0 %v1244
  %v2220 = vpop.f32.mrb[0].mxu0
  %v2221 = vadd.f32 0.0, %v2220
  %v2222 = vpop.f32.mrb[0].mxu0
  %v2223 = vpop.f32.mrb[0].mxu0
  %v2224 = vadd.f32 0.0, %v2223
  %v2225 = vpop.f32.mrb[0].mxu0
  %2226 = vmatprep.mubr.bf16.mxu0 0
  %2227 = vmatmul.mubr.bf16.gmra.mrb[0].mxu0 %v1247
  %v2228 = vpop.f32.mrb[0].mxu0
  %v2229 = vadd.f32 0.0, %v2228
  %v2230 = vpop.f32.mrb[0].mxu0
  %v2231 = vpop.f32.mrb[0].mxu0
  %v2232 = vadd.f32 0.0, %v2231
  %v2233 = vpop.f32.mrb[0].mxu0
  %2234 = vmatprep.mubr.bf16.mxu0 0
  %2235 = vmatmul.mubr.bf16.gmra.mrb[0].mxu0 %v1250
  %v2236 = vpop.f32.mrb[0].mxu0
  %v2237 = vadd.f32 0.0, %v2236
  %v2238 = vpop.f32.mrb[0].mxu0
  %v2239 = vpop.f32.mrb[0].mxu0
  %v2240 = vadd.f32 0.0, %v2239
  %v2241 = vpop.f32.mrb[0].mxu0
  %2242 = vmatprep.mubr.bf16.mxu0 0
  %2243 = vmatmul.mubr.bf16.gmra.mrb[0].mxu0 %v1253
  %v2244 = vpop.f32.mrb[0].mxu0
  %v2245 = vadd.f32 0.0, %v2244
  %v2246 = vpop.f32.mrb[0].mxu0
  %v2247 = vpop.f32.mrb[0].mxu0
  %v2248 = vadd.f32 0.0, %v2247
  %v2249 = vpop.f32.mrb[0].mxu0
  %2250 = vmatprep.mubr.bf16.mxu0 0
  %2251 = vmatmul.mubr.bf16.gmra.mrb[0].mxu0 %v1256
  %v2252 = vpop.f32.mrb[0].mxu0
  %v2253 = vadd.f32 0.0, %v2252
  %v2254 = vpop.f32.mrb[0].mxu0
  %v2255 = vpop.f32.mrb[0].mxu0
  %v2256 = vadd.f32 0.0, %v2255
  %v2257 = vpop.f32.mrb[0].mxu0
  %2258 = vmatprep.mubr.bf16.mxu0 0
  %2259 = vmatmul.mubr.bf16.gmra.mrb[0].mxu0 %v1259
  %v2260 = vpop.f32.mrb[0].mxu0
  %v2261 = vadd.f32 0.0, %v2260
  %v2262 = vpop.f32.mrb[0].mxu0
  %v2263 = vpop.f32.mrb[0].mxu0
  %v2264 = vadd.f32 0.0, %v2263
  %v2265 = vpop.f32.mrb[0].mxu0
  %2266 = vmatprep.mubr.bf16.mxu0 0
  %2267 = vmatmul.mubr.bf16.gmra.mrb[0].mxu0 %v1262
  %v2268 = vpop.f32.mrb[0].mxu0
  %v2269 = vadd.f32 0.0, %v2268
  %v2270 = vpop.f32.mrb[0].mxu0
  %v2271 = vpop.f32.mrb[0].mxu0
  %v2272 = vadd.f32 0.0, %v2271
  %v2273 = vpop.f32.mrb[0].mxu0
  %2274 = vmatprep.mubr.bf16.mxu0 0
  %2275 = vmatmul.mubr.bf16.gmra.mrb[0].mxu0 %v1265
  %v2276 = vpop.f32.mrb[0].mxu0
  %v2277 = vadd.f32 0.0, %v2276
  %v2278 = vpop.f32.mrb[0].mxu0
  %v2279 = vpop.f32.mrb[0].mxu0
  %v2280 = vadd.f32 0.0, %v2279
  %v2281 = vpop.f32.mrb[0].mxu0
  %2282 = vmatprep.mubr.bf16.mxu0 0
  %2283 = vmatmul.mubr.bf16.gmra.mrb[0].mxu0 %v1268
  %v2284 = vpop.f32.mrb[0].mxu0
  %v2285 = vadd.f32 0.0, %v2284
  %v2286 = vpop.f32.mrb[0].mxu0
  %v2287 = vpop.f32.mrb[0].mxu0
  %v2288 = vadd.f32 0.0, %v2287
  %v2289 = vpop.f32.mrb[0].mxu0
  %2290 = vmatprep.mubr.bf16.mxu0 0
  %2291 = vmatmul.mubr.bf16.gmra.mrb[0].mxu0 %v1271
  %v2292 = vpop.f32.mrb[0].mxu0
  %v2293 = vadd.f32 0.0, %v2292
  %v2294 = vpop.f32.mrb[0].mxu0
  %v2295 = vpop.f32.mrb[0].mxu0
  %v2296 = vadd.f32 0.0, %v2295
  %v2297 = vpop.f32.mrb[0].mxu0
  %2298 = vmatprep.mubr.bf16.mxu0 0
  %2299 = vmatmul.mubr.bf16.gmra.mrb[0].mxu0 %v1274
  %v2300 = vpop.f32.mrb[0].mxu0
  %v2301 = vadd.f32 0.0, %v2300
  %v2302 = vpop.f32.mrb[0].mxu0
  %v2303 = vpop.f32.mrb[0].mxu0
  %v2304 = vadd.f32 0.0, %v2303
  %v2305 = vpop.f32.mrb[0].mxu0
  %2306 = vmatprep.mubr.bf16.mxu0 0
  %2307 = vmatmul.mubr.bf16.gmra.mrb[0].mxu0 %v1277
  %v2308 = vpop.f32.mrb[0].mxu0
  %v2309 = vadd.f32 0.0, %v2308
  %v2310 = vpop.f32.mrb[0].mxu0
  %v2311 = vpop.f32.mrb[0].mxu0
  %v2312 = vadd.f32 0.0, %v2311
  %v2313 = vpop.f32.mrb[0].mxu0
  %2314 = vmatprep.mubr.bf16.mxu0 0
  %2315 = vmatmul.mubr.bf16.gmra.mrb[0].mxu0 %v1280
  %v2316 = vpop.f32.mrb[0].mxu0
  %v2317 = vadd.f32 0.0, %v2316
  %v2318 = vpop.f32.mrb[0].mxu0
  %v2319 = vpop.f32.mrb[0].mxu0
  %v2320 = vadd.f32 0.0, %v2319
  %v2321 = vpop.f32.mrb[0].mxu0
  %2322 = vmatprep.mubr.bf16.mxu0 0
  %2323 = vmatmul.mubr.bf16.gmra.mrb[0].mxu0 %v1283
  %v2324 = vpop.f32.mrb[0].mxu0
  %v2325 = vadd.f32 0.0, %v2324
  %v2326 = vpop.f32.mrb[0].mxu0
  %v2327 = vpop.f32.mrb[0].mxu0
  %v2328 = vadd.f32 0.0, %v2327
  %v2329 = vpop.f32.mrb[0].mxu0
  %2330 = vmatprep.mubr.bf16.mxu0 0
  %2331 = vmatmul.mubr.bf16.gmra.mrb[0].mxu0 %v1286
  %v2332 = vpop.f32.mrb[0].mxu0
  %v2333 = vadd.f32 0.0, %v2332
  %v2334 = vpop.f32.mrb[0].mxu0
  %v2335 = vpop.f32.mrb[0].mxu0
  %v2336 = vadd.f32 0.0, %v2335
  %v2337 = vpop.f32.mrb[0].mxu0
  %2338 = vmatprep.mubr.bf16.mxu0 0
  %2339 = vmatmul.mubr.bf16.gmra.mrb[0].mxu0 %v1289
  %v2340 = vpop.f32.mrb[0].mxu0
  %v2341 = vadd.f32 0.0, %v2340
  %v2342 = vpop.f32.mrb[0].mxu0
  %v2343 = vpop.f32.mrb[0].mxu0
  %v2344 = vadd.f32 0.0, %v2343
  %v2345 = vpop.f32.mrb[0].mxu0
  %2346 = vmatprep.mubr.bf16.mxu0 0
  %2347 = vmatmul.mubr.bf16.gmra.mrb[0].mxu0 %v1292
  %v2348 = vpop.f32.mrb[0].mxu0
  %v2349 = vadd.f32 0.0, %v2348
  %v2350 = vpop.f32.mrb[0].mxu0
  %v2351 = vpop.f32.mrb[0].mxu0
  %v2352 = vadd.f32 0.0, %v2351
  %v2353 = vpop.f32.mrb[0].mxu0
  %2354 = vdwg.mxu0
  %vm2355 = vcmask 523264
  %2356 = vst.msk [vmem:[%s2] sm:$0xff] %vm2355, %v1333
  %2357 = vst.msk [vmem:[%s2 + $0x8] sm:$0xff] %vm2355, %v1336
  %2358 = vst.msk [vmem:[%s2 + $0x10] sm:$0xff] %vm2355, %v1341
  %2359 = vst.msk [vmem:[%s2 + $0x18] sm:$0xff] %vm2355, %v1344
  %2360 = vst.msk [vmem:[%s2 + $0x20] sm:$0xff] %vm2355, %v1349
  %2361 = vst.msk [vmem:[%s2 + $0x28] sm:$0xff] %vm2355, %v1352
  %2362 = vst.msk [vmem:[%s2 + $0x30] sm:$0xff] %vm2355, %v1357
  %2363 = vst.msk [vmem:[%s2 + $0x38] sm:$0xff] %vm2355, %v1360
  %2364 = vst.msk [vmem:[%s2 + $0x40] sm:$0xff] %vm2355, %v1365
  %2365 = vst.msk [vmem:[%s2 + $0x48] sm:$0xff] %vm2355, %v1368
  %2366 = vst.msk [vmem:[%s2 + $0x50] sm:$0xff] %vm2355, %v1373
  %2367 = vst.msk [vmem:[%s2 + $0x58] sm:$0xff] %vm2355, %v1376
  %2368 = vst.msk [vmem:[%s2 + $0x60] sm:$0xff] %vm2355, %v1381
  %2369 = vst.msk [vmem:[%s2 + $0x68] sm:$0xff] %vm2355, %v1384
  %2370 = vst.msk [vmem:[%s2 + $0x70] sm:$0xff] %vm2355, %v1389
  %2371 = vst.msk [vmem:[%s2 + $0x78] sm:$0xff] %vm2355, %v1392
  %2372 = vst.msk [vmem:[%s2 + $0x80] sm:$0xff] %vm2355, %v1397
  %2373 = vst.msk [vmem:[%s2 + $0x88] sm:$0xff] %vm2355, %v1400
  %2374 = vst.msk [vmem:[%s2 + $0x90] sm:$0xff] %vm2355, %v1405
  %2375 = vst.msk [vmem:[%s2 + $0x98] sm:$0xff] %vm2355, %v1408
  %2376 = vst.msk [vmem:[%s2 + $0xa0] sm:$0xff] %vm2355, %v1413
  %2377 = vst.msk [vmem:[%s2 + $0xa8] sm:$0xff] %vm2355, %v1416
  %2378 = vst.msk [vmem:[%s2 + $0xb0] sm:$0xff] %vm2355, %v1421
  %2379 = vst.msk [vmem:[%s2 + $0xb8] sm:$0xff] %vm2355, %v1424
  %2380 = vst.msk [vmem:[%s2 + $0xc0] sm:$0xff] %vm2355, %v1429
  %2381 = vst.msk [vmem:[%s2 + $0xc8] sm:$0xff] %vm2355, %v1432
  %2382 = vst.msk [vmem:[%s2 + $0xd0] sm:$0xff] %vm2355, %v1437
  %2383 = vst.msk [vmem:[%s2 + $0xd8] sm:$0xff] %vm2355, %v1440
  %2384 = vst.msk [vmem:[%s2 + $0xe0] sm:$0xff] %vm2355, %v1445
  %2385 = vst.msk [vmem:[%s2 + $0xe8] sm:$0xff] %vm2355, %v1448
  %2386 = vst.msk [vmem:[%s2 + $0xf0] sm:$0xff] %vm2355, %v1453
  %2387 = vst.msk [vmem:[%s2 + $0xf8] sm:$0xff] %vm2355, %v1456
  %2388 = vst.msk [vmem:[%s2 + $0x100] sm:$0xff] %vm2355, %v1461
  %2389 = vst.msk [vmem:[%s2 + $0x108] sm:$0xff] %vm2355, %v1464
  %2390 = vst.msk [vmem:[%s2 + $0x110] sm:$0xff] %vm2355, %v1469
  %2391 = vst.msk [vmem:[%s2 + $0x118] sm:$0xff] %vm2355, %v1472
  %2392 = vst.msk [vmem:[%s2 + $0x120] sm:$0xff] %vm2355, %v1477
  %2393 = vst.msk [vmem:[%s2 + $0x128] sm:$0xff] %vm2355, %v1480
  %2394 = vst.msk [vmem:[%s2 + $0x130] sm:$0xff] %vm2355, %v1485
  %2395 = vst.msk [vmem:[%s2 + $0x138] sm:$0xff] %vm2355, %v1488
  %2396 = vst.msk [vmem:[%s2 + $0x140] sm:$0xff] %vm2355, %v1493
  %2397 = vst.msk [vmem:[%s2 + $0x148] sm:$0xff] %vm2355, %v1496
  %2398 = vst.msk [vmem:[%s2 + $0x150] sm:$0xff] %vm2355, %v1501
  %2399 = vst.msk [vmem:[%s2 + $0x158] sm:$0xff] %vm2355, %v1504
  %2400 = vst.msk [vmem:[%s2 + $0x160] sm:$0xff] %vm2355, %v1509
  %2401 = vst.msk [vmem:[%s2 + $0x168] sm:$0xff] %vm2355, %v1512
  %2402 = vst.msk [vmem:[%s2 + $0x170] sm:$0xff] %vm2355, %v1517
  %2403 = vst.msk [vmem:[%s2 + $0x178] sm:$0xff] %vm2355, %v1520
  %2404 = vst.msk [vmem:[%s2 + $0x180] sm:$0xff] %vm2355, %v1525
  %2405 = vst.msk [vmem:[%s2 + $0x188] sm:$0xff] %vm2355, %v1528
  %2406 = vst.msk [vmem:[%s2 + $0x190] sm:$0xff] %vm2355, %v1533
  %2407 = vst.msk [vmem:[%s2 + $0x198] sm:$0xff] %vm2355, %v1536
  %2408 = vst.msk [vmem:[%s2 + $0x1a0] sm:$0xff] %vm2355, %v1541
  %2409 = vst.msk [vmem:[%s2 + $0x1a8] sm:$0xff] %vm2355, %v1544
  %2410 = vst.msk [vmem:[%s2 + $0x1b0] sm:$0xff] %vm2355, %v1549
  %2411 = vst.msk [vmem:[%s2 + $0x1b8] sm:$0xff] %vm2355, %v1552
  %2412 = vst.msk [vmem:[%s2 + $0x1c0] sm:$0xff] %vm2355, %v1557
  %2413 = vst.msk [vmem:[%s2 + $0x1c8] sm:$0xff] %vm2355, %v1560
  %2414 = vst.msk [vmem:[%s2 + $0x1d0] sm:$0xff] %vm2355, %v1565
  %2415 = vst.msk [vmem:[%s2 + $0x1d8] sm:$0xff] %vm2355, %v1568
  %2416 = vst.msk [vmem:[%s2 + $0x1e0] sm:$0xff] %vm2355, %v1573
  %2417 = vst.msk [vmem:[%s2 + $0x1e8] sm:$0xff] %vm2355, %v1576
  %2418 = vst.msk [vmem:[%s2 + $0x1f0] sm:$0xff] %vm2355, %v1581
  %2419 = vst.msk [vmem:[%s2 + $0x1f8] sm:$0xff] %vm2355, %v1584
  %2420 = vst.msk [vmem:[%s2 + $0x200] sm:$0xff] %vm2355, %v1589
  %2421 = vst.msk [vmem:[%s2 + $0x208] sm:$0xff] %vm2355, %v1592
  %2422 = vst.msk [vmem:[%s2 + $0x210] sm:$0xff] %vm2355, %v1597
  %2423 = vst.msk [vmem:[%s2 + $0x218] sm:$0xff] %vm2355, %v1600
  %2424 = vst.msk [vmem:[%s2 + $0x220] sm:$0xff] %vm2355, %v1605
  %2425 = vst.msk [vmem:[%s2 + $0x228] sm:$0xff] %vm2355, %v1608
  %2426 = vst.msk [vmem:[%s2 + $0x230] sm:$0xff] %vm2355, %v1613
  %2427 = vst.msk [vmem:[%s2 + $0x238] sm:$0xff] %vm2355, %v1616
  %2428 = vst.msk [vmem:[%s2 + $0x240] sm:$0xff] %vm2355, %v1621
  %2429 = vst.msk [vmem:[%s2 + $0x248] sm:$0xff] %vm2355, %v1624
  %2430 = vst.msk [vmem:[%s2 + $0x250] sm:$0xff] %vm2355, %v1629
  %2431 = vst.msk [vmem:[%s2 + $0x258] sm:$0xff] %vm2355, %v1632
  %2432 = vst.msk [vmem:[%s2 + $0x260] sm:$0xff] %vm2355, %v1637
  %2433 = vst.msk [vmem:[%s2 + $0x268] sm:$0xff] %vm2355, %v1640
  %2434 = vst.msk [vmem:[%s2 + $0x270] sm:$0xff] %vm2355, %v1645
  %2435 = vst.msk [vmem:[%s2 + $0x278] sm:$0xff] %vm2355, %v1648
  %2436 = vst.msk [vmem:[%s2 + $0x280] sm:$0xff] %vm2355, %v1653
  %2437 = vst.msk [vmem:[%s2 + $0x288] sm:$0xff] %vm2355, %v1656
  %2438 = vst.msk [vmem:[%s2 + $0x290] sm:$0xff] %vm2355, %v1661
  %2439 = vst.msk [vmem:[%s2 + $0x298] sm:$0xff] %vm2355, %v1664
  %2440 = vst.msk [vmem:[%s2 + $0x2a0] sm:$0xff] %vm2355, %v1669
  %2441 = vst.msk [vmem:[%s2 + $0x2a8] sm:$0xff] %vm2355, %v1672
  %2442 = vst.msk [vmem:[%s2 + $0x2b0] sm:$0xff] %vm2355, %v1677
  %2443 = vst.msk [vmem:[%s2 + $0x2b8] sm:$0xff] %vm2355, %v1680
  %2444 = vst.msk [vmem:[%s2 + $0x2c0] sm:$0xff] %vm2355, %v1685
  %2445 = vst.msk [vmem:[%s2 + $0x2c8] sm:$0xff] %vm2355, %v1688
  %2446 = vst.msk [vmem:[%s2 + $0x2d0] sm:$0xff] %vm2355, %v1693
  %2447 = vst.msk [vmem:[%s2 + $0x2d8] sm:$0xff] %vm2355, %v1696
  %2448 = vst.msk [vmem:[%s2 + $0x2e0] sm:$0xff] %vm2355, %v1701
  %2449 = vst.msk [vmem:[%s2 + $0x2e8] sm:$0xff] %vm2355, %v1704
  %2450 = vst.msk [vmem:[%s2 + $0x2f0] sm:$0xff] %vm2355, %v1709
  %2451 = vst.msk [vmem:[%s2 + $0x2f8] sm:$0xff] %vm2355, %v1712
  %2452 = vst.msk [vmem:[%s2 + $0x300] sm:$0xff] %vm2355, %v1717
  %2453 = vst.msk [vmem:[%s2 + $0x308] sm:$0xff] %vm2355, %v1720
  %2454 = vst.msk [vmem:[%s2 + $0x310] sm:$0xff] %vm2355, %v1725
  %2455 = vst.msk [vmem:[%s2 + $0x318] sm:$0xff] %vm2355, %v1728
  %2456 = vst.msk [vmem:[%s2 + $0x320] sm:$0xff] %vm2355, %v1733
  %2457 = vst.msk [vmem:[%s2 + $0x328] sm:$0xff] %vm2355, %v1736
  %2458 = vst.msk [vmem:[%s2 + $0x330] sm:$0xff] %vm2355, %v1741
  %2459 = vst.msk [vmem:[%s2 + $0x338] sm:$0xff] %vm2355, %v1744
  %2460 = vst.msk [vmem:[%s2 + $0x340] sm:$0xff] %vm2355, %v1749
  %2461 = vst.msk [vmem:[%s2 + $0x348] sm:$0xff] %vm2355, %v1752
  %2462 = vst.msk [vmem:[%s2 + $0x350] sm:$0xff] %vm2355, %v1757
  %2463 = vst.msk [vmem:[%s2 + $0x358] sm:$0xff] %vm2355, %v1760
  %2464 = vst.msk [vmem:[%s2 + $0x360] sm:$0xff] %vm2355, %v1765
  %2465 = vst.msk [vmem:[%s2 + $0x368] sm:$0xff] %vm2355, %v1768
  %2466 = vst.msk [vmem:[%s2 + $0x370] sm:$0xff] %vm2355, %v1773
  %2467 = vst.msk [vmem:[%s2 + $0x378] sm:$0xff] %vm2355, %v1776
  %2468 = vst.msk [vmem:[%s2 + $0x380] sm:$0xff] %vm2355, %v1781
  %2469 = vst.msk [vmem:[%s2 + $0x388] sm:$0xff] %vm2355, %v1784
  %2470 = vst.msk [vmem:[%s2 + $0x390] sm:$0xff] %vm2355, %v1789
  %2471 = vst.msk [vmem:[%s2 + $0x398] sm:$0xff] %vm2355, %v1792
  %2472 = vst.msk [vmem:[%s2 + $0x3a0] sm:$0xff] %vm2355, %v1797
  %2473 = vst.msk [vmem:[%s2 + $0x3a8] sm:$0xff] %vm2355, %v1800
  %2474 = vst.msk [vmem:[%s2 + $0x3b0] sm:$0xff] %vm2355, %v1805
  %2475 = vst.msk [vmem:[%s2 + $0x3b8] sm:$0xff] %vm2355, %v1808
  %2476 = vst.msk [vmem:[%s2 + $0x3c0] sm:$0xff] %vm2355, %v1813
  %2477 = vst.msk [vmem:[%s2 + $0x3c8] sm:$0xff] %vm2355, %v1816
  %2478 = vst.msk [vmem:[%s2 + $0x3d0] sm:$0xff] %vm2355, %v1821
  %2479 = vst.msk [vmem:[%s2 + $0x3d8] sm:$0xff] %vm2355, %v1824
  %2480 = vst.msk [vmem:[%s2 + $0x3e0] sm:$0xff] %vm2355, %v1829
  %2481 = vst.msk [vmem:[%s2 + $0x3e8] sm:$0xff] %vm2355, %v1832
  %2482 = vst.msk [vmem:[%s2 + $0x3f0] sm:$0xff] %vm2355, %v1837
  %2483 = vst.msk [vmem:[%s2 + $0x3f8] sm:$0xff] %vm2355, %v1840
  %2484 = vst.msk [vmem:[%s2 + $0x400] sm:$0xff] %vm2355, %v1845
  %2485 = vst.msk [vmem:[%s2 + $0x408] sm:$0xff] %vm2355, %v1848
  %2486 = vst.msk [vmem:[%s2 + $0x410] sm:$0xff] %vm2355, %v1853
  %2487 = vst.msk [vmem:[%s2 + $0x418] sm:$0xff] %vm2355, %v1856
  %2488 = vst.msk [vmem:[%s2 + $0x420] sm:$0xff] %vm2355, %v1861
  %2489 = vst.msk [vmem:[%s2 + $0x428] sm:$0xff] %vm2355, %v1864
  %2490 = vst.msk [vmem:[%s2 + $0x430] sm:$0xff] %vm2355, %v1869
  %2491 = vst.msk [vmem:[%s2 + $0x438] sm:$0xff] %vm2355, %v1872
  %2492 = vst.msk [vmem:[%s2 + $0x440] sm:$0xff] %vm2355, %v1877
  %2493 = vst.msk [vmem:[%s2 + $0x448] sm:$0xff] %vm2355, %v1880
  %2494 = vst.msk [vmem:[%s2 + $0x450] sm:$0xff] %vm2355, %v1885
  %2495 = vst.msk [vmem:[%s2 + $0x458] sm:$0xff] %vm2355, %v1888
  %2496 = vst.msk [vmem:[%s2 + $0x460] sm:$0xff] %vm2355, %v1893
  %2497 = vst.msk [vmem:[%s2 + $0x468] sm:$0xff] %vm2355, %v1896
  %2498 = vst.msk [vmem:[%s2 + $0x470] sm:$0xff] %vm2355, %v1901
  %2499 = vst.msk [vmem:[%s2 + $0x478] sm:$0xff] %vm2355, %v1904
  %2500 = vst.msk [vmem:[%s2 + $0x480] sm:$0xff] %vm2355, %v1909
  %2501 = vst.msk [vmem:[%s2 + $0x488] sm:$0xff] %vm2355, %v1912
  %2502 = vst.msk [vmem:[%s2 + $0x490] sm:$0xff] %vm2355, %v1917
  %2503 = vst.msk [vmem:[%s2 + $0x498] sm:$0xff] %vm2355, %v1920
  %2504 = vst.msk [vmem:[%s2 + $0x4a0] sm:$0xff] %vm2355, %v1925
  %2505 = vst.msk [vmem:[%s2 + $0x4a8] sm:$0xff] %vm2355, %v1928
  %2506 = vst.msk [vmem:[%s2 + $0x4b0] sm:$0xff] %vm2355, %v1933
  %2507 = vst.msk [vmem:[%s2 + $0x4b8] sm:$0xff] %vm2355, %v1936
  %2508 = vst.msk [vmem:[%s2 + $0x4c0] sm:$0xff] %vm2355, %v1941
  %2509 = vst.msk [vmem:[%s2 + $0x4c8] sm:$0xff] %vm2355, %v1944
  %2510 = vst.msk [vmem:[%s2 + $0x4d0] sm:$0xff] %vm2355, %v1949
  %2511 = vst.msk [vmem:[%s2 + $0x4d8] sm:$0xff] %vm2355, %v1952
  %2512 = vst.msk [vmem:[%s2 + $0x4e0] sm:$0xff] %vm2355, %v1957
  %2513 = vst.msk [vmem:[%s2 + $0x4e8] sm:$0xff] %vm2355, %v1960
  %2514 = vst.msk [vmem:[%s2 + $0x4f0] sm:$0xff] %vm2355, %v1965
  %2515 = vst.msk [vmem:[%s2 + $0x4f8] sm:$0xff] %vm2355, %v1968
  %2516 = vst.msk [vmem:[%s2 + $0x500] sm:$0xff] %vm2355, %v1973
  %2517 = vst.msk [vmem:[%s2 + $0x508] sm:$0xff] %vm2355, %v1976
  %2518 = vst.msk [vmem:[%s2 + $0x510] sm:$0xff] %vm2355, %v1981
  %2519 = vst.msk [vmem:[%s2 + $0x518] sm:$0xff] %vm2355, %v1984
  %2520 = vst.msk [vmem:[%s2 + $0x520] sm:$0xff] %vm2355, %v1989
  %2521 = vst.msk [vmem:[%s2 + $0x528] sm:$0xff] %vm2355, %v1992
  %2522 = vst.msk [vmem:[%s2 + $0x530] sm:$0xff] %vm2355, %v1997
  %2523 = vst.msk [vmem:[%s2 + $0x538] sm:$0xff] %vm2355, %v2000
  %2524 = vst.msk [vmem:[%s2 + $0x540] sm:$0xff] %vm2355, %v2005
  %2525 = vst.msk [vmem:[%s2 + $0x548] sm:$0xff] %vm2355, %v2008
  %2526 = vst.msk [vmem:[%s2 + $0x550] sm:$0xff] %vm2355, %v2013
  %2527 = vst.msk [vmem:[%s2 + $0x558] sm:$0xff] %vm2355, %v2016
  %2528 = vst.msk [vmem:[%s2 + $0x560] sm:$0xff] %vm2355, %v2021
  %2529 = vst.msk [vmem:[%s2 + $0x568] sm:$0xff] %vm2355, %v2024
  %2530 = vst.msk [vmem:[%s2 + $0x570] sm:$0xff] %vm2355, %v2029
  %2531 = vst.msk [vmem:[%s2 + $0x578] sm:$0xff] %vm2355, %v2032
  %2532 = vst.msk [vmem:[%s2 + $0x580] sm:$0xff] %vm2355, %v2037
  %2533 = vst.msk [vmem:[%s2 + $0x588] sm:$0xff] %vm2355, %v2040
  %2534 = vst.msk [vmem:[%s2 + $0x590] sm:$0xff] %vm2355, %v2045
  %2535 = vst.msk [vmem:[%s2 + $0x598] sm:$0xff] %vm2355, %v2048
  %2536 = vst.msk [vmem:[%s2 + $0x5a0] sm:$0xff] %vm2355, %v2053
  %2537 = vst.msk [vmem:[%s2 + $0x5a8] sm:$0xff] %vm2355, %v2056
  %2538 = vst.msk [vmem:[%s2 + $0x5b0] sm:$0xff] %vm2355, %v2061
  %2539 = vst.msk [vmem:[%s2 + $0x5b8] sm:$0xff] %vm2355, %v2064
  %2540 = vst.msk [vmem:[%s2 + $0x5c0] sm:$0xff] %vm2355, %v2069
  %2541 = vst.msk [vmem:[%s2 + $0x5c8] sm:$0xff] %vm2355, %v2072
  %2542 = vst.msk [vmem:[%s2 + $0x5d0] sm:$0xff] %vm2355, %v2077
  %2543 = vst.msk [vmem:[%s2 + $0x5d8] sm:$0xff] %vm2355, %v2080
  %2544 = vst.msk [vmem:[%s2 + $0x5e0] sm:$0xff] %vm2355, %v2085
  %2545 = vst.msk [vmem:[%s2 + $0x5e8] sm:$0xff] %vm2355, %v2088
  %2546 = vst.msk [vmem:[%s2 + $0x5f0] sm:$0xff] %vm2355, %v2093
  %2547 = vst.msk [vmem:[%s2 + $0x5f8] sm:$0xff] %vm2355, %v2096
  %2548 = vst.msk [vmem:[%s2 + $0x600] sm:$0xff] %vm2355, %v2101
  %2549 = vst.msk [vmem:[%s2 + $0x608] sm:$0xff] %vm2355, %v2104
  %2550 = vst.msk [vmem:[%s2 + $0x610] sm:$0xff] %vm2355, %v2109
  %2551 = vst.msk [vmem:[%s2 + $0x618] sm:$0xff] %vm2355, %v2112
  %2552 = vst.msk [vmem:[%s2 + $0x620] sm:$0xff] %vm2355, %v2117
  %2553 = vst.msk [vmem:[%s2 + $0x628] sm:$0xff] %vm2355, %v2120
  %2554 = vst.msk [vmem:[%s2 + $0x630] sm:$0xff] %vm2355, %v2125
  %2555 = vst.msk [vmem:[%s2 + $0x638] sm:$0xff] %vm2355, %v2128
  %2556 = vst.msk [vmem:[%s2 + $0x640] sm:$0xff] %vm2355, %v2133
  %2557 = vst.msk [vmem:[%s2 + $0x648] sm:$0xff] %vm2355, %v2136
  %2558 = vst.msk [vmem:[%s2 + $0x650] sm:$0xff] %vm2355, %v2141
  %2559 = vst.msk [vmem:[%s2 + $0x658] sm:$0xff] %vm2355, %v2144
  %2560 = vst.msk [vmem:[%s2 + $0x660] sm:$0xff] %vm2355, %v2149
  %2561 = vst.msk [vmem:[%s2 + $0x668] sm:$0xff] %vm2355, %v2152
  %2562 = vst.msk [vmem:[%s2 + $0x670] sm:$0xff] %vm2355, %v2157
  %2563 = vst.msk [vmem:[%s2 + $0x678] sm:$0xff] %vm2355, %v2160
  %2564 = vst.msk [vmem:[%s2 + $0x680] sm:$0xff] %vm2355, %v2165
  %2565 = vst.msk [vmem:[%s2 + $0x688] sm:$0xff] %vm2355, %v2168
  %2566 = vst.msk [vmem:[%s2 + $0x690] sm:$0xff] %vm2355, %v2173
  %2567 = vst.msk [vmem:[%s2 + $0x698] sm:$0xff] %vm2355, %v2176
  %2568 = vst.msk [vmem:[%s2 + $0x6a0] sm:$0xff] %vm2355, %v2181
  %2569 = vst.msk [vmem:[%s2 + $0x6a8] sm:$0xff] %vm2355, %v2184
  %2570 = vst.msk [vmem:[%s2 + $0x6b0] sm:$0xff] %vm2355, %v2189
  %2571 = vst.msk [vmem:[%s2 + $0x6b8] sm:$0xff] %vm2355, %v2192
  %2572 = vst.msk [vmem:[%s2 + $0x6c0] sm:$0xff] %vm2355, %v2197
  %2573 = vst.msk [vmem:[%s2 + $0x6c8] sm:$0xff] %vm2355, %v2200
  %2574 = vst.msk [vmem:[%s2 + $0x6d0] sm:$0xff] %vm2355, %v2205
  %2575 = vst.msk [vmem:[%s2 + $0x6d8] sm:$0xff] %vm2355, %v2208
  %2576 = vst.msk [vmem:[%s2 + $0x6e0] sm:$0xff] %vm2355, %v2213
  %2577 = vst.msk [vmem:[%s2 + $0x6e8] sm:$0xff] %vm2355, %v2216
  %2578 = vst.msk [vmem:[%s2 + $0x6f0] sm:$0xff] %vm2355, %v2221
  %2579 = vst.msk [vmem:[%s2 + $0x6f8] sm:$0xff] %vm2355, %v2224
  %2580 = vst.msk [vmem:[%s2 + $0x700] sm:$0xff] %vm2355, %v2229
  %2581 = vst.msk [vmem:[%s2 + $0x708] sm:$0xff] %vm2355, %v2232
  %2582 = vst.msk [vmem:[%s2 + $0x710] sm:$0xff] %vm2355, %v2237
  %2583 = vst.msk [vmem:[%s2 + $0x718] sm:$0xff] %vm2355, %v2240
  %2584 = vst.msk [vmem:[%s2 + $0x720] sm:$0xff] %vm2355, %v2245
  %2585 = vst.msk [vmem:[%s2 + $0x728] sm:$0xff] %vm2355, %v2248
  %2586 = vst.msk [vmem:[%s2 + $0x730] sm:$0xff] %vm2355, %v2253
  %2587 = vst.msk [vmem:[%s2 + $0x738] sm:$0xff] %vm2355, %v2256
  %2588 = vst.msk [vmem:[%s2 + $0x740] sm:$0xff] %vm2355, %v2261
  %2589 = vst.msk [vmem:[%s2 + $0x748] sm:$0xff] %vm2355, %v2264
  %2590 = vst.msk [vmem:[%s2 + $0x750] sm:$0xff] %vm2355, %v2269
  %2591 = vst.msk [vmem:[%s2 + $0x758] sm:$0xff] %vm2355, %v2272
  %2592 = vst.msk [vmem:[%s2 + $0x760] sm:$0xff] %vm2355, %v2277
  %2593 = vst.msk [vmem:[%s2 + $0x768] sm:$0xff] %vm2355, %v2280
  %2594 = vst.msk [vmem:[%s2 + $0x770] sm:$0xff] %vm2355, %v2285
  %2595 = vst.msk [vmem:[%s2 + $0x778] sm:$0xff] %vm2355, %v2288
  %2596 = vst.msk [vmem:[%s2 + $0x780] sm:$0xff] %vm2355, %v2293
  %2597 = vst.msk [vmem:[%s2 + $0x788] sm:$0xff] %vm2355, %v2296
  %2598 = vst.msk [vmem:[%s2 + $0x790] sm:$0xff] %vm2355, %v2301
  %2599 = vst.msk [vmem:[%s2 + $0x798] sm:$0xff] %vm2355, %v2304
  %2600 = vst.msk [vmem:[%s2 + $0x7a0] sm:$0xff] %vm2355, %v2309
  %2601 = vst.msk [vmem:[%s2 + $0x7a8] sm:$0xff] %vm2355, %v2312
  %2602 = vst.msk [vmem:[%s2 + $0x7b0] sm:$0xff] %vm2355, %v2317
  %2603 = vst.msk [vmem:[%s2 + $0x7b8] sm:$0xff] %vm2355, %v2320
  %2604 = vst.msk [vmem:[%s2 + $0x7c0] sm:$0xff] %vm2355, %v2325
  %2605 = vst.msk [vmem:[%s2 + $0x7c8] sm:$0xff] %vm2355, %v2328
  %2606 = vst.msk [vmem:[%s2 + $0x7d0] sm:$0xff] %vm2355, %v2333
  %2607 = vst.msk [vmem:[%s2 + $0x7d8] sm:$0xff] %vm2355, %v2336
  %2608 = vst.msk [vmem:[%s2 + $0x7e0] sm:$0xff] %vm2355, %v2341
  %2609 = vst.msk [vmem:[%s2 + $0x7e8] sm:$0xff] %vm2355, %v2344
  %2610 = vst.msk [vmem:[%s2 + $0x7f0] sm:$0xff] %vm2355, %v2349
  %2611 = vst.msk [vmem:[%s2 + $0x7f8] sm:$0xff] %vm2355, %v2352
  // Predicated region
  $region10: #{netG_forward.8} parent=0 // pred_check
    _
  $region11: #{netG_forward.8} parent=0 // pred_check_branch
    %2613 = sbr.rel (0) target = $region13
  $region12: #{netG_forward.8} parent=0 // pred_region
    _
  $region13: #{netG_forward.8} parent=0 // pred_fallthru
    _
  // Predicated region
  $region14: #{netG_forward.8} parent=0 // pred_check
    _
  $region15: #{netG_forward.8} parent=0 // pred_check_branch
    %2615 = sbr.rel (0) target = $region17
  $region16: #{netG_forward.8} parent=0 // pred_region
    _
  $region17: #{netG_forward.8} parent=0 // pred_fallthru
    _

// kernel: netG_forward.9
$region0: #{netG_forward.9}
  #allocation0 [shape = 'u32[]', space=smem, size = 0x4, offset = 0x4, fixed_abs, tag = 'smem constant byte address 0x4 - core index']
  #allocation1 [shape = 'u32[144,128]{1,0:T(1,128)}', space=vmem, size = 0x12000, scoped, tag = 'internal scratch']
  %s0 = inlined_call_operand.vmem [shape: bf16[8192,4], index: 0, kind: input, shape index: {}]
  %s1 = inlined_call_operand.vmem [shape: bf16[4,48], index: 1, kind: input, shape index: {}]
  %s2 = inlined_call_operand.vmem [shape: f32[8192,48], index: 2, kind: output, shape index: {}]
  %s3 = sld [smem:[#allocation0]]
  $region41: #{netG_forward.9} parent=0
    _
  %s5 = ssub.s32 1, %s3
  %s6 = scalar_select 0, %s5, %s3
  loop: start=0, step=1, limit=4
  $region2: #{netG_forward.9} parent=0 // loop_pre_header
    _
  $region3: #{netG_forward.9} parent=0 // loop_header
    %s8 = sphi 0, %s12
    %p9 = scmp.ge.s32.totalorder %s8, 4
    %s18 = sphi 0, %s20
    %s21 = sphi 0, %s18
    %s22 = sphi 0, %s21
    %s38 = sphi 0, %s22
    %s42 = sphi 0, %s42
    %s44 = sphi 0, %s42
    %s45 = sphi 0, %s44
    %s59 = sphi 0, %s45
    %s65 = sphi 0, %s67
    %s68 = sphi 0, %s65
    %s69 = sphi 0, %s68
    %s85 = sphi 0, %s69
  $region4: #{netG_forward.9} parent=0 // loop_header_branch
    %11 = sbr.rel (%p9) target = $region8
  $region5: #{netG_forward.9} parent=0 // loop_body
    %s13 = ssub.s32 %s8, 1
    %s14 = ssub.s32 %s8, 2
    %s15 = sadd.s32 %s8, 1
    %s16 = ssub.s32 %s8, %s15
    %p17 = scmp.eq.s32.totalorder %s16, 0
    %s19 = sadd.s32 %s18, 1
    %s20 = scalar_select %p17, %s18, %s19
    %p23 = pneg %p17
    %p24 = scmp.eq.s32.totalorder %s8, 1
    %p25 = por %p23, %p24
    %p26 = scmp.ne.s32.totalorder %s18, %s21
    %p27 = scmp.eq.s32.totalorder %s8, 0
    %p28 = por %p26, %p27
    %p29 = scmp.ne.s32.totalorder %s18, %s21
    %p30 = scmp.eq.s32.totalorder %s13, 1
    %p31 = por %p29, %p30
    %p32 = scmp.ne.s32.totalorder %s21, %s22
    %p33 = scmp.eq.s32.totalorder %s13, 0
    %p34 = por %p32, %p33
    %p35 = scmp.ne.s32.totalorder %s21, %s22
    %p36 = scmp.eq.s32.totalorder %s14, 1
    %p37 = por %p35, %p36
    %p39 = scmp.ne.s32.totalorder %s22, %s38
    %p40 = scmp.eq.s32.totalorder %s14, 0
    %p41 = por %p39, %p40
    %s43 = sadd.s32 %s42, 1
    %p46 = scmp.eq.s32.totalorder %s8, 1
    %p47 = scmp.ne.s32.totalorder %s42, %s44
    %p48 = scmp.eq.s32.totalorder %s8, 0
    %p49 = por %p47, %p48
    %p50 = scmp.ne.s32.totalorder %s42, %s44
    %p51 = scmp.eq.s32.totalorder %s13, 1
    %p52 = por %p50, %p51
    %p53 = scmp.ne.s32.totalorder %s44, %s45
    %p54 = scmp.eq.s32.totalorder %s13, 0
    %p55 = por %p53, %p54
    %p56 = scmp.ne.s32.totalorder %s44, %s45
    %p57 = scmp.eq.s32.totalorder %s14, 1
    %p58 = por %p56, %p57
    %p60 = scmp.ne.s32.totalorder %s45, %s59
    %p61 = scmp.eq.s32.totalorder %s14, 0
    %p62 = por %p60, %p61
    %s63 = ssub.s32 %s8, %s15
    %p64 = scmp.eq.s32.totalorder %s63, 0
    %s66 = sadd.s32 %s65, 1
    %s67 = scalar_select %p64, %s65, %s66
    %p70 = pneg %p64
    %p71 = scmp.eq.s32.totalorder %s8, 1
    %p72 = por %p70, %p71
    %p73 = scmp.ne.s32.totalorder %s65, %s68
    %p74 = scmp.eq.s32.totalorder %s8, 0
    %p75 = por %p73, %p74
    %p76 = scmp.ne.s32.totalorder %s65, %s68
    %p77 = scmp.eq.s32.totalorder %s13, 1
    %p78 = por %p76, %p77
    %p79 = scmp.ne.s32.totalorder %s68, %s69
    %p80 = scmp.eq.s32.totalorder %s13, 0
    %p81 = por %p79, %p80
    %p82 = scmp.ne.s32.totalorder %s68, %s69
    %p83 = scmp.eq.s32.totalorder %s14, 1
    %p84 = por %p82, %p83
    %p86 = scmp.ne.s32.totalorder %s69, %s85
    %p87 = scmp.eq.s32.totalorder %s14, 0
    %p88 = por %p86, %p87
    %p89 = scmp.le.s32.totalorder 1, %s8
    %p90 = scmp.lt.s32.totalorder %s8, 3
    %p91 = pnand %p89, %p90
    %p92 = pneg %p91
    // Predicated region
    $region9: #{netG_forward.9} parent=5 // pred_check
      _
    $region10: #{netG_forward.9} parent=5 // pred_check_branch
      %94 = sbr.rel (%p91) target = $region12
    $region11: #{netG_forward.9} parent=5 // pred_region
      %s95 = ssub.s32 %s8, 1
      // Predicated region
      $region13: #{netG_forward.9} parent=11 // pred_check
        %p96 = pneg %p55
      $region14: #{netG_forward.9} parent=11 // pred_check_branch
        %98 = sbr.rel (%p96) target = $region16
      $region15: #{netG_forward.9} parent=11 // pred_region
        _
      $region16: #{netG_forward.9} parent=11 // pred_fallthru
        _
    $region12: #{netG_forward.9} parent=5 // pred_fallthru
      _
    %p99 = scmp.lt.s32.totalorder %s8, 2
    // Predicated region
    $region17: #{netG_forward.9} parent=5 // pred_check
      %p100 = pneg %p99
    $region18: #{netG_forward.9} parent=5 // pred_check_branch
      %102 = sbr.rel (%p100) target = $region20
    $region19: #{netG_forward.9} parent=5 // pred_region
      // Predicated region
      $region21: #{netG_forward.9} parent=19 // pred_check
        %p103 = pneg %p28
      $region22: #{netG_forward.9} parent=19 // pred_check_branch
        %105 = sbr.rel (%p103) target = $region24
      $region23: #{netG_forward.9} parent=19 // pred_region
        %s106 = smul.u32 512, %s8
        %p107 = scmp.lt.s32.totalorder %s106, 1023
        %s108 = scalar_select %p107, %s106, 1023
        %s109 = smul.addr %s108, 4
        %s110 = scalar_lea.vmem %s0, %s109
        %s111 = smul.u32 512, %s8
      $region24: #{netG_forward.9} parent=19 // pred_fallthru
        _
    $region20: #{netG_forward.9} parent=5 // pred_fallthru
      _
    %p112 = scmp.le.s32.totalorder 1, %s8
    %p113 = scmp.lt.s32.totalorder %s8, 3
    %p114 = pnand %p112, %p113
    %p115 = pneg %p114
    // Predicated region
    $region25: #{netG_forward.9} parent=5 // pred_check
      _
    $region26: #{netG_forward.9} parent=5 // pred_check_branch
      %117 = sbr.rel (%p114) target = $region28
    $region27: #{netG_forward.9} parent=5 // pred_region
      %s118 = ssub.s32 %s8, 1
      %s119 = smul.u32 512, %s13
      %p120 = scmp.lt.s32.totalorder %s119, 1023
      %s121 = scalar_select %p120, %s119, 1023
      %s122 = smul.addr %s121, 4
      %s123 = scalar_lea.vmem %s0, %s122
      %p124 = pneg %p34
      %p125 = pneg %p31
      %p126 = pneg %p55
      %p127 = pneg %p52
      %p128 = pneg %p81
      %p129 = pneg %p78
      %s130 = smul.u32 512, %s13
      %p131 = scmp.lt.s32.totalorder %s130, 1023
      %s132 = scalar_select %p131, %s130, 1023
      %s133 = smul.addr %s132, 8
      %s134 = scalar_lea.vmem %s2, %s133
      %s135 = smul.u32 512, %s13
      %p136 = scmp.lt.s32.totalorder %s135, 1023
      %s137 = scalar_select %p136, %s135, 1023
      %s138 = smul.addr %s137, 4
      %s139 = scalar_lea.vmem %s0, %s138
      %s140 = smul.u32 512, %s13
      %s141 = smul.u32 512, %s13
      %p142 = scmp.lt.s32.totalorder %s141, 1023
      %s143 = scalar_select %p142, %s141, 1023
      %s144 = smul.addr %s143, 8
      %s145 = scalar_lea.vmem %s2, %s144
      %s146 = smul.u32 512, %s13
      %v148 = vld [vmem:[%s139] sm:$0xf]
      %v149 = vld [vmem:[%s139 + $0x4] sm:$0xf]
      %v150 = vld [vmem:[%s139 + $0x8] sm:$0xf]
      %v151 = vld [vmem:[%s139 + $0xc] sm:$0xf]
      %v152 = vld [vmem:[%s139 + $0x10] sm:$0xf]
      %v153 = vld [vmem:[%s139 + $0x14] sm:$0xf]
      %v154 = vld [vmem:[%s139 + $0x18] sm:$0xf]
      %v155 = vld [vmem:[%s139 + $0x1c] sm:$0xf]
      %v156 = vld [vmem:[%s139 + $0x20] sm:$0xf]
      %v157 = vld [vmem:[%s139 + $0x24] sm:$0xf]
      %v158 = vld [vmem:[%s139 + $0x28] sm:$0xf]
      %v159 = vld [vmem:[%s139 + $0x2c] sm:$0xf]
      %v160 = vld [vmem:[%s139 + $0x30] sm:$0xf]
      %v161 = vld [vmem:[%s139 + $0x34] sm:$0xf]
      %v162 = vld [vmem:[%s139 + $0x38] sm:$0xf]
      %v163 = vld [vmem:[%s139 + $0x3c] sm:$0xf]
      %v164 = vld [vmem:[%s139 + $0x40] sm:$0xf]
      %v165 = vld [vmem:[%s139 + $0x44] sm:$0xf]
      %v166 = vld [vmem:[%s139 + $0x48] sm:$0xf]
      %v167 = vld [vmem:[%s139 + $0x4c] sm:$0xf]
      %v168 = vld [vmem:[%s139 + $0x50] sm:$0xf]
      %v169 = vld [vmem:[%s139 + $0x54] sm:$0xf]
      %v170 = vld [vmem:[%s139 + $0x58] sm:$0xf]
      %v171 = vld [vmem:[%s139 + $0x5c] sm:$0xf]
      %v172 = vld [vmem:[%s139 + $0x60] sm:$0xf]
      %v173 = vld [vmem:[%s139 + $0x64] sm:$0xf]
      %v174 = vld [vmem:[%s139 + $0x68] sm:$0xf]
      %v175 = vld [vmem:[%s139 + $0x6c] sm:$0xf]
      %v176 = vld [vmem:[%s139 + $0x70] sm:$0xf]
      %v177 = vld [vmem:[%s139 + $0x74] sm:$0xf]
      %v178 = vld [vmem:[%s139 + $0x78] sm:$0xf]
      %v179 = vld [vmem:[%s139 + $0x7c] sm:$0xf]
      %v180 = vld [vmem:[%s139 + $0x80] sm:$0xf]
      %v181 = vld [vmem:[%s139 + $0x84] sm:$0xf]
      %v182 = vld [vmem:[%s139 + $0x88] sm:$0xf]
      %v183 = vld [vmem:[%s139 + $0x8c] sm:$0xf]
      %v184 = vld [vmem:[%s139 + $0x90] sm:$0xf]
      %v185 = vld [vmem:[%s139 + $0x94] sm:$0xf]
      %v186 = vld [vmem:[%s139 + $0x98] sm:$0xf]
      %v187 = vld [vmem:[%s139 + $0x9c] sm:$0xf]
      %v188 = vld [vmem:[%s139 + $0xa0] sm:$0xf]
      %v189 = vld [vmem:[%s139 + $0xa4] sm:$0xf]
      %v190 = vld [vmem:[%s139 + $0xa8] sm:$0xf]
      %v191 = vld [vmem:[%s139 + $0xac] sm:$0xf]
      %v192 = vld [vmem:[%s139 + $0xb0] sm:$0xf]
      %v193 = vld [vmem:[%s139 + $0xb4] sm:$0xf]
      %v194 = vld [vmem:[%s139 + $0xb8] sm:$0xf]
      %v195 = vld [vmem:[%s139 + $0xbc] sm:$0xf]
      %v196 = vld [vmem:[%s139 + $0xc0] sm:$0xf]
      %v197 = vld [vmem:[%s139 + $0xc4] sm:$0xf]
      %v198 = vld [vmem:[%s139 + $0xc8] sm:$0xf]
      %v199 = vld [vmem:[%s139 + $0xcc] sm:$0xf]
      %v200 = vld [vmem:[%s139 + $0xd0] sm:$0xf]
      %v201 = vld [vmem:[%s139 + $0xd4] sm:$0xf]
      %v202 = vld [vmem:[%s139 + $0xd8] sm:$0xf]
      %v203 = vld [vmem:[%s139 + $0xdc] sm:$0xf]
      %v204 = vld [vmem:[%s139 + $0xe0] sm:$0xf]
      %v205 = vld [vmem:[%s139 + $0xe4] sm:$0xf]
      %v206 = vld [vmem:[%s139 + $0xe8] sm:$0xf]
      %v207 = vld [vmem:[%s139 + $0xec] sm:$0xf]
      %v208 = vld [vmem:[%s139 + $0xf0] sm:$0xf]
      %v209 = vld [vmem:[%s139 + $0xf4] sm:$0xf]
      %v210 = vld [vmem:[%s139 + $0xf8] sm:$0xf]
      %v211 = vld [vmem:[%s139 + $0xfc] sm:$0xf]
      %v212 = vld [vmem:[%s139 + $0x100] sm:$0xf]
      %v213 = vld [vmem:[%s139 + $0x104] sm:$0xf]
      %v214 = vld [vmem:[%s139 + $0x108] sm:$0xf]
      %v215 = vld [vmem:[%s139 + $0x10c] sm:$0xf]
      %v216 = vld [vmem:[%s139 + $0x110] sm:$0xf]
      %v217 = vld [vmem:[%s139 + $0x114] sm:$0xf]
      %v218 = vld [vmem:[%s139 + $0x118] sm:$0xf]
      %v219 = vld [vmem:[%s139 + $0x11c] sm:$0xf]
      %v220 = vld [vmem:[%s139 + $0x120] sm:$0xf]
      %v221 = vld [vmem:[%s139 + $0x124] sm:$0xf]
      %v222 = vld [vmem:[%s139 + $0x128] sm:$0xf]
      %v223 = vld [vmem:[%s139 + $0x12c] sm:$0xf]
      %v224 = vld [vmem:[%s139 + $0x130] sm:$0xf]
      %v225 = vld [vmem:[%s139 + $0x134] sm:$0xf]
      %v226 = vld [vmem:[%s139 + $0x138] sm:$0xf]
      %v227 = vld [vmem:[%s139 + $0x13c] sm:$0xf]
      %v228 = vld [vmem:[%s139 + $0x140] sm:$0xf]
      %v229 = vld [vmem:[%s139 + $0x144] sm:$0xf]
      %v230 = vld [vmem:[%s139 + $0x148] sm:$0xf]
      %v231 = vld [vmem:[%s139 + $0x14c] sm:$0xf]
      %v232 = vld [vmem:[%s139 + $0x150] sm:$0xf]
      %v233 = vld [vmem:[%s139 + $0x154] sm:$0xf]
      %v234 = vld [vmem:[%s139 + $0x158] sm:$0xf]
      %v235 = vld [vmem:[%s139 + $0x15c] sm:$0xf]
      %v236 = vld [vmem:[%s139 + $0x160] sm:$0xf]
      %v237 = vld [vmem:[%s139 + $0x164] sm:$0xf]
      %v238 = vld [vmem:[%s139 + $0x168] sm:$0xf]
      %v239 = vld [vmem:[%s139 + $0x16c] sm:$0xf]
      %v240 = vld [vmem:[%s139 + $0x170] sm:$0xf]
      %v241 = vld [vmem:[%s139 + $0x174] sm:$0xf]
      %v242 = vld [vmem:[%s139 + $0x178] sm:$0xf]
      %v243 = vld [vmem:[%s139 + $0x17c] sm:$0xf]
      %v244 = vld [vmem:[%s139 + $0x180] sm:$0xf]
      %v245 = vld [vmem:[%s139 + $0x184] sm:$0xf]
      %v246 = vld [vmem:[%s139 + $0x188] sm:$0xf]
      %v247 = vld [vmem:[%s139 + $0x18c] sm:$0xf]
      %v248 = vld [vmem:[%s139 + $0x190] sm:$0xf]
      %v249 = vld [vmem:[%s139 + $0x194] sm:$0xf]
      %v250 = vld [vmem:[%s139 + $0x198] sm:$0xf]
      %v251 = vld [vmem:[%s139 + $0x19c] sm:$0xf]
      %v252 = vld [vmem:[%s139 + $0x1a0] sm:$0xf]
      %v253 = vld [vmem:[%s139 + $0x1a4] sm:$0xf]
      %v254 = vld [vmem:[%s139 + $0x1a8] sm:$0xf]
      %v255 = vld [vmem:[%s139 + $0x1ac] sm:$0xf]
      %v256 = vld [vmem:[%s139 + $0x1b0] sm:$0xf]
      %v257 = vld [vmem:[%s139 + $0x1b4] sm:$0xf]
      %v258 = vld [vmem:[%s139 + $0x1b8] sm:$0xf]
      %v259 = vld [vmem:[%s139 + $0x1bc] sm:$0xf]
      %v260 = vld [vmem:[%s139 + $0x1c0] sm:$0xf]
      %v261 = vld [vmem:[%s139 + $0x1c4] sm:$0xf]
      %v262 = vld [vmem:[%s139 + $0x1c8] sm:$0xf]
      %v263 = vld [vmem:[%s139 + $0x1cc] sm:$0xf]
      %v264 = vld [vmem:[%s139 + $0x1d0] sm:$0xf]
      %v265 = vld [vmem:[%s139 + $0x1d4] sm:$0xf]
      %v266 = vld [vmem:[%s139 + $0x1d8] sm:$0xf]
      %v267 = vld [vmem:[%s139 + $0x1dc] sm:$0xf]
      %v268 = vld [vmem:[%s139 + $0x1e0] sm:$0xf]
      %v269 = vld [vmem:[%s139 + $0x1e4] sm:$0xf]
      %v270 = vld [vmem:[%s139 + $0x1e8] sm:$0xf]
      %v271 = vld [vmem:[%s139 + $0x1ec] sm:$0xf]
      %v272 = vld [vmem:[%s139 + $0x1f0] sm:$0xf]
      %v273 = vld [vmem:[%s139 + $0x1f4] sm:$0xf]
      %v274 = vld [vmem:[%s139 + $0x1f8] sm:$0xf]
      %v275 = vld [vmem:[%s139 + $0x1fc] sm:$0xf]
      %v276 = vld [vmem:[%s139 + $0x200] sm:$0xf]
      %v277 = vld [vmem:[%s139 + $0x204] sm:$0xf]
      %v278 = vld [vmem:[%s139 + $0x208] sm:$0xf]
      %v279 = vld [vmem:[%s139 + $0x20c] sm:$0xf]
      %v280 = vld [vmem:[%s139 + $0x210] sm:$0xf]
      %v281 = vld [vmem:[%s139 + $0x214] sm:$0xf]
      %v282 = vld [vmem:[%s139 + $0x218] sm:$0xf]
      %v283 = vld [vmem:[%s139 + $0x21c] sm:$0xf]
      %v284 = vld [vmem:[%s139 + $0x220] sm:$0xf]
      %v285 = vld [vmem:[%s139 + $0x224] sm:$0xf]
      %v286 = vld [vmem:[%s139 + $0x228] sm:$0xf]
      %v287 = vld [vmem:[%s139 + $0x22c] sm:$0xf]
      %v288 = vld [vmem:[%s139 + $0x230] sm:$0xf]
      %v289 = vld [vmem:[%s139 + $0x234] sm:$0xf]
      %v290 = vld [vmem:[%s139 + $0x238] sm:$0xf]
      %v291 = vld [vmem:[%s139 + $0x23c] sm:$0xf]
      %v292 = vld [vmem:[%s139 + $0x240] sm:$0xf]
      %v293 = vld [vmem:[%s139 + $0x244] sm:$0xf]
      %v294 = vld [vmem:[%s139 + $0x248] sm:$0xf]
      %v295 = vld [vmem:[%s139 + $0x24c] sm:$0xf]
      %v296 = vld [vmem:[%s139 + $0x250] sm:$0xf]
      %v297 = vld [vmem:[%s139 + $0x254] sm:$0xf]
      %v298 = vld [vmem:[%s139 + $0x258] sm:$0xf]
      %v299 = vld [vmem:[%s139 + $0x25c] sm:$0xf]
      %v300 = vld [vmem:[%s139 + $0x260] sm:$0xf]
      %v301 = vld [vmem:[%s139 + $0x264] sm:$0xf]
      %v302 = vld [vmem:[%s139 + $0x268] sm:$0xf]
      %v303 = vld [vmem:[%s139 + $0x26c] sm:$0xf]
      %v304 = vld [vmem:[%s139 + $0x270] sm:$0xf]
      %v305 = vld [vmem:[%s139 + $0x274] sm:$0xf]
      %v306 = vld [vmem:[%s139 + $0x278] sm:$0xf]
      %v307 = vld [vmem:[%s139 + $0x27c] sm:$0xf]
      %v308 = vld [vmem:[%s139 + $0x280] sm:$0xf]
      %v309 = vld [vmem:[%s139 + $0x284] sm:$0xf]
      %v310 = vld [vmem:[%s139 + $0x288] sm:$0xf]
      %v311 = vld [vmem:[%s139 + $0x28c] sm:$0xf]
      %v312 = vld [vmem:[%s139 + $0x290] sm:$0xf]
      %v313 = vld [vmem:[%s139 + $0x294] sm:$0xf]
      %v314 = vld [vmem:[%s139 + $0x298] sm:$0xf]
      %v315 = vld [vmem:[%s139 + $0x29c] sm:$0xf]
      %v316 = vld [vmem:[%s139 + $0x2a0] sm:$0xf]
      %v317 = vld [vmem:[%s139 + $0x2a4] sm:$0xf]
      %v318 = vld [vmem:[%s139 + $0x2a8] sm:$0xf]
      %v319 = vld [vmem:[%s139 + $0x2ac] sm:$0xf]
      %v320 = vld [vmem:[%s139 + $0x2b0] sm:$0xf]
      %v321 = vld [vmem:[%s139 + $0x2b4] sm:$0xf]
      %v322 = vld [vmem:[%s139 + $0x2b8] sm:$0xf]
      %v323 = vld [vmem:[%s139 + $0x2bc] sm:$0xf]
      %v324 = vld [vmem:[%s139 + $0x2c0] sm:$0xf]
      %v325 = vld [vmem:[%s139 + $0x2c4] sm:$0xf]
      %v326 = vld [vmem:[%s139 + $0x2c8] sm:$0xf]
      %v327 = vld [vmem:[%s139 + $0x2cc] sm:$0xf]
      %v328 = vld [vmem:[%s139 + $0x2d0] sm:$0xf]
      %v329 = vld [vmem:[%s139 + $0x2d4] sm:$0xf]
      %v330 = vld [vmem:[%s139 + $0x2d8] sm:$0xf]
      %v331 = vld [vmem:[%s139 + $0x2dc] sm:$0xf]
      %v332 = vld [vmem:[%s139 + $0x2e0] sm:$0xf]
      %v333 = vld [vmem:[%s139 + $0x2e4] sm:$0xf]
      %v334 = vld [vmem:[%s139 + $0x2e8] sm:$0xf]
      %v335 = vld [vmem:[%s139 + $0x2ec] sm:$0xf]
      %v336 = vld [vmem:[%s139 + $0x2f0] sm:$0xf]
      %v337 = vld [vmem:[%s139 + $0x2f4] sm:$0xf]
      %v338 = vld [vmem:[%s139 + $0x2f8] sm:$0xf]
      %v339 = vld [vmem:[%s139 + $0x2fc] sm:$0xf]
      %v340 = vld [vmem:[%s139 + $0x300] sm:$0xf]
      %v341 = vld [vmem:[%s139 + $0x304] sm:$0xf]
      %v342 = vld [vmem:[%s139 + $0x308] sm:$0xf]
      %v343 = vld [vmem:[%s139 + $0x30c] sm:$0xf]
      %v344 = vld [vmem:[%s139 + $0x310] sm:$0xf]
      %v345 = vld [vmem:[%s139 + $0x314] sm:$0xf]
      %v346 = vld [vmem:[%s139 + $0x318] sm:$0xf]
      %v347 = vld [vmem:[%s139 + $0x31c] sm:$0xf]
      %v348 = vld [vmem:[%s139 + $0x320] sm:$0xf]
      %v349 = vld [vmem:[%s139 + $0x324] sm:$0xf]
      %v350 = vld [vmem:[%s139 + $0x328] sm:$0xf]
      %v351 = vld [vmem:[%s139 + $0x32c] sm:$0xf]
      %v352 = vld [vmem:[%s139 + $0x330] sm:$0xf]
      %v353 = vld [vmem:[%s139 + $0x334] sm:$0xf]
      %v354 = vld [vmem:[%s139 + $0x338] sm:$0xf]
      %v355 = vld [vmem:[%s139 + $0x33c] sm:$0xf]
      %v356 = vld [vmem:[%s139 + $0x340] sm:$0xf]
      %v357 = vld [vmem:[%s139 + $0x344] sm:$0xf]
      %v358 = vld [vmem:[%s139 + $0x348] sm:$0xf]
      %v359 = vld [vmem:[%s139 + $0x34c] sm:$0xf]
      %v360 = vld [vmem:[%s139 + $0x350] sm:$0xf]
      %v361 = vld [vmem:[%s139 + $0x354] sm:$0xf]
      %v362 = vld [vmem:[%s139 + $0x358] sm:$0xf]
      %v363 = vld [vmem:[%s139 + $0x35c] sm:$0xf]
      %v364 = vld [vmem:[%s139 + $0x360] sm:$0xf]
      %v365 = vld [vmem:[%s139 + $0x364] sm:$0xf]
      %v366 = vld [vmem:[%s139 + $0x368] sm:$0xf]
      %v367 = vld [vmem:[%s139 + $0x36c] sm:$0xf]
      %v368 = vld [vmem:[%s139 + $0x370] sm:$0xf]
      %v369 = vld [vmem:[%s139 + $0x374] sm:$0xf]
      %v370 = vld [vmem:[%s139 + $0x378] sm:$0xf]
      %v371 = vld [vmem:[%s139 + $0x37c] sm:$0xf]
      %v372 = vld [vmem:[%s139 + $0x380] sm:$0xf]
      %v373 = vld [vmem:[%s139 + $0x384] sm:$0xf]
      %v374 = vld [vmem:[%s139 + $0x388] sm:$0xf]
      %v375 = vld [vmem:[%s139 + $0x38c] sm:$0xf]
      %v376 = vld [vmem:[%s139 + $0x390] sm:$0xf]
      %v377 = vld [vmem:[%s139 + $0x394] sm:$0xf]
      %v378 = vld [vmem:[%s139 + $0x398] sm:$0xf]
      %v379 = vld [vmem:[%s139 + $0x39c] sm:$0xf]
      %v380 = vld [vmem:[%s139 + $0x3a0] sm:$0xf]
      %v381 = vld [vmem:[%s139 + $0x3a4] sm:$0xf]
      %v382 = vld [vmem:[%s139 + $0x3a8] sm:$0xf]
      %v383 = vld [vmem:[%s139 + $0x3ac] sm:$0xf]
      %v384 = vld [vmem:[%s139 + $0x3b0] sm:$0xf]
      %v385 = vld [vmem:[%s139 + $0x3b4] sm:$0xf]
      %v386 = vld [vmem:[%s139 + $0x3b8] sm:$0xf]
      %v387 = vld [vmem:[%s139 + $0x3bc] sm:$0xf]
      %v388 = vld [vmem:[%s139 + $0x3c0] sm:$0xf]
      %v389 = vld [vmem:[%s139 + $0x3c4] sm:$0xf]
      %v390 = vld [vmem:[%s139 + $0x3c8] sm:$0xf]
      %v391 = vld [vmem:[%s139 + $0x3cc] sm:$0xf]
      %v392 = vld [vmem:[%s139 + $0x3d0] sm:$0xf]
      %v393 = vld [vmem:[%s139 + $0x3d4] sm:$0xf]
      %v394 = vld [vmem:[%s139 + $0x3d8] sm:$0xf]
      %v395 = vld [vmem:[%s139 + $0x3dc] sm:$0xf]
      %v396 = vld [vmem:[%s139 + $0x3e0] sm:$0xf]
      %v397 = vld [vmem:[%s139 + $0x3e4] sm:$0xf]
      %v398 = vld [vmem:[%s139 + $0x3e8] sm:$0xf]
      %v399 = vld [vmem:[%s139 + $0x3ec] sm:$0xf]
      %v400 = vld [vmem:[%s139 + $0x3f0] sm:$0xf]
      %v401 = vld [vmem:[%s139 + $0x3f4] sm:$0xf]
      %v402 = vld [vmem:[%s139 + $0x3f8] sm:$0xf]
      %v403 = vld [vmem:[%s139 + $0x3fc] sm:$0xf]
      %v404 = vld [vmem:[%s139 + $0x400] sm:$0xf]
      %v405 = vld [vmem:[%s139 + $0x404] sm:$0xf]
      %v406 = vld [vmem:[%s139 + $0x408] sm:$0xf]
      %v407 = vld [vmem:[%s139 + $0x40c] sm:$0xf]
      %v408 = vld [vmem:[%s139 + $0x410] sm:$0xf]
      %v409 = vld [vmem:[%s139 + $0x414] sm:$0xf]
      %v410 = vld [vmem:[%s139 + $0x418] sm:$0xf]
      %v411 = vld [vmem:[%s139 + $0x41c] sm:$0xf]
      %v412 = vld [vmem:[%s139 + $0x420] sm:$0xf]
      %v413 = vld [vmem:[%s139 + $0x424] sm:$0xf]
      %v414 = vld [vmem:[%s139 + $0x428] sm:$0xf]
      %v415 = vld [vmem:[%s139 + $0x42c] sm:$0xf]
      %v416 = vld [vmem:[%s139 + $0x430] sm:$0xf]
      %v417 = vld [vmem:[%s139 + $0x434] sm:$0xf]
      %v418 = vld [vmem:[%s139 + $0x438] sm:$0xf]
      %v419 = vld [vmem:[%s139 + $0x43c] sm:$0xf]
      %v420 = vld [vmem:[%s139 + $0x440] sm:$0xf]
      %v421 = vld [vmem:[%s139 + $0x444] sm:$0xf]
      %v422 = vld [vmem:[%s139 + $0x448] sm:$0xf]
      %v423 = vld [vmem:[%s139 + $0x44c] sm:$0xf]
      %v424 = vld [vmem:[%s139 + $0x450] sm:$0xf]
      %v425 = vld [vmem:[%s139 + $0x454] sm:$0xf]
      %v426 = vld [vmem:[%s139 + $0x458] sm:$0xf]
      %v427 = vld [vmem:[%s139 + $0x45c] sm:$0xf]
      %v428 = vld [vmem:[%s139 + $0x460] sm:$0xf]
      %v429 = vld [vmem:[%s139 + $0x464] sm:$0xf]
      %v430 = vld [vmem:[%s139 + $0x468] sm:$0xf]
      %v431 = vld [vmem:[%s139 + $0x46c] sm:$0xf]
      %v432 = vld [vmem:[%s139 + $0x470] sm:$0xf]
      %v433 = vld [vmem:[%s139 + $0x474] sm:$0xf]
      %v434 = vld [vmem:[%s139 + $0x478] sm:$0xf]
      %v435 = vld [vmem:[%s139 + $0x47c] sm:$0xf]
      %v436 = vld [vmem:[%s139 + $0x480] sm:$0xf]
      %v437 = vld [vmem:[%s139 + $0x484] sm:$0xf]
      %v438 = vld [vmem:[%s139 + $0x488] sm:$0xf]
      %v439 = vld [vmem:[%s139 + $0x48c] sm:$0xf]
      %v440 = vld [vmem:[%s139 + $0x490] sm:$0xf]
      %v441 = vld [vmem:[%s139 + $0x494] sm:$0xf]
      %v442 = vld [vmem:[%s139 + $0x498] sm:$0xf]
      %v443 = vld [vmem:[%s139 + $0x49c] sm:$0xf]
      %v444 = vld [vmem:[%s139 + $0x4a0] sm:$0xf]
      %v445 = vld [vmem:[%s139 + $0x4a4] sm:$0xf]
      %v446 = vld [vmem:[%s139 + $0x4a8] sm:$0xf]
      %v447 = vld [vmem:[%s139 + $0x4ac] sm:$0xf]
      %v448 = vld [vmem:[%s139 + $0x4b0] sm:$0xf]
      %v449 = vld [vmem:[%s139 + $0x4b4] sm:$0xf]
      %v450 = vld [vmem:[%s139 + $0x4b8] sm:$0xf]
      %v451 = vld [vmem:[%s139 + $0x4bc] sm:$0xf]
      %v452 = vld [vmem:[%s139 + $0x4c0] sm:$0xf]
      %v453 = vld [vmem:[%s139 + $0x4c4] sm:$0xf]
      %v454 = vld [vmem:[%s139 + $0x4c8] sm:$0xf]
      %v455 = vld [vmem:[%s139 + $0x4cc] sm:$0xf]
      %v456 = vld [vmem:[%s139 + $0x4d0] sm:$0xf]
      %v457 = vld [vmem:[%s139 + $0x4d4] sm:$0xf]
      %v458 = vld [vmem:[%s139 + $0x4d8] sm:$0xf]
      %v459 = vld [vmem:[%s139 + $0x4dc] sm:$0xf]
      %v460 = vld [vmem:[%s139 + $0x4e0] sm:$0xf]
      %v461 = vld [vmem:[%s139 + $0x4e4] sm:$0xf]
      %v462 = vld [vmem:[%s139 + $0x4e8] sm:$0xf]
      %v463 = vld [vmem:[%s139 + $0x4ec] sm:$0xf]
      %v464 = vld [vmem:[%s139 + $0x4f0] sm:$0xf]
      %v465 = vld [vmem:[%s139 + $0x4f4] sm:$0xf]
      %v466 = vld [vmem:[%s139 + $0x4f8] sm:$0xf]
      %v467 = vld [vmem:[%s139 + $0x4fc] sm:$0xf]
      %v468 = vld [vmem:[%s139 + $0x500] sm:$0xf]
      %v469 = vld [vmem:[%s139 + $0x504] sm:$0xf]
      %v470 = vld [vmem:[%s139 + $0x508] sm:$0xf]
      %v471 = vld [vmem:[%s139 + $0x50c] sm:$0xf]
      %v472 = vld [vmem:[%s139 + $0x510] sm:$0xf]
      %v473 = vld [vmem:[%s139 + $0x514] sm:$0xf]
      %v474 = vld [vmem:[%s139 + $0x518] sm:$0xf]
      %v475 = vld [vmem:[%s139 + $0x51c] sm:$0xf]
      %v476 = vld [vmem:[%s139 + $0x520] sm:$0xf]
      %v477 = vld [vmem:[%s139 + $0x524] sm:$0xf]
      %v478 = vld [vmem:[%s139 + $0x528] sm:$0xf]
      %v479 = vld [vmem:[%s139 + $0x52c] sm:$0xf]
      %v480 = vld [vmem:[%s139 + $0x530] sm:$0xf]
      %v481 = vld [vmem:[%s139 + $0x534] sm:$0xf]
      %v482 = vld [vmem:[%s139 + $0x538] sm:$0xf]
      %v483 = vld [vmem:[%s139 + $0x53c] sm:$0xf]
      %v484 = vld [vmem:[%s139 + $0x540] sm:$0xf]
      %v485 = vld [vmem:[%s139 + $0x544] sm:$0xf]
      %v486 = vld [vmem:[%s139 + $0x548] sm:$0xf]
      %v487 = vld [vmem:[%s139 + $0x54c] sm:$0xf]
      %v488 = vld [vmem:[%s139 + $0x550] sm:$0xf]
      %v489 = vld [vmem:[%s139 + $0x554] sm:$0xf]
      %v490 = vld [vmem:[%s139 + $0x558] sm:$0xf]
      %v491 = vld [vmem:[%s139 + $0x55c] sm:$0xf]
      %v492 = vld [vmem:[%s139 + $0x560] sm:$0xf]
      %v493 = vld [vmem:[%s139 + $0x564] sm:$0xf]
      %v494 = vld [vmem:[%s139 + $0x568] sm:$0xf]
      %v495 = vld [vmem:[%s139 + $0x56c] sm:$0xf]
      %v496 = vld [vmem:[%s139 + $0x570] sm:$0xf]
      %v497 = vld [vmem:[%s139 + $0x574] sm:$0xf]
      %v498 = vld [vmem:[%s139 + $0x578] sm:$0xf]
      %v499 = vld [vmem:[%s139 + $0x57c] sm:$0xf]
      %v500 = vld [vmem:[%s139 + $0x580] sm:$0xf]
      %v501 = vld [vmem:[%s139 + $0x584] sm:$0xf]
      %v502 = vld [vmem:[%s139 + $0x588] sm:$0xf]
      %v503 = vld [vmem:[%s139 + $0x58c] sm:$0xf]
      %v504 = vld [vmem:[%s139 + $0x590] sm:$0xf]
      %v505 = vld [vmem:[%s139 + $0x594] sm:$0xf]
      %v506 = vld [vmem:[%s139 + $0x598] sm:$0xf]
      %v507 = vld [vmem:[%s139 + $0x59c] sm:$0xf]
      %v508 = vld [vmem:[%s139 + $0x5a0] sm:$0xf]
      %v509 = vld [vmem:[%s139 + $0x5a4] sm:$0xf]
      %v510 = vld [vmem:[%s139 + $0x5a8] sm:$0xf]
      %v511 = vld [vmem:[%s139 + $0x5ac] sm:$0xf]
      %v512 = vld [vmem:[%s139 + $0x5b0] sm:$0xf]
      %v513 = vld [vmem:[%s139 + $0x5b4] sm:$0xf]
      %v514 = vld [vmem:[%s139 + $0x5b8] sm:$0xf]
      %v515 = vld [vmem:[%s139 + $0x5bc] sm:$0xf]
      %v516 = vld [vmem:[%s139 + $0x5c0] sm:$0xf]
      %v517 = vld [vmem:[%s139 + $0x5c4] sm:$0xf]
      %v518 = vld [vmem:[%s139 + $0x5c8] sm:$0xf]
      %v519 = vld [vmem:[%s139 + $0x5cc] sm:$0xf]
      %v520 = vld [vmem:[%s139 + $0x5d0] sm:$0xf]
      %v521 = vld [vmem:[%s139 + $0x5d4] sm:$0xf]
      %v522 = vld [vmem:[%s139 + $0x5d8] sm:$0xf]
      %v523 = vld [vmem:[%s139 + $0x5dc] sm:$0xf]
      %v524 = vld [vmem:[%s139 + $0x5e0] sm:$0xf]
      %v525 = vld [vmem:[%s139 + $0x5e4] sm:$0xf]
      %v526 = vld [vmem:[%s139 + $0x5e8] sm:$0xf]
      %v527 = vld [vmem:[%s139 + $0x5ec] sm:$0xf]
      %v528 = vld [vmem:[%s139 + $0x5f0] sm:$0xf]
      %v529 = vld [vmem:[%s139 + $0x5f4] sm:$0xf]
      %v530 = vld [vmem:[%s139 + $0x5f8] sm:$0xf]
      %v531 = vld [vmem:[%s139 + $0x5fc] sm:$0xf]
      %v532 = vld [vmem:[%s139 + $0x600] sm:$0xf]
      %v533 = vld [vmem:[%s139 + $0x604] sm:$0xf]
      %v534 = vld [vmem:[%s139 + $0x608] sm:$0xf]
      %v535 = vld [vmem:[%s139 + $0x60c] sm:$0xf]
      %v536 = vld [vmem:[%s139 + $0x610] sm:$0xf]
      %v537 = vld [vmem:[%s139 + $0x614] sm:$0xf]
      %v538 = vld [vmem:[%s139 + $0x618] sm:$0xf]
      %v539 = vld [vmem:[%s139 + $0x61c] sm:$0xf]
      %v540 = vld [vmem:[%s139 + $0x620] sm:$0xf]
      %v541 = vld [vmem:[%s139 + $0x624] sm:$0xf]
      %v542 = vld [vmem:[%s139 + $0x628] sm:$0xf]
      %v543 = vld [vmem:[%s139 + $0x62c] sm:$0xf]
      %v544 = vld [vmem:[%s139 + $0x630] sm:$0xf]
      %v545 = vld [vmem:[%s139 + $0x634] sm:$0xf]
      %v546 = vld [vmem:[%s139 + $0x638] sm:$0xf]
      %v547 = vld [vmem:[%s139 + $0x63c] sm:$0xf]
      %v548 = vld [vmem:[%s139 + $0x640] sm:$0xf]
      %v549 = vld [vmem:[%s139 + $0x644] sm:$0xf]
      %v550 = vld [vmem:[%s139 + $0x648] sm:$0xf]
      %v551 = vld [vmem:[%s139 + $0x64c] sm:$0xf]
      %v552 = vld [vmem:[%s139 + $0x650] sm:$0xf]
      %v553 = vld [vmem:[%s139 + $0x654] sm:$0xf]
      %v554 = vld [vmem:[%s139 + $0x658] sm:$0xf]
      %v555 = vld [vmem:[%s139 + $0x65c] sm:$0xf]
      %v556 = vld [vmem:[%s139 + $0x660] sm:$0xf]
      %v557 = vld [vmem:[%s139 + $0x664] sm:$0xf]
      %v558 = vld [vmem:[%s139 + $0x668] sm:$0xf]
      %v559 = vld [vmem:[%s139 + $0x66c] sm:$0xf]
      %v560 = vld [vmem:[%s139 + $0x670] sm:$0xf]
      %v561 = vld [vmem:[%s139 + $0x674] sm:$0xf]
      %v562 = vld [vmem:[%s139 + $0x678] sm:$0xf]
      %v563 = vld [vmem:[%s139 + $0x67c] sm:$0xf]
      %v564 = vld [vmem:[%s139 + $0x680] sm:$0xf]
      %v565 = vld [vmem:[%s139 + $0x684] sm:$0xf]
      %v566 = vld [vmem:[%s139 + $0x688] sm:$0xf]
      %v567 = vld [vmem:[%s139 + $0x68c] sm:$0xf]
      %v568 = vld [vmem:[%s139 + $0x690] sm:$0xf]
      %v569 = vld [vmem:[%s139 + $0x694] sm:$0xf]
      %v570 = vld [vmem:[%s139 + $0x698] sm:$0xf]
      %v571 = vld [vmem:[%s139 + $0x69c] sm:$0xf]
      %v572 = vld [vmem:[%s139 + $0x6a0] sm:$0xf]
      %v573 = vld [vmem:[%s139 + $0x6a4] sm:$0xf]
      %v574 = vld [vmem:[%s139 + $0x6a8] sm:$0xf]
      %v575 = vld [vmem:[%s139 + $0x6ac] sm:$0xf]
      %v576 = vld [vmem:[%s139 + $0x6b0] sm:$0xf]
      %v577 = vld [vmem:[%s139 + $0x6b4] sm:$0xf]
      %v578 = vld [vmem:[%s139 + $0x6b8] sm:$0xf]
      %v579 = vld [vmem:[%s139 + $0x6bc] sm:$0xf]
      %v580 = vld [vmem:[%s139 + $0x6c0] sm:$0xf]
      %v581 = vld [vmem:[%s139 + $0x6c4] sm:$0xf]
      %v582 = vld [vmem:[%s139 + $0x6c8] sm:$0xf]
      %v583 = vld [vmem:[%s139 + $0x6cc] sm:$0xf]
      %v584 = vld [vmem:[%s139 + $0x6d0] sm:$0xf]
      %v585 = vld [vmem:[%s139 + $0x6d4] sm:$0xf]
      %v586 = vld [vmem:[%s139 + $0x6d8] sm:$0xf]
      %v587 = vld [vmem:[%s139 + $0x6dc] sm:$0xf]
      %v588 = vld [vmem:[%s139 + $0x6e0] sm:$0xf]
      %v589 = vld [vmem:[%s139 + $0x6e4] sm:$0xf]
      %v590 = vld [vmem:[%s139 + $0x6e8] sm:$0xf]
      %v591 = vld [vmem:[%s139 + $0x6ec] sm:$0xf]
      %v592 = vld [vmem:[%s139 + $0x6f0] sm:$0xf]
      %v593 = vld [vmem:[%s139 + $0x6f4] sm:$0xf]
      %v594 = vld [vmem:[%s139 + $0x6f8] sm:$0xf]
      %v595 = vld [vmem:[%s139 + $0x6fc] sm:$0xf]
      %v596 = vld [vmem:[%s139 + $0x700] sm:$0xf]
      %v597 = vld [vmem:[%s139 + $0x704] sm:$0xf]
      %v598 = vld [vmem:[%s139 + $0x708] sm:$0xf]
      %v599 = vld [vmem:[%s139 + $0x70c] sm:$0xf]
      %v600 = vld [vmem:[%s139 + $0x710] sm:$0xf]
      %v601 = vld [vmem:[%s139 + $0x714] sm:$0xf]
      %v602 = vld [vmem:[%s139 + $0x718] sm:$0xf]
      %v603 = vld [vmem:[%s139 + $0x71c] sm:$0xf]
      %v604 = vld [vmem:[%s139 + $0x720] sm:$0xf]
      %v605 = vld [vmem:[%s139 + $0x724] sm:$0xf]
      %v606 = vld [vmem:[%s139 + $0x728] sm:$0xf]
      %v607 = vld [vmem:[%s139 + $0x72c] sm:$0xf]
      %v608 = vld [vmem:[%s139 + $0x730] sm:$0xf]
      %v609 = vld [vmem:[%s139 + $0x734] sm:$0xf]
      %v610 = vld [vmem:[%s139 + $0x738] sm:$0xf]
      %v611 = vld [vmem:[%s139 + $0x73c] sm:$0xf]
      %v612 = vld [vmem:[%s139 + $0x740] sm:$0xf]
      %v613 = vld [vmem:[%s139 + $0x744] sm:$0xf]
      %v614 = vld [vmem:[%s139 + $0x748] sm:$0xf]
      %v615 = vld [vmem:[%s139 + $0x74c] sm:$0xf]
      %v616 = vld [vmem:[%s139 + $0x750] sm:$0xf]
      %v617 = vld [vmem:[%s139 + $0x754] sm:$0xf]
      %v618 = vld [vmem:[%s139 + $0x758] sm:$0xf]
      %v619 = vld [vmem:[%s139 + $0x75c] sm:$0xf]
      %v620 = vld [vmem:[%s139 + $0x760] sm:$0xf]
      %v621 = vld [vmem:[%s139 + $0x764] sm:$0xf]
      %v622 = vld [vmem:[%s139 + $0x768] sm:$0xf]
      %v623 = vld [vmem:[%s139 + $0x76c] sm:$0xf]
      %v624 = vld [vmem:[%s139 + $0x770] sm:$0xf]
      %v625 = vld [vmem:[%s139 + $0x774] sm:$0xf]
      %v626 = vld [vmem:[%s139 + $0x778] sm:$0xf]
      %v627 = vld [vmem:[%s139 + $0x77c] sm:$0xf]
      %v628 = vld [vmem:[%s139 + $0x780] sm:$0xf]
      %v629 = vld [vmem:[%s139 + $0x784] sm:$0xf]
      %v630 = vld [vmem:[%s139 + $0x788] sm:$0xf]
      %v631 = vld [vmem:[%s139 + $0x78c] sm:$0xf]
      %v632 = vld [vmem:[%s139 + $0x790] sm:$0xf]
      %v633 = vld [vmem:[%s139 + $0x794] sm:$0xf]
      %v634 = vld [vmem:[%s139 + $0x798] sm:$0xf]
      %v635 = vld [vmem:[%s139 + $0x79c] sm:$0xf]
      %v636 = vld [vmem:[%s139 + $0x7a0] sm:$0xf]
      %v637 = vld [vmem:[%s139 + $0x7a4] sm:$0xf]
      %v638 = vld [vmem:[%s139 + $0x7a8] sm:$0xf]
      %v639 = vld [vmem:[%s139 + $0x7ac] sm:$0xf]
      %v640 = vld [vmem:[%s139 + $0x7b0] sm:$0xf]
      %v641 = vld [vmem:[%s139 + $0x7b4] sm:$0xf]
      %v642 = vld [vmem:[%s139 + $0x7b8] sm:$0xf]
      %v643 = vld [vmem:[%s139 + $0x7bc] sm:$0xf]
      %v644 = vld [vmem:[%s139 + $0x7c0] sm:$0xf]
      %v645 = vld [vmem:[%s139 + $0x7c4] sm:$0xf]
      %v646 = vld [vmem:[%s139 + $0x7c8] sm:$0xf]
      %v647 = vld [vmem:[%s139 + $0x7cc] sm:$0xf]
      %v648 = vld [vmem:[%s139 + $0x7d0] sm:$0xf]
      %v649 = vld [vmem:[%s139 + $0x7d4] sm:$0xf]
      %v650 = vld [vmem:[%s139 + $0x7d8] sm:$0xf]
      %v651 = vld [vmem:[%s139 + $0x7dc] sm:$0xf]
      %v652 = vld [vmem:[%s139 + $0x7e0] sm:$0xf]
      %v653 = vld [vmem:[%s139 + $0x7e4] sm:$0xf]
      %v654 = vld [vmem:[%s139 + $0x7e8] sm:$0xf]
      %v655 = vld [vmem:[%s139 + $0x7ec] sm:$0xf]
      %v656 = vld [vmem:[%s139 + $0x7f0] sm:$0xf]
      %v657 = vld [vmem:[%s139 + $0x7f4] sm:$0xf]
      %v658 = vld [vmem:[%s139 + $0x7f8] sm:$0xf]
      %v659 = vld [vmem:[%s139 + $0x7fc] sm:$0xf]
      %v660 = vld [vmem:[%s1] sm:$0x3]
      %v1173 = vunpack.c.l.b16 %v148
      %v1174 = vunpack.c.l.b16 %v149
      %v1175 = vunpack.c.l.b16 %v150
      %v1176 = vunpack.c.l.b16 %v151
      %v1177 = vunpack.c.l.b16 %v152
      %v1178 = vunpack.c.l.b16 %v153
      %v1179 = vunpack.c.l.b16 %v154
      %v1180 = vunpack.c.l.b16 %v155
      %v1181 = vunpack.c.l.b16 %v156
      %v1182 = vunpack.c.l.b16 %v157
      %v1183 = vunpack.c.l.b16 %v158
      %v1184 = vunpack.c.l.b16 %v159
      %v1185 = vunpack.c.l.b16 %v160
      %v1186 = vunpack.c.l.b16 %v161
      %v1187 = vunpack.c.l.b16 %v162
      %v1188 = vunpack.c.l.b16 %v163
      %v1189 = vunpack.c.l.b16 %v164
      %v1190 = vunpack.c.l.b16 %v165
      %v1191 = vunpack.c.l.b16 %v166
      %v1192 = vunpack.c.l.b16 %v167
      %v1193 = vunpack.c.l.b16 %v168
      %v1194 = vunpack.c.l.b16 %v169
      %v1195 = vunpack.c.l.b16 %v170
      %v1196 = vunpack.c.l.b16 %v171
      %v1197 = vunpack.c.l.b16 %v172
      %v1198 = vunpack.c.l.b16 %v173
      %v1199 = vunpack.c.l.b16 %v174
      %v1200 = vunpack.c.l.b16 %v175
      %v1201 = vunpack.c.l.b16 %v176
      %v1202 = vunpack.c.l.b16 %v177
      %v1203 = vunpack.c.l.b16 %v178
      %v1204 = vunpack.c.l.b16 %v179
      %v1205 = vunpack.c.l.b16 %v180
      %v1206 = vunpack.c.l.b16 %v181
      %v1207 = vunpack.c.l.b16 %v182
      %v1208 = vunpack.c.l.b16 %v183
      %v1209 = vunpack.c.l.b16 %v184
      %v1210 = vunpack.c.l.b16 %v185
      %v1211 = vunpack.c.l.b16 %v186
      %v1212 = vunpack.c.l.b16 %v187
      %v1213 = vunpack.c.l.b16 %v188
      %v1214 = vunpack.c.l.b16 %v189
      %v1215 = vunpack.c.l.b16 %v190
      %v1216 = vunpack.c.l.b16 %v191
      %v1217 = vunpack.c.l.b16 %v192
      %v1218 = vunpack.c.l.b16 %v193
      %v1219 = vunpack.c.l.b16 %v194
      %v1220 = vunpack.c.l.b16 %v195
      %v1221 = vunpack.c.l.b16 %v196
      %v1222 = vunpack.c.l.b16 %v197
      %v1223 = vunpack.c.l.b16 %v198
      %v1224 = vunpack.c.l.b16 %v199
      %v1225 = vunpack.c.l.b16 %v200
      %v1226 = vunpack.c.l.b16 %v201
      %v1227 = vunpack.c.l.b16 %v202
      %v1228 = vunpack.c.l.b16 %v203
      %v1229 = vunpack.c.l.b16 %v204
      %v1230 = vunpack.c.l.b16 %v205
      %v1231 = vunpack.c.l.b16 %v206
      %v1232 = vunpack.c.l.b16 %v207
      %v1233 = vunpack.c.l.b16 %v208
      %v1234 = vunpack.c.l.b16 %v209
      %v1235 = vunpack.c.l.b16 %v210
      %v1236 = vunpack.c.l.b16 %v211
      %v1237 = vunpack.c.l.b16 %v212
      %v1238 = vunpack.c.l.b16 %v213
      %v1239 = vunpack.c.l.b16 %v214
      %v1240 = vunpack.c.l.b16 %v215
      %v1241 = vunpack.c.l.b16 %v216
      %v1242 = vunpack.c.l.b16 %v217
      %v1243 = vunpack.c.l.b16 %v218
      %v1244 = vunpack.c.l.b16 %v219
      %v1245 = vunpack.c.l.b16 %v220
      %v1246 = vunpack.c.l.b16 %v221
      %v1247 = vunpack.c.l.b16 %v222
      %v1248 = vunpack.c.l.b16 %v223
      %v1249 = vunpack.c.l.b16 %v224
      %v1250 = vunpack.c.l.b16 %v225
      %v1251 = vunpack.c.l.b16 %v226
      %v1252 = vunpack.c.l.b16 %v227
      %v1253 = vunpack.c.l.b16 %v228
      %v1254 = vunpack.c.l.b16 %v229
      %v1255 = vunpack.c.l.b16 %v230
      %v1256 = vunpack.c.l.b16 %v231
      %v1257 = vunpack.c.l.b16 %v232
      %v1258 = vunpack.c.l.b16 %v233
      %v1259 = vunpack.c.l.b16 %v234
      %v1260 = vunpack.c.l.b16 %v235
      %v1261 = vunpack.c.l.b16 %v236
      %v1262 = vunpack.c.l.b16 %v237
      %v1263 = vunpack.c.l.b16 %v238
      %v1264 = vunpack.c.l.b16 %v239
      %v1265 = vunpack.c.l.b16 %v240
      %v1266 = vunpack.c.l.b16 %v241
      %v1267 = vunpack.c.l.b16 %v242
      %v1268 = vunpack.c.l.b16 %v243
      %v1269 = vunpack.c.l.b16 %v244
      %v1270 = vunpack.c.l.b16 %v245
      %v1271 = vunpack.c.l.b16 %v246
      %v1272 = vunpack.c.l.b16 %v247
      %v1273 = vunpack.c.l.b16 %v248
      %v1274 = vunpack.c.l.b16 %v249
      %v1275 = vunpack.c.l.b16 %v250
      %v1276 = vunpack.c.l.b16 %v251
      %v1277 = vunpack.c.l.b16 %v252
      %v1278 = vunpack.c.l.b16 %v253
      %v1279 = vunpack.c.l.b16 %v254
      %v1280 = vunpack.c.l.b16 %v255
      %v1281 = vunpack.c.l.b16 %v256
      %v1282 = vunpack.c.l.b16 %v257
      %v1283 = vunpack.c.l.b16 %v258
      %v1284 = vunpack.c.l.b16 %v259
      %v1285 = vunpack.c.l.b16 %v260
      %v1286 = vunpack.c.l.b16 %v261
      %v1287 = vunpack.c.l.b16 %v262
      %v1288 = vunpack.c.l.b16 %v263
      %v1289 = vunpack.c.l.b16 %v264
      %v1290 = vunpack.c.l.b16 %v265
      %v1291 = vunpack.c.l.b16 %v266
      %v1292 = vunpack.c.l.b16 %v267
      %v1293 = vunpack.c.l.b16 %v268
      %v1294 = vunpack.c.l.b16 %v269
      %v1295 = vunpack.c.l.b16 %v270
      %v1296 = vunpack.c.l.b16 %v271
      %v1297 = vunpack.c.l.b16 %v272
      %v1298 = vunpack.c.l.b16 %v273
      %v1299 = vunpack.c.l.b16 %v274
      %v1300 = vunpack.c.l.b16 %v275
      %v1301 = vunpack.c.l.b16 %v276
      %v1302 = vunpack.c.l.b16 %v277
      %v1303 = vunpack.c.l.b16 %v278
      %v1304 = vunpack.c.l.b16 %v279
      %v1305 = vunpack.c.l.b16 %v280
      %v1306 = vunpack.c.l.b16 %v281
      %v1307 = vunpack.c.l.b16 %v282
      %v1308 = vunpack.c.l.b16 %v283
      %v1309 = vunpack.c.l.b16 %v284
      %v1310 = vunpack.c.l.b16 %v285
      %v1311 = vunpack.c.l.b16 %v286
      %v1312 = vunpack.c.l.b16 %v287
      %v1313 = vunpack.c.l.b16 %v288
      %v1314 = vunpack.c.l.b16 %v289
      %v1315 = vunpack.c.l.b16 %v290
      %v1316 = vunpack.c.l.b16 %v291
      %v1317 = vunpack.c.l.b16 %v292
      %v1318 = vunpack.c.l.b16 %v293
      %v1319 = vunpack.c.l.b16 %v294
      %v1320 = vunpack.c.l.b16 %v295
      %v1321 = vunpack.c.l.b16 %v296
      %v1322 = vunpack.c.l.b16 %v297
      %v1323 = vunpack.c.l.b16 %v298
      %v1324 = vunpack.c.l.b16 %v299
      %v1325 = vunpack.c.l.b16 %v300
      %v1326 = vunpack.c.l.b16 %v301
      %v1327 = vunpack.c.l.b16 %v302
      %v1328 = vunpack.c.l.b16 %v303
      %v1329 = vunpack.c.l.b16 %v304
      %v1330 = vunpack.c.l.b16 %v305
      %v1331 = vunpack.c.l.b16 %v306
      %v1332 = vunpack.c.l.b16 %v307
      %v1333 = vunpack.c.l.b16 %v308
      %v1334 = vunpack.c.l.b16 %v309
      %v1335 = vunpack.c.l.b16 %v310
      %v1336 = vunpack.c.l.b16 %v311
      %v1337 = vunpack.c.l.b16 %v312
      %v1338 = vunpack.c.l.b16 %v313
      %v1339 = vunpack.c.l.b16 %v314
      %v1340 = vunpack.c.l.b16 %v315
      %v1341 = vunpack.c.l.b16 %v316
      %v1342 = vunpack.c.l.b16 %v317
      %v1343 = vunpack.c.l.b16 %v318
      %v1344 = vunpack.c.l.b16 %v319
      %v1345 = vunpack.c.l.b16 %v320
      %v1346 = vunpack.c.l.b16 %v321
      %v1347 = vunpack.c.l.b16 %v322
      %v1348 = vunpack.c.l.b16 %v323
      %v1349 = vunpack.c.l.b16 %v324
      %v1350 = vunpack.c.l.b16 %v325
      %v1351 = vunpack.c.l.b16 %v326
      %v1352 = vunpack.c.l.b16 %v327
      %v1353 = vunpack.c.l.b16 %v328
      %v1354 = vunpack.c.l.b16 %v329
      %v1355 = vunpack.c.l.b16 %v330
      %v1356 = vunpack.c.l.b16 %v331
      %v1357 = vunpack.c.l.b16 %v332
      %v1358 = vunpack.c.l.b16 %v333
      %v1359 = vunpack.c.l.b16 %v334
      %v1360 = vunpack.c.l.b16 %v335
      %v1361 = vunpack.c.l.b16 %v336
      %v1362 = vunpack.c.l.b16 %v337
      %v1363 = vunpack.c.l.b16 %v338
      %v1364 = vunpack.c.l.b16 %v339
      %v1365 = vunpack.c.l.b16 %v340
      %v1366 = vunpack.c.l.b16 %v341
      %v1367 = vunpack.c.l.b16 %v342
      %v1368 = vunpack.c.l.b16 %v343
      %v1369 = vunpack.c.l.b16 %v344
      %v1370 = vunpack.c.l.b16 %v345
      %v1371 = vunpack.c.l.b16 %v346
      %v1372 = vunpack.c.l.b16 %v347
      %v1373 = vunpack.c.l.b16 %v348
      %v1374 = vunpack.c.l.b16 %v349
      %v1375 = vunpack.c.l.b16 %v350
      %v1376 = vunpack.c.l.b16 %v351
      %v1377 = vunpack.c.l.b16 %v352
      %v1378 = vunpack.c.l.b16 %v353
      %v1379 = vunpack.c.l.b16 %v354
      %v1380 = vunpack.c.l.b16 %v355
      %v1381 = vunpack.c.l.b16 %v356
      %v1382 = vunpack.c.l.b16 %v357
      %v1383 = vunpack.c.l.b16 %v358
      %v1384 = vunpack.c.l.b16 %v359
      %v1385 = vunpack.c.l.b16 %v360
      %v1386 = vunpack.c.l.b16 %v361
      %v1387 = vunpack.c.l.b16 %v362
      %v1388 = vunpack.c.l.b16 %v363
      %v1389 = vunpack.c.l.b16 %v364
      %v1390 = vunpack.c.l.b16 %v365
      %v1391 = vunpack.c.l.b16 %v366
      %v1392 = vunpack.c.l.b16 %v367
      %v1393 = vunpack.c.l.b16 %v368
      %v1394 = vunpack.c.l.b16 %v369
      %v1395 = vunpack.c.l.b16 %v370
      %v1396 = vunpack.c.l.b16 %v371
      %v1397 = vunpack.c.l.b16 %v372
      %v1398 = vunpack.c.l.b16 %v373
      %v1399 = vunpack.c.l.b16 %v374
      %v1400 = vunpack.c.l.b16 %v375
      %v1401 = vunpack.c.l.b16 %v376
      %v1402 = vunpack.c.l.b16 %v377
      %v1403 = vunpack.c.l.b16 %v378
      %v1404 = vunpack.c.l.b16 %v379
      %v1405 = vunpack.c.l.b16 %v380
      %v1406 = vunpack.c.l.b16 %v381
      %v1407 = vunpack.c.l.b16 %v382
      %v1408 = vunpack.c.l.b16 %v383
      %v1409 = vunpack.c.l.b16 %v384
      %v1410 = vunpack.c.l.b16 %v385
      %v1411 = vunpack.c.l.b16 %v386
      %v1412 = vunpack.c.l.b16 %v387
      %v1413 = vunpack.c.l.b16 %v388
      %v1414 = vunpack.c.l.b16 %v389
      %v1415 = vunpack.c.l.b16 %v390
      %v1416 = vunpack.c.l.b16 %v391
      %v1417 = vunpack.c.l.b16 %v392
      %v1418 = vunpack.c.l.b16 %v393
      %v1419 = vunpack.c.l.b16 %v394
      %v1420 = vunpack.c.l.b16 %v395
      %v1421 = vunpack.c.l.b16 %v396
      %v1422 = vunpack.c.l.b16 %v397
      %v1423 = vunpack.c.l.b16 %v398
      %v1424 = vunpack.c.l.b16 %v399
      %v1425 = vunpack.c.l.b16 %v400
      %v1426 = vunpack.c.l.b16 %v401
      %v1427 = vunpack.c.l.b16 %v402
      %v1428 = vunpack.c.l.b16 %v403
      %v1429 = vunpack.c.l.b16 %v404
      %v1430 = vunpack.c.l.b16 %v405
      %v1431 = vunpack.c.l.b16 %v406
      %v1432 = vunpack.c.l.b16 %v407
      %v1433 = vunpack.c.l.b16 %v408
      %v1434 = vunpack.c.l.b16 %v409
      %v1435 = vunpack.c.l.b16 %v410
      %v1436 = vunpack.c.l.b16 %v411
      %v1437 = vunpack.c.l.b16 %v412
      %v1438 = vunpack.c.l.b16 %v413
      %v1439 = vunpack.c.l.b16 %v414
      %v1440 = vunpack.c.l.b16 %v415
      %v1441 = vunpack.c.l.b16 %v416
      %v1442 = vunpack.c.l.b16 %v417
      %v1443 = vunpack.c.l.b16 %v418
      %v1444 = vunpack.c.l.b16 %v419
      %v1445 = vunpack.c.l.b16 %v420
      %v1446 = vunpack.c.l.b16 %v421
      %v1447 = vunpack.c.l.b16 %v422
      %v1448 = vunpack.c.l.b16 %v423
      %v1449 = vunpack.c.l.b16 %v424
      %v1450 = vunpack.c.l.b16 %v425
      %v1451 = vunpack.c.l.b16 %v426
      %v1452 = vunpack.c.l.b16 %v427
      %v1453 = vunpack.c.l.b16 %v428
      %v1454 = vunpack.c.l.b16 %v429
      %v1455 = vunpack.c.l.b16 %v430
      %v1456 = vunpack.c.l.b16 %v431
      %v1457 = vunpack.c.l.b16 %v432
      %v1458 = vunpack.c.l.b16 %v433
      %v1459 = vunpack.c.l.b16 %v434
      %v1460 = vunpack.c.l.b16 %v435
      %v1461 = vunpack.c.l.b16 %v436
      %v1462 = vunpack.c.l.b16 %v437
      %v1463 = vunpack.c.l.b16 %v438
      %v1464 = vunpack.c.l.b16 %v439
      %v1465 = vunpack.c.l.b16 %v440
      %v1466 = vunpack.c.l.b16 %v441
      %v1467 = vunpack.c.l.b16 %v442
      %v1468 = vunpack.c.l.b16 %v443
      %v1469 = vunpack.c.l.b16 %v444
      %v1470 = vunpack.c.l.b16 %v445
      %v1471 = vunpack.c.l.b16 %v446
      %v1472 = vunpack.c.l.b16 %v447
      %v1473 = vunpack.c.l.b16 %v448
      %v1474 = vunpack.c.l.b16 %v449
      %v1475 = vunpack.c.l.b16 %v450
      %v1476 = vunpack.c.l.b16 %v451
      %v1477 = vunpack.c.l.b16 %v452
      %v1478 = vunpack.c.l.b16 %v453
      %v1479 = vunpack.c.l.b16 %v454
      %v1480 = vunpack.c.l.b16 %v455
      %v1481 = vunpack.c.l.b16 %v456
      %v1482 = vunpack.c.l.b16 %v457
      %v1483 = vunpack.c.l.b16 %v458
      %v1484 = vunpack.c.l.b16 %v459
      %v1485 = vunpack.c.l.b16 %v460
      %v1486 = vunpack.c.l.b16 %v461
      %v1487 = vunpack.c.l.b16 %v462
      %v1488 = vunpack.c.l.b16 %v463
      %v1489 = vunpack.c.l.b16 %v464
      %v1490 = vunpack.c.l.b16 %v465
      %v1491 = vunpack.c.l.b16 %v466
      %v1492 = vunpack.c.l.b16 %v467
      %v1493 = vunpack.c.l.b16 %v468
      %v1494 = vunpack.c.l.b16 %v469
      %v1495 = vunpack.c.l.b16 %v470
      %v1496 = vunpack.c.l.b16 %v471
      %v1497 = vunpack.c.l.b16 %v472
      %v1498 = vunpack.c.l.b16 %v473
      %v1499 = vunpack.c.l.b16 %v474
      %v1500 = vunpack.c.l.b16 %v475
      %v1501 = vunpack.c.l.b16 %v476
      %v1502 = vunpack.c.l.b16 %v477
      %v1503 = vunpack.c.l.b16 %v478
      %v1504 = vunpack.c.l.b16 %v479
      %v1505 = vunpack.c.l.b16 %v480
      %v1506 = vunpack.c.l.b16 %v481
      %v1507 = vunpack.c.l.b16 %v482
      %v1508 = vunpack.c.l.b16 %v483
      %v1509 = vunpack.c.l.b16 %v484
      %v1510 = vunpack.c.l.b16 %v485
      %v1511 = vunpack.c.l.b16 %v486
      %v1512 = vunpack.c.l.b16 %v487
      %v1513 = vunpack.c.l.b16 %v488
      %v1514 = vunpack.c.l.b16 %v489
      %v1515 = vunpack.c.l.b16 %v490
      %v1516 = vunpack.c.l.b16 %v491
      %v1517 = vunpack.c.l.b16 %v492
      %v1518 = vunpack.c.l.b16 %v493
      %v1519 = vunpack.c.l.b16 %v494
      %v1520 = vunpack.c.l.b16 %v495
      %v1521 = vunpack.c.l.b16 %v496
      %v1522 = vunpack.c.l.b16 %v497
      %v1523 = vunpack.c.l.b16 %v498
      %v1524 = vunpack.c.l.b16 %v499
      %v1525 = vunpack.c.l.b16 %v500
      %v1526 = vunpack.c.l.b16 %v501
      %v1527 = vunpack.c.l.b16 %v502
      %v1528 = vunpack.c.l.b16 %v503
      %v1529 = vunpack.c.l.b16 %v504
      %v1530 = vunpack.c.l.b16 %v505
      %v1531 = vunpack.c.l.b16 %v506
      %v1532 = vunpack.c.l.b16 %v507
      %v1533 = vunpack.c.l.b16 %v508
      %v1534 = vunpack.c.l.b16 %v509
      %v1535 = vunpack.c.l.b16 %v510
      %v1536 = vunpack.c.l.b16 %v511
      %v1537 = vunpack.c.l.b16 %v512
      %v1538 = vunpack.c.l.b16 %v513
      %v1539 = vunpack.c.l.b16 %v514
      %v1540 = vunpack.c.l.b16 %v515
      %v1541 = vunpack.c.l.b16 %v516
      %v1542 = vunpack.c.l.b16 %v517
      %v1543 = vunpack.c.l.b16 %v518
      %v1544 = vunpack.c.l.b16 %v519
      %v1545 = vunpack.c.l.b16 %v520
      %v1546 = vunpack.c.l.b16 %v521
      %v1547 = vunpack.c.l.b16 %v522
      %v1548 = vunpack.c.l.b16 %v523
      %v1549 = vunpack.c.l.b16 %v524
      %v1550 = vunpack.c.l.b16 %v525
      %v1551 = vunpack.c.l.b16 %v526
      %v1552 = vunpack.c.l.b16 %v527
      %v1553 = vunpack.c.l.b16 %v528
      %v1554 = vunpack.c.l.b16 %v529
      %v1555 = vunpack.c.l.b16 %v530
      %v1556 = vunpack.c.l.b16 %v531
      %v1557 = vunpack.c.l.b16 %v532
      %v1558 = vunpack.c.l.b16 %v533
      %v1559 = vunpack.c.l.b16 %v534
      %v1560 = vunpack.c.l.b16 %v535
      %v1561 = vunpack.c.l.b16 %v536
      %v1562 = vunpack.c.l.b16 %v537
      %v1563 = vunpack.c.l.b16 %v538
      %v1564 = vunpack.c.l.b16 %v539
      %v1565 = vunpack.c.l.b16 %v540
      %v1566 = vunpack.c.l.b16 %v541
      %v1567 = vunpack.c.l.b16 %v542
      %v1568 = vunpack.c.l.b16 %v543
      %v1569 = vunpack.c.l.b16 %v544
      %v1570 = vunpack.c.l.b16 %v545
      %v1571 = vunpack.c.l.b16 %v546
      %v1572 = vunpack.c.l.b16 %v547
      %v1573 = vunpack.c.l.b16 %v548
      %v1574 = vunpack.c.l.b16 %v549
      %v1575 = vunpack.c.l.b16 %v550
      %v1576 = vunpack.c.l.b16 %v551
      %v1577 = vunpack.c.l.b16 %v552
      %v1578 = vunpack.c.l.b16 %v553
      %v1579 = vunpack.c.l.b16 %v554
      %v1580 = vunpack.c.l.b16 %v555
      %v1581 = vunpack.c.l.b16 %v556
      %v1582 = vunpack.c.l.b16 %v557
      %v1583 = vunpack.c.l.b16 %v558
      %v1584 = vunpack.c.l.b16 %v559
      %v1585 = vunpack.c.l.b16 %v560
      %v1586 = vunpack.c.l.b16 %v561
      %v1587 = vunpack.c.l.b16 %v562
      %v1588 = vunpack.c.l.b16 %v563
      %v1589 = vunpack.c.l.b16 %v564
      %v1590 = vunpack.c.l.b16 %v565
      %v1591 = vunpack.c.l.b16 %v566
      %v1592 = vunpack.c.l.b16 %v567
      %v1593 = vunpack.c.l.b16 %v568
      %v1594 = vunpack.c.l.b16 %v569
      %v1595 = vunpack.c.l.b16 %v570
      %v1596 = vunpack.c.l.b16 %v571
      %v1597 = vunpack.c.l.b16 %v572
      %v1598 = vunpack.c.l.b16 %v573
      %v1599 = vunpack.c.l.b16 %v574
      %v1600 = vunpack.c.l.b16 %v575
      %v1601 = vunpack.c.l.b16 %v576
      %v1602 = vunpack.c.l.b16 %v577
      %v1603 = vunpack.c.l.b16 %v578
      %v1604 = vunpack.c.l.b16 %v579
      %v1605 = vunpack.c.l.b16 %v580
      %v1606 = vunpack.c.l.b16 %v581
      %v1607 = vunpack.c.l.b16 %v582
      %v1608 = vunpack.c.l.b16 %v583
      %v1609 = vunpack.c.l.b16 %v584
      %v1610 = vunpack.c.l.b16 %v585
      %v1611 = vunpack.c.l.b16 %v586
      %v1612 = vunpack.c.l.b16 %v587
      %v1613 = vunpack.c.l.b16 %v588
      %v1614 = vunpack.c.l.b16 %v589
      %v1615 = vunpack.c.l.b16 %v590
      %v1616 = vunpack.c.l.b16 %v591
      %v1617 = vunpack.c.l.b16 %v592
      %v1618 = vunpack.c.l.b16 %v593
      %v1619 = vunpack.c.l.b16 %v594
      %v1620 = vunpack.c.l.b16 %v595
      %v1621 = vunpack.c.l.b16 %v596
      %v1622 = vunpack.c.l.b16 %v597
      %v1623 = vunpack.c.l.b16 %v598
      %v1624 = vunpack.c.l.b16 %v599
      %v1625 = vunpack.c.l.b16 %v600
      %v1626 = vunpack.c.l.b16 %v601
      %v1627 = vunpack.c.l.b16 %v602
      %v1628 = vunpack.c.l.b16 %v603
      %v1629 = vunpack.c.l.b16 %v604
      %v1630 = vunpack.c.l.b16 %v605
      %v1631 = vunpack.c.l.b16 %v606
      %v1632 = vunpack.c.l.b16 %v607
      %v1633 = vunpack.c.l.b16 %v608
      %v1634 = vunpack.c.l.b16 %v609
      %v1635 = vunpack.c.l.b16 %v610
      %v1636 = vunpack.c.l.b16 %v611
      %v1637 = vunpack.c.l.b16 %v612
      %v1638 = vunpack.c.l.b16 %v613
      %v1639 = vunpack.c.l.b16 %v614
      %v1640 = vunpack.c.l.b16 %v615
      %v1641 = vunpack.c.l.b16 %v616
      %v1642 = vunpack.c.l.b16 %v617
      %v1643 = vunpack.c.l.b16 %v618
      %v1644 = vunpack.c.l.b16 %v619
      %v1645 = vunpack.c.l.b16 %v620
      %v1646 = vunpack.c.l.b16 %v621
      %v1647 = vunpack.c.l.b16 %v622
      %v1648 = vunpack.c.l.b16 %v623
      %v1649 = vunpack.c.l.b16 %v624
      %v1650 = vunpack.c.l.b16 %v625
      %v1651 = vunpack.c.l.b16 %v626
      %v1652 = vunpack.c.l.b16 %v627
      %v1653 = vunpack.c.l.b16 %v628
      %v1654 = vunpack.c.l.b16 %v629
      %v1655 = vunpack.c.l.b16 %v630
      %v1656 = vunpack.c.l.b16 %v631
      %v1657 = vunpack.c.l.b16 %v632
      %v1658 = vunpack.c.l.b16 %v633
      %v1659 = vunpack.c.l.b16 %v634
      %v1660 = vunpack.c.l.b16 %v635
      %v1661 = vunpack.c.l.b16 %v636
      %v1662 = vunpack.c.l.b16 %v637
      %v1663 = vunpack.c.l.b16 %v638
      %v1664 = vunpack.c.l.b16 %v639
      %v1665 = vunpack.c.l.b16 %v640
      %v1666 = vunpack.c.l.b16 %v641
      %v1667 = vunpack.c.l.b16 %v642
      %v1668 = vunpack.c.l.b16 %v643
      %v1669 = vunpack.c.l.b16 %v644
      %v1670 = vunpack.c.l.b16 %v645
      %v1671 = vunpack.c.l.b16 %v646
      %v1672 = vunpack.c.l.b16 %v647
      %v1673 = vunpack.c.l.b16 %v648
      %v1674 = vunpack.c.l.b16 %v649
      %v1675 = vunpack.c.l.b16 %v650
      %v1676 = vunpack.c.l.b16 %v651
      %v1677 = vunpack.c.l.b16 %v652
      %v1678 = vunpack.c.l.b16 %v653
      %v1679 = vunpack.c.l.b16 %v654
      %v1680 = vunpack.c.l.b16 %v655
      %v1681 = vunpack.c.l.b16 %v656
      %v1682 = vunpack.c.l.b16 %v657
      %v1683 = vunpack.c.l.b16 %v658
      %v1684 = vunpack.c.l.b16 %v659
      %v1685 = vpack.c.b16 %v1174, %v1173
      %v1686 = vpack.c.b16 %v1176, %v1175
      %v1687 = vpack.c.b16 %v1178, %v1177
      %v1688 = vpack.c.b16 %v1180, %v1179
      %v1689 = vpack.c.b16 %v1182, %v1181
      %v1690 = vpack.c.b16 %v1184, %v1183
      %v1691 = vpack.c.b16 %v1186, %v1185
      %v1692 = vpack.c.b16 %v1188, %v1187
      %v1693 = vpack.c.b16 %v1190, %v1189
      %v1694 = vpack.c.b16 %v1192, %v1191
      %v1695 = vpack.c.b16 %v1194, %v1193
      %v1696 = vpack.c.b16 %v1196, %v1195
      %v1697 = vpack.c.b16 %v1198, %v1197
      %v1698 = vpack.c.b16 %v1200, %v1199
      %v1699 = vpack.c.b16 %v1202, %v1201
      %v1700 = vpack.c.b16 %v1204, %v1203
      %v1701 = vpack.c.b16 %v1206, %v1205
      %v1702 = vpack.c.b16 %v1208, %v1207
      %v1703 = vpack.c.b16 %v1210, %v1209
      %v1704 = vpack.c.b16 %v1212, %v1211
      %v1705 = vpack.c.b16 %v1214, %v1213
      %v1706 = vpack.c.b16 %v1216, %v1215
      %v1707 = vpack.c.b16 %v1218, %v1217
      %v1708 = vpack.c.b16 %v1220, %v1219
      %v1709 = vpack.c.b16 %v1222, %v1221
      %v1710 = vpack.c.b16 %v1224, %v1223
      %v1711 = vpack.c.b16 %v1226, %v1225
      %v1712 = vpack.c.b16 %v1228, %v1227
      %v1713 = vpack.c.b16 %v1230, %v1229
      %v1714 = vpack.c.b16 %v1232, %v1231
      %v1715 = vpack.c.b16 %v1234, %v1233
      %v1716 = vpack.c.b16 %v1236, %v1235
      %v1717 = vpack.c.b16 %v1238, %v1237
      %v1718 = vpack.c.b16 %v1240, %v1239
      %v1719 = vpack.c.b16 %v1242, %v1241
      %v1720 = vpack.c.b16 %v1244, %v1243
      %v1721 = vpack.c.b16 %v1246, %v1245
      %v1722 = vpack.c.b16 %v1248, %v1247
      %v1723 = vpack.c.b16 %v1250, %v1249
      %v1724 = vpack.c.b16 %v1252, %v1251
      %v1725 = vpack.c.b16 %v1254, %v1253
      %v1726 = vpack.c.b16 %v1256, %v1255
      %v1727 = vpack.c.b16 %v1258, %v1257
      %v1728 = vpack.c.b16 %v1260, %v1259
      %v1729 = vpack.c.b16 %v1262, %v1261
      %v1730 = vpack.c.b16 %v1264, %v1263
      %v1731 = vpack.c.b16 %v1266, %v1265
      %v1732 = vpack.c.b16 %v1268, %v1267
      %v1733 = vpack.c.b16 %v1270, %v1269
      %v1734 = vpack.c.b16 %v1272, %v1271
      %v1735 = vpack.c.b16 %v1274, %v1273
      %v1736 = vpack.c.b16 %v1276, %v1275
      %v1737 = vpack.c.b16 %v1278, %v1277
      %v1738 = vpack.c.b16 %v1280, %v1279
      %v1739 = vpack.c.b16 %v1282, %v1281
      %v1740 = vpack.c.b16 %v1284, %v1283
      %v1741 = vpack.c.b16 %v1286, %v1285
      %v1742 = vpack.c.b16 %v1288, %v1287
      %v1743 = vpack.c.b16 %v1290, %v1289
      %v1744 = vpack.c.b16 %v1292, %v1291
      %v1745 = vpack.c.b16 %v1294, %v1293
      %v1746 = vpack.c.b16 %v1296, %v1295
      %v1747 = vpack.c.b16 %v1298, %v1297
      %v1748 = vpack.c.b16 %v1300, %v1299
      %v1749 = vpack.c.b16 %v1302, %v1301
      %v1750 = vpack.c.b16 %v1304, %v1303
      %v1751 = vpack.c.b16 %v1306, %v1305
      %v1752 = vpack.c.b16 %v1308, %v1307
      %v1753 = vpack.c.b16 %v1310, %v1309
      %v1754 = vpack.c.b16 %v1312, %v1311
      %v1755 = vpack.c.b16 %v1314, %v1313
      %v1756 = vpack.c.b16 %v1316, %v1315
      %v1757 = vpack.c.b16 %v1318, %v1317
      %v1758 = vpack.c.b16 %v1320, %v1319
      %v1759 = vpack.c.b16 %v1322, %v1321
      %v1760 = vpack.c.b16 %v1324, %v1323
      %v1761 = vpack.c.b16 %v1326, %v1325
      %v1762 = vpack.c.b16 %v1328, %v1327
      %v1763 = vpack.c.b16 %v1330, %v1329
      %v1764 = vpack.c.b16 %v1332, %v1331
      %v1765 = vpack.c.b16 %v1334, %v1333
      %v1766 = vpack.c.b16 %v1336, %v1335
      %v1767 = vpack.c.b16 %v1338, %v1337
      %v1768 = vpack.c.b16 %v1340, %v1339
      %v1769 = vpack.c.b16 %v1342, %v1341
      %v1770 = vpack.c.b16 %v1344, %v1343
      %v1771 = vpack.c.b16 %v1346, %v1345
      %v1772 = vpack.c.b16 %v1348, %v1347
      %v1773 = vpack.c.b16 %v1350, %v1349
      %v1774 = vpack.c.b16 %v1352, %v1351
      %v1775 = vpack.c.b16 %v1354, %v1353
      %v1776 = vpack.c.b16 %v1356, %v1355
      %v1777 = vpack.c.b16 %v1358, %v1357
      %v1778 = vpack.c.b16 %v1360, %v1359
      %v1779 = vpack.c.b16 %v1362, %v1361
      %v1780 = vpack.c.b16 %v1364, %v1363
      %v1781 = vpack.c.b16 %v1366, %v1365
      %v1782 = vpack.c.b16 %v1368, %v1367
      %v1783 = vpack.c.b16 %v1370, %v1369
      %v1784 = vpack.c.b16 %v1372, %v1371
      %v1785 = vpack.c.b16 %v1374, %v1373
      %v1786 = vpack.c.b16 %v1376, %v1375
      %v1787 = vpack.c.b16 %v1378, %v1377
      %v1788 = vpack.c.b16 %v1380, %v1379
      %v1789 = vpack.c.b16 %v1382, %v1381
      %v1790 = vpack.c.b16 %v1384, %v1383
      %v1791 = vpack.c.b16 %v1386, %v1385
      %v1792 = vpack.c.b16 %v1388, %v1387
      %v1793 = vpack.c.b16 %v1390, %v1389
      %v1794 = vpack.c.b16 %v1392, %v1391
      %v1795 = vpack.c.b16 %v1394, %v1393
      %v1796 = vpack.c.b16 %v1396, %v1395
      %v1797 = vpack.c.b16 %v1398, %v1397
      %v1798 = vpack.c.b16 %v1400, %v1399
      %v1799 = vpack.c.b16 %v1402, %v1401
      %v1800 = vpack.c.b16 %v1404, %v1403
      %v1801 = vpack.c.b16 %v1406, %v1405
      %v1802 = vpack.c.b16 %v1408, %v1407
      %v1803 = vpack.c.b16 %v1410, %v1409
      %v1804 = vpack.c.b16 %v1412, %v1411
      %v1805 = vpack.c.b16 %v1414, %v1413
      %v1806 = vpack.c.b16 %v1416, %v1415
      %v1807 = vpack.c.b16 %v1418, %v1417
      %v1808 = vpack.c.b16 %v1420, %v1419
      %v1809 = vpack.c.b16 %v1422, %v1421
      %v1810 = vpack.c.b16 %v1424, %v1423
      %v1811 = vpack.c.b16 %v1426, %v1425
      %v1812 = vpack.c.b16 %v1428, %v1427
      %v1813 = vpack.c.b16 %v1430, %v1429
      %v1814 = vpack.c.b16 %v1432, %v1431
      %v1815 = vpack.c.b16 %v1434, %v1433
      %v1816 = vpack.c.b16 %v1436, %v1435
      %v1817 = vpack.c.b16 %v1438, %v1437
      %v1818 = vpack.c.b16 %v1440, %v1439
      %v1819 = vpack.c.b16 %v1442, %v1441
      %v1820 = vpack.c.b16 %v1444, %v1443
      %v1821 = vpack.c.b16 %v1446, %v1445
      %v1822 = vpack.c.b16 %v1448, %v1447
      %v1823 = vpack.c.b16 %v1450, %v1449
      %v1824 = vpack.c.b16 %v1452, %v1451
      %v1825 = vpack.c.b16 %v1454, %v1453
      %v1826 = vpack.c.b16 %v1456, %v1455
      %v1827 = vpack.c.b16 %v1458, %v1457
      %v1828 = vpack.c.b16 %v1460, %v1459
      %v1829 = vpack.c.b16 %v1462, %v1461
      %v1830 = vpack.c.b16 %v1464, %v1463
      %v1831 = vpack.c.b16 %v1466, %v1465
      %v1832 = vpack.c.b16 %v1468, %v1467
      %v1833 = vpack.c.b16 %v1470, %v1469
      %v1834 = vpack.c.b16 %v1472, %v1471
      %v1835 = vpack.c.b16 %v1474, %v1473
      %v1836 = vpack.c.b16 %v1476, %v1475
      %v1837 = vpack.c.b16 %v1478, %v1477
      %v1838 = vpack.c.b16 %v1480, %v1479
      %v1839 = vpack.c.b16 %v1482, %v1481
      %v1840 = vpack.c.b16 %v1484, %v1483
      %v1841 = vpack.c.b16 %v1486, %v1485
      %v1842 = vpack.c.b16 %v1488, %v1487
      %v1843 = vpack.c.b16 %v1490, %v1489
      %v1844 = vpack.c.b16 %v1492, %v1491
      %v1845 = vpack.c.b16 %v1494, %v1493
      %v1846 = vpack.c.b16 %v1496, %v1495
      %v1847 = vpack.c.b16 %v1498, %v1497
      %v1848 = vpack.c.b16 %v1500, %v1499
      %v1849 = vpack.c.b16 %v1502, %v1501
      %v1850 = vpack.c.b16 %v1504, %v1503
      %v1851 = vpack.c.b16 %v1506, %v1505
      %v1852 = vpack.c.b16 %v1508, %v1507
      %v1853 = vpack.c.b16 %v1510, %v1509
      %v1854 = vpack.c.b16 %v1512, %v1511
      %v1855 = vpack.c.b16 %v1514, %v1513
      %v1856 = vpack.c.b16 %v1516, %v1515
      %v1857 = vpack.c.b16 %v1518, %v1517
      %v1858 = vpack.c.b16 %v1520, %v1519
      %v1859 = vpack.c.b16 %v1522, %v1521
      %v1860 = vpack.c.b16 %v1524, %v1523
      %v1861 = vpack.c.b16 %v1526, %v1525
      %v1862 = vpack.c.b16 %v1528, %v1527
      %v1863 = vpack.c.b16 %v1530, %v1529
      %v1864 = vpack.c.b16 %v1532, %v1531
      %v1865 = vpack.c.b16 %v1534, %v1533
      %v1866 = vpack.c.b16 %v1536, %v1535
      %v1867 = vpack.c.b16 %v1538, %v1537
      %v1868 = vpack.c.b16 %v1540, %v1539
      %v1869 = vpack.c.b16 %v1542, %v1541
      %v1870 = vpack.c.b16 %v1544, %v1543
      %v1871 = vpack.c.b16 %v1546, %v1545
      %v1872 = vpack.c.b16 %v1548, %v1547
      %v1873 = vpack.c.b16 %v1550, %v1549
      %v1874 = vpack.c.b16 %v1552, %v1551
      %v1875 = vpack.c.b16 %v1554, %v1553
      %v1876 = vpack.c.b16 %v1556, %v1555
      %v1877 = vpack.c.b16 %v1558, %v1557
      %v1878 = vpack.c.b16 %v1560, %v1559
      %v1879 = vpack.c.b16 %v1562, %v1561
      %v1880 = vpack.c.b16 %v1564, %v1563
      %v1881 = vpack.c.b16 %v1566, %v1565
      %v1882 = vpack.c.b16 %v1568, %v1567
      %v1883 = vpack.c.b16 %v1570, %v1569
      %v1884 = vpack.c.b16 %v1572, %v1571
      %v1885 = vpack.c.b16 %v1574, %v1573
      %v1886 = vpack.c.b16 %v1576, %v1575
      %v1887 = vpack.c.b16 %v1578, %v1577
      %v1888 = vpack.c.b16 %v1580, %v1579
      %v1889 = vpack.c.b16 %v1582, %v1581
      %v1890 = vpack.c.b16 %v1584, %v1583
      %v1891 = vpack.c.b16 %v1586, %v1585
      %v1892 = vpack.c.b16 %v1588, %v1587
      %v1893 = vpack.c.b16 %v1590, %v1589
      %v1894 = vpack.c.b16 %v1592, %v1591
      %v1895 = vpack.c.b16 %v1594, %v1593
      %v1896 = vpack.c.b16 %v1596, %v1595
      %v1897 = vpack.c.b16 %v1598, %v1597
      %v1898 = vpack.c.b16 %v1600, %v1599
      %v1899 = vpack.c.b16 %v1602, %v1601
      %v1900 = vpack.c.b16 %v1604, %v1603
      %v1901 = vpack.c.b16 %v1606, %v1605
      %v1902 = vpack.c.b16 %v1608, %v1607
      %v1903 = vpack.c.b16 %v1610, %v1609
      %v1904 = vpack.c.b16 %v1612, %v1611
      %v1905 = vpack.c.b16 %v1614, %v1613
      %v1906 = vpack.c.b16 %v1616, %v1615
      %v1907 = vpack.c.b16 %v1618, %v1617
      %v1908 = vpack.c.b16 %v1620, %v1619
      %v1909 = vpack.c.b16 %v1622, %v1621
      %v1910 = vpack.c.b16 %v1624, %v1623
      %v1911 = vpack.c.b16 %v1626, %v1625
      %v1912 = vpack.c.b16 %v1628, %v1627
      %v1913 = vpack.c.b16 %v1630, %v1629
      %v1914 = vpack.c.b16 %v1632, %v1631
      %v1915 = vpack.c.b16 %v1634, %v1633
      %v1916 = vpack.c.b16 %v1636, %v1635
      %v1917 = vpack.c.b16 %v1638, %v1637
      %v1918 = vpack.c.b16 %v1640, %v1639
      %v1919 = vpack.c.b16 %v1642, %v1641
      %v1920 = vpack.c.b16 %v1644, %v1643
      %v1921 = vpack.c.b16 %v1646, %v1645
      %v1922 = vpack.c.b16 %v1648, %v1647
      %v1923 = vpack.c.b16 %v1650, %v1649
      %v1924 = vpack.c.b16 %v1652, %v1651
      %v1925 = vpack.c.b16 %v1654, %v1653
      %v1926 = vpack.c.b16 %v1656, %v1655
      %v1927 = vpack.c.b16 %v1658, %v1657
      %v1928 = vpack.c.b16 %v1660, %v1659
      %v1929 = vpack.c.b16 %v1662, %v1661
      %v1930 = vpack.c.b16 %v1664, %v1663
      %v1931 = vpack.c.b16 %v1666, %v1665
      %v1932 = vpack.c.b16 %v1668, %v1667
      %v1933 = vpack.c.b16 %v1670, %v1669
      %v1934 = vpack.c.b16 %v1672, %v1671
      %v1935 = vpack.c.b16 %v1674, %v1673
      %v1936 = vpack.c.b16 %v1676, %v1675
      %v1937 = vpack.c.b16 %v1678, %v1677
      %v1938 = vpack.c.b16 %v1680, %v1679
      %v1939 = vpack.c.b16 %v1682, %v1681
      %v1940 = vpack.c.b16 %v1684, %v1683
      %vm1941 = vcmask 31744
      %v1943 = vsel %vm1941, %v1685, 0
      %v1946 = vsel %vm1941, %v1686, 0
      %v1949 = vsel %vm1941, %v1687, 0
      %v1952 = vsel %vm1941, %v1688, 0
      %v1955 = vsel %vm1941, %v1689, 0
      %v1958 = vsel %vm1941, %v1690, 0
      %v1961 = vsel %vm1941, %v1691, 0
      %v1964 = vsel %vm1941, %v1692, 0
      %v1967 = vsel %vm1941, %v1693, 0
      %v1970 = vsel %vm1941, %v1694, 0
      %v1973 = vsel %vm1941, %v1695, 0
      %v1976 = vsel %vm1941, %v1696, 0
      %v1979 = vsel %vm1941, %v1697, 0
      %v1982 = vsel %vm1941, %v1698, 0
      %v1985 = vsel %vm1941, %v1699, 0
      %v1988 = vsel %vm1941, %v1700, 0
      %v1991 = vsel %vm1941, %v1701, 0
      %v1994 = vsel %vm1941, %v1702, 0
      %v1997 = vsel %vm1941, %v1703, 0
      %v2000 = vsel %vm1941, %v1704, 0
      %v2003 = vsel %vm1941, %v1705, 0
      %v2006 = vsel %vm1941, %v1706, 0
      %v2009 = vsel %vm1941, %v1707, 0
      %v2012 = vsel %vm1941, %v1708, 0
      %v2015 = vsel %vm1941, %v1709, 0
      %v2018 = vsel %vm1941, %v1710, 0
      %v2021 = vsel %vm1941, %v1711, 0
      %v2024 = vsel %vm1941, %v1712, 0
      %v2027 = vsel %vm1941, %v1713, 0
      %v2030 = vsel %vm1941, %v1714, 0
      %v2033 = vsel %vm1941, %v1715, 0
      %v2036 = vsel %vm1941, %v1716, 0
      %v2039 = vsel %vm1941, %v1717, 0
      %v2042 = vsel %vm1941, %v1718, 0
      %v2045 = vsel %vm1941, %v1719, 0
      %v2048 = vsel %vm1941, %v1720, 0
      %v2051 = vsel %vm1941, %v1721, 0
      %v2054 = vsel %vm1941, %v1722, 0
      %v2057 = vsel %vm1941, %v1723, 0
      %v2060 = vsel %vm1941, %v1724, 0
      %v2063 = vsel %vm1941, %v1725, 0
      %v2066 = vsel %vm1941, %v1726, 0
      %v2069 = vsel %vm1941, %v1727, 0
      %v2072 = vsel %vm1941, %v1728, 0
      %v2075 = vsel %vm1941, %v1729, 0
      %v2078 = vsel %vm1941, %v1730, 0
      %v2081 = vsel %vm1941, %v1731, 0
      %v2084 = vsel %vm1941, %v1732, 0
      %v2087 = vsel %vm1941, %v1733, 0
      %v2090 = vsel %vm1941, %v1734, 0
      %v2093 = vsel %vm1941, %v1735, 0
      %v2096 = vsel %vm1941, %v1736, 0
      %v2099 = vsel %vm1941, %v1737, 0
      %v2102 = vsel %vm1941, %v1738, 0
      %v2105 = vsel %vm1941, %v1739, 0
      %v2108 = vsel %vm1941, %v1740, 0
      %v2111 = vsel %vm1941, %v1741, 0
      %v2114 = vsel %vm1941, %v1742, 0
      %v2117 = vsel %vm1941, %v1743, 0
      %v2120 = vsel %vm1941, %v1744, 0
      %v2123 = vsel %vm1941, %v1745, 0
      %v2126 = vsel %vm1941, %v1746, 0
      %v2129 = vsel %vm1941, %v1747, 0
      %v2132 = vsel %vm1941, %v1748, 0
      %v2135 = vsel %vm1941, %v1749, 0
      %v2138 = vsel %vm1941, %v1750, 0
      %v2141 = vsel %vm1941, %v1751, 0
      %v2144 = vsel %vm1941, %v1752, 0
      %v2147 = vsel %vm1941, %v1753, 0
      %v2150 = vsel %vm1941, %v1754, 0
      %v2153 = vsel %vm1941, %v1755, 0
      %v2156 = vsel %vm1941, %v1756, 0
      %v2159 = vsel %vm1941, %v1757, 0
      %v2162 = vsel %vm1941, %v1758, 0
      %v2165 = vsel %vm1941, %v1759, 0
      %v2168 = vsel %vm1941, %v1760, 0
      %v2171 = vsel %vm1941, %v1761, 0
      %v2174 = vsel %vm1941, %v1762, 0
      %v2177 = vsel %vm1941, %v1763, 0
      %v2180 = vsel %vm1941, %v1764, 0
      %v2183 = vsel %vm1941, %v1765, 0
      %v2186 = vsel %vm1941, %v1766, 0
      %v2189 = vsel %vm1941, %v1767, 0
      %v2192 = vsel %vm1941, %v1768, 0
      %v2195 = vsel %vm1941, %v1769, 0
      %v2198 = vsel %vm1941, %v1770, 0
      %v2201 = vsel %vm1941, %v1771, 0
      %v2204 = vsel %vm1941, %v1772, 0
      %v2207 = vsel %vm1941, %v1773, 0
      %v2210 = vsel %vm1941, %v1774, 0
      %v2213 = vsel %vm1941, %v1775, 0
      %v2216 = vsel %vm1941, %v1776, 0
      %v2219 = vsel %vm1941, %v1777, 0
      %v2222 = vsel %vm1941, %v1778, 0
      %v2225 = vsel %vm1941, %v1779, 0
      %v2228 = vsel %vm1941, %v1780, 0
      %v2231 = vsel %vm1941, %v1781, 0
      %v2234 = vsel %vm1941, %v1782, 0
      %v2237 = vsel %vm1941, %v1783, 0
      %v2240 = vsel %vm1941, %v1784, 0
      %v2243 = vsel %vm1941, %v1785, 0
      %v2246 = vsel %vm1941, %v1786, 0
      %v2249 = vsel %vm1941, %v1787, 0
      %v2252 = vsel %vm1941, %v1788, 0
      %v2255 = vsel %vm1941, %v1789, 0
      %v2258 = vsel %vm1941, %v1790, 0
      %v2261 = vsel %vm1941, %v1791, 0
      %v2264 = vsel %vm1941, %v1792, 0
      %v2267 = vsel %vm1941, %v1793, 0
      %v2270 = vsel %vm1941, %v1794, 0
      %v2273 = vsel %vm1941, %v1795, 0
      %v2276 = vsel %vm1941, %v1796, 0
      %v2279 = vsel %vm1941, %v1797, 0
      %v2282 = vsel %vm1941, %v1798, 0
      %v2285 = vsel %vm1941, %v1799, 0
      %v2288 = vsel %vm1941, %v1800, 0
      %v2291 = vsel %vm1941, %v1801, 0
      %v2294 = vsel %vm1941, %v1802, 0
      %v2297 = vsel %vm1941, %v1803, 0
      %v2300 = vsel %vm1941, %v1804, 0
      %v2303 = vsel %vm1941, %v1805, 0
      %v2306 = vsel %vm1941, %v1806, 0
      %v2309 = vsel %vm1941, %v1807, 0
      %v2312 = vsel %vm1941, %v1808, 0
      %v2315 = vsel %vm1941, %v1809, 0
      %v2318 = vsel %vm1941, %v1810, 0
      %v2321 = vsel %vm1941, %v1811, 0
      %v2324 = vsel %vm1941, %v1812, 0
      %v2327 = vsel %vm1941, %v1813, 0
      %v2330 = vsel %vm1941, %v1814, 0
      %v2333 = vsel %vm1941, %v1815, 0
      %v2336 = vsel %vm1941, %v1816, 0
      %v2339 = vsel %vm1941, %v1817, 0
      %v2342 = vsel %vm1941, %v1818, 0
      %v2345 = vsel %vm1941, %v1819, 0
      %v2348 = vsel %vm1941, %v1820, 0
      %v2351 = vsel %vm1941, %v1821, 0
      %v2354 = vsel %vm1941, %v1822, 0
      %v2357 = vsel %vm1941, %v1823, 0
      %v2360 = vsel %vm1941, %v1824, 0
      %v2363 = vsel %vm1941, %v1825, 0
      %v2366 = vsel %vm1941, %v1826, 0
      %v2369 = vsel %vm1941, %v1827, 0
      %v2372 = vsel %vm1941, %v1828, 0
      %v2375 = vsel %vm1941, %v1829, 0
      %v2378 = vsel %vm1941, %v1830, 0
      %v2381 = vsel %vm1941, %v1831, 0
      %v2384 = vsel %vm1941, %v1832, 0
      %v2387 = vsel %vm1941, %v1833, 0
      %v2390 = vsel %vm1941, %v1834, 0
      %v2393 = vsel %vm1941, %v1835, 0
      %v2396 = vsel %vm1941, %v1836, 0
      %v2399 = vsel %vm1941, %v1837, 0
      %v2402 = vsel %vm1941, %v1838, 0
      %v2405 = vsel %vm1941, %v1839, 0
      %v2408 = vsel %vm1941, %v1840, 0
      %v2411 = vsel %vm1941, %v1841, 0
      %v2414 = vsel %vm1941, %v1842, 0
      %v2417 = vsel %vm1941, %v1843, 0
      %v2420 = vsel %vm1941, %v1844, 0
      %v2423 = vsel %vm1941, %v1845, 0
      %v2426 = vsel %vm1941, %v1846, 0
      %v2429 = vsel %vm1941, %v1847, 0
      %v2432 = vsel %vm1941, %v1848, 0
      %v2435 = vsel %vm1941, %v1849, 0
      %v2438 = vsel %vm1941, %v1850, 0
      %v2441 = vsel %vm1941, %v1851, 0
      %v2444 = vsel %vm1941, %v1852, 0
      %v2447 = vsel %vm1941, %v1853, 0
      %v2450 = vsel %vm1941, %v1854, 0
      %v2453 = vsel %vm1941, %v1855, 0
      %v2456 = vsel %vm1941, %v1856, 0
      %v2459 = vsel %vm1941, %v1857, 0
      %v2462 = vsel %vm1941, %v1858, 0
      %v2465 = vsel %vm1941, %v1859, 0
      %v2468 = vsel %vm1941, %v1860, 0
      %v2471 = vsel %vm1941, %v1861, 0
      %v2474 = vsel %vm1941, %v1862, 0
      %v2477 = vsel %vm1941, %v1863, 0
      %v2480 = vsel %vm1941, %v1864, 0
      %v2483 = vsel %vm1941, %v1865, 0
      %v2486 = vsel %vm1941, %v1866, 0
      %v2489 = vsel %vm1941, %v1867, 0
      %v2492 = vsel %vm1941, %v1868, 0
      %v2495 = vsel %vm1941, %v1869, 0
      %v2498 = vsel %vm1941, %v1870, 0
      %v2501 = vsel %vm1941, %v1871, 0
      %v2504 = vsel %vm1941, %v1872, 0
      %v2507 = vsel %vm1941, %v1873, 0
      %v2510 = vsel %vm1941, %v1874, 0
      %v2513 = vsel %vm1941, %v1875, 0
      %v2516 = vsel %vm1941, %v1876, 0
      %v2519 = vsel %vm1941, %v1877, 0
      %v2522 = vsel %vm1941, %v1878, 0
      %v2525 = vsel %vm1941, %v1879, 0
      %v2528 = vsel %vm1941, %v1880, 0
      %v2531 = vsel %vm1941, %v1881, 0
      %v2534 = vsel %vm1941, %v1882, 0
      %v2537 = vsel %vm1941, %v1883, 0
      %v2540 = vsel %vm1941, %v1884, 0
      %v2543 = vsel %vm1941, %v1885, 0
      %v2546 = vsel %vm1941, %v1886, 0
      %v2549 = vsel %vm1941, %v1887, 0
      %v2552 = vsel %vm1941, %v1888, 0
      %v2555 = vsel %vm1941, %v1889, 0
      %v2558 = vsel %vm1941, %v1890, 0
      %v2561 = vsel %vm1941, %v1891, 0
      %v2564 = vsel %vm1941, %v1892, 0
      %v2567 = vsel %vm1941, %v1893, 0
      %v2570 = vsel %vm1941, %v1894, 0
      %v2573 = vsel %vm1941, %v1895, 0
      %v2576 = vsel %vm1941, %v1896, 0
      %v2579 = vsel %vm1941, %v1897, 0
      %v2582 = vsel %vm1941, %v1898, 0
      %v2585 = vsel %vm1941, %v1899, 0
      %v2588 = vsel %vm1941, %v1900, 0
      %v2591 = vsel %vm1941, %v1901, 0
      %v2594 = vsel %vm1941, %v1902, 0
      %v2597 = vsel %vm1941, %v1903, 0
      %v2600 = vsel %vm1941, %v1904, 0
      %v2603 = vsel %vm1941, %v1905, 0
      %v2606 = vsel %vm1941, %v1906, 0
      %v2609 = vsel %vm1941, %v1907, 0
      %v2612 = vsel %vm1941, %v1908, 0
      %v2615 = vsel %vm1941, %v1909, 0
      %v2618 = vsel %vm1941, %v1910, 0
      %v2621 = vsel %vm1941, %v1911, 0
      %v2624 = vsel %vm1941, %v1912, 0
      %v2627 = vsel %vm1941, %v1913, 0
      %v2630 = vsel %vm1941, %v1914, 0
      %v2633 = vsel %vm1941, %v1915, 0
      %v2636 = vsel %vm1941, %v1916, 0
      %v2639 = vsel %vm1941, %v1917, 0
      %v2642 = vsel %vm1941, %v1918, 0
      %v2645 = vsel %vm1941, %v1919, 0
      %v2648 = vsel %vm1941, %v1920, 0
      %v2651 = vsel %vm1941, %v1921, 0
      %v2654 = vsel %vm1941, %v1922, 0
      %v2657 = vsel %vm1941, %v1923, 0
      %v2660 = vsel %vm1941, %v1924, 0
      %v2663 = vsel %vm1941, %v1925, 0
      %v2666 = vsel %vm1941, %v1926, 0
      %v2669 = vsel %vm1941, %v1927, 0
      %v2672 = vsel %vm1941, %v1928, 0
      %v2675 = vsel %vm1941, %v1929, 0
      %v2678 = vsel %vm1941, %v1930, 0
      %v2681 = vsel %vm1941, %v1931, 0
      %v2684 = vsel %vm1941, %v1932, 0
      %v2687 = vsel %vm1941, %v1933, 0
      %v2690 = vsel %vm1941, %v1934, 0
      %v2693 = vsel %vm1941, %v1935, 0
      %v2696 = vsel %vm1941, %v1936, 0
      %v2699 = vsel %vm1941, %v1937, 0
      %v2702 = vsel %vm1941, %v1938, 0
      %v2705 = vsel %vm1941, %v1939, 0
      %v2708 = vsel %vm1941, %v1940, 0
      %vm2710 = vcmask 1041408
      %v2712 = vsel %vm2710, %v660, 0
      %2714 = vmatprep.subr.bf16.mxu0 0
      %2715 = vmatpush1.bf16.msra.mxu0 %v2712
      %2716 = vmatprep.subr.bf16.mxu0 0
      %2717 = vmatpush1.bf16.msra.mxu0 0
      %2718 = vmatprep.subr.bf16.mxu0 0
      %2719 = vmatpush1.bf16.msra.mxu0 0
      %2720 = vmatprep.subr.bf16.mxu0 0
      %2721 = vmatpush1.bf16.msra.mxu0 0
      %2722 = vmatprep.subr.bf16.mxu0 0
      %2723 = vmatpush1.bf16.msra.mxu0 0
      %2724 = vmatprep.subr.bf16.mxu0 0
      %2725 = vmatpush1.bf16.msra.mxu0 0
      %2726 = vmatprep.subr.bf16.mxu0 0
      %2727 = vmatpush1.bf16.msra.mxu0 0
      %2728 = vmatprep.subr.bf16.mxu0 0
      %2729 = vmatpush1.bf16.msra.mxu0 0
      %2730 = vmatprep.subr.bf16.mxu0 0
      %2731 = vmatpush1.bf16.msra.mxu0 0
      %2732 = vmatprep.subr.bf16.mxu0 0
      %2733 = vmatpush1.bf16.msra.mxu0 0
      %2734 = vmatprep.subr.bf16.mxu0 0
      %2735 = vmatpush1.bf16.msra.mxu0 0
      %2736 = vmatprep.subr.bf16.mxu0 0
      %2737 = vmatpush1.bf16.msra.mxu0 0
      %2738 = vmatprep.subr.bf16.mxu0 0
      %2739 = vmatpush1.bf16.msra.mxu0 0
      %2740 = vmatprep.subr.bf16.mxu0 0
      %2741 = vmatpush1.bf16.msra.mxu0 0
      %2742 = vmatprep.subr.bf16.mxu0 0
      %2743 = vmatpush1.bf16.msra.mxu0 0
      %2744 = vmatprep.subr.bf16.mxu0 0
      %2745 = vmatpush1.bf16.msra.mxu0 0
      %2746 = vmatprep.mubr.bf16.mxu0 0
      %2747 = vmatmul.mubr.bf16.gmra.mrb[0].mxu0 %v1943
      %v2748 = vpop.f32.mrb[0].mxu0
      %v2749 = vadd.f32 0.0, %v2748
      %v2750 = vpop.f32.mrb[0].mxu0
      %v2751 = vpop.f32.mrb[0].mxu0
      %v2752 = vadd.f32 0.0, %v2751
      %v2753 = vpop.f32.mrb[0].mxu0
      %2754 = vmatprep.mubr.bf16.mxu0 0
      %2755 = vmatmul.mubr.bf16.gmra.mrb[0].mxu0 %v1946
      %v2756 = vpop.f32.mrb[0].mxu0
      %v2757 = vadd.f32 0.0, %v2756
      %v2758 = vpop.f32.mrb[0].mxu0
      %v2759 = vpop.f32.mrb[0].mxu0
      %v2760 = vadd.f32 0.0, %v2759
      %v2761 = vpop.f32.mrb[0].mxu0
      %2762 = vmatprep.mubr.bf16.mxu0 0
      %2763 = vmatmul.mubr.bf16.gmra.mrb[0].mxu0 %v1949
      %v2764 = vpop.f32.mrb[0].mxu0
      %v2765 = vadd.f32 0.0, %v2764
      %v2766 = vpop.f32.mrb[0].mxu0
      %v2767 = vpop.f32.mrb[0].mxu0
      %v2768 = vadd.f32 0.0, %v2767
      %v2769 = vpop.f32.mrb[0].mxu0
      %2770 = vmatprep.mubr.bf16.mxu0 0
      %2771 = vmatmul.mubr.bf16.gmra.mrb[0].mxu0 %v1952
      %v2772 = vpop.f32.mrb[0].mxu0
      %v2773 = vadd.f32 0.0, %v2772
      %v2774 = vpop.f32.mrb[0].mxu0
      %v2775 = vpop.f32.mrb[0].mxu0
      %v2776 = vadd.f32 0.0, %v2775
      %v2777 = vpop.f32.mrb[0].mxu0
      %2778 = vmatprep.mubr.bf16.mxu0 0
      %2779 = vmatmul.mubr.bf16.gmra.mrb[0].mxu0 %v1955
      %v2780 = vpop.f32.mrb[0].mxu0
      %v2781 = vadd.f32 0.0, %v2780
      %v2782 = vpop.f32.mrb[0].mxu0
      %v2783 = vpop.f32.mrb[0].mxu0
      %v2784 = vadd.f32 0.0, %v2783
      %v2785 = vpop.f32.mrb[0].mxu0
      %2786 = vmatprep.mubr.bf16.mxu0 0
      %2787 = vmatmul.mubr.bf16.gmra.mrb[0].mxu0 %v1958
      %v2788 = vpop.f32.mrb[0].mxu0
      %v2789 = vadd.f32 0.0, %v2788
      %v2790 = vpop.f32.mrb[0].mxu0
      %v2791 = vpop.f32.mrb[0].mxu0
      %v2792 = vadd.f32 0.0, %v2791
      %v2793 = vpop.f32.mrb[0].mxu0
      %2794 = vmatprep.mubr.bf16.mxu0 0
      %2795 = vmatmul.mubr.bf16.gmra.mrb[0].mxu0 %v1961
      %v2796 = vpop.f32.mrb[0].mxu0
      %v2797 = vadd.f32 0.0, %v2796
      %v2798 = vpop.f32.mrb[0].mxu0
      %v2799 = vpop.f32.mrb[0].mxu0
      %v2800 = vadd.f32 0.0, %v2799
      %v2801 = vpop.f32.mrb[0].mxu0
      %2802 = vmatprep.mubr.bf16.mxu0 0
      %2803 = vmatmul.mubr.bf16.gmra.mrb[0].mxu0 %v1964
      %v2804 = vpop.f32.mrb[0].mxu0
      %v2805 = vadd.f32 0.0, %v2804
      %v2806 = vpop.f32.mrb[0].mxu0
      %v2807 = vpop.f32.mrb[0].mxu0
      %v2808 = vadd.f32 0.0, %v2807
      %v2809 = vpop.f32.mrb[0].mxu0
      %2810 = vmatprep.mubr.bf16.mxu0 0
      %2811 = vmatmul.mubr.bf16.gmra.mrb[0].mxu0 %v1967
      %v2812 = vpop.f32.mrb[0].mxu0
      %v2813 = vadd.f32 0.0, %v2812
      %v2814 = vpop.f32.mrb[0].mxu0
      %v2815 = vpop.f32.mrb[0].mxu0
      %v2816 = vadd.f32 0.0, %v2815
      %v2817 = vpop.f32.mrb[0].mxu0
      %2818 = vmatprep.mubr.bf16.mxu0 0
      %2819 = vmatmul.mubr.bf16.gmra.mrb[0].mxu0 %v1970
      %v2820 = vpop.f32.mrb[0].mxu0
      %v2821 = vadd.f32 0.0, %v2820
      %v2822 = vpop.f32.mrb[0].mxu0
      %v2823 = vpop.f32.mrb[0].mxu0
      %v2824 = vadd.f32 0.0, %v2823
      %v2825 = vpop.f32.mrb[0].mxu0
      %2826 = vmatprep.mubr.bf16.mxu0 0
      %2827 = vmatmul.mubr.bf16.gmra.mrb[0].mxu0 %v1973
      %v2828 = vpop.f32.mrb[0].mxu0
      %v2829 = vadd.f32 0.0, %v2828
      %v2830 = vpop.f32.mrb[0].mxu0
      %v2831 = vpop.f32.mrb[0].mxu0
      %v2832 = vadd.f32 0.0, %v2831
      %v2833 = vpop.f32.mrb[0].mxu0
      %2834 = vmatprep.mubr.bf16.mxu0 0
      %2835 = vmatmul.mubr.bf16.gmra.mrb[0].mxu0 %v1976
      %v2836 = vpop.f32.mrb[0].mxu0
      %v2837 = vadd.f32 0.0, %v2836
      %v2838 = vpop.f32.mrb[0].mxu0
      %v2839 = vpop.f32.mrb[0].mxu0
      %v2840 = vadd.f32 0.0, %v2839
      %v2841 = vpop.f32.mrb[0].mxu0
      %2842 = vmatprep.mubr.bf16.mxu0 0
      %2843 = vmatmul.mubr.bf16.gmra.mrb[0].mxu0 %v1979
      %v2844 = vpop.f32.mrb[0].mxu0
      %v2845 = vadd.f32 0.0, %v2844
      %v2846 = vpop.f32.mrb[0].mxu0
      %v2847 = vpop.f32.mrb[0].mxu0
      %v2848 = vadd.f32 0.0, %v2847
      %v2849 = vpop.f32.mrb[0].mxu0
      %2850 = vmatprep.mubr.bf16.mxu0 0
      %2851 = vmatmul.mubr.bf16.gmra.mrb[0].mxu0 %v1982
      %v2852 = vpop.f32.mrb[0].mxu0
      %v2853 = vadd.f32 0.0, %v2852
      %v2854 = vpop.f32.mrb[0].mxu0
      %v2855 = vpop.f32.mrb[0].mxu0
      %v2856 = vadd.f32 0.0, %v2855
      %v2857 = vpop.f32.mrb[0].mxu0
      %2858 = vmatprep.mubr.bf16.mxu0 0
      %2859 = vmatmul.mubr.bf16.gmra.mrb[0].mxu0 %v1985
      %v2860 = vpop.f32.mrb[0].mxu0
      %v2861 = vadd.f32 0.0, %v2860
      %v2862 = vpop.f32.mrb[0].mxu0
      %v2863 = vpop.f32.mrb[0].mxu0
      %v2864 = vadd.f32 0.0, %v2863
      %v2865 = vpop.f32.mrb[0].mxu0
      %2866 = vmatprep.mubr.bf16.mxu0 0
      %2867 = vmatmul.mubr.bf16.gmra.mrb[0].mxu0 %v1988
      %v2868 = vpop.f32.mrb[0].mxu0
      %v2869 = vadd.f32 0.0, %v2868
      %v2870 = vpop.f32.mrb[0].mxu0
      %v2871 = vpop.f32.mrb[0].mxu0
      %v2872 = vadd.f32 0.0, %v2871
      %v2873 = vpop.f32.mrb[0].mxu0
      %2874 = vmatprep.mubr.bf16.mxu0 0
      %2875 = vmatmul.mubr.bf16.gmra.mrb[0].mxu0 %v1991
      %v2876 = vpop.f32.mrb[0].mxu0
      %v2877 = vadd.f32 0.0, %v2876
      %v2878 = vpop.f32.mrb[0].mxu0
      %v2879 = vpop.f32.mrb[0].mxu0
      %v2880 = vadd.f32 0.0, %v2879
      %v2881 = vpop.f32.mrb[0].mxu0
      %2882 = vmatprep.mubr.bf16.mxu0 0
      %2883 = vmatmul.mubr.bf16.gmra.mrb[0].mxu0 %v1994
      %v2884 = vpop.f32.mrb[0].mxu0
      %v2885 = vadd.f32 0.0, %v2884
      %v2886 = vpop.f32.mrb[0].mxu0
      %v2887 = vpop.f32.mrb[0].mxu0
      %v2888 = vadd.f32 0.0, %v2887
      %v2889 = vpop.f32.mrb[0].mxu0
      %2890 = vmatprep.mubr.bf16.mxu0 0
      %2891 = vmatmul.mubr.bf16.gmra.mrb[0].mxu0 %v1997
      %v2892 = vpop.f32.mrb[0].mxu0
      %v2893 = vadd.f32 0.0, %v2892
      %v2894 = vpop.f32.mrb[0].mxu0
      %v2895 = vpop.f32.mrb[0].mxu0
      %v2896 = vadd.f32 0.0, %v2895
      %v2897 = vpop.f32.mrb[0].mxu0
      %2898 = vmatprep.mubr.bf16.mxu0 0
      %2899 = vmatmul.mubr.bf16.gmra.mrb[0].mxu0 %v2000
      %v2900 = vpop.f32.mrb[0].mxu0
      %v2901 = vadd.f32 0.0, %v2900
      %v2902 = vpop.f32.mrb[0].mxu0
      %v2903 = vpop.f32.mrb[0].mxu0
      %v2904 = vadd.f32 0.0, %v2903
      %v2905 = vpop.f32.mrb[0].mxu0
      %2906 = vmatprep.mubr.bf16.mxu0 0
      %2907 = vmatmul.mubr.bf16.gmra.mrb[0].mxu0 %v2003
      %v2908 = vpop.f32.mrb[0].mxu0
      %v2909 = vadd.f32 0.0, %v2908
      %v2910 = vpop.f32.mrb[0].mxu0
      %v2911 = vpop.f32.mrb[0].mxu0
      %v2912 = vadd.f32 0.0, %v2911
      %v2913 = vpop.f32.mrb[0].mxu0
      %2914 = vmatprep.mubr.bf16.mxu0 0
      %2915 = vmatmul.mubr.bf16.gmra.mrb[0].mxu0 %v2006
      %v2916 = vpop.f32.mrb[0].mxu0
      %v2917 = vadd.f32 0.0, %v2916
      %v2918 = vpop.f32.mrb[0].mxu0
      %v2919 = vpop.f32.mrb[0].mxu0
      %v2920 = vadd.f32 0.0, %v2919
      %v2921 = vpop.f32.mrb[0].mxu0
      %2922 = vmatprep.mubr.bf16.mxu0 0
      %2923 = vmatmul.mubr.bf16.gmra.mrb[0].mxu0 %v2009
      %v2924 = vpop.f32.mrb[0].mxu0
      %v2925 = vadd.f32 0.0, %v2924
      %v2926 = vpop.f32.mrb[0].mxu0
      %v2927 = vpop.f32.mrb[0].mxu0
      %v2928 = vadd.f32 0.0, %v2927
      %v2929 = vpop.f32.mrb[0].mxu0
      %2930 = vmatprep.mubr.bf16.mxu0 0
      %2931 = vmatmul.mubr.bf16.gmra.mrb[0].mxu0 %v2012
      %v2932 = vpop.f32.mrb[0].mxu0
      %v2933 = vadd.f32 0.0, %v2932
      %v2934 = vpop.f32.mrb[0].mxu0
      %v2935 = vpop.f32.mrb[0].mxu0
      %v2936 = vadd.f32 0.0, %v2935
      %v2937 = vpop.f32.mrb[0].mxu0
      %2938 = vmatprep.mubr.bf16.mxu0 0
      %2939 = vmatmul.mubr.bf16.gmra.mrb[0].mxu0 %v2015
      %v2940 = vpop.f32.mrb[0].mxu0
      %v2941 = vadd.f32 0.0, %v2940
      %v2942 = vpop.f32.mrb[0].mxu0
      %v2943 = vpop.f32.mrb[0].mxu0
      %v2944 = vadd.f32 0.0, %v2943
      %v2945 = vpop.f32.mrb[0].mxu0
      %2946 = vmatprep.mubr.bf16.mxu0 0
      %2947 = vmatmul.mubr.bf16.gmra.mrb[0].mxu0 %v2018
      %v2948 = vpop.f32.mrb[0].mxu0
      %v2949 = vadd.f32 0.0, %v2948
      %v2950 = vpop.f32.mrb[0].mxu0
      %v2951 = vpop.f32.mrb[0].mxu0
      %v2952 = vadd.f32 0.0, %v2951
      %v2953 = vpop.f32.mrb[0].mxu0
      %2954 = vmatprep.mubr.bf16.mxu0 0
      %2955 = vmatmul.mubr.bf16.gmra.mrb[0].mxu0 %v2021
      %v2956 = vpop.f32.mrb[0].mxu0
      %v2957 = vadd.f32 0.0, %v2956
      %v2958 = vpop.f32.mrb[0].mxu0
      %v2959 = vpop.f32.mrb[0].mxu0
      %v2960 = vadd.f32 0.0, %v2959
      %v2961 = vpop.f32.mrb[0].mxu0
      %2962 = vmatprep.mubr.bf16.mxu0 0
      %2963 = vmatmul.mubr.bf16.gmra.mrb[0].mxu0 %v2024
      %v2964 = vpop.f32.mrb[0].mxu0
      %v2965 = vadd.f32 0.0, %v2964
      %v2966 = vpop.f32.mrb[0].mxu0
      %v2967 = vpop.f32.mrb[0].mxu0
      %v2968 = vadd.f32 0.0, %v2967
      %v2969 = vpop.f32.mrb[0].mxu0
      %2970 = vmatprep.mubr.bf16.mxu0 0
      %2971 = vmatmul.mubr.bf16.gmra.mrb[0].mxu0 %v2027
      %v2972 = vpop.f32.mrb[0].mxu0
      %v2973 = vadd.f32 0.0, %v2972
      %v2974 = vpop.f32.mrb[0].mxu0
      %v2975 = vpop.f32.mrb[0].mxu0
      %v2976 = vadd.f32 0.0, %v2975
      %v2977 = vpop.f32.mrb[0].mxu0
      %2978 = vmatprep.mubr.bf16.mxu0 0
      %2979 = vmatmul.mubr.bf16.gmra.mrb[0].mxu0 %v2030
      %v2980 = vpop.f32.mrb[0].mxu0
      %v2981 = vadd.f32 0.0, %v2980
      %v2982 = vpop.f32.mrb[0].mxu0
      %v2983 = vpop.f32.mrb[0].mxu0
      %v2984 = vadd.f32 0.0, %v2983
      %v2985 = vpop.f32.mrb[0].mxu0
      %2986 = vmatprep.mubr.bf16.mxu0 0
      %2987 = vmatmul.mubr.bf16.gmra.mrb[0].mxu0 %v2033
      %v2988 = vpop.f32.mrb[0].mxu0
      %v2989 = vadd.f32 0.0, %v2988
      %v2990 = vpop.f32.mrb[0].mxu0
      %v2991 = vpop.f32.mrb[0].mxu0
      %v2992 = vadd.f32 0.0, %v2991
      %v2993 = vpop.f32.mrb[0].mxu0
      %2994 = vmatprep.mubr.bf16.mxu0 0
      %2995 = vmatmul.mubr.bf16.gmra.mrb[0].mxu0 %v2036
      %v2996 = vpop.f32.mrb[0].mxu0
      %v2997 = vadd.f32 0.0, %v2996
      %v2998 = vpop.f32.mrb[0].mxu0
      %v2999 = vpop.f32.mrb[0].mxu0
      %v3000 = vadd.f32 0.0, %v2999
      %v3001 = vpop.f32.mrb[0].mxu0
      %3002 = vmatprep.mubr.bf16.mxu0 0
      %3003 = vmatmul.mubr.bf16.gmra.mrb[0].mxu0 %v2039
      %v3004 = vpop.f32.mrb[0].mxu0
      %v3005 = vadd.f32 0.0, %v3004
      %v3006 = vpop.f32.mrb[0].mxu0
      %v3007 = vpop.f32.mrb[0].mxu0
      %v3008 = vadd.f32 0.0, %v3007
      %v3009 = vpop.f32.mrb[0].mxu0
      %3010 = vmatprep.mubr.bf16.mxu0 0
      %3011 = vmatmul.mubr.bf16.gmra.mrb[0].mxu0 %v2042
      %v3012 = vpop.f32.mrb[0].mxu0
      %v3013 = vadd.f32 0.0, %v3012
      %v3014 = vpop.f32.mrb[0].mxu0
      %v3015 = vpop.f32.mrb[0].mxu0
      %v3016 = vadd.f32 0.0, %v3015
      %v3017 = vpop.f32.mrb[0].mxu0
      %3018 = vmatprep.mubr.bf16.mxu0 0
      %3019 = vmatmul.mubr.bf16.gmra.mrb[0].mxu0 %v2045
      %v3020 = vpop.f32.mrb[0].mxu0
      %v3021 = vadd.f32 0.0, %v3020
      %v3022 = vpop.f32.mrb[0].mxu0
      %v3023 = vpop.f32.mrb[0].mxu0
      %v3024 = vadd.f32 0.0, %v3023
      %v3025 = vpop.f32.mrb[0].mxu0
      %3026 = vmatprep.mubr.bf16.mxu0 0
      %3027 = vmatmul.mubr.bf16.gmra.mrb[0].mxu0 %v2048
      %v3028 = vpop.f32.mrb[0].mxu0
      %v3029 = vadd.f32 0.0, %v3028
      %v3030 = vpop.f32.mrb[0].mxu0
      %v3031 = vpop.f32.mrb[0].mxu0
      %v3032 = vadd.f32 0.0, %v3031
      %v3033 = vpop.f32.mrb[0].mxu0
      %3034 = vmatprep.mubr.bf16.mxu0 0
      %3035 = vmatmul.mubr.bf16.gmra.mrb[0].mxu0 %v2051
      %v3036 = vpop.f32.mrb[0].mxu0
      %v3037 = vadd.f32 0.0, %v3036
      %v3038 = vpop.f32.mrb[0].mxu0
      %v3039 = vpop.f32.mrb[0].mxu0
      %v3040 = vadd.f32 0.0, %v3039
      %v3041 = vpop.f32.mrb[0].mxu0
      %3042 = vmatprep.mubr.bf16.mxu0 0
      %3043 = vmatmul.mubr.bf16.gmra.mrb[0].mxu0 %v2054
      %v3044 = vpop.f32.mrb[0].mxu0
      %v3045 = vadd.f32 0.0, %v3044
      %v3046 = vpop.f32.mrb[0].mxu0
      %v3047 = vpop.f32.mrb[0].mxu0
      %v3048 = vadd.f32 0.0, %v3047
      %v3049 = vpop.f32.mrb[0].mxu0
      %3050 = vmatprep.mubr.bf16.mxu0 0
      %3051 = vmatmul.mubr.bf16.gmra.mrb[0].mxu0 %v2057
      %v3052 = vpop.f32.mrb[0].mxu0
      %v3053 = vadd.f32 0.0, %v3052
      %v3054 = vpop.f32.mrb[0].mxu0
      %v3055 = vpop.f32.mrb[0].mxu0
      %v3056 = vadd.f32 0.0, %v3055
      %v3057 = vpop.f32.mrb[0].mxu0
      %3058 = vmatprep.mubr.bf16.mxu0 0
      %3059 = vmatmul.mubr.bf16.gmra.mrb[0].mxu0 %v2060
      %v3060 = vpop.f32.mrb[0].mxu0
      %v3061 = vadd.f32 0.0, %v3060
      %v3062 = vpop.f32.mrb[0].mxu0
      %v3063 = vpop.f32.mrb[0].mxu0
      %v3064 = vadd.f32 0.0, %v3063
      %v3065 = vpop.f32.mrb[0].mxu0
      %3066 = vmatprep.mubr.bf16.mxu0 0
      %3067 = vmatmul.mubr.bf16.gmra.mrb[0].mxu0 %v2063
      %v3068 = vpop.f32.mrb[0].mxu0
      %v3069 = vadd.f32 0.0, %v3068
      %v3070 = vpop.f32.mrb[0].mxu0
      %v3071 = vpop.f32.mrb[0].mxu0
      %v3072 = vadd.f32 0.0, %v3071
      %v3073 = vpop.f32.mrb[0].mxu0
      %3074 = vmatprep.mubr.bf16.mxu0 0
      %3075 = vmatmul.mubr.bf16.gmra.mrb[0].mxu0 %v2066
      %v3076 = vpop.f32.mrb[0].mxu0
      %v3077 = vadd.f32 0.0, %v3076
      %v3078 = vpop.f32.mrb[0].mxu0
      %v3079 = vpop.f32.mrb[0].mxu0
      %v3080 = vadd.f32 0.0, %v3079
      %v3081 = vpop.f32.mrb[0].mxu0
      %3082 = vmatprep.mubr.bf16.mxu0 0
      %3083 = vmatmul.mubr.bf16.gmra.mrb[0].mxu0 %v2069
      %v3084 = vpop.f32.mrb[0].mxu0
      %v3085 = vadd.f32 0.0, %v3084
      %v3086 = vpop.f32.mrb[0].mxu0
      %v3087 = vpop.f32.mrb[0].mxu0
      %v3088 = vadd.f32 0.0, %v3087
      %v3089 = vpop.f32.mrb[0].mxu0
      %3090 = vmatprep.mubr.bf16.mxu0 0
      %3091 = vmatmul.mubr.bf16.gmra.mrb[0].mxu0 %v2072
      %v3092 = vpop.f32.mrb[0].mxu0
      %v3093 = vadd.f32 0.0, %v3092
      %v3094 = vpop.f32.mrb[0].mxu0
      %v3095 = vpop.f32.mrb[0].mxu0
      %v3096 = vadd.f32 0.0, %v3095
      %v3097 = vpop.f32.mrb[0].mxu0
      %3098 = vmatprep.mubr.bf16.mxu0 0
      %3099 = vmatmul.mubr.bf16.gmra.mrb[0].mxu0 %v2075
      %v3100 = vpop.f32.mrb[0].mxu0
      %v3101 = vadd.f32 0.0, %v3100
      %v3102 = vpop.f32.mrb[0].mxu0
      %v3103 = vpop.f32.mrb[0].mxu0
      %v3104 = vadd.f32 0.0, %v3103
      %v3105 = vpop.f32.mrb[0].mxu0
      %3106 = vmatprep.mubr.bf16.mxu0 0
      %3107 = vmatmul.mubr.bf16.gmra.mrb[0].mxu0 %v2078
      %v3108 = vpop.f32.mrb[0].mxu0
      %v3109 = vadd.f32 0.0, %v3108
      %v3110 = vpop.f32.mrb[0].mxu0
      %v3111 = vpop.f32.mrb[0].mxu0
      %v3112 = vadd.f32 0.0, %v3111
      %v3113 = vpop.f32.mrb[0].mxu0
      %3114 = vmatprep.mubr.bf16.mxu0 0
      %3115 = vmatmul.mubr.bf16.gmra.mrb[0].mxu0 %v2081
      %v3116 = vpop.f32.mrb[0].mxu0
      %v3117 = vadd.f32 0.0, %v3116
      %v3118 = vpop.f32.mrb[0].mxu0
      %v3119 = vpop.f32.mrb[0].mxu0
      %v3120 = vadd.f32 0.0, %v3119
      %v3121 = vpop.f32.mrb[0].mxu0
      %3122 = vmatprep.mubr.bf16.mxu0 0
      %3123 = vmatmul.mubr.bf16.gmra.mrb[0].mxu0 %v2084
      %v3124 = vpop.f32.mrb[0].mxu0
      %v3125 = vadd.f32 0.0, %v3124
      %v3126 = vpop.f32.mrb[0].mxu0
      %v3127 = vpop.f32.mrb[0].mxu0
      %v3128 = vadd.f32 0.0, %v3127
      %v3129 = vpop.f32.mrb[0].mxu0
      %3130 = vmatprep.mubr.bf16.mxu0 0
      %3131 = vmatmul.mubr.bf16.gmra.mrb[0].mxu0 %v2087
      %v3132 = vpop.f32.mrb[0].mxu0
      %v3133 = vadd.f32 0.0, %v3132
      %v3134 = vpop.f32.mrb[0].mxu0
      %v3135 = vpop.f32.mrb[0].mxu0
      %v3136 = vadd.f32 0.0, %v3135
      %v3137 = vpop.f32.mrb[0].mxu0
      %3138 = vmatprep.mubr.bf16.mxu0 0
      %3139 = vmatmul.mubr.bf16.gmra.mrb[0].mxu0 %v2090
      %v3140 = vpop.f32.mrb[0].mxu0
      %v3141 = vadd.f32 0.0, %v3140
      %v3142 = vpop.f32.mrb[0].mxu0
      %v3143 = vpop.f32.mrb[0].mxu0
      %v3144 = vadd.f32 0.0, %v3143
      %v3145 = vpop.f32.mrb[0].mxu0
      %3146 = vmatprep.mubr.bf16.mxu0 0
      %3147 = vmatmul.mubr.bf16.gmra.mrb[0].mxu0 %v2093
      %v3148 = vpop.f32.mrb[0].mxu0
      %v3149 = vadd.f32 0.0, %v3148
      %v3150 = vpop.f32.mrb[0].mxu0
      %v3151 = vpop.f32.mrb[0].mxu0
      %v3152 = vadd.f32 0.0, %v3151
      %v3153 = vpop.f32.mrb[0].mxu0
      %3154 = vmatprep.mubr.bf16.mxu0 0
      %3155 = vmatmul.mubr.bf16.gmra.mrb[0].mxu0 %v2096
      %v3156 = vpop.f32.mrb[0].mxu0
      %v3157 = vadd.f32 0.0, %v3156
      %v3158 = vpop.f32.mrb[0].mxu0
      %v3159 = vpop.f32.mrb[0].mxu0
      %v3160 = vadd.f32 0.0, %v3159
      %v3161 = vpop.f32.mrb[0].mxu0
      %3162 = vmatprep.mubr.bf16.mxu0 0
      %3163 = vmatmul.mubr.bf16.gmra.mrb[0].mxu0 %v2099
      %v3164 = vpop.f32.mrb[0].mxu0
      %v3165 = vadd.f32 0.0, %v3164
      %v3166 = vpop.f32.mrb[0].mxu0
      %v3167 = vpop.f32.mrb[0].mxu0
      %v3168 = vadd.f32 0.0, %v3167
      %v3169 = vpop.f32.mrb[0].mxu0
      %3170 = vmatprep.mubr.bf16.mxu0 0
      %3171 = vmatmul.mubr.bf16.gmra.mrb[0].mxu0 %v2102
      %v3172 = vpop.f32.mrb[0].mxu0
      %v3173 = vadd.f32 0.0, %v3172
      %v3174 = vpop.f32.mrb[0].mxu0
      %v3175 = vpop.f32.mrb[0].mxu0
      %v3176 = vadd.f32 0.0, %v3175
      %v3177 = vpop.f32.mrb[0].mxu0
      %3178 = vmatprep.mubr.bf16.mxu0 0
      %3179 = vmatmul.mubr.bf16.gmra.mrb[0].mxu0 %v2105
      %v3180 = vpop.f32.mrb[0].mxu0
      %v3181 = vadd.f32 0.0, %v3180
      %v3182 = vpop.f32.mrb[0].mxu0
      %v3183 = vpop.f32.mrb[0].mxu0
      %v3184 = vadd.f32 0.0, %v3183
      %v3185 = vpop.f32.mrb[0].mxu0
      %3186 = vmatprep.mubr.bf16.mxu0 0
      %3187 = vmatmul.mubr.bf16.gmra.mrb[0].mxu0 %v2108
      %v3188 = vpop.f32.mrb[0].mxu0
      %v3189 = vadd.f32 0.0, %v3188
      %v3190 = vpop.f32.mrb[0].mxu0
      %v3191 = vpop.f32.mrb[0].mxu0
      %v3192 = vadd.f32 0.0, %v3191
      %v3193 = vpop.f32.mrb[0].mxu0
      %3194 = vmatprep.mubr.bf16.mxu0 0
      %3195 = vmatmul.mubr.bf16.gmra.mrb[0].mxu0 %v2111
      %v3196 = vpop.f32.mrb[0].mxu0
      %v3197 = vadd.f32 0.0, %v3196
      %v3198 = vpop.f32.mrb[0].mxu0
      %v3199 = vpop.f32.mrb[0].mxu0
      %v3200 = vadd.f32 0.0, %v3199
      %v3201 = vpop.f32.mrb[0].mxu0
      %3202 = vmatprep.mubr.bf16.mxu0 0
      %3203 = vmatmul.mubr.bf16.gmra.mrb[0].mxu0 %v2114
      %v3204 = vpop.f32.mrb[0].mxu0
      %v3205 = vadd.f32 0.0, %v3204
      %v3206 = vpop.f32.mrb[0].mxu0
      %v3207 = vpop.f32.mrb[0].mxu0
      %v3208 = vadd.f32 0.0, %v3207
      %v3209 = vpop.f32.mrb[0].mxu0
      %3210 = vmatprep.mubr.bf16.mxu0 0
      %3211 = vmatmul.mubr.bf16.gmra.mrb[0].mxu0 %v2117
      %v3212 = vpop.f32.mrb[0].mxu0
      %v3213 = vadd.f32 0.0, %v3212
      %v3214 = vpop.f32.mrb[0].mxu0
      %v3215 = vpop.f32.mrb[0].mxu0
      %v3216 = vadd.f32 0.0, %v3215
      %v3217 = vpop.f32.mrb[0].mxu0
      %3218 = vmatprep.mubr.bf16.mxu0 0
      %3219 = vmatmul.mubr.bf16.gmra.mrb[0].mxu0 %v2120
      %v3220 = vpop.f32.mrb[0].mxu0
      %v3221 = vadd.f32 0.0, %v3220
      %v3222 = vpop.f32.mrb[0].mxu0
      %v3223 = vpop.f32.mrb[0].mxu0
      %v3224 = vadd.f32 0.0, %v3223
      %v3225 = vpop.f32.mrb[0].mxu0
      %3226 = vmatprep.mubr.bf16.mxu0 0
      %3227 = vmatmul.mubr.bf16.gmra.mrb[0].mxu0 %v2123
      %v3228 = vpop.f32.mrb[0].mxu0
      %v3229 = vadd.f32 0.0, %v3228
      %v3230 = vpop.f32.mrb[0].mxu0
      %v3231 = vpop.f32.mrb[0].mxu0
      %v3232 = vadd.f32 0.0, %v3231
      %v3233 = vpop.f32.mrb[0].mxu0
      %3234 = vmatprep.mubr.bf16.mxu0 0
      %3235 = vmatmul.mubr.bf16.gmra.mrb[0].mxu0 %v2126
      %v3236 = vpop.f32.mrb[0].mxu0
      %v3237 = vadd.f32 0.0, %v3236
      %v3238 = vpop.f32.mrb[0].mxu0
      %v3239 = vpop.f32.mrb[0].mxu0
      %v3240 = vadd.f32 0.0, %v3239
      %v3241 = vpop.f32.mrb[0].mxu0
      %3242 = vmatprep.mubr.bf16.mxu0 0
      %3243 = vmatmul.mubr.bf16.gmra.mrb[0].mxu0 %v2129
      %v3244 = vpop.f32.mrb[0].mxu0
      %v3245 = vadd.f32 0.0, %v3244
      %v3246 = vpop.f32.mrb[0].mxu0
      %v3247 = vpop.f32.mrb[0].mxu0
      %v3248 = vadd.f32 0.0, %v3247
      %v3249 = vpop.f32.mrb[0].mxu0
      %3250 = vmatprep.mubr.bf16.mxu0 0
      %3251 = vmatmul.mubr.bf16.gmra.mrb[0].mxu0 %v2132
      %v3252 = vpop.f32.mrb[0].mxu0
      %v3253 = vadd.f32 0.0, %v3252
      %v3254 = vpop.f32.mrb[0].mxu0
      %v3255 = vpop.f32.mrb[0].mxu0
      %v3256 = vadd.f32 0.0, %v3255
      %v3257 = vpop.f32.mrb[0].mxu0
      %3258 = vmatprep.mubr.bf16.mxu0 0
      %3259 = vmatmul.mubr.bf16.gmra.mrb[0].mxu0 %v2135
      %v3260 = vpop.f32.mrb[0].mxu0
      %v3261 = vadd.f32 0.0, %v3260
      %v3262 = vpop.f32.mrb[0].mxu0
      %v3263 = vpop.f32.mrb[0].mxu0
      %v3264 = vadd.f32 0.0, %v3263
      %v3265 = vpop.f32.mrb[0].mxu0
      %3266 = vmatprep.mubr.bf16.mxu0 0
      %3267 = vmatmul.mubr.bf16.gmra.mrb[0].mxu0 %v2138
      %v3268 = vpop.f32.mrb[0].mxu0
      %v3269 = vadd.f32 0.0, %v3268
      %v3270 = vpop.f32.mrb[0].mxu0
      %v3271 = vpop.f32.mrb[0].mxu0
      %v3272 = vadd.f32 0.0, %v3271
      %v3273 = vpop.f32.mrb[0].mxu0
      %3274 = vmatprep.mubr.bf16.mxu0 0
      %3275 = vmatmul.mubr.bf16.gmra.mrb[0].mxu0 %v2141
      %v3276 = vpop.f32.mrb[0].mxu0
      %v3277 = vadd.f32 0.0, %v3276
      %v3278 = vpop.f32.mrb[0].mxu0
      %v3279 = vpop.f32.mrb[0].mxu0
      %v3280 = vadd.f32 0.0, %v3279
      %v3281 = vpop.f32.mrb[0].mxu0
      %3282 = vmatprep.mubr.bf16.mxu0 0
      %3283 = vmatmul.mubr.bf16.gmra.mrb[0].mxu0 %v2144
      %v3284 = vpop.f32.mrb[0].mxu0
      %v3285 = vadd.f32 0.0, %v3284
      %v3286 = vpop.f32.mrb[0].mxu0
      %v3287 = vpop.f32.mrb[0].mxu0
      %v3288 = vadd.f32 0.0, %v3287
      %v3289 = vpop.f32.mrb[0].mxu0
      %3290 = vmatprep.mubr.bf16.mxu0 0
      %3291 = vmatmul.mubr.bf16.gmra.mrb[0].mxu0 %v2147
      %v3292 = vpop.f32.mrb[0].mxu0
      %v3293 = vadd.f32 0.0, %v3292
      %v3294 = vpop.f32.mrb[0].mxu0
      %v3295 = vpop.f32.mrb[0].mxu0
      %v3296 = vadd.f32 0.0, %v3295
      %v3297 = vpop.f32.mrb[0].mxu0
      %3298 = vmatprep.mubr.bf16.mxu0 0
      %3299 = vmatmul.mubr.bf16.gmra.mrb[0].mxu0 %v2150
      %v3300 = vpop.f32.mrb[0].mxu0
      %v3301 = vadd.f32 0.0, %v3300
      %v3302 = vpop.f32.mrb[0].mxu0
      %v3303 = vpop.f32.mrb[0].mxu0
      %v3304 = vadd.f32 0.0, %v3303
      %v3305 = vpop.f32.mrb[0].mxu0
      %3306 = vmatprep.mubr.bf16.mxu0 0
      %3307 = vmatmul.mubr.bf16.gmra.mrb[0].mxu0 %v2153
      %v3308 = vpop.f32.mrb[0].mxu0
      %v3309 = vadd.f32 0.0, %v3308
      %v3310 = vpop.f32.mrb[0].mxu0
      %v3311 = vpop.f32.mrb[0].mxu0
      %v3312 = vadd.f32 0.0, %v3311
      %v3313 = vpop.f32.mrb[0].mxu0
      %3314 = vmatprep.mubr.bf16.mxu0 0
      %3315 = vmatmul.mubr.bf16.gmra.mrb[0].mxu0 %v2156
      %v3316 = vpop.f32.mrb[0].mxu0
      %v3317 = vadd.f32 0.0, %v3316
      %v3318 = vpop.f32.mrb[0].mxu0
      %v3319 = vpop.f32.mrb[0].mxu0
      %v3320 = vadd.f32 0.0, %v3319
      %v3321 = vpop.f32.mrb[0].mxu0
      %3322 = vmatprep.mubr.bf16.mxu0 0
      %3323 = vmatmul.mubr.bf16.gmra.mrb[0].mxu0 %v2159
      %v3324 = vpop.f32.mrb[0].mxu0
      %v3325 = vadd.f32 0.0, %v3324
      %v3326 = vpop.f32.mrb[0].mxu0
      %v3327 = vpop.f32.mrb[0].mxu0
      %v3328 = vadd.f32 0.0, %v3327
      %v3329 = vpop.f32.mrb[0].mxu0
      %3330 = vmatprep.mubr.bf16.mxu0 0
      %3331 = vmatmul.mubr.bf16.gmra.mrb[0].mxu0 %v2162
      %v3332 = vpop.f32.mrb[0].mxu0
      %v3333 = vadd.f32 0.0, %v3332
      %v3334 = vpop.f32.mrb[0].mxu0
      %v3335 = vpop.f32.mrb[0].mxu0
      %v3336 = vadd.f32 0.0, %v3335
      %v3337 = vpop.f32.mrb[0].mxu0
      %3338 = vmatprep.mubr.bf16.mxu0 0
      %3339 = vmatmul.mubr.bf16.gmra.mrb[0].mxu0 %v2165
      %v3340 = vpop.f32.mrb[0].mxu0
      %v3341 = vadd.f32 0.0, %v3340
      %v3342 = vpop.f32.mrb[0].mxu0
      %v3343 = vpop.f32.mrb[0].mxu0
      %v3344 = vadd.f32 0.0, %v3343
      %v3345 = vpop.f32.mrb[0].mxu0
      %3346 = vmatprep.mubr.bf16.mxu0 0
      %3347 = vmatmul.mubr.bf16.gmra.mrb[0].mxu0 %v2168
      %v3348 = vpop.f32.mrb[0].mxu0
      %v3349 = vadd.f32 0.0, %v3348
      %v3350 = vpop.f32.mrb[0].mxu0
      %v3351 = vpop.f32.mrb[0].mxu0
      %v3352 = vadd.f32 0.0, %v3351
      %v3353 = vpop.f32.mrb[0].mxu0
      %3354 = vmatprep.mubr.bf16.mxu0 0
      %3355 = vmatmul.mubr.bf16.gmra.mrb[0].mxu0 %v2171
      %v3356 = vpop.f32.mrb[0].mxu0
      %v3357 = vadd.f32 0.0, %v3356
      %v3358 = vpop.f32.mrb[0].mxu0
      %v3359 = vpop.f32.mrb[0].mxu0
      %v3360 = vadd.f32 0.0, %v3359
      %v3361 = vpop.f32.mrb[0].mxu0
      %3362 = vmatprep.mubr.bf16.mxu0 0
      %3363 = vmatmul.mubr.bf16.gmra.mrb[0].mxu0 %v2174
      %v3364 = vpop.f32.mrb[0].mxu0
      %v3365 = vadd.f32 0.0, %v3364
      %v3366 = vpop.f32.mrb[0].mxu0
      %v3367 = vpop.f32.mrb[0].mxu0
      %v3368 = vadd.f32 0.0, %v3367
      %v3369 = vpop.f32.mrb[0].mxu0
      %3370 = vmatprep.mubr.bf16.mxu0 0
      %3371 = vmatmul.mubr.bf16.gmra.mrb[0].mxu0 %v2177
      %v3372 = vpop.f32.mrb[0].mxu0
      %v3373 = vadd.f32 0.0, %v3372
      %v3374 = vpop.f32.mrb[0].mxu0
      %v3375 = vpop.f32.mrb[0].mxu0
      %v3376 = vadd.f32 0.0, %v3375
      %v3377 = vpop.f32.mrb[0].mxu0
      %3378 = vmatprep.mubr.bf16.mxu0 0
      %3379 = vmatmul.mubr.bf16.gmra.mrb[0].mxu0 %v2180
      %v3380 = vpop.f32.mrb[0].mxu0
      %v3381 = vadd.f32 0.0, %v3380
      %v3382 = vpop.f32.mrb[0].mxu0
      %v3383 = vpop.f32.mrb[0].mxu0
      %v3384 = vadd.f32 0.0, %v3383
      %v3385 = vpop.f32.mrb[0].mxu0
      %3386 = vmatprep.mubr.bf16.mxu0 0
      %3387 = vmatmul.mubr.bf16.gmra.mrb[0].mxu0 %v2183
      %v3388 = vpop.f32.mrb[0].mxu0
      %v3389 = vadd.f32 0.0, %v3388
      %v3390 = vpop.f32.mrb[0].mxu0
      %v3391 = vpop.f32.mrb[0].mxu0
      %v3392 = vadd.f32 0.0, %v3391
      %v3393 = vpop.f32.mrb[0].mxu0
      %3394 = vmatprep.mubr.bf16.mxu0 0
      %3395 = vmatmul.mubr.bf16.gmra.mrb[0].mxu0 %v2186
      %v3396 = vpop.f32.mrb[0].mxu0
      %v3397 = vadd.f32 0.0, %v3396
      %v3398 = vpop.f32.mrb[0].mxu0
      %v3399 = vpop.f32.mrb[0].mxu0
      %v3400 = vadd.f32 0.0, %v3399
      %v3401 = vpop.f32.mrb[0].mxu0
      %3402 = vmatprep.mubr.bf16.mxu0 0
      %3403 = vmatmul.mubr.bf16.gmra.mrb[0].mxu0 %v2189
      %v3404 = vpop.f32.mrb[0].mxu0
      %v3405 = vadd.f32 0.0, %v3404
      %v3406 = vpop.f32.mrb[0].mxu0
      %v3407 = vpop.f32.mrb[0].mxu0
      %v3408 = vadd.f32 0.0, %v3407
      %v3409 = vpop.f32.mrb[0].mxu0
      %3410 = vmatprep.mubr.bf16.mxu0 0
      %3411 = vmatmul.mubr.bf16.gmra.mrb[0].mxu0 %v2192
      %v3412 = vpop.f32.mrb[0].mxu0
      %v3413 = vadd.f32 0.0, %v3412
      %v3414 = vpop.f32.mrb[0].mxu0
      %v3415 = vpop.f32.mrb[0].mxu0
      %v3416 = vadd.f32 0.0, %v3415
      %v3417 = vpop.f32.mrb[0].mxu0
      %3418 = vmatprep.mubr.bf16.mxu0 0
      %3419 = vmatmul.mubr.bf16.gmra.mrb[0].mxu0 %v2195
      %v3420 = vpop.f32.mrb[0].mxu0
      %v3421 = vadd.f32 0.0, %v3420
      %v3422 = vpop.f32.mrb[0].mxu0
      %v3423 = vpop.f32.mrb[0].mxu0
      %v3424 = vadd.f32 0.0, %v3423
      %v3425 = vpop.f32.mrb[0].mxu0
      %3426 = vmatprep.mubr.bf16.mxu0 0
      %3427 = vmatmul.mubr.bf16.gmra.mrb[0].mxu0 %v2198
      %v3428 = vpop.f32.mrb[0].mxu0
      %v3429 = vadd.f32 0.0, %v3428
      %v3430 = vpop.f32.mrb[0].mxu0
      %v3431 = vpop.f32.mrb[0].mxu0
      %v3432 = vadd.f32 0.0, %v3431
      %v3433 = vpop.f32.mrb[0].mxu0
      %3434 = vmatprep.mubr.bf16.mxu0 0
      %3435 = vmatmul.mubr.bf16.gmra.mrb[0].mxu0 %v2201
      %v3436 = vpop.f32.mrb[0].mxu0
      %v3437 = vadd.f32 0.0, %v3436
      %v3438 = vpop.f32.mrb[0].mxu0
      %v3439 = vpop.f32.mrb[0].mxu0
      %v3440 = vadd.f32 0.0, %v3439
      %v3441 = vpop.f32.mrb[0].mxu0
      %3442 = vmatprep.mubr.bf16.mxu0 0
      %3443 = vmatmul.mubr.bf16.gmra.mrb[0].mxu0 %v2204
      %v3444 = vpop.f32.mrb[0].mxu0
      %v3445 = vadd.f32 0.0, %v3444
      %v3446 = vpop.f32.mrb[0].mxu0
      %v3447 = vpop.f32.mrb[0].mxu0
      %v3448 = vadd.f32 0.0, %v3447
      %v3449 = vpop.f32.mrb[0].mxu0
      %3450 = vmatprep.mubr.bf16.mxu0 0
      %3451 = vmatmul.mubr.bf16.gmra.mrb[0].mxu0 %v2207
      %v3452 = vpop.f32.mrb[0].mxu0
      %v3453 = vadd.f32 0.0, %v3452
      %v3454 = vpop.f32.mrb[0].mxu0
      %v3455 = vpop.f32.mrb[0].mxu0
      %v3456 = vadd.f32 0.0, %v3455
      %v3457 = vpop.f32.mrb[0].mxu0
      %3458 = vmatprep.mubr.bf16.mxu0 0
      %3459 = vmatmul.mubr.bf16.gmra.mrb[0].mxu0 %v2210
      %v3460 = vpop.f32.mrb[0].mxu0
      %v3461 = vadd.f32 0.0, %v3460
      %v3462 = vpop.f32.mrb[0].mxu0
      %v3463 = vpop.f32.mrb[0].mxu0
      %v3464 = vadd.f32 0.0, %v3463
      %v3465 = vpop.f32.mrb[0].mxu0
      %3466 = vmatprep.mubr.bf16.mxu0 0
      %3467 = vmatmul.mubr.bf16.gmra.mrb[0].mxu0 %v2213
      %v3468 = vpop.f32.mrb[0].mxu0
      %v3469 = vadd.f32 0.0, %v3468
      %v3470 = vpop.f32.mrb[0].mxu0
      %v3471 = vpop.f32.mrb[0].mxu0
      %v3472 = vadd.f32 0.0, %v3471
      %v3473 = vpop.f32.mrb[0].mxu0
      %3474 = vmatprep.mubr.bf16.mxu0 0
      %3475 = vmatmul.mubr.bf16.gmra.mrb[0].mxu0 %v2216
      %v3476 = vpop.f32.mrb[0].mxu0
      %v3477 = vadd.f32 0.0, %v3476
      %v3478 = vpop.f32.mrb[0].mxu0
      %v3479 = vpop.f32.mrb[0].mxu0
      %v3480 = vadd.f32 0.0, %v3479
      %v3481 = vpop.f32.mrb[0].mxu0
      %3482 = vmatprep.mubr.bf16.mxu0 0
      %3483 = vmatmul.mubr.bf16.gmra.mrb[0].mxu0 %v2219
      %v3484 = vpop.f32.mrb[0].mxu0
      %v3485 = vadd.f32 0.0, %v3484
      %v3486 = vpop.f32.mrb[0].mxu0
      %v3487 = vpop.f32.mrb[0].mxu0
      %v3488 = vadd.f32 0.0, %v3487
      %v3489 = vpop.f32.mrb[0].mxu0
      %3490 = vmatprep.mubr.bf16.mxu0 0
      %3491 = vmatmul.mubr.bf16.gmra.mrb[0].mxu0 %v2222
      %v3492 = vpop.f32.mrb[0].mxu0
      %v3493 = vadd.f32 0.0, %v3492
      %v3494 = vpop.f32.mrb[0].mxu0
      %v3495 = vpop.f32.mrb[0].mxu0
      %v3496 = vadd.f32 0.0, %v3495
      %v3497 = vpop.f32.mrb[0].mxu0
      %3498 = vmatprep.mubr.bf16.mxu0 0
      %3499 = vmatmul.mubr.bf16.gmra.mrb[0].mxu0 %v2225
      %v3500 = vpop.f32.mrb[0].mxu0
      %v3501 = vadd.f32 0.0, %v3500
      %v3502 = vpop.f32.mrb[0].mxu0
      %v3503 = vpop.f32.mrb[0].mxu0
      %v3504 = vadd.f32 0.0, %v3503
      %v3505 = vpop.f32.mrb[0].mxu0
      %3506 = vmatprep.mubr.bf16.mxu0 0
      %3507 = vmatmul.mubr.bf16.gmra.mrb[0].mxu0 %v2228
      %v3508 = vpop.f32.mrb[0].mxu0
      %v3509 = vadd.f32 0.0, %v3508
      %v3510 = vpop.f32.mrb[0].mxu0
      %v3511 = vpop.f32.mrb[0].mxu0
      %v3512 = vadd.f32 0.0, %v3511
      %v3513 = vpop.f32.mrb[0].mxu0
      %3514 = vmatprep.mubr.bf16.mxu0 0
      %3515 = vmatmul.mubr.bf16.gmra.mrb[0].mxu0 %v2231
      %v3516 = vpop.f32.mrb[0].mxu0
      %v3517 = vadd.f32 0.0, %v3516
      %v3518 = vpop.f32.mrb[0].mxu0
      %v3519 = vpop.f32.mrb[0].mxu0
      %v3520 = vadd.f32 0.0, %v3519
      %v3521 = vpop.f32.mrb[0].mxu0
      %3522 = vmatprep.mubr.bf16.mxu0 0
      %3523 = vmatmul.mubr.bf16.gmra.mrb[0].mxu0 %v2234
      %v3524 = vpop.f32.mrb[0].mxu0
      %v3525 = vadd.f32 0.0, %v3524
      %v3526 = vpop.f32.mrb[0].mxu0
      %v3527 = vpop.f32.mrb[0].mxu0
      %v3528 = vadd.f32 0.0, %v3527
      %v3529 = vpop.f32.mrb[0].mxu0
      %3530 = vmatprep.mubr.bf16.mxu0 0
      %3531 = vmatmul.mubr.bf16.gmra.mrb[0].mxu0 %v2237
      %v3532 = vpop.f32.mrb[0].mxu0
      %v3533 = vadd.f32 0.0, %v3532
      %v3534 = vpop.f32.mrb[0].mxu0
      %v3535 = vpop.f32.mrb[0].mxu0
      %v3536 = vadd.f32 0.0, %v3535
      %v3537 = vpop.f32.mrb[0].mxu0
      %3538 = vmatprep.mubr.bf16.mxu0 0
      %3539 = vmatmul.mubr.bf16.gmra.mrb[0].mxu0 %v2240
      %v3540 = vpop.f32.mrb[0].mxu0
      %v3541 = vadd.f32 0.0, %v3540
      %v3542 = vpop.f32.mrb[0].mxu0
      %v3543 = vpop.f32.mrb[0].mxu0
      %v3544 = vadd.f32 0.0, %v3543
      %v3545 = vpop.f32.mrb[0].mxu0
      %3546 = vmatprep.mubr.bf16.mxu0 0
      %3547 = vmatmul.mubr.bf16.gmra.mrb[0].mxu0 %v2243
      %v3548 = vpop.f32.mrb[0].mxu0
      %v3549 = vadd.f32 0.0, %v3548
      %v3550 = vpop.f32.mrb[0].mxu0
      %v3551 = vpop.f32.mrb[0].mxu0
      %v3552 = vadd.f32 0.0, %v3551
      %v3553 = vpop.f32.mrb[0].mxu0
      %3554 = vmatprep.mubr.bf16.mxu0 0
      %3555 = vmatmul.mubr.bf16.gmra.mrb[0].mxu0 %v2246
      %v3556 = vpop.f32.mrb[0].mxu0
      %v3557 = vadd.f32 0.0, %v3556
      %v3558 = vpop.f32.mrb[0].mxu0
      %v3559 = vpop.f32.mrb[0].mxu0
      %v3560 = vadd.f32 0.0, %v3559
      %v3561 = vpop.f32.mrb[0].mxu0
      %3562 = vmatprep.mubr.bf16.mxu0 0
      %3563 = vmatmul.mubr.bf16.gmra.mrb[0].mxu0 %v2249
      %v3564 = vpop.f32.mrb[0].mxu0
      %v3565 = vadd.f32 0.0, %v3564
      %v3566 = vpop.f32.mrb[0].mxu0
      %v3567 = vpop.f32.mrb[0].mxu0
      %v3568 = vadd.f32 0.0, %v3567
      %v3569 = vpop.f32.mrb[0].mxu0
      %3570 = vmatprep.mubr.bf16.mxu0 0
      %3571 = vmatmul.mubr.bf16.gmra.mrb[0].mxu0 %v2252
      %v3572 = vpop.f32.mrb[0].mxu0
      %v3573 = vadd.f32 0.0, %v3572
      %v3574 = vpop.f32.mrb[0].mxu0
      %v3575 = vpop.f32.mrb[0].mxu0
      %v3576 = vadd.f32 0.0, %v3575
      %v3577 = vpop.f32.mrb[0].mxu0
      %3578 = vmatprep.mubr.bf16.mxu0 0
      %3579 = vmatmul.mubr.bf16.gmra.mrb[0].mxu0 %v2255
      %v3580 = vpop.f32.mrb[0].mxu0
      %v3581 = vadd.f32 0.0, %v3580
      %v3582 = vpop.f32.mrb[0].mxu0
      %v3583 = vpop.f32.mrb[0].mxu0
      %v3584 = vadd.f32 0.0, %v3583
      %v3585 = vpop.f32.mrb[0].mxu0
      %3586 = vmatprep.mubr.bf16.mxu0 0
      %3587 = vmatmul.mubr.bf16.gmra.mrb[0].mxu0 %v2258
      %v3588 = vpop.f32.mrb[0].mxu0
      %v3589 = vadd.f32 0.0, %v3588
      %v3590 = vpop.f32.mrb[0].mxu0
      %v3591 = vpop.f32.mrb[0].mxu0
      %v3592 = vadd.f32 0.0, %v3591
      %v3593 = vpop.f32.mrb[0].mxu0
      %3594 = vmatprep.mubr.bf16.mxu0 0
      %3595 = vmatmul.mubr.bf16.gmra.mrb[0].mxu0 %v2261
      %v3596 = vpop.f32.mrb[0].mxu0
      %v3597 = vadd.f32 0.0, %v3596
      %v3598 = vpop.f32.mrb[0].mxu0
      %v3599 = vpop.f32.mrb[0].mxu0
      %v3600 = vadd.f32 0.0, %v3599
      %v3601 = vpop.f32.mrb[0].mxu0
      %3602 = vmatprep.mubr.bf16.mxu0 0
      %3603 = vmatmul.mubr.bf16.gmra.mrb[0].mxu0 %v2264
      %v3604 = vpop.f32.mrb[0].mxu0
      %v3605 = vadd.f32 0.0, %v3604
      %v3606 = vpop.f32.mrb[0].mxu0
      %v3607 = vpop.f32.mrb[0].mxu0
      %v3608 = vadd.f32 0.0, %v3607
      %v3609 = vpop.f32.mrb[0].mxu0
      %3610 = vmatprep.mubr.bf16.mxu0 0
      %3611 = vmatmul.mubr.bf16.gmra.mrb[0].mxu0 %v2267
      %v3612 = vpop.f32.mrb[0].mxu0
      %v3613 = vadd.f32 0.0, %v3612
      %v3614 = vpop.f32.mrb[0].mxu0
      %v3615 = vpop.f32.mrb[0].mxu0
      %v3616 = vadd.f32 0.0, %v3615
      %v3617 = vpop.f32.mrb[0].mxu0
      %3618 = vmatprep.mubr.bf16.mxu0 0
      %3619 = vmatmul.mubr.bf16.gmra.mrb[0].mxu0 %v2270
      %v3620 = vpop.f32.mrb[0].mxu0
      %v3621 = vadd.f32 0.0, %v3620
      %v3622 = vpop.f32.mrb[0].mxu0
      %v3623 = vpop.f32.mrb[0].mxu0
      %v3624 = vadd.f32 0.0, %v3623
      %v3625 = vpop.f32.mrb[0].mxu0
      %3626 = vmatprep.mubr.bf16.mxu0 0
      %3627 = vmatmul.mubr.bf16.gmra.mrb[0].mxu0 %v2273
      %v3628 = vpop.f32.mrb[0].mxu0
      %v3629 = vadd.f32 0.0, %v3628
      %v3630 = vpop.f32.mrb[0].mxu0
      %v3631 = vpop.f32.mrb[0].mxu0
      %v3632 = vadd.f32 0.0, %v3631
      %v3633 = vpop.f32.mrb[0].mxu0
      %3634 = vmatprep.mubr.bf16.mxu0 0
      %3635 = vmatmul.mubr.bf16.gmra.mrb[0].mxu0 %v2276
      %v3636 = vpop.f32.mrb[0].mxu0
      %v3637 = vadd.f32 0.0, %v3636
      %v3638 = vpop.f32.mrb[0].mxu0
      %v3639 = vpop.f32.mrb[0].mxu0
      %v3640 = vadd.f32 0.0, %v3639
      %v3641 = vpop.f32.mrb[0].mxu0
      %3642 = vmatprep.mubr.bf16.mxu0 0
      %3643 = vmatmul.mubr.bf16.gmra.mrb[0].mxu0 %v2279
      %v3644 = vpop.f32.mrb[0].mxu0
      %v3645 = vadd.f32 0.0, %v3644
      %v3646 = vpop.f32.mrb[0].mxu0
      %v3647 = vpop.f32.mrb[0].mxu0
      %v3648 = vadd.f32 0.0, %v3647
      %v3649 = vpop.f32.mrb[0].mxu0
      %3650 = vmatprep.mubr.bf16.mxu0 0
      %3651 = vmatmul.mubr.bf16.gmra.mrb[0].mxu0 %v2282
      %v3652 = vpop.f32.mrb[0].mxu0
      %v3653 = vadd.f32 0.0, %v3652
      %v3654 = vpop.f32.mrb[0].mxu0
      %v3655 = vpop.f32.mrb[0].mxu0
      %v3656 = vadd.f32 0.0, %v3655
      %v3657 = vpop.f32.mrb[0].mxu0
      %3658 = vmatprep.mubr.bf16.mxu0 0
      %3659 = vmatmul.mubr.bf16.gmra.mrb[0].mxu0 %v2285
      %v3660 = vpop.f32.mrb[0].mxu0
      %v3661 = vadd.f32 0.0, %v3660
      %v3662 = vpop.f32.mrb[0].mxu0
      %v3663 = vpop.f32.mrb[0].mxu0
      %v3664 = vadd.f32 0.0, %v3663
      %v3665 = vpop.f32.mrb[0].mxu0
      %3666 = vmatprep.mubr.bf16.mxu0 0
      %3667 = vmatmul.mubr.bf16.gmra.mrb[0].mxu0 %v2288
      %v3668 = vpop.f32.mrb[0].mxu0
      %v3669 = vadd.f32 0.0, %v3668
      %v3670 = vpop.f32.mrb[0].mxu0
      %v3671 = vpop.f32.mrb[0].mxu0
      %v3672 = vadd.f32 0.0, %v3671
      %v3673 = vpop.f32.mrb[0].mxu0
      %3674 = vmatprep.mubr.bf16.mxu0 0
      %3675 = vmatmul.mubr.bf16.gmra.mrb[0].mxu0 %v2291
      %v3676 = vpop.f32.mrb[0].mxu0
      %v3677 = vadd.f32 0.0, %v3676
      %v3678 = vpop.f32.mrb[0].mxu0
      %v3679 = vpop.f32.mrb[0].mxu0
      %v3680 = vadd.f32 0.0, %v3679
      %v3681 = vpop.f32.mrb[0].mxu0
      %3682 = vmatprep.mubr.bf16.mxu0 0
      %3683 = vmatmul.mubr.bf16.gmra.mrb[0].mxu0 %v2294
      %v3684 = vpop.f32.mrb[0].mxu0
      %v3685 = vadd.f32 0.0, %v3684
      %v3686 = vpop.f32.mrb[0].mxu0
      %v3687 = vpop.f32.mrb[0].mxu0
      %v3688 = vadd.f32 0.0, %v3687
      %v3689 = vpop.f32.mrb[0].mxu0
      %3690 = vmatprep.mubr.bf16.mxu0 0
      %3691 = vmatmul.mubr.bf16.gmra.mrb[0].mxu0 %v2297
      %v3692 = vpop.f32.mrb[0].mxu0
      %v3693 = vadd.f32 0.0, %v3692
      %v3694 = vpop.f32.mrb[0].mxu0
      %v3695 = vpop.f32.mrb[0].mxu0
      %v3696 = vadd.f32 0.0, %v3695
      %v3697 = vpop.f32.mrb[0].mxu0
      %3698 = vmatprep.mubr.bf16.mxu0 0
      %3699 = vmatmul.mubr.bf16.gmra.mrb[0].mxu0 %v2300
      %v3700 = vpop.f32.mrb[0].mxu0
      %v3701 = vadd.f32 0.0, %v3700
      %v3702 = vpop.f32.mrb[0].mxu0
      %v3703 = vpop.f32.mrb[0].mxu0
      %v3704 = vadd.f32 0.0, %v3703
      %v3705 = vpop.f32.mrb[0].mxu0
      %3706 = vmatprep.mubr.bf16.mxu0 0
      %3707 = vmatmul.mubr.bf16.gmra.mrb[0].mxu0 %v2303
      %v3708 = vpop.f32.mrb[0].mxu0
      %v3709 = vadd.f32 0.0, %v3708
      %v3710 = vpop.f32.mrb[0].mxu0
      %v3711 = vpop.f32.mrb[0].mxu0
      %v3712 = vadd.f32 0.0, %v3711
      %v3713 = vpop.f32.mrb[0].mxu0
      %3714 = vmatprep.mubr.bf16.mxu0 0
      %3715 = vmatmul.mubr.bf16.gmra.mrb[0].mxu0 %v2306
      %v3716 = vpop.f32.mrb[0].mxu0
      %v3717 = vadd.f32 0.0, %v3716
      %v3718 = vpop.f32.mrb[0].mxu0
      %v3719 = vpop.f32.mrb[0].mxu0
      %v3720 = vadd.f32 0.0, %v3719
      %v3721 = vpop.f32.mrb[0].mxu0
      %3722 = vmatprep.mubr.bf16.mxu0 0
      %3723 = vmatmul.mubr.bf16.gmra.mrb[0].mxu0 %v2309
      %v3724 = vpop.f32.mrb[0].mxu0
      %v3725 = vadd.f32 0.0, %v3724
      %v3726 = vpop.f32.mrb[0].mxu0
      %v3727 = vpop.f32.mrb[0].mxu0
      %v3728 = vadd.f32 0.0, %v3727
      %v3729 = vpop.f32.mrb[0].mxu0
      %3730 = vmatprep.mubr.bf16.mxu0 0
      %3731 = vmatmul.mubr.bf16.gmra.mrb[0].mxu0 %v2312
      %v3732 = vpop.f32.mrb[0].mxu0
      %v3733 = vadd.f32 0.0, %v3732
      %v3734 = vpop.f32.mrb[0].mxu0
      %v3735 = vpop.f32.mrb[0].mxu0
      %v3736 = vadd.f32 0.0, %v3735
      %v3737 = vpop.f32.mrb[0].mxu0
      %3738 = vmatprep.mubr.bf16.mxu0 0
      %3739 = vmatmul.mubr.bf16.gmra.mrb[0].mxu0 %v2315
      %v3740 = vpop.f32.mrb[0].mxu0
      %v3741 = vadd.f32 0.0, %v3740
      %v3742 = vpop.f32.mrb[0].mxu0
      %v3743 = vpop.f32.mrb[0].mxu0
      %v3744 = vadd.f32 0.0, %v3743
      %v3745 = vpop.f32.mrb[0].mxu0
      %3746 = vmatprep.mubr.bf16.mxu0 0
      %3747 = vmatmul.mubr.bf16.gmra.mrb[0].mxu0 %v2318
      %v3748 = vpop.f32.mrb[0].mxu0
      %v3749 = vadd.f32 0.0, %v3748
      %v3750 = vpop.f32.mrb[0].mxu0
      %v3751 = vpop.f32.mrb[0].mxu0
      %v3752 = vadd.f32 0.0, %v3751
      %v3753 = vpop.f32.mrb[0].mxu0
      %3754 = vmatprep.mubr.bf16.mxu0 0
      %3755 = vmatmul.mubr.bf16.gmra.mrb[0].mxu0 %v2321
      %v3756 = vpop.f32.mrb[0].mxu0
      %v3757 = vadd.f32 0.0, %v3756
      %v3758 = vpop.f32.mrb[0].mxu0
      %v3759 = vpop.f32.mrb[0].mxu0
      %v3760 = vadd.f32 0.0, %v3759
      %v3761 = vpop.f32.mrb[0].mxu0
      %3762 = vmatprep.mubr.bf16.mxu0 0
      %3763 = vmatmul.mubr.bf16.gmra.mrb[0].mxu0 %v2324
      %v3764 = vpop.f32.mrb[0].mxu0
      %v3765 = vadd.f32 0.0, %v3764
      %v3766 = vpop.f32.mrb[0].mxu0
      %v3767 = vpop.f32.mrb[0].mxu0
      %v3768 = vadd.f32 0.0, %v3767
      %v3769 = vpop.f32.mrb[0].mxu0
      %3770 = vmatprep.mubr.bf16.mxu0 0
      %3771 = vmatmul.mubr.bf16.gmra.mrb[0].mxu0 %v2327
      %v3772 = vpop.f32.mrb[0].mxu0
      %v3773 = vadd.f32 0.0, %v3772
      %v3774 = vpop.f32.mrb[0].mxu0
      %v3775 = vpop.f32.mrb[0].mxu0
      %v3776 = vadd.f32 0.0, %v3775
      %v3777 = vpop.f32.mrb[0].mxu0
      %3778 = vmatprep.mubr.bf16.mxu0 0
      %3779 = vmatmul.mubr.bf16.gmra.mrb[0].mxu0 %v2330
      %v3780 = vpop.f32.mrb[0].mxu0
      %v3781 = vadd.f32 0.0, %v3780
      %v3782 = vpop.f32.mrb[0].mxu0
      %v3783 = vpop.f32.mrb[0].mxu0
      %v3784 = vadd.f32 0.0, %v3783
      %v3785 = vpop.f32.mrb[0].mxu0
      %3786 = vmatprep.mubr.bf16.mxu0 0
      %3787 = vmatmul.mubr.bf16.gmra.mrb[0].mxu0 %v2333
      %v3788 = vpop.f32.mrb[0].mxu0
      %v3789 = vadd.f32 0.0, %v3788
      %v3790 = vpop.f32.mrb[0].mxu0
      %v3791 = vpop.f32.mrb[0].mxu0
      %v3792 = vadd.f32 0.0, %v3791
      %v3793 = vpop.f32.mrb[0].mxu0
      %3794 = vmatprep.mubr.bf16.mxu0 0
      %3795 = vmatmul.mubr.bf16.gmra.mrb[0].mxu0 %v2336
      %v3796 = vpop.f32.mrb[0].mxu0
      %v3797 = vadd.f32 0.0, %v3796
      %v3798 = vpop.f32.mrb[0].mxu0
      %v3799 = vpop.f32.mrb[0].mxu0
      %v3800 = vadd.f32 0.0, %v3799
      %v3801 = vpop.f32.mrb[0].mxu0
      %3802 = vmatprep.mubr.bf16.mxu0 0
      %3803 = vmatmul.mubr.bf16.gmra.mrb[0].mxu0 %v2339
      %v3804 = vpop.f32.mrb[0].mxu0
      %v3805 = vadd.f32 0.0, %v3804
      %v3806 = vpop.f32.mrb[0].mxu0
      %v3807 = vpop.f32.mrb[0].mxu0
      %v3808 = vadd.f32 0.0, %v3807
      %v3809 = vpop.f32.mrb[0].mxu0
      %3810 = vmatprep.mubr.bf16.mxu0 0
      %3811 = vmatmul.mubr.bf16.gmra.mrb[0].mxu0 %v2342
      %v3812 = vpop.f32.mrb[0].mxu0
      %v3813 = vadd.f32 0.0, %v3812
      %v3814 = vpop.f32.mrb[0].mxu0
      %v3815 = vpop.f32.mrb[0].mxu0
      %v3816 = vadd.f32 0.0, %v3815
      %v3817 = vpop.f32.mrb[0].mxu0
      %3818 = vmatprep.mubr.bf16.mxu0 0
      %3819 = vmatmul.mubr.bf16.gmra.mrb[0].mxu0 %v2345
      %v3820 = vpop.f32.mrb[0].mxu0
      %v3821 = vadd.f32 0.0, %v3820
      %v3822 = vpop.f32.mrb[0].mxu0
      %v3823 = vpop.f32.mrb[0].mxu0
      %v3824 = vadd.f32 0.0, %v3823
      %v3825 = vpop.f32.mrb[0].mxu0
      %3826 = vmatprep.mubr.bf16.mxu0 0
      %3827 = vmatmul.mubr.bf16.gmra.mrb[0].mxu0 %v2348
      %v3828 = vpop.f32.mrb[0].mxu0
      %v3829 = vadd.f32 0.0, %v3828
      %v3830 = vpop.f32.mrb[0].mxu0
      %v3831 = vpop.f32.mrb[0].mxu0
      %v3832 = vadd.f32 0.0, %v3831
      %v3833 = vpop.f32.mrb[0].mxu0
      %3834 = vmatprep.mubr.bf16.mxu0 0
      %3835 = vmatmul.mubr.bf16.gmra.mrb[0].mxu0 %v2351
      %v3836 = vpop.f32.mrb[0].mxu0
      %v3837 = vadd.f32 0.0, %v3836
      %v3838 = vpop.f32.mrb[0].mxu0
      %v3839 = vpop.f32.mrb[0].mxu0
      %v3840 = vadd.f32 0.0, %v3839
      %v3841 = vpop.f32.mrb[0].mxu0
      %3842 = vmatprep.mubr.bf16.mxu0 0
      %3843 = vmatmul.mubr.bf16.gmra.mrb[0].mxu0 %v2354
      %v3844 = vpop.f32.mrb[0].mxu0
      %v3845 = vadd.f32 0.0, %v3844
      %v3846 = vpop.f32.mrb[0].mxu0
      %v3847 = vpop.f32.mrb[0].mxu0
      %v3848 = vadd.f32 0.0, %v3847
      %v3849 = vpop.f32.mrb[0].mxu0
      %3850 = vmatprep.mubr.bf16.mxu0 0
      %3851 = vmatmul.mubr.bf16.gmra.mrb[0].mxu0 %v2357
      %v3852 = vpop.f32.mrb[0].mxu0
      %v3853 = vadd.f32 0.0, %v3852
      %v3854 = vpop.f32.mrb[0].mxu0
      %v3855 = vpop.f32.mrb[0].mxu0
      %v3856 = vadd.f32 0.0, %v3855
      %v3857 = vpop.f32.mrb[0].mxu0
      %3858 = vmatprep.mubr.bf16.mxu0 0
      %3859 = vmatmul.mubr.bf16.gmra.mrb[0].mxu0 %v2360
      %v3860 = vpop.f32.mrb[0].mxu0
      %v3861 = vadd.f32 0.0, %v3860
      %v3862 = vpop.f32.mrb[0].mxu0
      %v3863 = vpop.f32.mrb[0].mxu0
      %v3864 = vadd.f32 0.0, %v3863
      %v3865 = vpop.f32.mrb[0].mxu0
      %3866 = vmatprep.mubr.bf16.mxu0 0
      %3867 = vmatmul.mubr.bf16.gmra.mrb[0].mxu0 %v2363
      %v3868 = vpop.f32.mrb[0].mxu0
      %v3869 = vadd.f32 0.0, %v3868
      %v3870 = vpop.f32.mrb[0].mxu0
      %v3871 = vpop.f32.mrb[0].mxu0
      %v3872 = vadd.f32 0.0, %v3871
      %v3873 = vpop.f32.mrb[0].mxu0
      %3874 = vmatprep.mubr.bf16.mxu0 0
      %3875 = vmatmul.mubr.bf16.gmra.mrb[0].mxu0 %v2366
      %v3876 = vpop.f32.mrb[0].mxu0
      %v3877 = vadd.f32 0.0, %v3876
      %v3878 = vpop.f32.mrb[0].mxu0
      %v3879 = vpop.f32.mrb[0].mxu0
      %v3880 = vadd.f32 0.0, %v3879
      %v3881 = vpop.f32.mrb[0].mxu0
      %3882 = vmatprep.mubr.bf16.mxu0 0
      %3883 = vmatmul.mubr.bf16.gmra.mrb[0].mxu0 %v2369
      %v3884 = vpop.f32.mrb[0].mxu0
      %v3885 = vadd.f32 0.0, %v3884
      %v3886 = vpop.f32.mrb[0].mxu0
      %v3887 = vpop.f32.mrb[0].mxu0
      %v3888 = vadd.f32 0.0, %v3887
      %v3889 = vpop.f32.mrb[0].mxu0
      %3890 = vmatprep.mubr.bf16.mxu0 0
      %3891 = vmatmul.mubr.bf16.gmra.mrb[0].mxu0 %v2372
      %v3892 = vpop.f32.mrb[0].mxu0
      %v3893 = vadd.f32 0.0, %v3892
      %v3894 = vpop.f32.mrb[0].mxu0
      %v3895 = vpop.f32.mrb[0].mxu0
      %v3896 = vadd.f32 0.0, %v3895
      %v3897 = vpop.f32.mrb[0].mxu0
      %3898 = vmatprep.mubr.bf16.mxu0 0
      %3899 = vmatmul.mubr.bf16.gmra.mrb[0].mxu0 %v2375
      %v3900 = vpop.f32.mrb[0].mxu0
      %v3901 = vadd.f32 0.0, %v3900
      %v3902 = vpop.f32.mrb[0].mxu0
      %v3903 = vpop.f32.mrb[0].mxu0
      %v3904 = vadd.f32 0.0, %v3903
      %v3905 = vpop.f32.mrb[0].mxu0
      %3906 = vmatprep.mubr.bf16.mxu0 0
      %3907 = vmatmul.mubr.bf16.gmra.mrb[0].mxu0 %v2378
      %v3908 = vpop.f32.mrb[0].mxu0
      %v3909 = vadd.f32 0.0, %v3908
      %v3910 = vpop.f32.mrb[0].mxu0
      %v3911 = vpop.f32.mrb[0].mxu0
      %v3912 = vadd.f32 0.0, %v3911
      %v3913 = vpop.f32.mrb[0].mxu0
      %3914 = vmatprep.mubr.bf16.mxu0 0
      %3915 = vmatmul.mubr.bf16.gmra.mrb[0].mxu0 %v2381
      %v3916 = vpop.f32.mrb[0].mxu0
      %v3917 = vadd.f32 0.0, %v3916
      %v3918 = vpop.f32.mrb[0].mxu0
      %v3919 = vpop.f32.mrb[0].mxu0
      %v3920 = vadd.f32 0.0, %v3919
      %v3921 = vpop.f32.mrb[0].mxu0
      %3922 = vmatprep.mubr.bf16.mxu0 0
      %3923 = vmatmul.mubr.bf16.gmra.mrb[0].mxu0 %v2384
      %v3924 = vpop.f32.mrb[0].mxu0
      %v3925 = vadd.f32 0.0, %v3924
      %v3926 = vpop.f32.mrb[0].mxu0
      %v3927 = vpop.f32.mrb[0].mxu0
      %v3928 = vadd.f32 0.0, %v3927
      %v3929 = vpop.f32.mrb[0].mxu0
      %3930 = vmatprep.mubr.bf16.mxu0 0
      %3931 = vmatmul.mubr.bf16.gmra.mrb[0].mxu0 %v2387
      %v3932 = vpop.f32.mrb[0].mxu0
      %v3933 = vadd.f32 0.0, %v3932
      %v3934 = vpop.f32.mrb[0].mxu0
      %v3935 = vpop.f32.mrb[0].mxu0
      %v3936 = vadd.f32 0.0, %v3935
      %v3937 = vpop.f32.mrb[0].mxu0
      %3938 = vmatprep.mubr.bf16.mxu0 0
      %3939 = vmatmul.mubr.bf16.gmra.mrb[0].mxu0 %v2390
      %v3940 = vpop.f32.mrb[0].mxu0
      %v3941 = vadd.f32 0.0, %v3940
      %v3942 = vpop.f32.mrb[0].mxu0
      %v3943 = vpop.f32.mrb[0].mxu0
      %v3944 = vadd.f32 0.0, %v3943
      %v3945 = vpop.f32.mrb[0].mxu0
      %3946 = vmatprep.mubr.bf16.mxu0 0
      %3947 = vmatmul.mubr.bf16.gmra.mrb[0].mxu0 %v2393
      %v3948 = vpop.f32.mrb[0].mxu0
      %v3949 = vadd.f32 0.0, %v3948
      %v3950 = vpop.f32.mrb[0].mxu0
      %v3951 = vpop.f32.mrb[0].mxu0
      %v3952 = vadd.f32 0.0, %v3951
      %v3953 = vpop.f32.mrb[0].mxu0
      %3954 = vmatprep.mubr.bf16.mxu0 0
      %3955 = vmatmul.mubr.bf16.gmra.mrb[0].mxu0 %v2396
      %v3956 = vpop.f32.mrb[0].mxu0
      %v3957 = vadd.f32 0.0, %v3956
      %v3958 = vpop.f32.mrb[0].mxu0
      %v3959 = vpop.f32.mrb[0].mxu0
      %v3960 = vadd.f32 0.0, %v3959
      %v3961 = vpop.f32.mrb[0].mxu0
      %3962 = vmatprep.mubr.bf16.mxu0 0
      %3963 = vmatmul.mubr.bf16.gmra.mrb[0].mxu0 %v2399
      %v3964 = vpop.f32.mrb[0].mxu0
      %v3965 = vadd.f32 0.0, %v3964
      %v3966 = vpop.f32.mrb[0].mxu0
      %v3967 = vpop.f32.mrb[0].mxu0
      %v3968 = vadd.f32 0.0, %v3967
      %v3969 = vpop.f32.mrb[0].mxu0
      %3970 = vmatprep.mubr.bf16.mxu0 0
      %3971 = vmatmul.mubr.bf16.gmra.mrb[0].mxu0 %v2402
      %v3972 = vpop.f32.mrb[0].mxu0
      %v3973 = vadd.f32 0.0, %v3972
      %v3974 = vpop.f32.mrb[0].mxu0
      %v3975 = vpop.f32.mrb[0].mxu0
      %v3976 = vadd.f32 0.0, %v3975
      %v3977 = vpop.f32.mrb[0].mxu0
      %3978 = vmatprep.mubr.bf16.mxu0 0
      %3979 = vmatmul.mubr.bf16.gmra.mrb[0].mxu0 %v2405
      %v3980 = vpop.f32.mrb[0].mxu0
      %v3981 = vadd.f32 0.0, %v3980
      %v3982 = vpop.f32.mrb[0].mxu0
      %v3983 = vpop.f32.mrb[0].mxu0
      %v3984 = vadd.f32 0.0, %v3983
      %v3985 = vpop.f32.mrb[0].mxu0
      %3986 = vmatprep.mubr.bf16.mxu0 0
      %3987 = vmatmul.mubr.bf16.gmra.mrb[0].mxu0 %v2408
      %v3988 = vpop.f32.mrb[0].mxu0
      %v3989 = vadd.f32 0.0, %v3988
      %v3990 = vpop.f32.mrb[0].mxu0
      %v3991 = vpop.f32.mrb[0].mxu0
      %v3992 = vadd.f32 0.0, %v3991
      %v3993 = vpop.f32.mrb[0].mxu0
      %3994 = vmatprep.mubr.bf16.mxu0 0
      %3995 = vmatmul.mubr.bf16.gmra.mrb[0].mxu0 %v2411
      %v3996 = vpop.f32.mrb[0].mxu0
      %v3997 = vadd.f32 0.0, %v3996
      %v3998 = vpop.f32.mrb[0].mxu0
      %v3999 = vpop.f32.mrb[0].mxu0
      %v4000 = vadd.f32 0.0, %v3999
      %v4001 = vpop.f32.mrb[0].mxu0
      %4002 = vmatprep.mubr.bf16.mxu0 0
      %4003 = vmatmul.mubr.bf16.gmra.mrb[0].mxu0 %v2414
      %v4004 = vpop.f32.mrb[0].mxu0
      %v4005 = vadd.f32 0.0, %v4004
      %v4006 = vpop.f32.mrb[0].mxu0
      %v4007 = vpop.f32.mrb[0].mxu0
      %v4008 = vadd.f32 0.0, %v4007
      %v4009 = vpop.f32.mrb[0].mxu0
      %4010 = vmatprep.mubr.bf16.mxu0 0
      %4011 = vmatmul.mubr.bf16.gmra.mrb[0].mxu0 %v2417
      %v4012 = vpop.f32.mrb[0].mxu0
      %v4013 = vadd.f32 0.0, %v4012
      %v4014 = vpop.f32.mrb[0].mxu0
      %v4015 = vpop.f32.mrb[0].mxu0
      %v4016 = vadd.f32 0.0, %v4015
      %v4017 = vpop.f32.mrb[0].mxu0
      %4018 = vmatprep.mubr.bf16.mxu0 0
      %4019 = vmatmul.mubr.bf16.gmra.mrb[0].mxu0 %v2420
      %v4020 = vpop.f32.mrb[0].mxu0
      %v4021 = vadd.f32 0.0, %v4020
      %v4022 = vpop.f32.mrb[0].mxu0
      %v4023 = vpop.f32.mrb[0].mxu0
      %v4024 = vadd.f32 0.0, %v4023
      %v4025 = vpop.f32.mrb[0].mxu0
      %4026 = vmatprep.mubr.bf16.mxu0 0
      %4027 = vmatmul.mubr.bf16.gmra.mrb[0].mxu0 %v2423
      %v4028 = vpop.f32.mrb[0].mxu0
      %v4029 = vadd.f32 0.0, %v4028
      %v4030 = vpop.f32.mrb[0].mxu0
      %v4031 = vpop.f32.mrb[0].mxu0
      %v4032 = vadd.f32 0.0, %v4031
      %v4033 = vpop.f32.mrb[0].mxu0
      %4034 = vmatprep.mubr.bf16.mxu0 0
      %4035 = vmatmul.mubr.bf16.gmra.mrb[0].mxu0 %v2426
      %v4036 = vpop.f32.mrb[0].mxu0
      %v4037 = vadd.f32 0.0, %v4036
      %v4038 = vpop.f32.mrb[0].mxu0
      %v4039 = vpop.f32.mrb[0].mxu0
      %v4040 = vadd.f32 0.0, %v4039
      %v4041 = vpop.f32.mrb[0].mxu0
      %4042 = vmatprep.mubr.bf16.mxu0 0
      %4043 = vmatmul.mubr.bf16.gmra.mrb[0].mxu0 %v2429
      %v4044 = vpop.f32.mrb[0].mxu0
      %v4045 = vadd.f32 0.0, %v4044
      %v4046 = vpop.f32.mrb[0].mxu0
      %v4047 = vpop.f32.mrb[0].mxu0
      %v4048 = vadd.f32 0.0, %v4047
      %v4049 = vpop.f32.mrb[0].mxu0
      %4050 = vmatprep.mubr.bf16.mxu0 0
      %4051 = vmatmul.mubr.bf16.gmra.mrb[0].mxu0 %v2432
      %v4052 = vpop.f32.mrb[0].mxu0
      %v4053 = vadd.f32 0.0, %v4052
      %v4054 = vpop.f32.mrb[0].mxu0
      %v4055 = vpop.f32.mrb[0].mxu0
      %v4056 = vadd.f32 0.0, %v4055
      %v4057 = vpop.f32.mrb[0].mxu0
      %4058 = vmatprep.mubr.bf16.mxu0 0
      %4059 = vmatmul.mubr.bf16.gmra.mrb[0].mxu0 %v2435
      %v4060 = vpop.f32.mrb[0].mxu0
      %v4061 = vadd.f32 0.0, %v4060
      %v4062 = vpop.f32.mrb[0].mxu0
      %v4063 = vpop.f32.mrb[0].mxu0
      %v4064 = vadd.f32 0.0, %v4063
      %v4065 = vpop.f32.mrb[0].mxu0
      %4066 = vmatprep.mubr.bf16.mxu0 0
      %4067 = vmatmul.mubr.bf16.gmra.mrb[0].mxu0 %v2438
      %v4068 = vpop.f32.mrb[0].mxu0
      %v4069 = vadd.f32 0.0, %v4068
      %v4070 = vpop.f32.mrb[0].mxu0
      %v4071 = vpop.f32.mrb[0].mxu0
      %v4072 = vadd.f32 0.0, %v4071
      %v4073 = vpop.f32.mrb[0].mxu0
      %4074 = vmatprep.mubr.bf16.mxu0 0
      %4075 = vmatmul.mubr.bf16.gmra.mrb[0].mxu0 %v2441
      %v4076 = vpop.f32.mrb[0].mxu0
      %v4077 = vadd.f32 0.0, %v4076
      %v4078 = vpop.f32.mrb[0].mxu0
      %v4079 = vpop.f32.mrb[0].mxu0
      %v4080 = vadd.f32 0.0, %v4079
      %v4081 = vpop.f32.mrb[0].mxu0
      %4082 = vmatprep.mubr.bf16.mxu0 0
      %4083 = vmatmul.mubr.bf16.gmra.mrb[0].mxu0 %v2444
      %v4084 = vpop.f32.mrb[0].mxu0
      %v4085 = vadd.f32 0.0, %v4084
      %v4086 = vpop.f32.mrb[0].mxu0
      %v4087 = vpop.f32.mrb[0].mxu0
      %v4088 = vadd.f32 0.0, %v4087
      %v4089 = vpop.f32.mrb[0].mxu0
      %4090 = vmatprep.mubr.bf16.mxu0 0
      %4091 = vmatmul.mubr.bf16.gmra.mrb[0].mxu0 %v2447
      %v4092 = vpop.f32.mrb[0].mxu0
      %v4093 = vadd.f32 0.0, %v4092
      %v4094 = vpop.f32.mrb[0].mxu0
      %v4095 = vpop.f32.mrb[0].mxu0
      %v4096 = vadd.f32 0.0, %v4095
      %v4097 = vpop.f32.mrb[0].mxu0
      %4098 = vmatprep.mubr.bf16.mxu0 0
      %4099 = vmatmul.mubr.bf16.gmra.mrb[0].mxu0 %v2450
      %v4100 = vpop.f32.mrb[0].mxu0
      %v4101 = vadd.f32 0.0, %v4100
      %v4102 = vpop.f32.mrb[0].mxu0
      %v4103 = vpop.f32.mrb[0].mxu0
      %v4104 = vadd.f32 0.0, %v4103
      %v4105 = vpop.f32.mrb[0].mxu0
      %4106 = vmatprep.mubr.bf16.mxu0 0
      %4107 = vmatmul.mubr.bf16.gmra.mrb[0].mxu0 %v2453
      %v4108 = vpop.f32.mrb[0].mxu0
      %v4109 = vadd.f32 0.0, %v4108
      %v4110 = vpop.f32.mrb[0].mxu0
      %v4111 = vpop.f32.mrb[0].mxu0
      %v4112 = vadd.f32 0.0, %v4111
      %v4113 = vpop.f32.mrb[0].mxu0
      %4114 = vmatprep.mubr.bf16.mxu0 0
      %4115 = vmatmul.mubr.bf16.gmra.mrb[0].mxu0 %v2456
      %v4116 = vpop.f32.mrb[0].mxu0
      %v4117 = vadd.f32 0.0, %v4116
      %v4118 = vpop.f32.mrb[0].mxu0
      %v4119 = vpop.f32.mrb[0].mxu0
      %v4120 = vadd.f32 0.0, %v4119
      %v4121 = vpop.f32.mrb[0].mxu0
      %4122 = vmatprep.mubr.bf16.mxu0 0
      %4123 = vmatmul.mubr.bf16.gmra.mrb[0].mxu0 %v2459
      %v4124 = vpop.f32.mrb[0].mxu0
      %v4125 = vadd.f32 0.0, %v4124
      %v4126 = vpop.f32.mrb[0].mxu0
      %v4127 = vpop.f32.mrb[0].mxu0
      %v4128 = vadd.f32 0.0, %v4127
      %v4129 = vpop.f32.mrb[0].mxu0
      %4130 = vmatprep.mubr.bf16.mxu0 0
      %4131 = vmatmul.mubr.bf16.gmra.mrb[0].mxu0 %v2462
      %v4132 = vpop.f32.mrb[0].mxu0
      %v4133 = vadd.f32 0.0, %v4132
      %v4134 = vpop.f32.mrb[0].mxu0
      %v4135 = vpop.f32.mrb[0].mxu0
      %v4136 = vadd.f32 0.0, %v4135
      %v4137 = vpop.f32.mrb[0].mxu0
      %4138 = vmatprep.mubr.bf16.mxu0 0
      %4139 = vmatmul.mubr.bf16.gmra.mrb[0].mxu0 %v2465
      %v4140 = vpop.f32.mrb[0].mxu0
      %v4141 = vadd.f32 0.0, %v4140
      %v4142 = vpop.f32.mrb[0].mxu0
      %v4143 = vpop.f32.mrb[0].mxu0
      %v4144 = vadd.f32 0.0, %v4143
      %v4145 = vpop.f32.mrb[0].mxu0
      %4146 = vmatprep.mubr.bf16.mxu0 0
      %4147 = vmatmul.mubr.bf16.gmra.mrb[0].mxu0 %v2468
      %v4148 = vpop.f32.mrb[0].mxu0
      %v4149 = vadd.f32 0.0, %v4148
      %v4150 = vpop.f32.mrb[0].mxu0
      %v4151 = vpop.f32.mrb[0].mxu0
      %v4152 = vadd.f32 0.0, %v4151
      %v4153 = vpop.f32.mrb[0].mxu0
      %4154 = vmatprep.mubr.bf16.mxu0 0
      %4155 = vmatmul.mubr.bf16.gmra.mrb[0].mxu0 %v2471
      %v4156 = vpop.f32.mrb[0].mxu0
      %v4157 = vadd.f32 0.0, %v4156
      %v4158 = vpop.f32.mrb[0].mxu0
      %v4159 = vpop.f32.mrb[0].mxu0
      %v4160 = vadd.f32 0.0, %v4159
      %v4161 = vpop.f32.mrb[0].mxu0
      %4162 = vmatprep.mubr.bf16.mxu0 0
      %4163 = vmatmul.mubr.bf16.gmra.mrb[0].mxu0 %v2474
      %v4164 = vpop.f32.mrb[0].mxu0
      %v4165 = vadd.f32 0.0, %v4164
      %v4166 = vpop.f32.mrb[0].mxu0
      %v4167 = vpop.f32.mrb[0].mxu0
      %v4168 = vadd.f32 0.0, %v4167
      %v4169 = vpop.f32.mrb[0].mxu0
      %4170 = vmatprep.mubr.bf16.mxu0 0
      %4171 = vmatmul.mubr.bf16.gmra.mrb[0].mxu0 %v2477
      %v4172 = vpop.f32.mrb[0].mxu0
      %v4173 = vadd.f32 0.0, %v4172
      %v4174 = vpop.f32.mrb[0].mxu0
      %v4175 = vpop.f32.mrb[0].mxu0
      %v4176 = vadd.f32 0.0, %v4175
      %v4177 = vpop.f32.mrb[0].mxu0
      %4178 = vmatprep.mubr.bf16.mxu0 0
      %4179 = vmatmul.mubr.bf16.gmra.mrb[0].mxu0 %v2480
      %v4180 = vpop.f32.mrb[0].mxu0
      %v4181 = vadd.f32 0.0, %v4180
      %v4182 = vpop.f32.mrb[0].mxu0
      %v4183 = vpop.f32.mrb[0].mxu0
      %v4184 = vadd.f32 0.0, %v4183
      %v4185 = vpop.f32.mrb[0].mxu0
      %4186 = vmatprep.mubr.bf16.mxu0 0
      %4187 = vmatmul.mubr.bf16.gmra.mrb[0].mxu0 %v2483
      %v4188 = vpop.f32.mrb[0].mxu0
      %v4189 = vadd.f32 0.0, %v4188
      %v4190 = vpop.f32.mrb[0].mxu0
      %v4191 = vpop.f32.mrb[0].mxu0
      %v4192 = vadd.f32 0.0, %v4191
      %v4193 = vpop.f32.mrb[0].mxu0
      %4194 = vmatprep.mubr.bf16.mxu0 0
      %4195 = vmatmul.mubr.bf16.gmra.mrb[0].mxu0 %v2486
      %v4196 = vpop.f32.mrb[0].mxu0
      %v4197 = vadd.f32 0.0, %v4196
      %v4198 = vpop.f32.mrb[0].mxu0
      %v4199 = vpop.f32.mrb[0].mxu0
      %v4200 = vadd.f32 0.0, %v4199
      %v4201 = vpop.f32.mrb[0].mxu0
      %4202 = vmatprep.mubr.bf16.mxu0 0
      %4203 = vmatmul.mubr.bf16.gmra.mrb[0].mxu0 %v2489
      %v4204 = vpop.f32.mrb[0].mxu0
      %v4205 = vadd.f32 0.0, %v4204
      %v4206 = vpop.f32.mrb[0].mxu0
      %v4207 = vpop.f32.mrb[0].mxu0
      %v4208 = vadd.f32 0.0, %v4207
      %v4209 = vpop.f32.mrb[0].mxu0
      %4210 = vmatprep.mubr.bf16.mxu0 0
      %4211 = vmatmul.mubr.bf16.gmra.mrb[0].mxu0 %v2492
      %v4212 = vpop.f32.mrb[0].mxu0
      %v4213 = vadd.f32 0.0, %v4212
      %v4214 = vpop.f32.mrb[0].mxu0
      %v4215 = vpop.f32.mrb[0].mxu0
      %v4216 = vadd.f32 0.0, %v4215
      %v4217 = vpop.f32.mrb[0].mxu0
      %4218 = vmatprep.mubr.bf16.mxu0 0
      %4219 = vmatmul.mubr.bf16.gmra.mrb[0].mxu0 %v2495
      %v4220 = vpop.f32.mrb[0].mxu0
      %v4221 = vadd.f32 0.0, %v4220
      %v4222 = vpop.f32.mrb[0].mxu0
      %v4223 = vpop.f32.mrb[0].mxu0
      %v4224 = vadd.f32 0.0, %v4223
      %v4225 = vpop.f32.mrb[0].mxu0
      %4226 = vmatprep.mubr.bf16.mxu0 0
      %4227 = vmatmul.mubr.bf16.gmra.mrb[0].mxu0 %v2498
      %v4228 = vpop.f32.mrb[0].mxu0
      %v4229 = vadd.f32 0.0, %v4228
      %v4230 = vpop.f32.mrb[0].mxu0
      %v4231 = vpop.f32.mrb[0].mxu0
      %v4232 = vadd.f32 0.0, %v4231
      %v4233 = vpop.f32.mrb[0].mxu0
      %4234 = vmatprep.mubr.bf16.mxu0 0
      %4235 = vmatmul.mubr.bf16.gmra.mrb[0].mxu0 %v2501
      %v4236 = vpop.f32.mrb[0].mxu0
      %v4237 = vadd.f32 0.0, %v4236
      %v4238 = vpop.f32.mrb[0].mxu0
      %v4239 = vpop.f32.mrb[0].mxu0
      %v4240 = vadd.f32 0.0, %v4239
      %v4241 = vpop.f32.mrb[0].mxu0
      %4242 = vmatprep.mubr.bf16.mxu0 0
      %4243 = vmatmul.mubr.bf16.gmra.mrb[0].mxu0 %v2504
      %v4244 = vpop.f32.mrb[0].mxu0
      %v4245 = vadd.f32 0.0, %v4244
      %v4246 = vpop.f32.mrb[0].mxu0
      %v4247 = vpop.f32.mrb[0].mxu0
      %v4248 = vadd.f32 0.0, %v4247
      %v4249 = vpop.f32.mrb[0].mxu0
      %4250 = vmatprep.mubr.bf16.mxu0 0
      %4251 = vmatmul.mubr.bf16.gmra.mrb[0].mxu0 %v2507
      %v4252 = vpop.f32.mrb[0].mxu0
      %v4253 = vadd.f32 0.0, %v4252
      %v4254 = vpop.f32.mrb[0].mxu0
      %v4255 = vpop.f32.mrb[0].mxu0
      %v4256 = vadd.f32 0.0, %v4255
      %v4257 = vpop.f32.mrb[0].mxu0
      %4258 = vmatprep.mubr.bf16.mxu0 0
      %4259 = vmatmul.mubr.bf16.gmra.mrb[0].mxu0 %v2510
      %v4260 = vpop.f32.mrb[0].mxu0
      %v4261 = vadd.f32 0.0, %v4260
      %v4262 = vpop.f32.mrb[0].mxu0
      %v4263 = vpop.f32.mrb[0].mxu0
      %v4264 = vadd.f32 0.0, %v4263
      %v4265 = vpop.f32.mrb[0].mxu0
      %4266 = vmatprep.mubr.bf16.mxu0 0
      %4267 = vmatmul.mubr.bf16.gmra.mrb[0].mxu0 %v2513
      %v4268 = vpop.f32.mrb[0].mxu0
      %v4269 = vadd.f32 0.0, %v4268
      %v4270 = vpop.f32.mrb[0].mxu0
      %v4271 = vpop.f32.mrb[0].mxu0
      %v4272 = vadd.f32 0.0, %v4271
      %v4273 = vpop.f32.mrb[0].mxu0
      %4274 = vmatprep.mubr.bf16.mxu0 0
      %4275 = vmatmul.mubr.bf16.gmra.mrb[0].mxu0 %v2516
      %v4276 = vpop.f32.mrb[0].mxu0
      %v4277 = vadd.f32 0.0, %v4276
      %v4278 = vpop.f32.mrb[0].mxu0
      %v4279 = vpop.f32.mrb[0].mxu0
      %v4280 = vadd.f32 0.0, %v4279
      %v4281 = vpop.f32.mrb[0].mxu0
      %4282 = vmatprep.mubr.bf16.mxu0 0
      %4283 = vmatmul.mubr.bf16.gmra.mrb[0].mxu0 %v2519
      %v4284 = vpop.f32.mrb[0].mxu0
      %v4285 = vadd.f32 0.0, %v4284
      %v4286 = vpop.f32.mrb[0].mxu0
      %v4287 = vpop.f32.mrb[0].mxu0
      %v4288 = vadd.f32 0.0, %v4287
      %v4289 = vpop.f32.mrb[0].mxu0
      %4290 = vmatprep.mubr.bf16.mxu0 0
      %4291 = vmatmul.mubr.bf16.gmra.mrb[0].mxu0 %v2522
      %v4292 = vpop.f32.mrb[0].mxu0
      %v4293 = vadd.f32 0.0, %v4292
      %v4294 = vpop.f32.mrb[0].mxu0
      %v4295 = vpop.f32.mrb[0].mxu0
      %v4296 = vadd.f32 0.0, %v4295
      %v4297 = vpop.f32.mrb[0].mxu0
      %4298 = vmatprep.mubr.bf16.mxu0 0
      %4299 = vmatmul.mubr.bf16.gmra.mrb[0].mxu0 %v2525
      %v4300 = vpop.f32.mrb[0].mxu0
      %v4301 = vadd.f32 0.0, %v4300
      %v4302 = vpop.f32.mrb[0].mxu0
      %v4303 = vpop.f32.mrb[0].mxu0
      %v4304 = vadd.f32 0.0, %v4303
      %v4305 = vpop.f32.mrb[0].mxu0
      %4306 = vmatprep.mubr.bf16.mxu0 0
      %4307 = vmatmul.mubr.bf16.gmra.mrb[0].mxu0 %v2528
      %v4308 = vpop.f32.mrb[0].mxu0
      %v4309 = vadd.f32 0.0, %v4308
      %v4310 = vpop.f32.mrb[0].mxu0
      %v4311 = vpop.f32.mrb[0].mxu0
      %v4312 = vadd.f32 0.0, %v4311
      %v4313 = vpop.f32.mrb[0].mxu0
      %4314 = vmatprep.mubr.bf16.mxu0 0
      %4315 = vmatmul.mubr.bf16.gmra.mrb[0].mxu0 %v2531
      %v4316 = vpop.f32.mrb[0].mxu0
      %v4317 = vadd.f32 0.0, %v4316
      %v4318 = vpop.f32.mrb[0].mxu0
      %v4319 = vpop.f32.mrb[0].mxu0
      %v4320 = vadd.f32 0.0, %v4319
      %v4321 = vpop.f32.mrb[0].mxu0
      %4322 = vmatprep.mubr.bf16.mxu0 0
      %4323 = vmatmul.mubr.bf16.gmra.mrb[0].mxu0 %v2534
      %v4324 = vpop.f32.mrb[0].mxu0
      %v4325 = vadd.f32 0.0, %v4324
      %v4326 = vpop.f32.mrb[0].mxu0
      %v4327 = vpop.f32.mrb[0].mxu0
      %v4328 = vadd.f32 0.0, %v4327
      %v4329 = vpop.f32.mrb[0].mxu0
      %4330 = vmatprep.mubr.bf16.mxu0 0
      %4331 = vmatmul.mubr.bf16.gmra.mrb[0].mxu0 %v2537
      %v4332 = vpop.f32.mrb[0].mxu0
      %v4333 = vadd.f32 0.0, %v4332
      %v4334 = vpop.f32.mrb[0].mxu0
      %v4335 = vpop.f32.mrb[0].mxu0
      %v4336 = vadd.f32 0.0, %v4335
      %v4337 = vpop.f32.mrb[0].mxu0
      %4338 = vmatprep.mubr.bf16.mxu0 0
      %4339 = vmatmul.mubr.bf16.gmra.mrb[0].mxu0 %v2540
      %v4340 = vpop.f32.mrb[0].mxu0
      %v4341 = vadd.f32 0.0, %v4340
      %v4342 = vpop.f32.mrb[0].mxu0
      %v4343 = vpop.f32.mrb[0].mxu0
      %v4344 = vadd.f32 0.0, %v4343
      %v4345 = vpop.f32.mrb[0].mxu0
      %4346 = vmatprep.mubr.bf16.mxu0 0
      %4347 = vmatmul.mubr.bf16.gmra.mrb[0].mxu0 %v2543
      %v4348 = vpop.f32.mrb[0].mxu0
      %v4349 = vadd.f32 0.0, %v4348
      %v4350 = vpop.f32.mrb[0].mxu0
      %v4351 = vpop.f32.mrb[0].mxu0
      %v4352 = vadd.f32 0.0, %v4351
      %v4353 = vpop.f32.mrb[0].mxu0
      %4354 = vmatprep.mubr.bf16.mxu0 0
      %4355 = vmatmul.mubr.bf16.gmra.mrb[0].mxu0 %v2546
      %v4356 = vpop.f32.mrb[0].mxu0
      %v4357 = vadd.f32 0.0, %v4356
      %v4358 = vpop.f32.mrb[0].mxu0
      %v4359 = vpop.f32.mrb[0].mxu0
      %v4360 = vadd.f32 0.0, %v4359
      %v4361 = vpop.f32.mrb[0].mxu0
      %4362 = vmatprep.mubr.bf16.mxu0 0
      %4363 = vmatmul.mubr.bf16.gmra.mrb[0].mxu0 %v2549
      %v4364 = vpop.f32.mrb[0].mxu0
      %v4365 = vadd.f32 0.0, %v4364
      %v4366 = vpop.f32.mrb[0].mxu0
      %v4367 = vpop.f32.mrb[0].mxu0
      %v4368 = vadd.f32 0.0, %v4367
      %v4369 = vpop.f32.mrb[0].mxu0
      %4370 = vmatprep.mubr.bf16.mxu0 0
      %4371 = vmatmul.mubr.bf16.gmra.mrb[0].mxu0 %v2552
      %v4372 = vpop.f32.mrb[0].mxu0
      %v4373 = vadd.f32 0.0, %v4372
      %v4374 = vpop.f32.mrb[0].mxu0
      %v4375 = vpop.f32.mrb[0].mxu0
      %v4376 = vadd.f32 0.0, %v4375
      %v4377 = vpop.f32.mrb[0].mxu0
      %4378 = vmatprep.mubr.bf16.mxu0 0
      %4379 = vmatmul.mubr.bf16.gmra.mrb[0].mxu0 %v2555
      %v4380 = vpop.f32.mrb[0].mxu0
      %v4381 = vadd.f32 0.0, %v4380
      %v4382 = vpop.f32.mrb[0].mxu0
      %v4383 = vpop.f32.mrb[0].mxu0
      %v4384 = vadd.f32 0.0, %v4383
      %v4385 = vpop.f32.mrb[0].mxu0
      %4386 = vmatprep.mubr.bf16.mxu0 0
      %4387 = vmatmul.mubr.bf16.gmra.mrb[0].mxu0 %v2558
      %v4388 = vpop.f32.mrb[0].mxu0
      %v4389 = vadd.f32 0.0, %v4388
      %v4390 = vpop.f32.mrb[0].mxu0
      %v4391 = vpop.f32.mrb[0].mxu0
      %v4392 = vadd.f32 0.0, %v4391
      %v4393 = vpop.f32.mrb[0].mxu0
      %4394 = vmatprep.mubr.bf16.mxu0 0
      %4395 = vmatmul.mubr.bf16.gmra.mrb[0].mxu0 %v2561
      %v4396 = vpop.f32.mrb[0].mxu0
      %v4397 = vadd.f32 0.0, %v4396
      %v4398 = vpop.f32.mrb[0].mxu0
      %v4399 = vpop.f32.mrb[0].mxu0
      %v4400 = vadd.f32 0.0, %v4399
      %v4401 = vpop.f32.mrb[0].mxu0
      %4402 = vmatprep.mubr.bf16.mxu0 0
      %4403 = vmatmul.mubr.bf16.gmra.mrb[0].mxu0 %v2564
      %v4404 = vpop.f32.mrb[0].mxu0
      %v4405 = vadd.f32 0.0, %v4404
      %v4406 = vpop.f32.mrb[0].mxu0
      %v4407 = vpop.f32.mrb[0].mxu0
      %v4408 = vadd.f32 0.0, %v4407
      %v4409 = vpop.f32.mrb[0].mxu0
      %4410 = vmatprep.mubr.bf16.mxu0 0
      %4411 = vmatmul.mubr.bf16.gmra.mrb[0].mxu0 %v2567
      %v4412 = vpop.f32.mrb[0].mxu0
      %v4413 = vadd.f32 0.0, %v4412
      %v4414 = vpop.f32.mrb[0].mxu0
      %v4415 = vpop.f32.mrb[0].mxu0
      %v4416 = vadd.f32 0.0, %v4415
      %v4417 = vpop.f32.mrb[0].mxu0
      %4418 = vmatprep.mubr.bf16.mxu0 0
      %4419 = vmatmul.mubr.bf16.gmra.mrb[0].mxu0 %v2570
      %v4420 = vpop.f32.mrb[0].mxu0
      %v4421 = vadd.f32 0.0, %v4420
      %v4422 = vpop.f32.mrb[0].mxu0
      %v4423 = vpop.f32.mrb[0].mxu0
      %v4424 = vadd.f32 0.0, %v4423
      %v4425 = vpop.f32.mrb[0].mxu0
      %4426 = vmatprep.mubr.bf16.mxu0 0
      %4427 = vmatmul.mubr.bf16.gmra.mrb[0].mxu0 %v2573
      %v4428 = vpop.f32.mrb[0].mxu0
      %v4429 = vadd.f32 0.0, %v4428
      %v4430 = vpop.f32.mrb[0].mxu0
      %v4431 = vpop.f32.mrb[0].mxu0
      %v4432 = vadd.f32 0.0, %v4431
      %v4433 = vpop.f32.mrb[0].mxu0
      %4434 = vmatprep.mubr.bf16.mxu0 0
      %4435 = vmatmul.mubr.bf16.gmra.mrb[0].mxu0 %v2576
      %v4436 = vpop.f32.mrb[0].mxu0
      %v4437 = vadd.f32 0.0, %v4436
      %v4438 = vpop.f32.mrb[0].mxu0
      %v4439 = vpop.f32.mrb[0].mxu0
      %v4440 = vadd.f32 0.0, %v4439
      %v4441 = vpop.f32.mrb[0].mxu0
      %4442 = vmatprep.mubr.bf16.mxu0 0
      %4443 = vmatmul.mubr.bf16.gmra.mrb[0].mxu0 %v2579
      %v4444 = vpop.f32.mrb[0].mxu0
      %v4445 = vadd.f32 0.0, %v4444
      %v4446 = vpop.f32.mrb[0].mxu0
      %v4447 = vpop.f32.mrb[0].mxu0
      %v4448 = vadd.f32 0.0, %v4447
      %v4449 = vpop.f32.mrb[0].mxu0
      %4450 = vmatprep.mubr.bf16.mxu0 0
      %4451 = vmatmul.mubr.bf16.gmra.mrb[0].mxu0 %v2582
      %v4452 = vpop.f32.mrb[0].mxu0
      %v4453 = vadd.f32 0.0, %v4452
      %v4454 = vpop.f32.mrb[0].mxu0
      %v4455 = vpop.f32.mrb[0].mxu0
      %v4456 = vadd.f32 0.0, %v4455
      %v4457 = vpop.f32.mrb[0].mxu0
      %4458 = vmatprep.mubr.bf16.mxu0 0
      %4459 = vmatmul.mubr.bf16.gmra.mrb[0].mxu0 %v2585
      %v4460 = vpop.f32.mrb[0].mxu0
      %v4461 = vadd.f32 0.0, %v4460
      %v4462 = vpop.f32.mrb[0].mxu0
      %v4463 = vpop.f32.mrb[0].mxu0
      %v4464 = vadd.f32 0.0, %v4463
      %v4465 = vpop.f32.mrb[0].mxu0
      %4466 = vmatprep.mubr.bf16.mxu0 0
      %4467 = vmatmul.mubr.bf16.gmra.mrb[0].mxu0 %v2588
      %v4468 = vpop.f32.mrb[0].mxu0
      %v4469 = vadd.f32 0.0, %v4468
      %v4470 = vpop.f32.mrb[0].mxu0
      %v4471 = vpop.f32.mrb[0].mxu0
      %v4472 = vadd.f32 0.0, %v4471
      %v4473 = vpop.f32.mrb[0].mxu0
      %4474 = vmatprep.mubr.bf16.mxu0 0
      %4475 = vmatmul.mubr.bf16.gmra.mrb[0].mxu0 %v2591
      %v4476 = vpop.f32.mrb[0].mxu0
      %v4477 = vadd.f32 0.0, %v4476
      %v4478 = vpop.f32.mrb[0].mxu0
      %v4479 = vpop.f32.mrb[0].mxu0
      %v4480 = vadd.f32 0.0, %v4479
      %v4481 = vpop.f32.mrb[0].mxu0
      %4482 = vmatprep.mubr.bf16.mxu0 0
      %4483 = vmatmul.mubr.bf16.gmra.mrb[0].mxu0 %v2594
      %v4484 = vpop.f32.mrb[0].mxu0
      %v4485 = vadd.f32 0.0, %v4484
      %v4486 = vpop.f32.mrb[0].mxu0
      %v4487 = vpop.f32.mrb[0].mxu0
      %v4488 = vadd.f32 0.0, %v4487
      %v4489 = vpop.f32.mrb[0].mxu0
      %4490 = vmatprep.mubr.bf16.mxu0 0
      %4491 = vmatmul.mubr.bf16.gmra.mrb[0].mxu0 %v2597
      %v4492 = vpop.f32.mrb[0].mxu0
      %v4493 = vadd.f32 0.0, %v4492
      %v4494 = vpop.f32.mrb[0].mxu0
      %v4495 = vpop.f32.mrb[0].mxu0
      %v4496 = vadd.f32 0.0, %v4495
      %v4497 = vpop.f32.mrb[0].mxu0
      %4498 = vmatprep.mubr.bf16.mxu0 0
      %4499 = vmatmul.mubr.bf16.gmra.mrb[0].mxu0 %v2600
      %v4500 = vpop.f32.mrb[0].mxu0
      %v4501 = vadd.f32 0.0, %v4500
      %v4502 = vpop.f32.mrb[0].mxu0
      %v4503 = vpop.f32.mrb[0].mxu0
      %v4504 = vadd.f32 0.0, %v4503
      %v4505 = vpop.f32.mrb[0].mxu0
      %4506 = vmatprep.mubr.bf16.mxu0 0
      %4507 = vmatmul.mubr.bf16.gmra.mrb[0].mxu0 %v2603
      %v4508 = vpop.f32.mrb[0].mxu0
      %v4509 = vadd.f32 0.0, %v4508
      %v4510 = vpop.f32.mrb[0].mxu0
      %v4511 = vpop.f32.mrb[0].mxu0
      %v4512 = vadd.f32 0.0, %v4511
      %v4513 = vpop.f32.mrb[0].mxu0
      %4514 = vmatprep.mubr.bf16.mxu0 0
      %4515 = vmatmul.mubr.bf16.gmra.mrb[0].mxu0 %v2606
      %v4516 = vpop.f32.mrb[0].mxu0
      %v4517 = vadd.f32 0.0, %v4516
      %v4518 = vpop.f32.mrb[0].mxu0
      %v4519 = vpop.f32.mrb[0].mxu0
      %v4520 = vadd.f32 0.0, %v4519
      %v4521 = vpop.f32.mrb[0].mxu0
      %4522 = vmatprep.mubr.bf16.mxu0 0
      %4523 = vmatmul.mubr.bf16.gmra.mrb[0].mxu0 %v2609
      %v4524 = vpop.f32.mrb[0].mxu0
      %v4525 = vadd.f32 0.0, %v4524
      %v4526 = vpop.f32.mrb[0].mxu0
      %v4527 = vpop.f32.mrb[0].mxu0
      %v4528 = vadd.f32 0.0, %v4527
      %v4529 = vpop.f32.mrb[0].mxu0
      %4530 = vmatprep.mubr.bf16.mxu0 0
      %4531 = vmatmul.mubr.bf16.gmra.mrb[0].mxu0 %v2612
      %v4532 = vpop.f32.mrb[0].mxu0
      %v4533 = vadd.f32 0.0, %v4532
      %v4534 = vpop.f32.mrb[0].mxu0
      %v4535 = vpop.f32.mrb[0].mxu0
      %v4536 = vadd.f32 0.0, %v4535
      %v4537 = vpop.f32.mrb[0].mxu0
      %4538 = vmatprep.mubr.bf16.mxu0 0
      %4539 = vmatmul.mubr.bf16.gmra.mrb[0].mxu0 %v2615
      %v4540 = vpop.f32.mrb[0].mxu0
      %v4541 = vadd.f32 0.0, %v4540
      %v4542 = vpop.f32.mrb[0].mxu0
      %v4543 = vpop.f32.mrb[0].mxu0
      %v4544 = vadd.f32 0.0, %v4543
      %v4545 = vpop.f32.mrb[0].mxu0
      %4546 = vmatprep.mubr.bf16.mxu0 0
      %4547 = vmatmul.mubr.bf16.gmra.mrb[0].mxu0 %v2618
      %v4548 = vpop.f32.mrb[0].mxu0
      %v4549 = vadd.f32 0.0, %v4548
      %v4550 = vpop.f32.mrb[0].mxu0
      %v4551 = vpop.f32.mrb[0].mxu0
      %v4552 = vadd.f32 0.0, %v4551
      %v4553 = vpop.f32.mrb[0].mxu0
      %4554 = vmatprep.mubr.bf16.mxu0 0
      %4555 = vmatmul.mubr.bf16.gmra.mrb[0].mxu0 %v2621
      %v4556 = vpop.f32.mrb[0].mxu0
      %v4557 = vadd.f32 0.0, %v4556
      %v4558 = vpop.f32.mrb[0].mxu0
      %v4559 = vpop.f32.mrb[0].mxu0
      %v4560 = vadd.f32 0.0, %v4559
      %v4561 = vpop.f32.mrb[0].mxu0
      %4562 = vmatprep.mubr.bf16.mxu0 0
      %4563 = vmatmul.mubr.bf16.gmra.mrb[0].mxu0 %v2624
      %v4564 = vpop.f32.mrb[0].mxu0
      %v4565 = vadd.f32 0.0, %v4564
      %v4566 = vpop.f32.mrb[0].mxu0
      %v4567 = vpop.f32.mrb[0].mxu0
      %v4568 = vadd.f32 0.0, %v4567
      %v4569 = vpop.f32.mrb[0].mxu0
      %4570 = vmatprep.mubr.bf16.mxu0 0
      %4571 = vmatmul.mubr.bf16.gmra.mrb[0].mxu0 %v2627
      %v4572 = vpop.f32.mrb[0].mxu0
      %v4573 = vadd.f32 0.0, %v4572
      %v4574 = vpop.f32.mrb[0].mxu0
      %v4575 = vpop.f32.mrb[0].mxu0
      %v4576 = vadd.f32 0.0, %v4575
      %v4577 = vpop.f32.mrb[0].mxu0
      %4578 = vmatprep.mubr.bf16.mxu0 0
      %4579 = vmatmul.mubr.bf16.gmra.mrb[0].mxu0 %v2630
      %v4580 = vpop.f32.mrb[0].mxu0
      %v4581 = vadd.f32 0.0, %v4580
      %v4582 = vpop.f32.mrb[0].mxu0
      %v4583 = vpop.f32.mrb[0].mxu0
      %v4584 = vadd.f32 0.0, %v4583
      %v4585 = vpop.f32.mrb[0].mxu0
      %4586 = vmatprep.mubr.bf16.mxu0 0
      %4587 = vmatmul.mubr.bf16.gmra.mrb[0].mxu0 %v2633
      %v4588 = vpop.f32.mrb[0].mxu0
      %v4589 = vadd.f32 0.0, %v4588
      %v4590 = vpop.f32.mrb[0].mxu0
      %v4591 = vpop.f32.mrb[0].mxu0
      %v4592 = vadd.f32 0.0, %v4591
      %v4593 = vpop.f32.mrb[0].mxu0
      %4594 = vmatprep.mubr.bf16.mxu0 0
      %4595 = vmatmul.mubr.bf16.gmra.mrb[0].mxu0 %v2636
      %v4596 = vpop.f32.mrb[0].mxu0
      %v4597 = vadd.f32 0.0, %v4596
      %v4598 = vpop.f32.mrb[0].mxu0
      %v4599 = vpop.f32.mrb[0].mxu0
      %v4600 = vadd.f32 0.0, %v4599
      %v4601 = vpop.f32.mrb[0].mxu0
      %4602 = vmatprep.mubr.bf16.mxu0 0
      %4603 = vmatmul.mubr.bf16.gmra.mrb[0].mxu0 %v2639
      %v4604 = vpop.f32.mrb[0].mxu0
      %v4605 = vadd.f32 0.0, %v4604
      %v4606 = vpop.f32.mrb[0].mxu0
      %v4607 = vpop.f32.mrb[0].mxu0
      %v4608 = vadd.f32 0.0, %v4607
      %v4609 = vpop.f32.mrb[0].mxu0
      %4610 = vmatprep.mubr.bf16.mxu0 0
      %4611 = vmatmul.mubr.bf16.gmra.mrb[0].mxu0 %v2642
      %v4612 = vpop.f32.mrb[0].mxu0
      %v4613 = vadd.f32 0.0, %v4612
      %v4614 = vpop.f32.mrb[0].mxu0
      %v4615 = vpop.f32.mrb[0].mxu0
      %v4616 = vadd.f32 0.0, %v4615
      %v4617 = vpop.f32.mrb[0].mxu0
      %4618 = vmatprep.mubr.bf16.mxu0 0
      %4619 = vmatmul.mubr.bf16.gmra.mrb[0].mxu0 %v2645
      %v4620 = vpop.f32.mrb[0].mxu0
      %v4621 = vadd.f32 0.0, %v4620
      %v4622 = vpop.f32.mrb[0].mxu0
      %v4623 = vpop.f32.mrb[0].mxu0
      %v4624 = vadd.f32 0.0, %v4623
      %v4625 = vpop.f32.mrb[0].mxu0
      %4626 = vmatprep.mubr.bf16.mxu0 0
      %4627 = vmatmul.mubr.bf16.gmra.mrb[0].mxu0 %v2648
      %v4628 = vpop.f32.mrb[0].mxu0
      %v4629 = vadd.f32 0.0, %v4628
      %v4630 = vpop.f32.mrb[0].mxu0
      %v4631 = vpop.f32.mrb[0].mxu0
      %v4632 = vadd.f32 0.0, %v4631
      %v4633 = vpop.f32.mrb[0].mxu0
      %4634 = vmatprep.mubr.bf16.mxu0 0
      %4635 = vmatmul.mubr.bf16.gmra.mrb[0].mxu0 %v2651
      %v4636 = vpop.f32.mrb[0].mxu0
      %v4637 = vadd.f32 0.0, %v4636
      %v4638 = vpop.f32.mrb[0].mxu0
      %v4639 = vpop.f32.mrb[0].mxu0
      %v4640 = vadd.f32 0.0, %v4639
      %v4641 = vpop.f32.mrb[0].mxu0
      %4642 = vmatprep.mubr.bf16.mxu0 0
      %4643 = vmatmul.mubr.bf16.gmra.mrb[0].mxu0 %v2654
      %v4644 = vpop.f32.mrb[0].mxu0
      %v4645 = vadd.f32 0.0, %v4644
      %v4646 = vpop.f32.mrb[0].mxu0
      %v4647 = vpop.f32.mrb[0].mxu0
      %v4648 = vadd.f32 0.0, %v4647
      %v4649 = vpop.f32.mrb[0].mxu0
      %4650 = vmatprep.mubr.bf16.mxu0 0
      %4651 = vmatmul.mubr.bf16.gmra.mrb[0].mxu0 %v2657
      %v4652 = vpop.f32.mrb[0].mxu0
      %v4653 = vadd.f32 0.0, %v4652
      %v4654 = vpop.f32.mrb[0].mxu0
      %v4655 = vpop.f32.mrb[0].mxu0
      %v4656 = vadd.f32 0.0, %v4655
      %v4657 = vpop.f32.mrb[0].mxu0
      %4658 = vmatprep.mubr.bf16.mxu0 0
      %4659 = vmatmul.mubr.bf16.gmra.mrb[0].mxu0 %v2660
      %v4660 = vpop.f32.mrb[0].mxu0
      %v4661 = vadd.f32 0.0, %v4660
      %v4662 = vpop.f32.mrb[0].mxu0
      %v4663 = vpop.f32.mrb[0].mxu0
      %v4664 = vadd.f32 0.0, %v4663
      %v4665 = vpop.f32.mrb[0].mxu0
      %4666 = vmatprep.mubr.bf16.mxu0 0
      %4667 = vmatmul.mubr.bf16.gmra.mrb[0].mxu0 %v2663
      %v4668 = vpop.f32.mrb[0].mxu0
      %v4669 = vadd.f32 0.0, %v4668
      %v4670 = vpop.f32.mrb[0].mxu0
      %v4671 = vpop.f32.mrb[0].mxu0
      %v4672 = vadd.f32 0.0, %v4671
      %v4673 = vpop.f32.mrb[0].mxu0
      %4674 = vmatprep.mubr.bf16.mxu0 0
      %4675 = vmatmul.mubr.bf16.gmra.mrb[0].mxu0 %v2666
      %v4676 = vpop.f32.mrb[0].mxu0
      %v4677 = vadd.f32 0.0, %v4676
      %v4678 = vpop.f32.mrb[0].mxu0
      %v4679 = vpop.f32.mrb[0].mxu0
      %v4680 = vadd.f32 0.0, %v4679
      %v4681 = vpop.f32.mrb[0].mxu0
      %4682 = vmatprep.mubr.bf16.mxu0 0
      %4683 = vmatmul.mubr.bf16.gmra.mrb[0].mxu0 %v2669
      %v4684 = vpop.f32.mrb[0].mxu0
      %v4685 = vadd.f32 0.0, %v4684
      %v4686 = vpop.f32.mrb[0].mxu0
      %v4687 = vpop.f32.mrb[0].mxu0
      %v4688 = vadd.f32 0.0, %v4687
      %v4689 = vpop.f32.mrb[0].mxu0
      %4690 = vmatprep.mubr.bf16.mxu0 0
      %4691 = vmatmul.mubr.bf16.gmra.mrb[0].mxu0 %v2672
      %v4692 = vpop.f32.mrb[0].mxu0
      %v4693 = vadd.f32 0.0, %v4692
      %v4694 = vpop.f32.mrb[0].mxu0
      %v4695 = vpop.f32.mrb[0].mxu0
      %v4696 = vadd.f32 0.0, %v4695
      %v4697 = vpop.f32.mrb[0].mxu0
      %4698 = vmatprep.mubr.bf16.mxu0 0
      %4699 = vmatmul.mubr.bf16.gmra.mrb[0].mxu0 %v2675
      %v4700 = vpop.f32.mrb[0].mxu0
      %v4701 = vadd.f32 0.0, %v4700
      %v4702 = vpop.f32.mrb[0].mxu0
      %v4703 = vpop.f32.mrb[0].mxu0
      %v4704 = vadd.f32 0.0, %v4703
      %v4705 = vpop.f32.mrb[0].mxu0
      %4706 = vmatprep.mubr.bf16.mxu0 0
      %4707 = vmatmul.mubr.bf16.gmra.mrb[0].mxu0 %v2678
      %v4708 = vpop.f32.mrb[0].mxu0
      %v4709 = vadd.f32 0.0, %v4708
      %v4710 = vpop.f32.mrb[0].mxu0
      %v4711 = vpop.f32.mrb[0].mxu0
      %v4712 = vadd.f32 0.0, %v4711
      %v4713 = vpop.f32.mrb[0].mxu0
      %4714 = vmatprep.mubr.bf16.mxu0 0
      %4715 = vmatmul.mubr.bf16.gmra.mrb[0].mxu0 %v2681
      %v4716 = vpop.f32.mrb[0].mxu0
      %v4717 = vadd.f32 0.0, %v4716
      %v4718 = vpop.f32.mrb[0].mxu0
      %v4719 = vpop.f32.mrb[0].mxu0
      %v4720 = vadd.f32 0.0, %v4719
      %v4721 = vpop.f32.mrb[0].mxu0
      %4722 = vmatprep.mubr.bf16.mxu0 0
      %4723 = vmatmul.mubr.bf16.gmra.mrb[0].mxu0 %v2684
      %v4724 = vpop.f32.mrb[0].mxu0
      %v4725 = vadd.f32 0.0, %v4724
      %v4726 = vpop.f32.mrb[0].mxu0
      %v4727 = vpop.f32.mrb[0].mxu0
      %v4728 = vadd.f32 0.0, %v4727
      %v4729 = vpop.f32.mrb[0].mxu0
      %4730 = vmatprep.mubr.bf16.mxu0 0
      %4731 = vmatmul.mubr.bf16.gmra.mrb[0].mxu0 %v2687
      %v4732 = vpop.f32.mrb[0].mxu0
      %v4733 = vadd.f32 0.0, %v4732
      %v4734 = vpop.f32.mrb[0].mxu0
      %v4735 = vpop.f32.mrb[0].mxu0
      %v4736 = vadd.f32 0.0, %v4735
      %v4737 = vpop.f32.mrb[0].mxu0
      %4738 = vmatprep.mubr.bf16.mxu0 0
      %4739 = vmatmul.mubr.bf16.gmra.mrb[0].mxu0 %v2690
      %v4740 = vpop.f32.mrb[0].mxu0
      %v4741 = vadd.f32 0.0, %v4740
      %v4742 = vpop.f32.mrb[0].mxu0
      %v4743 = vpop.f32.mrb[0].mxu0
      %v4744 = vadd.f32 0.0, %v4743
      %v4745 = vpop.f32.mrb[0].mxu0
      %4746 = vmatprep.mubr.bf16.mxu0 0
      %4747 = vmatmul.mubr.bf16.gmra.mrb[0].mxu0 %v2693
      %v4748 = vpop.f32.mrb[0].mxu0
      %v4749 = vadd.f32 0.0, %v4748
      %v4750 = vpop.f32.mrb[0].mxu0
      %v4751 = vpop.f32.mrb[0].mxu0
      %v4752 = vadd.f32 0.0, %v4751
      %v4753 = vpop.f32.mrb[0].mxu0
      %4754 = vmatprep.mubr.bf16.mxu0 0
      %4755 = vmatmul.mubr.bf16.gmra.mrb[0].mxu0 %v2696
      %v4756 = vpop.f32.mrb[0].mxu0
      %v4757 = vadd.f32 0.0, %v4756
      %v4758 = vpop.f32.mrb[0].mxu0
      %v4759 = vpop.f32.mrb[0].mxu0
      %v4760 = vadd.f32 0.0, %v4759
      %v4761 = vpop.f32.mrb[0].mxu0
      %4762 = vmatprep.mubr.bf16.mxu0 0
      %4763 = vmatmul.mubr.bf16.gmra.mrb[0].mxu0 %v2699
      %v4764 = vpop.f32.mrb[0].mxu0
      %v4765 = vadd.f32 0.0, %v4764
      %v4766 = vpop.f32.mrb[0].mxu0
      %v4767 = vpop.f32.mrb[0].mxu0
      %v4768 = vadd.f32 0.0, %v4767
      %v4769 = vpop.f32.mrb[0].mxu0
      %4770 = vmatprep.mubr.bf16.mxu0 0
      %4771 = vmatmul.mubr.bf16.gmra.mrb[0].mxu0 %v2702
      %v4772 = vpop.f32.mrb[0].mxu0
      %v4773 = vadd.f32 0.0, %v4772
      %v4774 = vpop.f32.mrb[0].mxu0
      %v4775 = vpop.f32.mrb[0].mxu0
      %v4776 = vadd.f32 0.0, %v4775
      %v4777 = vpop.f32.mrb[0].mxu0
      %4778 = vmatprep.mubr.bf16.mxu0 0
      %4779 = vmatmul.mubr.bf16.gmra.mrb[0].mxu0 %v2705
      %v4780 = vpop.f32.mrb[0].mxu0
      %v4781 = vadd.f32 0.0, %v4780
      %v4782 = vpop.f32.mrb[0].mxu0
      %v4783 = vpop.f32.mrb[0].mxu0
      %v4784 = vadd.f32 0.0, %v4783
      %v4785 = vpop.f32.mrb[0].mxu0
      %4786 = vmatprep.mubr.bf16.mxu0 0
      %4787 = vmatmul.mubr.bf16.gmra.mrb[0].mxu0 %v2708
      %v4788 = vpop.f32.mrb[0].mxu0
      %v4789 = vadd.f32 0.0, %v4788
      %v4790 = vpop.f32.mrb[0].mxu0
      %v4791 = vpop.f32.mrb[0].mxu0
      %v4792 = vadd.f32 0.0, %v4791
      %v4793 = vpop.f32.mrb[0].mxu0
      %4794 = vdwg.mxu0
      %vm4795 = vcmask 392192
      %4796 = vst.msk [vmem:[%s145] sm:$0xff] %vm4795, %v2749
      %4797 = vst.msk [vmem:[%s145 + $0x8] sm:$0xff] %vm4795, %v2752
      %4798 = vst.msk [vmem:[%s145 + $0x10] sm:$0xff] %vm4795, %v2757
      %4799 = vst.msk [vmem:[%s145 + $0x18] sm:$0xff] %vm4795, %v2760
      %4800 = vst.msk [vmem:[%s145 + $0x20] sm:$0xff] %vm4795, %v2765
      %4801 = vst.msk [vmem:[%s145 + $0x28] sm:$0xff] %vm4795, %v2768
      %4802 = vst.msk [vmem:[%s145 + $0x30] sm:$0xff] %vm4795, %v2773
      %4803 = vst.msk [vmem:[%s145 + $0x38] sm:$0xff] %vm4795, %v2776
      %4804 = vst.msk [vmem:[%s145 + $0x40] sm:$0xff] %vm4795, %v2781
      %4805 = vst.msk [vmem:[%s145 + $0x48] sm:$0xff] %vm4795, %v2784
      %4806 = vst.msk [vmem:[%s145 + $0x50] sm:$0xff] %vm4795, %v2789
      %4807 = vst.msk [vmem:[%s145 + $0x58] sm:$0xff] %vm4795, %v2792
      %4808 = vst.msk [vmem:[%s145 + $0x60] sm:$0xff] %vm4795, %v2797
      %4809 = vst.msk [vmem:[%s145 + $0x68] sm:$0xff] %vm4795, %v2800
      %4810 = vst.msk [vmem:[%s145 + $0x70] sm:$0xff] %vm4795, %v2805
      %4811 = vst.msk [vmem:[%s145 + $0x78] sm:$0xff] %vm4795, %v2808
      %4812 = vst.msk [vmem:[%s145 + $0x80] sm:$0xff] %vm4795, %v2813
      %4813 = vst.msk [vmem:[%s145 + $0x88] sm:$0xff] %vm4795, %v2816
      %4814 = vst.msk [vmem:[%s145 + $0x90] sm:$0xff] %vm4795, %v2821
      %4815 = vst.msk [vmem:[%s145 + $0x98] sm:$0xff] %vm4795, %v2824
      %4816 = vst.msk [vmem:[%s145 + $0xa0] sm:$0xff] %vm4795, %v2829
      %4817 = vst.msk [vmem:[%s145 + $0xa8] sm:$0xff] %vm4795, %v2832
      %4818 = vst.msk [vmem:[%s145 + $0xb0] sm:$0xff] %vm4795, %v2837
      %4819 = vst.msk [vmem:[%s145 + $0xb8] sm:$0xff] %vm4795, %v2840
      %4820 = vst.msk [vmem:[%s145 + $0xc0] sm:$0xff] %vm4795, %v2845
      %4821 = vst.msk [vmem:[%s145 + $0xc8] sm:$0xff] %vm4795, %v2848
      %4822 = vst.msk [vmem:[%s145 + $0xd0] sm:$0xff] %vm4795, %v2853
      %4823 = vst.msk [vmem:[%s145 + $0xd8] sm:$0xff] %vm4795, %v2856
      %4824 = vst.msk [vmem:[%s145 + $0xe0] sm:$0xff] %vm4795, %v2861
      %4825 = vst.msk [vmem:[%s145 + $0xe8] sm:$0xff] %vm4795, %v2864
      %4826 = vst.msk [vmem:[%s145 + $0xf0] sm:$0xff] %vm4795, %v2869
      %4827 = vst.msk [vmem:[%s145 + $0xf8] sm:$0xff] %vm4795, %v2872
      %4828 = vst.msk [vmem:[%s145 + $0x100] sm:$0xff] %vm4795, %v2877
      %4829 = vst.msk [vmem:[%s145 + $0x108] sm:$0xff] %vm4795, %v2880
      %4830 = vst.msk [vmem:[%s145 + $0x110] sm:$0xff] %vm4795, %v2885
      %4831 = vst.msk [vmem:[%s145 + $0x118] sm:$0xff] %vm4795, %v2888
      %4832 = vst.msk [vmem:[%s145 + $0x120] sm:$0xff] %vm4795, %v2893
      %4833 = vst.msk [vmem:[%s145 + $0x128] sm:$0xff] %vm4795, %v2896
      %4834 = vst.msk [vmem:[%s145 + $0x130] sm:$0xff] %vm4795, %v2901
      %4835 = vst.msk [vmem:[%s145 + $0x138] sm:$0xff] %vm4795, %v2904
      %4836 = vst.msk [vmem:[%s145 + $0x140] sm:$0xff] %vm4795, %v2909
      %4837 = vst.msk [vmem:[%s145 + $0x148] sm:$0xff] %vm4795, %v2912
      %4838 = vst.msk [vmem:[%s145 + $0x150] sm:$0xff] %vm4795, %v2917
      %4839 = vst.msk [vmem:[%s145 + $0x158] sm:$0xff] %vm4795, %v2920
      %4840 = vst.msk [vmem:[%s145 + $0x160] sm:$0xff] %vm4795, %v2925
      %4841 = vst.msk [vmem:[%s145 + $0x168] sm:$0xff] %vm4795, %v2928
      %4842 = vst.msk [vmem:[%s145 + $0x170] sm:$0xff] %vm4795, %v2933
      %4843 = vst.msk [vmem:[%s145 + $0x178] sm:$0xff] %vm4795, %v2936
      %4844 = vst.msk [vmem:[%s145 + $0x180] sm:$0xff] %vm4795, %v2941
      %4845 = vst.msk [vmem:[%s145 + $0x188] sm:$0xff] %vm4795, %v2944
      %4846 = vst.msk [vmem:[%s145 + $0x190] sm:$0xff] %vm4795, %v2949
      %4847 = vst.msk [vmem:[%s145 + $0x198] sm:$0xff] %vm4795, %v2952
      %4848 = vst.msk [vmem:[%s145 + $0x1a0] sm:$0xff] %vm4795, %v2957
      %4849 = vst.msk [vmem:[%s145 + $0x1a8] sm:$0xff] %vm4795, %v2960
      %4850 = vst.msk [vmem:[%s145 + $0x1b0] sm:$0xff] %vm4795, %v2965
      %4851 = vst.msk [vmem:[%s145 + $0x1b8] sm:$0xff] %vm4795, %v2968
      %4852 = vst.msk [vmem:[%s145 + $0x1c0] sm:$0xff] %vm4795, %v2973
      %4853 = vst.msk [vmem:[%s145 + $0x1c8] sm:$0xff] %vm4795, %v2976
      %4854 = vst.msk [vmem:[%s145 + $0x1d0] sm:$0xff] %vm4795, %v2981
      %4855 = vst.msk [vmem:[%s145 + $0x1d8] sm:$0xff] %vm4795, %v2984
      %4856 = vst.msk [vmem:[%s145 + $0x1e0] sm:$0xff] %vm4795, %v2989
      %4857 = vst.msk [vmem:[%s145 + $0x1e8] sm:$0xff] %vm4795, %v2992
      %4858 = vst.msk [vmem:[%s145 + $0x1f0] sm:$0xff] %vm4795, %v2997
      %4859 = vst.msk [vmem:[%s145 + $0x1f8] sm:$0xff] %vm4795, %v3000
      %4860 = vst.msk [vmem:[%s145 + $0x200] sm:$0xff] %vm4795, %v3005
      %4861 = vst.msk [vmem:[%s145 + $0x208] sm:$0xff] %vm4795, %v3008
      %4862 = vst.msk [vmem:[%s145 + $0x210] sm:$0xff] %vm4795, %v3013
      %4863 = vst.msk [vmem:[%s145 + $0x218] sm:$0xff] %vm4795, %v3016
      %4864 = vst.msk [vmem:[%s145 + $0x220] sm:$0xff] %vm4795, %v3021
      %4865 = vst.msk [vmem:[%s145 + $0x228] sm:$0xff] %vm4795, %v3024
      %4866 = vst.msk [vmem:[%s145 + $0x230] sm:$0xff] %vm4795, %v3029
      %4867 = vst.msk [vmem:[%s145 + $0x238] sm:$0xff] %vm4795, %v3032
      %4868 = vst.msk [vmem:[%s145 + $0x240] sm:$0xff] %vm4795, %v3037
      %4869 = vst.msk [vmem:[%s145 + $0x248] sm:$0xff] %vm4795, %v3040
      %4870 = vst.msk [vmem:[%s145 + $0x250] sm:$0xff] %vm4795, %v3045
      %4871 = vst.msk [vmem:[%s145 + $0x258] sm:$0xff] %vm4795, %v3048
      %4872 = vst.msk [vmem:[%s145 + $0x260] sm:$0xff] %vm4795, %v3053
      %4873 = vst.msk [vmem:[%s145 + $0x268] sm:$0xff] %vm4795, %v3056
      %4874 = vst.msk [vmem:[%s145 + $0x270] sm:$0xff] %vm4795, %v3061
      %4875 = vst.msk [vmem:[%s145 + $0x278] sm:$0xff] %vm4795, %v3064
      %4876 = vst.msk [vmem:[%s145 + $0x280] sm:$0xff] %vm4795, %v3069
      %4877 = vst.msk [vmem:[%s145 + $0x288] sm:$0xff] %vm4795, %v3072
      %4878 = vst.msk [vmem:[%s145 + $0x290] sm:$0xff] %vm4795, %v3077
      %4879 = vst.msk [vmem:[%s145 + $0x298] sm:$0xff] %vm4795, %v3080
      %4880 = vst.msk [vmem:[%s145 + $0x2a0] sm:$0xff] %vm4795, %v3085
      %4881 = vst.msk [vmem:[%s145 + $0x2a8] sm:$0xff] %vm4795, %v3088
      %4882 = vst.msk [vmem:[%s145 + $0x2b0] sm:$0xff] %vm4795, %v3093
      %4883 = vst.msk [vmem:[%s145 + $0x2b8] sm:$0xff] %vm4795, %v3096
      %4884 = vst.msk [vmem:[%s145 + $0x2c0] sm:$0xff] %vm4795, %v3101
      %4885 = vst.msk [vmem:[%s145 + $0x2c8] sm:$0xff] %vm4795, %v3104
      %4886 = vst.msk [vmem:[%s145 + $0x2d0] sm:$0xff] %vm4795, %v3109
      %4887 = vst.msk [vmem:[%s145 + $0x2d8] sm:$0xff] %vm4795, %v3112
      %4888 = vst.msk [vmem:[%s145 + $0x2e0] sm:$0xff] %vm4795, %v3117
      %4889 = vst.msk [vmem:[%s145 + $0x2e8] sm:$0xff] %vm4795, %v3120
      %4890 = vst.msk [vmem:[%s145 + $0x2f0] sm:$0xff] %vm4795, %v3125
      %4891 = vst.msk [vmem:[%s145 + $0x2f8] sm:$0xff] %vm4795, %v3128
      %4892 = vst.msk [vmem:[%s145 + $0x300] sm:$0xff] %vm4795, %v3133
      %4893 = vst.msk [vmem:[%s145 + $0x308] sm:$0xff] %vm4795, %v3136
      %4894 = vst.msk [vmem:[%s145 + $0x310] sm:$0xff] %vm4795, %v3141
      %4895 = vst.msk [vmem:[%s145 + $0x318] sm:$0xff] %vm4795, %v3144
      %4896 = vst.msk [vmem:[%s145 + $0x320] sm:$0xff] %vm4795, %v3149
      %4897 = vst.msk [vmem:[%s145 + $0x328] sm:$0xff] %vm4795, %v3152
      %4898 = vst.msk [vmem:[%s145 + $0x330] sm:$0xff] %vm4795, %v3157
      %4899 = vst.msk [vmem:[%s145 + $0x338] sm:$0xff] %vm4795, %v3160
      %4900 = vst.msk [vmem:[%s145 + $0x340] sm:$0xff] %vm4795, %v3165
      %4901 = vst.msk [vmem:[%s145 + $0x348] sm:$0xff] %vm4795, %v3168
      %4902 = vst.msk [vmem:[%s145 + $0x350] sm:$0xff] %vm4795, %v3173
      %4903 = vst.msk [vmem:[%s145 + $0x358] sm:$0xff] %vm4795, %v3176
      %4904 = vst.msk [vmem:[%s145 + $0x360] sm:$0xff] %vm4795, %v3181
      %4905 = vst.msk [vmem:[%s145 + $0x368] sm:$0xff] %vm4795, %v3184
      %4906 = vst.msk [vmem:[%s145 + $0x370] sm:$0xff] %vm4795, %v3189
      %4907 = vst.msk [vmem:[%s145 + $0x378] sm:$0xff] %vm4795, %v3192
      %4908 = vst.msk [vmem:[%s145 + $0x380] sm:$0xff] %vm4795, %v3197
      %4909 = vst.msk [vmem:[%s145 + $0x388] sm:$0xff] %vm4795, %v3200
      %4910 = vst.msk [vmem:[%s145 + $0x390] sm:$0xff] %vm4795, %v3205
      %4911 = vst.msk [vmem:[%s145 + $0x398] sm:$0xff] %vm4795, %v3208
      %4912 = vst.msk [vmem:[%s145 + $0x3a0] sm:$0xff] %vm4795, %v3213
      %4913 = vst.msk [vmem:[%s145 + $0x3a8] sm:$0xff] %vm4795, %v3216
      %4914 = vst.msk [vmem:[%s145 + $0x3b0] sm:$0xff] %vm4795, %v3221
      %4915 = vst.msk [vmem:[%s145 + $0x3b8] sm:$0xff] %vm4795, %v3224
      %4916 = vst.msk [vmem:[%s145 + $0x3c0] sm:$0xff] %vm4795, %v3229
      %4917 = vst.msk [vmem:[%s145 + $0x3c8] sm:$0xff] %vm4795, %v3232
      %4918 = vst.msk [vmem:[%s145 + $0x3d0] sm:$0xff] %vm4795, %v3237
      %4919 = vst.msk [vmem:[%s145 + $0x3d8] sm:$0xff] %vm4795, %v3240
      %4920 = vst.msk [vmem:[%s145 + $0x3e0] sm:$0xff] %vm4795, %v3245
      %4921 = vst.msk [vmem:[%s145 + $0x3e8] sm:$0xff] %vm4795, %v3248
      %4922 = vst.msk [vmem:[%s145 + $0x3f0] sm:$0xff] %vm4795, %v3253
      %4923 = vst.msk [vmem:[%s145 + $0x3f8] sm:$0xff] %vm4795, %v3256
      %4924 = vst.msk [vmem:[%s145 + $0x400] sm:$0xff] %vm4795, %v3261
      %4925 = vst.msk [vmem:[%s145 + $0x408] sm:$0xff] %vm4795, %v3264
      %4926 = vst.msk [vmem:[%s145 + $0x410] sm:$0xff] %vm4795, %v3269
      %4927 = vst.msk [vmem:[%s145 + $0x418] sm:$0xff] %vm4795, %v3272
      %4928 = vst.msk [vmem:[%s145 + $0x420] sm:$0xff] %vm4795, %v3277
      %4929 = vst.msk [vmem:[%s145 + $0x428] sm:$0xff] %vm4795, %v3280
      %4930 = vst.msk [vmem:[%s145 + $0x430] sm:$0xff] %vm4795, %v3285
      %4931 = vst.msk [vmem:[%s145 + $0x438] sm:$0xff] %vm4795, %v3288
      %4932 = vst.msk [vmem:[%s145 + $0x440] sm:$0xff] %vm4795, %v3293
      %4933 = vst.msk [vmem:[%s145 + $0x448] sm:$0xff] %vm4795, %v3296
      %4934 = vst.msk [vmem:[%s145 + $0x450] sm:$0xff] %vm4795, %v3301
      %4935 = vst.msk [vmem:[%s145 + $0x458] sm:$0xff] %vm4795, %v3304
      %4936 = vst.msk [vmem:[%s145 + $0x460] sm:$0xff] %vm4795, %v3309
      %4937 = vst.msk [vmem:[%s145 + $0x468] sm:$0xff] %vm4795, %v3312
      %4938 = vst.msk [vmem:[%s145 + $0x470] sm:$0xff] %vm4795, %v3317
      %4939 = vst.msk [vmem:[%s145 + $0x478] sm:$0xff] %vm4795, %v3320
      %4940 = vst.msk [vmem:[%s145 + $0x480] sm:$0xff] %vm4795, %v3325
      %4941 = vst.msk [vmem:[%s145 + $0x488] sm:$0xff] %vm4795, %v3328
      %4942 = vst.msk [vmem:[%s145 + $0x490] sm:$0xff] %vm4795, %v3333
      %4943 = vst.msk [vmem:[%s145 + $0x498] sm:$0xff] %vm4795, %v3336
      %4944 = vst.msk [vmem:[%s145 + $0x4a0] sm:$0xff] %vm4795, %v3341
      %4945 = vst.msk [vmem:[%s145 + $0x4a8] sm:$0xff] %vm4795, %v3344
      %4946 = vst.msk [vmem:[%s145 + $0x4b0] sm:$0xff] %vm4795, %v3349
      %4947 = vst.msk [vmem:[%s145 + $0x4b8] sm:$0xff] %vm4795, %v3352
      %4948 = vst.msk [vmem:[%s145 + $0x4c0] sm:$0xff] %vm4795, %v3357
      %4949 = vst.msk [vmem:[%s145 + $0x4c8] sm:$0xff] %vm4795, %v3360
      %4950 = vst.msk [vmem:[%s145 + $0x4d0] sm:$0xff] %vm4795, %v3365
      %4951 = vst.msk [vmem:[%s145 + $0x4d8] sm:$0xff] %vm4795, %v3368
      %4952 = vst.msk [vmem:[%s145 + $0x4e0] sm:$0xff] %vm4795, %v3373
      %4953 = vst.msk [vmem:[%s145 + $0x4e8] sm:$0xff] %vm4795, %v3376
      %4954 = vst.msk [vmem:[%s145 + $0x4f0] sm:$0xff] %vm4795, %v3381
      %4955 = vst.msk [vmem:[%s145 + $0x4f8] sm:$0xff] %vm4795, %v3384
      %4956 = vst.msk [vmem:[%s145 + $0x500] sm:$0xff] %vm4795, %v3389
      %4957 = vst.msk [vmem:[%s145 + $0x508] sm:$0xff] %vm4795, %v3392
      %4958 = vst.msk [vmem:[%s145 + $0x510] sm:$0xff] %vm4795, %v3397
      %4959 = vst.msk [vmem:[%s145 + $0x518] sm:$0xff] %vm4795, %v3400
      %4960 = vst.msk [vmem:[%s145 + $0x520] sm:$0xff] %vm4795, %v3405
      %4961 = vst.msk [vmem:[%s145 + $0x528] sm:$0xff] %vm4795, %v3408
      %4962 = vst.msk [vmem:[%s145 + $0x530] sm:$0xff] %vm4795, %v3413
      %4963 = vst.msk [vmem:[%s145 + $0x538] sm:$0xff] %vm4795, %v3416
      %4964 = vst.msk [vmem:[%s145 + $0x540] sm:$0xff] %vm4795, %v3421
      %4965 = vst.msk [vmem:[%s145 + $0x548] sm:$0xff] %vm4795, %v3424
      %4966 = vst.msk [vmem:[%s145 + $0x550] sm:$0xff] %vm4795, %v3429
      %4967 = vst.msk [vmem:[%s145 + $0x558] sm:$0xff] %vm4795, %v3432
      %4968 = vst.msk [vmem:[%s145 + $0x560] sm:$0xff] %vm4795, %v3437
      %4969 = vst.msk [vmem:[%s145 + $0x568] sm:$0xff] %vm4795, %v3440
      %4970 = vst.msk [vmem:[%s145 + $0x570] sm:$0xff] %vm4795, %v3445
      %4971 = vst.msk [vmem:[%s145 + $0x578] sm:$0xff] %vm4795, %v3448
      %4972 = vst.msk [vmem:[%s145 + $0x580] sm:$0xff] %vm4795, %v3453
      %4973 = vst.msk [vmem:[%s145 + $0x588] sm:$0xff] %vm4795, %v3456
      %4974 = vst.msk [vmem:[%s145 + $0x590] sm:$0xff] %vm4795, %v3461
      %4975 = vst.msk [vmem:[%s145 + $0x598] sm:$0xff] %vm4795, %v3464
      %4976 = vst.msk [vmem:[%s145 + $0x5a0] sm:$0xff] %vm4795, %v3469
      %4977 = vst.msk [vmem:[%s145 + $0x5a8] sm:$0xff] %vm4795, %v3472
      %4978 = vst.msk [vmem:[%s145 + $0x5b0] sm:$0xff] %vm4795, %v3477
      %4979 = vst.msk [vmem:[%s145 + $0x5b8] sm:$0xff] %vm4795, %v3480
      %4980 = vst.msk [vmem:[%s145 + $0x5c0] sm:$0xff] %vm4795, %v3485
      %4981 = vst.msk [vmem:[%s145 + $0x5c8] sm:$0xff] %vm4795, %v3488
      %4982 = vst.msk [vmem:[%s145 + $0x5d0] sm:$0xff] %vm4795, %v3493
      %4983 = vst.msk [vmem:[%s145 + $0x5d8] sm:$0xff] %vm4795, %v3496
      %4984 = vst.msk [vmem:[%s145 + $0x5e0] sm:$0xff] %vm4795, %v3501
      %4985 = vst.msk [vmem:[%s145 + $0x5e8] sm:$0xff] %vm4795, %v3504
      %4986 = vst.msk [vmem:[%s145 + $0x5f0] sm:$0xff] %vm4795, %v3509
      %4987 = vst.msk [vmem:[%s145 + $0x5f8] sm:$0xff] %vm4795, %v3512
      %4988 = vst.msk [vmem:[%s145 + $0x600] sm:$0xff] %vm4795, %v3517
      %4989 = vst.msk [vmem:[%s145 + $0x608] sm:$0xff] %vm4795, %v3520
      %4990 = vst.msk [vmem:[%s145 + $0x610] sm:$0xff] %vm4795, %v3525
      %4991 = vst.msk [vmem:[%s145 + $0x618] sm:$0xff] %vm4795, %v3528
      %4992 = vst.msk [vmem:[%s145 + $0x620] sm:$0xff] %vm4795, %v3533
      %4993 = vst.msk [vmem:[%s145 + $0x628] sm:$0xff] %vm4795, %v3536
      %4994 = vst.msk [vmem:[%s145 + $0x630] sm:$0xff] %vm4795, %v3541
      %4995 = vst.msk [vmem:[%s145 + $0x638] sm:$0xff] %vm4795, %v3544
      %4996 = vst.msk [vmem:[%s145 + $0x640] sm:$0xff] %vm4795, %v3549
      %4997 = vst.msk [vmem:[%s145 + $0x648] sm:$0xff] %vm4795, %v3552
      %4998 = vst.msk [vmem:[%s145 + $0x650] sm:$0xff] %vm4795, %v3557
      %4999 = vst.msk [vmem:[%s145 + $0x658] sm:$0xff] %vm4795, %v3560
      %5000 = vst.msk [vmem:[%s145 + $0x660] sm:$0xff] %vm4795, %v3565
      %5001 = vst.msk [vmem:[%s145 + $0x668] sm:$0xff] %vm4795, %v3568
      %5002 = vst.msk [vmem:[%s145 + $0x670] sm:$0xff] %vm4795, %v3573
      %5003 = vst.msk [vmem:[%s145 + $0x678] sm:$0xff] %vm4795, %v3576
      %5004 = vst.msk [vmem:[%s145 + $0x680] sm:$0xff] %vm4795, %v3581
      %5005 = vst.msk [vmem:[%s145 + $0x688] sm:$0xff] %vm4795, %v3584
      %5006 = vst.msk [vmem:[%s145 + $0x690] sm:$0xff] %vm4795, %v3589
      %5007 = vst.msk [vmem:[%s145 + $0x698] sm:$0xff] %vm4795, %v3592
      %5008 = vst.msk [vmem:[%s145 + $0x6a0] sm:$0xff] %vm4795, %v3597
      %5009 = vst.msk [vmem:[%s145 + $0x6a8] sm:$0xff] %vm4795, %v3600
      %5010 = vst.msk [vmem:[%s145 + $0x6b0] sm:$0xff] %vm4795, %v3605
      %5011 = vst.msk [vmem:[%s145 + $0x6b8] sm:$0xff] %vm4795, %v3608
      %5012 = vst.msk [vmem:[%s145 + $0x6c0] sm:$0xff] %vm4795, %v3613
      %5013 = vst.msk [vmem:[%s145 + $0x6c8] sm:$0xff] %vm4795, %v3616
      %5014 = vst.msk [vmem:[%s145 + $0x6d0] sm:$0xff] %vm4795, %v3621
      %5015 = vst.msk [vmem:[%s145 + $0x6d8] sm:$0xff] %vm4795, %v3624
      %5016 = vst.msk [vmem:[%s145 + $0x6e0] sm:$0xff] %vm4795, %v3629
      %5017 = vst.msk [vmem:[%s145 + $0x6e8] sm:$0xff] %vm4795, %v3632
      %5018 = vst.msk [vmem:[%s145 + $0x6f0] sm:$0xff] %vm4795, %v3637
      %5019 = vst.msk [vmem:[%s145 + $0x6f8] sm:$0xff] %vm4795, %v3640
      %5020 = vst.msk [vmem:[%s145 + $0x700] sm:$0xff] %vm4795, %v3645
      %5021 = vst.msk [vmem:[%s145 + $0x708] sm:$0xff] %vm4795, %v3648
      %5022 = vst.msk [vmem:[%s145 + $0x710] sm:$0xff] %vm4795, %v3653
      %5023 = vst.msk [vmem:[%s145 + $0x718] sm:$0xff] %vm4795, %v3656
      %5024 = vst.msk [vmem:[%s145 + $0x720] sm:$0xff] %vm4795, %v3661
      %5025 = vst.msk [vmem:[%s145 + $0x728] sm:$0xff] %vm4795, %v3664
      %5026 = vst.msk [vmem:[%s145 + $0x730] sm:$0xff] %vm4795, %v3669
      %5027 = vst.msk [vmem:[%s145 + $0x738] sm:$0xff] %vm4795, %v3672
      %5028 = vst.msk [vmem:[%s145 + $0x740] sm:$0xff] %vm4795, %v3677
      %5029 = vst.msk [vmem:[%s145 + $0x748] sm:$0xff] %vm4795, %v3680
      %5030 = vst.msk [vmem:[%s145 + $0x750] sm:$0xff] %vm4795, %v3685
      %5031 = vst.msk [vmem:[%s145 + $0x758] sm:$0xff] %vm4795, %v3688
      %5032 = vst.msk [vmem:[%s145 + $0x760] sm:$0xff] %vm4795, %v3693
      %5033 = vst.msk [vmem:[%s145 + $0x768] sm:$0xff] %vm4795, %v3696
      %5034 = vst.msk [vmem:[%s145 + $0x770] sm:$0xff] %vm4795, %v3701
      %5035 = vst.msk [vmem:[%s145 + $0x778] sm:$0xff] %vm4795, %v3704
      %5036 = vst.msk [vmem:[%s145 + $0x780] sm:$0xff] %vm4795, %v3709
      %5037 = vst.msk [vmem:[%s145 + $0x788] sm:$0xff] %vm4795, %v3712
      %5038 = vst.msk [vmem:[%s145 + $0x790] sm:$0xff] %vm4795, %v3717
      %5039 = vst.msk [vmem:[%s145 + $0x798] sm:$0xff] %vm4795, %v3720
      %5040 = vst.msk [vmem:[%s145 + $0x7a0] sm:$0xff] %vm4795, %v3725
      %5041 = vst.msk [vmem:[%s145 + $0x7a8] sm:$0xff] %vm4795, %v3728
      %5042 = vst.msk [vmem:[%s145 + $0x7b0] sm:$0xff] %vm4795, %v3733
      %5043 = vst.msk [vmem:[%s145 + $0x7b8] sm:$0xff] %vm4795, %v3736
      %5044 = vst.msk [vmem:[%s145 + $0x7c0] sm:$0xff] %vm4795, %v3741
      %5045 = vst.msk [vmem:[%s145 + $0x7c8] sm:$0xff] %vm4795, %v3744
      %5046 = vst.msk [vmem:[%s145 + $0x7d0] sm:$0xff] %vm4795, %v3749
      %5047 = vst.msk [vmem:[%s145 + $0x7d8] sm:$0xff] %vm4795, %v3752
      %5048 = vst.msk [vmem:[%s145 + $0x7e0] sm:$0xff] %vm4795, %v3757
      %5049 = vst.msk [vmem:[%s145 + $0x7e8] sm:$0xff] %vm4795, %v3760
      %5050 = vst.msk [vmem:[%s145 + $0x7f0] sm:$0xff] %vm4795, %v3765
      %5051 = vst.msk [vmem:[%s145 + $0x7f8] sm:$0xff] %vm4795, %v3768
      %5052 = vst.msk [vmem:[%s145 + $0x800] sm:$0xff] %vm4795, %v3773
      %5053 = vst.msk [vmem:[%s145 + $0x808] sm:$0xff] %vm4795, %v3776
      %5054 = vst.msk [vmem:[%s145 + $0x810] sm:$0xff] %vm4795, %v3781
      %5055 = vst.msk [vmem:[%s145 + $0x818] sm:$0xff] %vm4795, %v3784
      %5056 = vst.msk [vmem:[%s145 + $0x820] sm:$0xff] %vm4795, %v3789
      %5057 = vst.msk [vmem:[%s145 + $0x828] sm:$0xff] %vm4795, %v3792
      %5058 = vst.msk [vmem:[%s145 + $0x830] sm:$0xff] %vm4795, %v3797
      %5059 = vst.msk [vmem:[%s145 + $0x838] sm:$0xff] %vm4795, %v3800
      %5060 = vst.msk [vmem:[%s145 + $0x840] sm:$0xff] %vm4795, %v3805
      %5061 = vst.msk [vmem:[%s145 + $0x848] sm:$0xff] %vm4795, %v3808
      %5062 = vst.msk [vmem:[%s145 + $0x850] sm:$0xff] %vm4795, %v3813
      %5063 = vst.msk [vmem:[%s145 + $0x858] sm:$0xff] %vm4795, %v3816
      %5064 = vst.msk [vmem:[%s145 + $0x860] sm:$0xff] %vm4795, %v3821
      %5065 = vst.msk [vmem:[%s145 + $0x868] sm:$0xff] %vm4795, %v3824
      %5066 = vst.msk [vmem:[%s145 + $0x870] sm:$0xff] %vm4795, %v3829
      %5067 = vst.msk [vmem:[%s145 + $0x878] sm:$0xff] %vm4795, %v3832
      %5068 = vst.msk [vmem:[%s145 + $0x880] sm:$0xff] %vm4795, %v3837
      %5069 = vst.msk [vmem:[%s145 + $0x888] sm:$0xff] %vm4795, %v3840
      %5070 = vst.msk [vmem:[%s145 + $0x890] sm:$0xff] %vm4795, %v3845
      %5071 = vst.msk [vmem:[%s145 + $0x898] sm:$0xff] %vm4795, %v3848
      %5072 = vst.msk [vmem:[%s145 + $0x8a0] sm:$0xff] %vm4795, %v3853
      %5073 = vst.msk [vmem:[%s145 + $0x8a8] sm:$0xff] %vm4795, %v3856
      %5074 = vst.msk [vmem:[%s145 + $0x8b0] sm:$0xff] %vm4795, %v3861
      %5075 = vst.msk [vmem:[%s145 + $0x8b8] sm:$0xff] %vm4795, %v3864
      %5076 = vst.msk [vmem:[%s145 + $0x8c0] sm:$0xff] %vm4795, %v3869
      %5077 = vst.msk [vmem:[%s145 + $0x8c8] sm:$0xff] %vm4795, %v3872
      %5078 = vst.msk [vmem:[%s145 + $0x8d0] sm:$0xff] %vm4795, %v3877
      %5079 = vst.msk [vmem:[%s145 + $0x8d8] sm:$0xff] %vm4795, %v3880
      %5080 = vst.msk [vmem:[%s145 + $0x8e0] sm:$0xff] %vm4795, %v3885
      %5081 = vst.msk [vmem:[%s145 + $0x8e8] sm:$0xff] %vm4795, %v3888
      %5082 = vst.msk [vmem:[%s145 + $0x8f0] sm:$0xff] %vm4795, %v3893
      %5083 = vst.msk [vmem:[%s145 + $0x8f8] sm:$0xff] %vm4795, %v3896
      %5084 = vst.msk [vmem:[%s145 + $0x900] sm:$0xff] %vm4795, %v3901
      %5085 = vst.msk [vmem:[%s145 + $0x908] sm:$0xff] %vm4795, %v3904
      %5086 = vst.msk [vmem:[%s145 + $0x910] sm:$0xff] %vm4795, %v3909
      %5087 = vst.msk [vmem:[%s145 + $0x918] sm:$0xff] %vm4795, %v3912
      %5088 = vst.msk [vmem:[%s145 + $0x920] sm:$0xff] %vm4795, %v3917
      %5089 = vst.msk [vmem:[%s145 + $0x928] sm:$0xff] %vm4795, %v3920
      %5090 = vst.msk [vmem:[%s145 + $0x930] sm:$0xff] %vm4795, %v3925
      %5091 = vst.msk [vmem:[%s145 + $0x938] sm:$0xff] %vm4795, %v3928
      %5092 = vst.msk [vmem:[%s145 + $0x940] sm:$0xff] %vm4795, %v3933
      %5093 = vst.msk [vmem:[%s145 + $0x948] sm:$0xff] %vm4795, %v3936
      %5094 = vst.msk [vmem:[%s145 + $0x950] sm:$0xff] %vm4795, %v3941
      %5095 = vst.msk [vmem:[%s145 + $0x958] sm:$0xff] %vm4795, %v3944
      %5096 = vst.msk [vmem:[%s145 + $0x960] sm:$0xff] %vm4795, %v3949
      %5097 = vst.msk [vmem:[%s145 + $0x968] sm:$0xff] %vm4795, %v3952
      %5098 = vst.msk [vmem:[%s145 + $0x970] sm:$0xff] %vm4795, %v3957
      %5099 = vst.msk [vmem:[%s145 + $0x978] sm:$0xff] %vm4795, %v3960
      %5100 = vst.msk [vmem:[%s145 + $0x980] sm:$0xff] %vm4795, %v3965
      %5101 = vst.msk [vmem:[%s145 + $0x988] sm:$0xff] %vm4795, %v3968
      %5102 = vst.msk [vmem:[%s145 + $0x990] sm:$0xff] %vm4795, %v3973
      %5103 = vst.msk [vmem:[%s145 + $0x998] sm:$0xff] %vm4795, %v3976
      %5104 = vst.msk [vmem:[%s145 + $0x9a0] sm:$0xff] %vm4795, %v3981
      %5105 = vst.msk [vmem:[%s145 + $0x9a8] sm:$0xff] %vm4795, %v3984
      %5106 = vst.msk [vmem:[%s145 + $0x9b0] sm:$0xff] %vm4795, %v3989
      %5107 = vst.msk [vmem:[%s145 + $0x9b8] sm:$0xff] %vm4795, %v3992
      %5108 = vst.msk [vmem:[%s145 + $0x9c0] sm:$0xff] %vm4795, %v3997
      %5109 = vst.msk [vmem:[%s145 + $0x9c8] sm:$0xff] %vm4795, %v4000
      %5110 = vst.msk [vmem:[%s145 + $0x9d0] sm:$0xff] %vm4795, %v4005
      %5111 = vst.msk [vmem:[%s145 + $0x9d8] sm:$0xff] %vm4795, %v4008
      %5112 = vst.msk [vmem:[%s145 + $0x9e0] sm:$0xff] %vm4795, %v4013
      %5113 = vst.msk [vmem:[%s145 + $0x9e8] sm:$0xff] %vm4795, %v4016
      %5114 = vst.msk [vmem:[%s145 + $0x9f0] sm:$0xff] %vm4795, %v4021
      %5115 = vst.msk [vmem:[%s145 + $0x9f8] sm:$0xff] %vm4795, %v4024
      %5116 = vst.msk [vmem:[%s145 + $0xa00] sm:$0xff] %vm4795, %v4029
      %5117 = vst.msk [vmem:[%s145 + $0xa08] sm:$0xff] %vm4795, %v4032
      %5118 = vst.msk [vmem:[%s145 + $0xa10] sm:$0xff] %vm4795, %v4037
      %5119 = vst.msk [vmem:[%s145 + $0xa18] sm:$0xff] %vm4795, %v4040
      %5120 = vst.msk [vmem:[%s145 + $0xa20] sm:$0xff] %vm4795, %v4045
      %5121 = vst.msk [vmem:[%s145 + $0xa28] sm:$0xff] %vm4795, %v4048
      %5122 = vst.msk [vmem:[%s145 + $0xa30] sm:$0xff] %vm4795, %v4053
      %5123 = vst.msk [vmem:[%s145 + $0xa38] sm:$0xff] %vm4795, %v4056
      %5124 = vst.msk [vmem:[%s145 + $0xa40] sm:$0xff] %vm4795, %v4061
      %5125 = vst.msk [vmem:[%s145 + $0xa48] sm:$0xff] %vm4795, %v4064
      %5126 = vst.msk [vmem:[%s145 + $0xa50] sm:$0xff] %vm4795, %v4069
      %5127 = vst.msk [vmem:[%s145 + $0xa58] sm:$0xff] %vm4795, %v4072
      %5128 = vst.msk [vmem:[%s145 + $0xa60] sm:$0xff] %vm4795, %v4077
      %5129 = vst.msk [vmem:[%s145 + $0xa68] sm:$0xff] %vm4795, %v4080
      %5130 = vst.msk [vmem:[%s145 + $0xa70] sm:$0xff] %vm4795, %v4085
      %5131 = vst.msk [vmem:[%s145 + $0xa78] sm:$0xff] %vm4795, %v4088
      %5132 = vst.msk [vmem:[%s145 + $0xa80] sm:$0xff] %vm4795, %v4093
      %5133 = vst.msk [vmem:[%s145 + $0xa88] sm:$0xff] %vm4795, %v4096
      %5134 = vst.msk [vmem:[%s145 + $0xa90] sm:$0xff] %vm4795, %v4101
      %5135 = vst.msk [vmem:[%s145 + $0xa98] sm:$0xff] %vm4795, %v4104
      %5136 = vst.msk [vmem:[%s145 + $0xaa0] sm:$0xff] %vm4795, %v4109
      %5137 = vst.msk [vmem:[%s145 + $0xaa8] sm:$0xff] %vm4795, %v4112
      %5138 = vst.msk [vmem:[%s145 + $0xab0] sm:$0xff] %vm4795, %v4117
      %5139 = vst.msk [vmem:[%s145 + $0xab8] sm:$0xff] %vm4795, %v4120
      %5140 = vst.msk [vmem:[%s145 + $0xac0] sm:$0xff] %vm4795, %v4125
      %5141 = vst.msk [vmem:[%s145 + $0xac8] sm:$0xff] %vm4795, %v4128
      %5142 = vst.msk [vmem:[%s145 + $0xad0] sm:$0xff] %vm4795, %v4133
      %5143 = vst.msk [vmem:[%s145 + $0xad8] sm:$0xff] %vm4795, %v4136
      %5144 = vst.msk [vmem:[%s145 + $0xae0] sm:$0xff] %vm4795, %v4141
      %5145 = vst.msk [vmem:[%s145 + $0xae8] sm:$0xff] %vm4795, %v4144
      %5146 = vst.msk [vmem:[%s145 + $0xaf0] sm:$0xff] %vm4795, %v4149
      %5147 = vst.msk [vmem:[%s145 + $0xaf8] sm:$0xff] %vm4795, %v4152
      %5148 = vst.msk [vmem:[%s145 + $0xb00] sm:$0xff] %vm4795, %v4157
      %5149 = vst.msk [vmem:[%s145 + $0xb08] sm:$0xff] %vm4795, %v4160
      %5150 = vst.msk [vmem:[%s145 + $0xb10] sm:$0xff] %vm4795, %v4165
      %5151 = vst.msk [vmem:[%s145 + $0xb18] sm:$0xff] %vm4795, %v4168
      %5152 = vst.msk [vmem:[%s145 + $0xb20] sm:$0xff] %vm4795, %v4173
      %5153 = vst.msk [vmem:[%s145 + $0xb28] sm:$0xff] %vm4795, %v4176
      %5154 = vst.msk [vmem:[%s145 + $0xb30] sm:$0xff] %vm4795, %v4181
      %5155 = vst.msk [vmem:[%s145 + $0xb38] sm:$0xff] %vm4795, %v4184
      %5156 = vst.msk [vmem:[%s145 + $0xb40] sm:$0xff] %vm4795, %v4189
      %5157 = vst.msk [vmem:[%s145 + $0xb48] sm:$0xff] %vm4795, %v4192
      %5158 = vst.msk [vmem:[%s145 + $0xb50] sm:$0xff] %vm4795, %v4197
      %5159 = vst.msk [vmem:[%s145 + $0xb58] sm:$0xff] %vm4795, %v4200
      %5160 = vst.msk [vmem:[%s145 + $0xb60] sm:$0xff] %vm4795, %v4205
      %5161 = vst.msk [vmem:[%s145 + $0xb68] sm:$0xff] %vm4795, %v4208
      %5162 = vst.msk [vmem:[%s145 + $0xb70] sm:$0xff] %vm4795, %v4213
      %5163 = vst.msk [vmem:[%s145 + $0xb78] sm:$0xff] %vm4795, %v4216
      %5164 = vst.msk [vmem:[%s145 + $0xb80] sm:$0xff] %vm4795, %v4221
      %5165 = vst.msk [vmem:[%s145 + $0xb88] sm:$0xff] %vm4795, %v4224
      %5166 = vst.msk [vmem:[%s145 + $0xb90] sm:$0xff] %vm4795, %v4229
      %5167 = vst.msk [vmem:[%s145 + $0xb98] sm:$0xff] %vm4795, %v4232
      %5168 = vst.msk [vmem:[%s145 + $0xba0] sm:$0xff] %vm4795, %v4237
      %5169 = vst.msk [vmem:[%s145 + $0xba8] sm:$0xff] %vm4795, %v4240
      %5170 = vst.msk [vmem:[%s145 + $0xbb0] sm:$0xff] %vm4795, %v4245
      %5171 = vst.msk [vmem:[%s145 + $0xbb8] sm:$0xff] %vm4795, %v4248
      %5172 = vst.msk [vmem:[%s145 + $0xbc0] sm:$0xff] %vm4795, %v4253
      %5173 = vst.msk [vmem:[%s145 + $0xbc8] sm:$0xff] %vm4795, %v4256
      %5174 = vst.msk [vmem:[%s145 + $0xbd0] sm:$0xff] %vm4795, %v4261
      %5175 = vst.msk [vmem:[%s145 + $0xbd8] sm:$0xff] %vm4795, %v4264
      %5176 = vst.msk [vmem:[%s145 + $0xbe0] sm:$0xff] %vm4795, %v4269
      %5177 = vst.msk [vmem:[%s145 + $0xbe8] sm:$0xff] %vm4795, %v4272
      %5178 = vst.msk [vmem:[%s145 + $0xbf0] sm:$0xff] %vm4795, %v4277
      %5179 = vst.msk [vmem:[%s145 + $0xbf8] sm:$0xff] %vm4795, %v4280
      %5180 = vst.msk [vmem:[%s145 + $0xc00] sm:$0xff] %vm4795, %v4285
      %5181 = vst.msk [vmem:[%s145 + $0xc08] sm:$0xff] %vm4795, %v4288
      %5182 = vst.msk [vmem:[%s145 + $0xc10] sm:$0xff] %vm4795, %v4293
      %5183 = vst.msk [vmem:[%s145 + $0xc18] sm:$0xff] %vm4795, %v4296
      %5184 = vst.msk [vmem:[%s145 + $0xc20] sm:$0xff] %vm4795, %v4301
      %5185 = vst.msk [vmem:[%s145 + $0xc28] sm:$0xff] %vm4795, %v4304
      %5186 = vst.msk [vmem:[%s145 + $0xc30] sm:$0xff] %vm4795, %v4309
      %5187 = vst.msk [vmem:[%s145 + $0xc38] sm:$0xff] %vm4795, %v4312
      %5188 = vst.msk [vmem:[%s145 + $0xc40] sm:$0xff] %vm4795, %v4317
      %5189 = vst.msk [vmem:[%s145 + $0xc48] sm:$0xff] %vm4795, %v4320
      %5190 = vst.msk [vmem:[%s145 + $0xc50] sm:$0xff] %vm4795, %v4325
      %5191 = vst.msk [vmem:[%s145 + $0xc58] sm:$0xff] %vm4795, %v4328
      %5192 = vst.msk [vmem:[%s145 + $0xc60] sm:$0xff] %vm4795, %v4333
      %5193 = vst.msk [vmem:[%s145 + $0xc68] sm:$0xff] %vm4795, %v4336
      %5194 = vst.msk [vmem:[%s145 + $0xc70] sm:$0xff] %vm4795, %v4341
      %5195 = vst.msk [vmem:[%s145 + $0xc78] sm:$0xff] %vm4795, %v4344
      %5196 = vst.msk [vmem:[%s145 + $0xc80] sm:$0xff] %vm4795, %v4349
      %5197 = vst.msk [vmem:[%s145 + $0xc88] sm:$0xff] %vm4795, %v4352
      %5198 = vst.msk [vmem:[%s145 + $0xc90] sm:$0xff] %vm4795, %v4357
      %5199 = vst.msk [vmem:[%s145 + $0xc98] sm:$0xff] %vm4795, %v4360
      %5200 = vst.msk [vmem:[%s145 + $0xca0] sm:$0xff] %vm4795, %v4365
      %5201 = vst.msk [vmem:[%s145 + $0xca8] sm:$0xff] %vm4795, %v4368
      %5202 = vst.msk [vmem:[%s145 + $0xcb0] sm:$0xff] %vm4795, %v4373
      %5203 = vst.msk [vmem:[%s145 + $0xcb8] sm:$0xff] %vm4795, %v4376
      %5204 = vst.msk [vmem:[%s145 + $0xcc0] sm:$0xff] %vm4795, %v4381
      %5205 = vst.msk [vmem:[%s145 + $0xcc8] sm:$0xff] %vm4795, %v4384
      %5206 = vst.msk [vmem:[%s145 + $0xcd0] sm:$0xff] %vm4795, %v4389
      %5207 = vst.msk [vmem:[%s145 + $0xcd8] sm:$0xff] %vm4795, %v4392
      %5208 = vst.msk [vmem:[%s145 + $0xce0] sm:$0xff] %vm4795, %v4397
      %5209 = vst.msk [vmem:[%s145 + $0xce8] sm:$0xff] %vm4795, %v4400
      %5210 = vst.msk [vmem:[%s145 + $0xcf0] sm:$0xff] %vm4795, %v4405
      %5211 = vst.msk [vmem:[%s145 + $0xcf8] sm:$0xff] %vm4795, %v4408
      %5212 = vst.msk [vmem:[%s145 + $0xd00] sm:$0xff] %vm4795, %v4413
      %5213 = vst.msk [vmem:[%s145 + $0xd08] sm:$0xff] %vm4795, %v4416
      %5214 = vst.msk [vmem:[%s145 + $0xd10] sm:$0xff] %vm4795, %v4421
      %5215 = vst.msk [vmem:[%s145 + $0xd18] sm:$0xff] %vm4795, %v4424
      %5216 = vst.msk [vmem:[%s145 + $0xd20] sm:$0xff] %vm4795, %v4429
      %5217 = vst.msk [vmem:[%s145 + $0xd28] sm:$0xff] %vm4795, %v4432
      %5218 = vst.msk [vmem:[%s145 + $0xd30] sm:$0xff] %vm4795, %v4437
      %5219 = vst.msk [vmem:[%s145 + $0xd38] sm:$0xff] %vm4795, %v4440
      %5220 = vst.msk [vmem:[%s145 + $0xd40] sm:$0xff] %vm4795, %v4445
      %5221 = vst.msk [vmem:[%s145 + $0xd48] sm:$0xff] %vm4795, %v4448
      %5222 = vst.msk [vmem:[%s145 + $0xd50] sm:$0xff] %vm4795, %v4453
      %5223 = vst.msk [vmem:[%s145 + $0xd58] sm:$0xff] %vm4795, %v4456
      %5224 = vst.msk [vmem:[%s145 + $0xd60] sm:$0xff] %vm4795, %v4461
      %5225 = vst.msk [vmem:[%s145 + $0xd68] sm:$0xff] %vm4795, %v4464
      %5226 = vst.msk [vmem:[%s145 + $0xd70] sm:$0xff] %vm4795, %v4469
      %5227 = vst.msk [vmem:[%s145 + $0xd78] sm:$0xff] %vm4795, %v4472
      %5228 = vst.msk [vmem:[%s145 + $0xd80] sm:$0xff] %vm4795, %v4477
      %5229 = vst.msk [vmem:[%s145 + $0xd88] sm:$0xff] %vm4795, %v4480
      %5230 = vst.msk [vmem:[%s145 + $0xd90] sm:$0xff] %vm4795, %v4485
      %5231 = vst.msk [vmem:[%s145 + $0xd98] sm:$0xff] %vm4795, %v4488
      %5232 = vst.msk [vmem:[%s145 + $0xda0] sm:$0xff] %vm4795, %v4493
      %5233 = vst.msk [vmem:[%s145 + $0xda8] sm:$0xff] %vm4795, %v4496
      %5234 = vst.msk [vmem:[%s145 + $0xdb0] sm:$0xff] %vm4795, %v4501
      %5235 = vst.msk [vmem:[%s145 + $0xdb8] sm:$0xff] %vm4795, %v4504
      %5236 = vst.msk [vmem:[%s145 + $0xdc0] sm:$0xff] %vm4795, %v4509
      %5237 = vst.msk [vmem:[%s145 + $0xdc8] sm:$0xff] %vm4795, %v4512
      %5238 = vst.msk [vmem:[%s145 + $0xdd0] sm:$0xff] %vm4795, %v4517
      %5239 = vst.msk [vmem:[%s145 + $0xdd8] sm:$0xff] %vm4795, %v4520
      %5240 = vst.msk [vmem:[%s145 + $0xde0] sm:$0xff] %vm4795, %v4525
      %5241 = vst.msk [vmem:[%s145 + $0xde8] sm:$0xff] %vm4795, %v4528
      %5242 = vst.msk [vmem:[%s145 + $0xdf0] sm:$0xff] %vm4795, %v4533
      %5243 = vst.msk [vmem:[%s145 + $0xdf8] sm:$0xff] %vm4795, %v4536
      %5244 = vst.msk [vmem:[%s145 + $0xe00] sm:$0xff] %vm4795, %v4541
      %5245 = vst.msk [vmem:[%s145 + $0xe08] sm:$0xff] %vm4795, %v4544
      %5246 = vst.msk [vmem:[%s145 + $0xe10] sm:$0xff] %vm4795, %v4549
      %5247 = vst.msk [vmem:[%s145 + $0xe18] sm:$0xff] %vm4795, %v4552
      %5248 = vst.msk [vmem:[%s145 + $0xe20] sm:$0xff] %vm4795, %v4557
      %5249 = vst.msk [vmem:[%s145 + $0xe28] sm:$0xff] %vm4795, %v4560
      %5250 = vst.msk [vmem:[%s145 + $0xe30] sm:$0xff] %vm4795, %v4565
      %5251 = vst.msk [vmem:[%s145 + $0xe38] sm:$0xff] %vm4795, %v4568
      %5252 = vst.msk [vmem:[%s145 + $0xe40] sm:$0xff] %vm4795, %v4573
      %5253 = vst.msk [vmem:[%s145 + $0xe48] sm:$0xff] %vm4795, %v4576
      %5254 = vst.msk [vmem:[%s145 + $0xe50] sm:$0xff] %vm4795, %v4581
      %5255 = vst.msk [vmem:[%s145 + $0xe58] sm:$0xff] %vm4795, %v4584
      %5256 = vst.msk [vmem:[%s145 + $0xe60] sm:$0xff] %vm4795, %v4589
      %5257 = vst.msk [vmem:[%s145 + $0xe68] sm:$0xff] %vm4795, %v4592
      %5258 = vst.msk [vmem:[%s145 + $0xe70] sm:$0xff] %vm4795, %v4597
      %5259 = vst.msk [vmem:[%s145 + $0xe78] sm:$0xff] %vm4795, %v4600
      %5260 = vst.msk [vmem:[%s145 + $0xe80] sm:$0xff] %vm4795, %v4605
      %5261 = vst.msk [vmem:[%s145 + $0xe88] sm:$0xff] %vm4795, %v4608
      %5262 = vst.msk [vmem:[%s145 + $0xe90] sm:$0xff] %vm4795, %v4613
      %5263 = vst.msk [vmem:[%s145 + $0xe98] sm:$0xff] %vm4795, %v4616
      %5264 = vst.msk [vmem:[%s145 + $0xea0] sm:$0xff] %vm4795, %v4621
      %5265 = vst.msk [vmem:[%s145 + $0xea8] sm:$0xff] %vm4795, %v4624
      %5266 = vst.msk [vmem:[%s145 + $0xeb0] sm:$0xff] %vm4795, %v4629
      %5267 = vst.msk [vmem:[%s145 + $0xeb8] sm:$0xff] %vm4795, %v4632
      %5268 = vst.msk [vmem:[%s145 + $0xec0] sm:$0xff] %vm4795, %v4637
      %5269 = vst.msk [vmem:[%s145 + $0xec8] sm:$0xff] %vm4795, %v4640
      %5270 = vst.msk [vmem:[%s145 + $0xed0] sm:$0xff] %vm4795, %v4645
      %5271 = vst.msk [vmem:[%s145 + $0xed8] sm:$0xff] %vm4795, %v4648
      %5272 = vst.msk [vmem:[%s145 + $0xee0] sm:$0xff] %vm4795, %v4653
      %5273 = vst.msk [vmem:[%s145 + $0xee8] sm:$0xff] %vm4795, %v4656
      %5274 = vst.msk [vmem:[%s145 + $0xef0] sm:$0xff] %vm4795, %v4661
      %5275 = vst.msk [vmem:[%s145 + $0xef8] sm:$0xff] %vm4795, %v4664
      %5276 = vst.msk [vmem:[%s145 + $0xf00] sm:$0xff] %vm4795, %v4669
      %5277 = vst.msk [vmem:[%s145 + $0xf08] sm:$0xff] %vm4795, %v4672
      %5278 = vst.msk [vmem:[%s145 + $0xf10] sm:$0xff] %vm4795, %v4677
      %5279 = vst.msk [vmem:[%s145 + $0xf18] sm:$0xff] %vm4795, %v4680
      %5280 = vst.msk [vmem:[%s145 + $0xf20] sm:$0xff] %vm4795, %v4685
      %5281 = vst.msk [vmem:[%s145 + $0xf28] sm:$0xff] %vm4795, %v4688
      %5282 = vst.msk [vmem:[%s145 + $0xf30] sm:$0xff] %vm4795, %v4693
      %5283 = vst.msk [vmem:[%s145 + $0xf38] sm:$0xff] %vm4795, %v4696
      %5284 = vst.msk [vmem:[%s145 + $0xf40] sm:$0xff] %vm4795, %v4701
      %5285 = vst.msk [vmem:[%s145 + $0xf48] sm:$0xff] %vm4795, %v4704
      %5286 = vst.msk [vmem:[%s145 + $0xf50] sm:$0xff] %vm4795, %v4709
      %5287 = vst.msk [vmem:[%s145 + $0xf58] sm:$0xff] %vm4795, %v4712
      %5288 = vst.msk [vmem:[%s145 + $0xf60] sm:$0xff] %vm4795, %v4717
      %5289 = vst.msk [vmem:[%s145 + $0xf68] sm:$0xff] %vm4795, %v4720
      %5290 = vst.msk [vmem:[%s145 + $0xf70] sm:$0xff] %vm4795, %v4725
      %5291 = vst.msk [vmem:[%s145 + $0xf78] sm:$0xff] %vm4795, %v4728
      %5292 = vst.msk [vmem:[%s145 + $0xf80] sm:$0xff] %vm4795, %v4733
      %5293 = vst.msk [vmem:[%s145 + $0xf88] sm:$0xff] %vm4795, %v4736
      %5294 = vst.msk [vmem:[%s145 + $0xf90] sm:$0xff] %vm4795, %v4741
      %5295 = vst.msk [vmem:[%s145 + $0xf98] sm:$0xff] %vm4795, %v4744
      %5296 = vst.msk [vmem:[%s145 + $0xfa0] sm:$0xff] %vm4795, %v4749
      %5297 = vst.msk [vmem:[%s145 + $0xfa8] sm:$0xff] %vm4795, %v4752
      %5298 = vst.msk [vmem:[%s145 + $0xfb0] sm:$0xff] %vm4795, %v4757
      %5299 = vst.msk [vmem:[%s145 + $0xfb8] sm:$0xff] %vm4795, %v4760
      %5300 = vst.msk [vmem:[%s145 + $0xfc0] sm:$0xff] %vm4795, %v4765
      %5301 = vst.msk [vmem:[%s145 + $0xfc8] sm:$0xff] %vm4795, %v4768
      %5302 = vst.msk [vmem:[%s145 + $0xfd0] sm:$0xff] %vm4795, %v4773
      %5303 = vst.msk [vmem:[%s145 + $0xfd8] sm:$0xff] %vm4795, %v4776
      %5304 = vst.msk [vmem:[%s145 + $0xfe0] sm:$0xff] %vm4795, %v4781
      %5305 = vst.msk [vmem:[%s145 + $0xfe8] sm:$0xff] %vm4795, %v4784
      %5306 = vst.msk [vmem:[%s145 + $0xff0] sm:$0xff] %vm4795, %v4789
      %5307 = vst.msk [vmem:[%s145 + $0xff8] sm:$0xff] %vm4795, %v4792
      %s5308 = smul.u32 512, %s13
      %p5309 = scmp.lt.s32.totalorder %s5308, 1023
      %s5310 = scalar_select %p5309, %s5308, 1023
      %s5311 = smul.addr %s5310, 8
      %s5312 = scalar_lea.vmem %s2, %s5311
      // Predicated region
      $region29: #{netG_forward.9} parent=27 // pred_check
        %p5313 = pneg %p78
      $region30: #{netG_forward.9} parent=27 // pred_check_branch
        %5315 = sbr.rel (%p5313) target = $region32
      $region31: #{netG_forward.9} parent=27 // pred_region
        %s5316 = smul.u32 512, %s13
      $region32: #{netG_forward.9} parent=27 // pred_fallthru
        _
    $region28: #{netG_forward.9} parent=5 // pred_fallthru
      _
    %p5317 = scmp.le.s32.totalorder 2, %s8
    // Predicated region
    $region33: #{netG_forward.9} parent=5 // pred_check
      %p5318 = pneg %p5317
    $region34: #{netG_forward.9} parent=5 // pred_check_branch
      %5320 = sbr.rel (%p5318) target = $region36
    $region35: #{netG_forward.9} parent=5 // pred_region
      %s5321 = ssub.s32 %s8, 2
      // Predicated region
      $region37: #{netG_forward.9} parent=35 // pred_check
        %p5322 = pneg %p84
      $region38: #{netG_forward.9} parent=35 // pred_check_branch
        %5324 = sbr.rel (%p5322) target = $region40
      $region39: #{netG_forward.9} parent=35 // pred_region
        %s5325 = smul.u32 512, %s14
        %p5326 = scmp.lt.s32.totalorder %s5325, 1023
        %s5327 = scalar_select %p5326, %s5325, 1023
        %s5328 = smul.addr %s5327, 8
        %s5329 = scalar_lea.vmem %s2, %s5328
      $region40: #{netG_forward.9} parent=35 // pred_fallthru
        _
    $region36: #{netG_forward.9} parent=5 // pred_fallthru
      _
  $region6: #{netG_forward.9} parent=0 // loop_footer
    %s12 = sadd.s32 1, %s8
  $region7: #{netG_forward.9} parent=0 // loop_footer_branch
    %7 = sbr.rel target = $region3
  $region8: #{netG_forward.9} parent=0 // loop_exit
    _

</llo_original>
